<compile_context>
chip_gen: v5e
topology: v5e:2x2
jax: 0.10.0
libtpu: 0.0.40
codegen_flags: <defaults>
</compile_context>

<pallas_src>
import jax
import jax.numpy as jnp
from jax.experimental import pallas as pl
from jax.experimental.pallas import tpu as pltpu


# -----------------------------------------------------------------------------
# Architecture (synthetic EfficientNet-ish backbone)
# -----------------------------------------------------------------------------

STEM_OUT = 16
ARCH = [
    # cin, cout, expand_ratio, stride, residual   (one entry == one backbone "block")
    dict(cin=16, cout=16, expand=1, stride=1, residual=True),
    dict(cin=16, cout=24, expand=4, stride=2, residual=False),
    dict(cin=24, cout=32, expand=4, stride=2, residual=False),
    dict(cin=32, cout=32, expand=4, stride=1, residual=True),
]


# -----------------------------------------------------------------------------
# JAX-side layout glue: pad (+ parity space-to-depth for stride 2) and flatten to a
# row-pitched 2-D (Mp, C) layout so that every 3x3 tap is a contiguous in-kernel
# row-slice.  This replaces the old im2col extract_taps (9-10x HBM blowup).
# -----------------------------------------------------------------------------

def _prep(x_nhwc, stride):
    """Returns (flat bf16 (N, Mp, C), valid f32 (Mp, 1), tap_offs[9], m_out,
    out_pitch, ho, wo).  Tap k of the conv is flat[off_k : off_k + m_out, :]."""
    n, h, w, c = x_nhwc.shape
    ones = jnp.ones((1, h, w, 1), jnp.float32)
    if stride == 1:
        wp = w + 2
        # one extra bottom pad row so the last tap slice stays in bounds
        pad = ((0, 0), (1, 2), (1, 1), (0, 0))
        flat = jnp.pad(x_nhwc, pad).reshape(n, (h + 3) * wp, c)
        valid = jnp.pad(ones, pad).reshape((h + 3) * wp, 1)
        tap_offs = [dh * wp + dw for dh in range(3) for dw in range(3)]
        ho, wo, m_out, pitch = h, w, h * wp, wp
    else:
        assert h % 2 == 0 and w % 2 == 0
        ho, wo = h // 2, w // 2
        hpar, wpar = ho + 2, wo + 1                  # +1 extra junk row per plane
        pad = ((0, 0), (1, 2 * hpar - h - 1), (1, 2 * wpar - w - 1), (0, 0))

        def s2d(a):                                  # (n,2*hpar,2*wpar,c)->(n,4*hpar*wpar,c)
            nn = a.shape[0]
            a = a.reshape(nn, hpar, 2, wpar, 2, a.shape[-1])
            a = a.transpose(0, 2, 4, 1, 3, 5)        # (n, py, px, i, j, c)
            return a.reshape(nn, 4 * hpar * wpar, a.shape[-1])

        flat = s2d(jnp.pad(x_nhwc, pad))
        valid = s2d(jnp.pad(ones, pad)).reshape(4 * hpar * wpar, 1)
        r = hpar * wpar
        tap_offs = [(2 * (dh % 2) + (dw % 2)) * r + (dh // 2) * wpar + (dw // 2)
                    for dh in range(3) for dw in range(3)]
        m_out, pitch = ho * wpar, wpar
    return flat.astype(jnp.bfloat16), valid, tap_offs, m_out, pitch, ho, wo


def _depitch(out_flat, ho, wo, pitch):
    """(N, ho*pitch, C) row-pitched kernel output -> clean (N, ho, wo, C)."""
    n, _, c = out_flat.shape
    return out_flat.reshape(n, ho, pitch, c)[:, :, :wo, :]


# -----------------------------------------------------------------------------
# Pallas kernels (one fused kernel per stage; grid is over the batch dim)
# -----------------------------------------------------------------------------

def _make_stem_kernel(tap_offs, m_out):
    """layer0: 3x3/s2 conv + folded BN + swish.  Taps are in-kernel row slices of the
    parity-decomposed padded image; with Cin=3 each tap matmul is tiny, so the 9
    accumulated MXU ops are negligible (K=3)."""

    def kernel(x_ref, w_ref, b_ref, o_ref):
        acc = None
        for k, off in enumerate(tap_offs):
            t = x_ref[pl.ds(off, m_out), :]                         # (M, 3) bf16
            c = jnp.dot(t, w_ref[k], preferred_element_type=jnp.float32)
            acc = c if acc is None else acc + c
        y = acc + b_ref[...]
        o_ref[...] = y * jax.nn.sigmoid(y)

    return kernel


def _make_block_kernel(*, expand, residual, tap_offs, center_off, m_out, pool_count):
    """Fused MBConv / DS block: [1x1 expand (once)] -> dw3x3 (in-kernel taps) ->
    SE (VPU) -> 1x1 project [+res]."""

    def kernel(*refs):
        if expand:
            (x_ref, valid_ref, w_exp_ref, b_exp_ref, w_dw_ref, b_dw_ref,
             w_se1_ref, b_se1_ref, w_se2_ref, b_se2_ref,
             w_proj_ref, b_proj_ref, o_ref, e_ref) = refs
        else:
            (x_ref, valid_ref, w_dw_ref, b_dw_ref,
             w_se1_ref, b_se1_ref, w_se2_ref, b_se2_ref,
             w_proj_ref, b_proj_ref, o_ref) = refs

        if expand:
            # 1x1 expansion + folded-BN bias + swish, computed ONCE per (padded)
            # spatial position as a single tall matmul; the validity mask zeroes
            # pad/junk rows so dw taps see exact zeros there (matches zero padding
            # of the expanded activation).
            e = jnp.dot(x_ref[...], w_exp_ref[...],
                        preferred_element_type=jnp.float32) + b_exp_ref[...]
            e = e * jax.nn.sigmoid(e)
            e_ref[...] = e * valid_ref[...]

            def tap(k):                                             # (M, Cmid) f32
                return e_ref[pl.ds(tap_offs[k], m_out), :]
        else:
            def tap(k):
                return x_ref[pl.ds(tap_offs[k], m_out), :].astype(jnp.float32)

        # --- depthwise 3x3: 9 shifted row-slices, VPU multiply-accumulate ---------
        acc = tap(0) * w_dw_ref[0]
        for k in range(1, 9):
            acc = acc + tap(k) * w_dw_ref[k]
        y = acc + b_dw_ref[...]
        y = y * jax.nn.sigmoid(y)                                   # dw BN + swish

        # --- squeeze-excite (matmul-free: VPU broadcast-mul + XLU reduces) --------
        out_valid = valid_ref[pl.ds(center_off, m_out), :]          # (M, 1)
        pooled = jnp.sum(y * out_valid, axis=0, keepdims=True) * (1.0 / pool_count)
        s = jnp.sum(w_se1_ref[...] * pooled, axis=1, keepdims=True) + b_se1_ref[...]
        s = s * jax.nn.sigmoid(s)                                   # (cr, 1)
        g = jnp.sum(w_se2_ref[...] * s, axis=0, keepdims=True) + b_se2_ref[...]
        y = y * jax.nn.sigmoid(g)                                   # per-channel gate

        # --- 1x1 projection + folded BN (+ residual) -------------------------------
        out = jnp.dot(y.astype(jnp.bfloat16), w_proj_ref[...],
                      preferred_element_type=jnp.float32) + b_proj_ref[...]
        if residual:
            # center tap (kh=kw=1) of a stride-1/pad-1 window == the block input.
            out = out + x_ref[pl.ds(center_off, m_out), :].astype(jnp.float32)
        o_ref[...] = out

    return kernel


# -----------------------------------------------------------------------------
# pallas_call wrapper: grid over batch, squeezed batch dim, consts broadcast
# -----------------------------------------------------------------------------

def _const_map(nd):
    return lambda b: (0,) * nd


def _pcall(kernel, batched_in, const_ins, out_rows, out_cols, scratch=()):
    n_batch, mp, cin = batched_in.shape
    in_specs = [pl.BlockSpec((None, mp, cin), lambda b: (b, 0, 0))]
    for w in const_ins:
        in_specs.append(pl.BlockSpec(tuple(w.shape), _const_map(w.ndim)))
    return pl.pallas_call(
        kernel,
        grid=(n_batch,),
        in_specs=in_specs,
        out_specs=pl.BlockSpec((None, out_rows, out_cols), lambda b: (b, 0, 0)),
        out_shape=jax.ShapeDtypeStruct((n_batch, out_rows, out_cols), jnp.float32),
        scratch_shapes=list(scratch),
        compiler_params=pltpu.CompilerParams(dimension_semantics=("parallel",)),
    )(batched_in, *const_ins)


# -----------------------------------------------------------------------------
# Parameters (deterministic; BN folded at init: scale -> weights, bias kept)
# -----------------------------------------------------------------------------

def make_bn(key, c):
    k1, k2 = jax.random.split(key)
    gamma = 1.0 + 0.1 * jax.random.normal(k1, (c,), jnp.float32)
    beta = 0.1 * jax.random.normal(k2, (c,), jnp.float32)
    eps = 1e-3
    scale = gamma / jnp.sqrt(1.0 + eps)          # running_var = 1
    bias = beta                                  # running_mean = 0
    return scale, bias


def init_encoder_params(key):
    keys = iter(jax.random.split(key, 64))
    nk = lambda: next(keys)
    cin_img = 3

    w_stem = jax.random.normal(nk(), (3, 3, cin_img, STEM_OUT), jnp.float32)
    w_stem = w_stem / jnp.sqrt(9.0 * cin_img)
    s_stem, b_stem = make_bn(nk(), STEM_OUT)
    params = {"stem": dict(
        w=(w_stem.reshape(9, cin_img, STEM_OUT) * s_stem[None, None, :]).astype(jnp.bfloat16),
        b=b_stem.reshape(1, STEM_OUT))}

    blocks = []
    for cfg in ARCH:
        cin, cout, er = cfg["cin"], cfg["cout"], cfg["expand"]
        cmid = cin * er
        p = {}
        if er != 1:
            w_exp = jax.random.normal(nk(), (cin, cmid), jnp.float32) / jnp.sqrt(float(cin))
            s_exp, b_exp = make_bn(nk(), cmid)
            p["w_exp"] = (w_exp * s_exp[None, :]).astype(jnp.bfloat16)
            p["b_exp"] = b_exp.reshape(1, cmid)
        wd = jax.random.normal(nk(), (3, 3, cmid), jnp.float32) / 3.0
        s_dw, b_dw = make_bn(nk(), cmid)
        p["w_dw"] = (wd.reshape(9, 1, cmid) * s_dw[None, None, :]).astype(jnp.float32)
        p["b_dw"] = b_dw.reshape(1, cmid)
        cr = max(1, cin // 4)
        # SE weights stored f32 and pre-transposed for the VPU (no-MXU) path.
        p["w_se1"] = jax.random.normal(nk(), (cr, cmid), jnp.float32) / jnp.sqrt(float(cmid))
        p["b_se1"] = jnp.zeros((cr, 1), jnp.float32)
        p["w_se2"] = jax.random.normal(nk(), (cr, cmid), jnp.float32) / jnp.sqrt(float(cr))
        p["b_se2"] = jnp.zeros((1, cmid), jnp.float32)
        w_proj = jax.random.normal(nk(), (cmid, cout), jnp.float32) / jnp.sqrt(float(cmid))
        s_proj, b_proj = make_bn(nk(), cout)
        p["w_proj"] = (w_proj * s_proj[None, :]).astype(jnp.bfloat16)
        p["b_proj"] = b_proj.reshape(1, cout)
        blocks.append(p)
    params["blocks"] = blocks
    return params


# -----------------------------------------------------------------------------
# Forward pass (Pallas)
# -----------------------------------------------------------------------------

def _stem_forward(x_nhwc, params):
    flat, _valid, tap_offs, m_out, pitch, ho, wo = _prep(x_nhwc, stride=2)
    kern = _make_stem_kernel(tap_offs, m_out)
    out = _pcall(kern, flat, (params["stem"]["w"], params["stem"]["b"]), m_out, STEM_OUT)
    return _depitch(out, ho, wo, pitch)


def _block_forward(x_nhwc, p, cfg):
    expand = cfg["expand"] != 1
    stride, residual, cin, cout = cfg["stride"], cfg["residual"], cfg["cin"], cfg["cout"]
    cmid = cin * cfg["expand"]
    if residual:
        assert stride == 1 and cin == cout, "residual needs stride 1 and cin == cout"

    flat, valid, tap_offs, m_out, pitch, ho, wo = _prep(x_nhwc, stride)
    kern = _make_block_kernel(expand=expand, residual=residual, tap_offs=tap_offs,
                              center_off=tap_offs[4], m_out=m_out,
                              pool_count=float(ho * wo))
    weights = ([p["w_exp"], p["b_exp"]] if expand else []) + [
        p["w_dw"], p["b_dw"], p["w_se1"], p["b_se1"], p["w_se2"], p["b_se2"],
        p["w_proj"], p["b_proj"]]
    scratch = (pltpu.VMEM((flat.shape[1], cmid), jnp.float32),) if expand else ()
    out = _pcall(kern, flat, tuple([valid] + weights), m_out, cout, scratch=scratch)
    return _depitch(out, ho, wo, pitch)


def encoder_forward(x_nchw, params):
    """Returns [layer0_out, block1_out, ...] in NCHW, matching the PyTorch module."""
    x = jnp.transpose(x_nchw, (0, 2, 3, 1)).astype(jnp.float32)   # NCHW -> NHWC
    x = _stem_forward(x, params)
    feats = [x]
    for p, cfg in zip(params["blocks"], ARCH):
        x = _block_forward(x, p, cfg)
        feats.append(x)
    return [jnp.transpose(f, (0, 3, 1, 2)) for f in feats]        # back to NCHW


# -----------------------------------------------------------------------------
# Pure-JAX reference (same math, same bf16 matmul operands) — correctness guard
# -----------------------------------------------------------------------------

def _ref_taps(x, stride):
    n, h, w, _ = x.shape
    xp = jnp.pad(x, ((0, 0), (1, 1), (1, 1), (0, 0)))
    ho = (h - 1) // stride + 1
    wo = (w - 1) // stride + 1
    taps = []
    for dh in range(3):
        for dw in range(3):
            taps.append(xp[:, dh:dh + (ho - 1) * stride + 1:stride,
                           dw:dw + (wo - 1) * stride + 1:stride, :])
    return taps


def encoder_forward_ref(x_nchw, params):
    x = jnp.transpose(x_nchw, (0, 2, 3, 1)).astype(jnp.float32)
    # stem
    taps = _ref_taps(x.astype(jnp.bfloat16), 2)
    y = sum(jnp.dot(taps[k], params["stem"]["w"][k],
                    preferred_element_type=jnp.float32) for k in range(9))
    y = y + params["stem"]["b"].reshape(1, 1, 1, -1)
    x = y * jax.nn.sigmoid(y)
    feats = [x]
    for p, cfg in zip(params["blocks"], ARCH):
        xb = x.astype(jnp.bfloat16)
        if cfg["expand"] != 1:
            e = jnp.dot(xb, p["w_exp"], preferred_element_type=jnp.float32)
            e = e + p["b_exp"].reshape(1, 1, 1, -1)
            e = e * jax.nn.sigmoid(e)
        else:
            e = xb.astype(jnp.float32)
        taps = _ref_taps(e, cfg["stride"])
        acc = sum(taps[k] * p["w_dw"][k].reshape(1, 1, 1, -1) for k in range(9))
        y = acc + p["b_dw"].reshape(1, 1, 1, -1)
        y = y * jax.nn.sigmoid(y)
        pooled = jnp.mean(y, axis=(1, 2))                                   # (n, cmid)
        s = jnp.einsum("nc,rc->nr", pooled, p["w_se1"]) + p["b_se1"][:, 0][None, :]
        s = s * jax.nn.sigmoid(s)
        g = jnp.einsum("nr,rc->nc", s, p["w_se2"]) + p["b_se2"]
        y = y * jax.nn.sigmoid(g)[:, None, None, :]
        out = jnp.dot(y.astype(jnp.bfloat16), p["w_proj"],
                      preferred_element_type=jnp.float32) + p["b_proj"].reshape(1, 1, 1, -1)
        if cfg["residual"]:
            out = out + xb.astype(jnp.float32)
        x = out
        feats.append(x)
    return [jnp.transpose(f, (0, 3, 1, 2)) for f in feats]


# -----------------------------------------------------------------------------

if __name__ == "__main__":
    x = jax.random.normal(jax.random.PRNGKey(0), (2, 3, 16, 16), jnp.float32)
    params = init_encoder_params(jax.random.PRNGKey(42))

    fwd = jax.jit(lambda inp: encoder_forward(inp, params))
    feats = jax.block_until_ready(fwd(x))

    expected = [(2, 16, 8, 8), (2, 16, 8, 8), (2, 24, 4, 4), (2, 32, 2, 2), (2, 32, 2, 2)]
    assert [tuple(f.shape) for f in feats] == expected, [f.shape for f in feats]
    assert all(bool(jnp.all(jnp.isfinite(f))) for f in feats)

    # Compare against the plain-JAX reference doing identical math.
    ref = jax.block_until_ready(jax.jit(lambda inp: encoder_forward_ref(inp, params))(x))
    for a, b in zip(feats, ref):
        err = float(jnp.max(jnp.abs(a - b)))
        assert err < 1e-2, f"mismatch vs reference: {err}"

    print("KERNEL_OK")
</pallas_src>

<mosaic_0001>
module attributes {stable_mosaic.version = 11 : i64} {
  func.func @kernel(%arg0: i32, %arg1: memref<1x360x3xbf16, #tpu.memory_space<vmem>>, %arg2: memref<9x3x16xbf16, #tpu.memory_space<vmem>>, %arg3: memref<1x16xf32, #tpu.memory_space<vmem>>, %arg4: memref<1x72x16xf32, #tpu.memory_space<vmem>>) attributes {dimension_semantics = [#tpu.dimension_semantics<parallel>], iteration_bounds = array<i64: 2>, scalar_prefetch = 0 : i64, scratch_operands = 0 : i64, tpu.core_type = #tpu.core_type<tc>, window_params = [{transform_indices = @transform_0, window_bounds = array<i64: 1, 360, 3>}, {pipeline_mode = #tpu.pipeline_mode<synchronous>, transform_indices = @transform_1, window_bounds = array<i64: 9, 3, 16>}, {pipeline_mode = #tpu.pipeline_mode<synchronous>, transform_indices = @transform_2, window_bounds = array<i64: 1, 16>}, {transform_indices = @transform_3, window_bounds = array<i64: 1, 72, 16>}]} {
    %c0 = arith.constant 0 : index
    %c0_0 = arith.constant 0 : index
    %c0_1 = arith.constant 0 : index
    %0 = vector.load %arg1[%c0, %c0_0, %c0_1] : memref<1x360x3xbf16, #tpu.memory_space<vmem>>, vector<1x72x3xbf16>
    %1 = vector.shape_cast %0 : vector<1x72x3xbf16> to vector<72x3xbf16>
    %c0_2 = arith.constant 0 : index
    %c0_3 = arith.constant 0 : index
    %c0_4 = arith.constant 0 : index
    %2 = vector.load %arg2[%c0_2, %c0_3, %c0_4] : memref<9x3x16xbf16, #tpu.memory_space<vmem>>, vector<1x3x16xbf16>
    %3 = vector.shape_cast %2 : vector<1x3x16xbf16> to vector<3x16xbf16>
    %cst = arith.constant dense<0.000000e+00> : vector<72x16xf32>
    %4 = tpu.matmul %1, %3, %cst {dimension_numbers = #tpu.dot_dimension_numbers<[1], [0], [0], [1], [0, 0, 1, 1], [], []>} : vector<72x3xbf16>, vector<3x16xbf16>, vector<72x16xf32> -> vector<72x16xf32>
    %c0_5 = arith.constant 0 : index
    %c90 = arith.constant 90 : index
    %c0_6 = arith.constant 0 : index
    %5 = vector.load %arg1[%c0_5, %c90, %c0_6] : memref<1x360x3xbf16, #tpu.memory_space<vmem>>, vector<1x72x3xbf16>
    %6 = vector.shape_cast %5 : vector<1x72x3xbf16> to vector<72x3xbf16>
    %c1 = arith.constant 1 : index
    %c0_7 = arith.constant 0 : index
    %c0_8 = arith.constant 0 : index
    %7 = vector.load %arg2[%c1, %c0_7, %c0_8] : memref<9x3x16xbf16, #tpu.memory_space<vmem>>, vector<1x3x16xbf16>
    %8 = vector.shape_cast %7 : vector<1x3x16xbf16> to vector<3x16xbf16>
    %cst_9 = arith.constant dense<0.000000e+00> : vector<72x16xf32>
    %9 = tpu.matmul %6, %8, %cst_9 {dimension_numbers = #tpu.dot_dimension_numbers<[1], [0], [0], [1], [0, 0, 1, 1], [], []>} : vector<72x3xbf16>, vector<3x16xbf16>, vector<72x16xf32> -> vector<72x16xf32>
    %10 = arith.addf %4, %9 : vector<72x16xf32>
    %c0_10 = arith.constant 0 : index
    %c1_11 = arith.constant 1 : index
    %c0_12 = arith.constant 0 : index
    %11 = vector.load %arg1[%c0_10, %c1_11, %c0_12] : memref<1x360x3xbf16, #tpu.memory_space<vmem>>, vector<1x72x3xbf16>
    %12 = vector.shape_cast %11 : vector<1x72x3xbf16> to vector<72x3xbf16>
    %c2 = arith.constant 2 : index
    %c0_13 = arith.constant 0 : index
    %c0_14 = arith.constant 0 : index
    %13 = vector.load %arg2[%c2, %c0_13, %c0_14] : memref<9x3x16xbf16, #tpu.memory_space<vmem>>, vector<1x3x16xbf16>
    %14 = vector.shape_cast %13 : vector<1x3x16xbf16> to vector<3x16xbf16>
    %cst_15 = arith.constant dense<0.000000e+00> : vector<72x16xf32>
    %15 = tpu.matmul %12, %14, %cst_15 {dimension_numbers = #tpu.dot_dimension_numbers<[1], [0], [0], [1], [0, 0, 1, 1], [], []>} : vector<72x3xbf16>, vector<3x16xbf16>, vector<72x16xf32> -> vector<72x16xf32>
    %16 = arith.addf %10, %15 : vector<72x16xf32>
    %c0_16 = arith.constant 0 : index
    %c180 = arith.constant 180 : index
    %c0_17 = arith.constant 0 : index
    %17 = vector.load %arg1[%c0_16, %c180, %c0_17] : memref<1x360x3xbf16, #tpu.memory_space<vmem>>, vector<1x72x3xbf16>
    %18 = vector.shape_cast %17 : vector<1x72x3xbf16> to vector<72x3xbf16>
    %c3 = arith.constant 3 : index
    %c0_18 = arith.constant 0 : index
    %c0_19 = arith.constant 0 : index
    %19 = vector.load %arg2[%c3, %c0_18, %c0_19] : memref<9x3x16xbf16, #tpu.memory_space<vmem>>, vector<1x3x16xbf16>
    %20 = vector.shape_cast %19 : vector<1x3x16xbf16> to vector<3x16xbf16>
    %cst_20 = arith.constant dense<0.000000e+00> : vector<72x16xf32>
    %21 = tpu.matmul %18, %20, %cst_20 {dimension_numbers = #tpu.dot_dimension_numbers<[1], [0], [0], [1], [0, 0, 1, 1], [], []>} : vector<72x3xbf16>, vector<3x16xbf16>, vector<72x16xf32> -> vector<72x16xf32>
    %22 = arith.addf %16, %21 : vector<72x16xf32>
    %c0_21 = arith.constant 0 : index
    %c270 = arith.constant 270 : index
    %c0_22 = arith.constant 0 : index
    %23 = vector.load %arg1[%c0_21, %c270, %c0_22] : memref<1x360x3xbf16, #tpu.memory_space<vmem>>, vector<1x72x3xbf16>
    %24 = vector.shape_cast %23 : vector<1x72x3xbf16> to vector<72x3xbf16>
    %c4 = arith.constant 4 : index
    %c0_23 = arith.constant 0 : index
    %c0_24 = arith.constant 0 : index
    %25 = vector.load %arg2[%c4, %c0_23, %c0_24] : memref<9x3x16xbf16, #tpu.memory_space<vmem>>, vector<1x3x16xbf16>
    %26 = vector.shape_cast %25 : vector<1x3x16xbf16> to vector<3x16xbf16>
    %cst_25 = arith.constant dense<0.000000e+00> : vector<72x16xf32>
    %27 = tpu.matmul %24, %26, %cst_25 {dimension_numbers = #tpu.dot_dimension_numbers<[1], [0], [0], [1], [0, 0, 1, 1], [], []>} : vector<72x3xbf16>, vector<3x16xbf16>, vector<72x16xf32> -> vector<72x16xf32>
    %28 = arith.addf %22, %27 : vector<72x16xf32>
    %c0_26 = arith.constant 0 : index
    %c181 = arith.constant 181 : index
    %c0_27 = arith.constant 0 : index
    %29 = vector.load %arg1[%c0_26, %c181, %c0_27] : memref<1x360x3xbf16, #tpu.memory_space<vmem>>, vector<1x72x3xbf16>
    %30 = vector.shape_cast %29 : vector<1x72x3xbf16> to vector<72x3xbf16>
    %c5 = arith.constant 5 : index
    %c0_28 = arith.constant 0 : index
    %c0_29 = arith.constant 0 : index
    %31 = vector.load %arg2[%c5, %c0_28, %c0_29] : memref<9x3x16xbf16, #tpu.memory_space<vmem>>, vector<1x3x16xbf16>
    %32 = vector.shape_cast %31 : vector<1x3x16xbf16> to vector<3x16xbf16>
    %cst_30 = arith.constant dense<0.000000e+00> : vector<72x16xf32>
    %33 = tpu.matmul %30, %32, %cst_30 {dimension_numbers = #tpu.dot_dimension_numbers<[1], [0], [0], [1], [0, 0, 1, 1], [], []>} : vector<72x3xbf16>, vector<3x16xbf16>, vector<72x16xf32> -> vector<72x16xf32>
    %34 = arith.addf %28, %33 : vector<72x16xf32>
    %c0_31 = arith.constant 0 : index
    %c9 = arith.constant 9 : index
    %c0_32 = arith.constant 0 : index
    %35 = vector.load %arg1[%c0_31, %c9, %c0_32] : memref<1x360x3xbf16, #tpu.memory_space<vmem>>, vector<1x72x3xbf16>
    %36 = vector.shape_cast %35 : vector<1x72x3xbf16> to vector<72x3xbf16>
    %c6 = arith.constant 6 : index
    %c0_33 = arith.constant 0 : index
    %c0_34 = arith.constant 0 : index
    %37 = vector.load %arg2[%c6, %c0_33, %c0_34] : memref<9x3x16xbf16, #tpu.memory_space<vmem>>, vector<1x3x16xbf16>
    %38 = vector.shape_cast %37 : vector<1x3x16xbf16> to vector<3x16xbf16>
    %cst_35 = arith.constant dense<0.000000e+00> : vector<72x16xf32>
    %39 = tpu.matmul %36, %38, %cst_35 {dimension_numbers = #tpu.dot_dimension_numbers<[1], [0], [0], [1], [0, 0, 1, 1], [], []>} : vector<72x3xbf16>, vector<3x16xbf16>, vector<72x16xf32> -> vector<72x16xf32>
    %40 = arith.addf %34, %39 : vector<72x16xf32>
    %c0_36 = arith.constant 0 : index
    %c99 = arith.constant 99 : index
    %c0_37 = arith.constant 0 : index
    %41 = vector.load %arg1[%c0_36, %c99, %c0_37] : memref<1x360x3xbf16, #tpu.memory_space<vmem>>, vector<1x72x3xbf16>
    %42 = vector.shape_cast %41 : vector<1x72x3xbf16> to vector<72x3xbf16>
    %c7 = arith.constant 7 : index
    %c0_38 = arith.constant 0 : index
    %c0_39 = arith.constant 0 : index
    %43 = vector.load %arg2[%c7, %c0_38, %c0_39] : memref<9x3x16xbf16, #tpu.memory_space<vmem>>, vector<1x3x16xbf16>
    %44 = vector.shape_cast %43 : vector<1x3x16xbf16> to vector<3x16xbf16>
    %cst_40 = arith.constant dense<0.000000e+00> : vector<72x16xf32>
    %45 = tpu.matmul %42, %44, %cst_40 {dimension_numbers = #tpu.dot_dimension_numbers<[1], [0], [0], [1], [0, 0, 1, 1], [], []>} : vector<72x3xbf16>, vector<3x16xbf16>, vector<72x16xf32> -> vector<72x16xf32>
    %46 = arith.addf %40, %45 : vector<72x16xf32>
    %c0_41 = arith.constant 0 : index
    %c10 = arith.constant 10 : index
    %c0_42 = arith.constant 0 : index
    %47 = vector.load %arg1[%c0_41, %c10, %c0_42] : memref<1x360x3xbf16, #tpu.memory_space<vmem>>, vector<1x72x3xbf16>
    %48 = vector.shape_cast %47 : vector<1x72x3xbf16> to vector<72x3xbf16>
    %c8 = arith.constant 8 : index
    %c0_43 = arith.constant 0 : index
    %c0_44 = arith.constant 0 : index
    %49 = vector.load %arg2[%c8, %c0_43, %c0_44] : memref<9x3x16xbf16, #tpu.memory_space<vmem>>, vector<1x3x16xbf16>
    %50 = vector.shape_cast %49 : vector<1x3x16xbf16> to vector<3x16xbf16>
    %cst_45 = arith.constant dense<0.000000e+00> : vector<72x16xf32>
    %51 = tpu.matmul %48, %50, %cst_45 {dimension_numbers = #tpu.dot_dimension_numbers<[1], [0], [0], [1], [0, 0, 1, 1], [], []>} : vector<72x3xbf16>, vector<3x16xbf16>, vector<72x16xf32> -> vector<72x16xf32>
    %52 = arith.addf %46, %51 : vector<72x16xf32>
    %c0_46 = arith.constant 0 : index
    %c0_47 = arith.constant 0 : index
    %53 = vector.load %arg3[%c0_46, %c0_47] : memref<1x16xf32, #tpu.memory_space<vmem>>, vector<1x16xf32>
    %54 = vector.broadcast %53 : vector<1x16xf32> to vector<72x16xf32>
    %55 = arith.addf %52, %54 : vector<72x16xf32>
    %56 = arith.negf %55 : vector<72x16xf32>
    %57 = math.exp %56 : vector<72x16xf32>
    %cst_48 = arith.constant 1.000000e+00 : f32
    %58 = vector.broadcast %cst_48 : f32 to vector<72x16xf32>
    %59 = arith.addf %58, %57 : vector<72x16xf32>
    %60 = arith.divf %58, %59 : vector<72x16xf32>
    %61 = arith.mulf %55, %60 : vector<72x16xf32>
    %c0_49 = arith.constant 0 : index
    %c0_50 = arith.constant 0 : index
    %c0_51 = arith.constant 0 : index
    %62 = vector.load %arg4[%c0_49, %c0_50, %c0_51] : memref<1x72x16xf32, #tpu.memory_space<vmem>>, vector<1x72x16xf32>
    %63 = vector.shape_cast %62 : vector<1x72x16xf32> to vector<72x16xf32>
    %64 = vector.shape_cast %61 : vector<72x16xf32> to vector<1x72x16xf32>
    tpu.vector_store %arg4[%c0_49, %c0_50, %c0_51], %64 {strides = array<i32>} : memref<1x72x16xf32, #tpu.memory_space<vmem>>, vector<1x72x16xf32>,
    return
  }
  func.func @transform_0(%arg0: i32) -> (i32, i32, i32) {
    %c0_i32 = arith.constant 0 : i32
    %c0_i32_0 = arith.constant 0 : i32
    %c0_i32_1 = arith.constant 0 : i32
    return %arg0, %c0_i32, %c0_i32_0 : i32, i32, i32
  }
  func.func @transform_1(%arg0: i32) -> (i32, i32, i32) {
    %c0_i32 = arith.constant 0 : i32
    %c0_i32_0 = arith.constant 0 : i32
    %c0_i32_1 = arith.constant 0 : i32
    %c0_i32_2 = arith.constant 0 : i32
    return %c0_i32, %c0_i32_0, %c0_i32_1 : i32, i32, i32
  }
  func.func @transform_2(%arg0: i32) -> (i32, i32) {
    %c0_i32 = arith.constant 0 : i32
    %c0_i32_0 = arith.constant 0 : i32
    %c0_i32_1 = arith.constant 0 : i32
    return %c0_i32, %c0_i32_0 : i32, i32
  }
  func.func @transform_3(%arg0: i32) -> (i32, i32, i32) {
    %c0_i32 = arith.constant 0 : i32
    %c0_i32_0 = arith.constant 0 : i32
    %c0_i32_1 = arith.constant 0 : i32
    return %arg0, %c0_i32, %c0_i32_0 : i32, i32, i32
  }
}

module attributes {stable_mosaic.version = 11 : i64} {
  func.func @kernel(%arg0: i32, %arg1: memref<1x110x16xbf16, #tpu.memory_space<vmem>>, %arg2: memref<110x1xf32, #tpu.memory_space<vmem>>, %arg3: memref<9x1x16xf32, #tpu.memory_space<vmem>>, %arg4: memref<1x16xf32, #tpu.memory_space<vmem>>, %arg5: memref<4x16xf32, #tpu.memory_space<vmem>>, %arg6: memref<4x1xf32, #tpu.memory_space<vmem>>, %arg7: memref<4x16xf32, #tpu.memory_space<vmem>>, %arg8: memref<1x16xf32, #tpu.memory_space<vmem>>, %arg9: memref<16x16xbf16, #tpu.memory_space<vmem>>, %arg10: memref<1x16xf32, #tpu.memory_space<vmem>>, %arg11: memref<1x80x16xf32, #tpu.memory_space<vmem>>) attributes {dimension_semantics = [#tpu.dimension_semantics<parallel>], iteration_bounds = array<i64: 2>, scalar_prefetch = 0 : i64, scratch_operands = 0 : i64, tpu.core_type = #tpu.core_type<tc>, window_params = [{transform_indices = @transform_0, window_bounds = array<i64: 1, 110, 16>}, {pipeline_mode = #tpu.pipeline_mode<synchronous>, transform_indices = @transform_1, window_bounds = array<i64: 110, 1>}, {pipeline_mode = #tpu.pipeline_mode<synchronous>, transform_indices = @transform_2, window_bounds = array<i64: 9, 1, 16>}, {pipeline_mode = #tpu.pipeline_mode<synchronous>, transform_indices = @transform_3, window_bounds = array<i64: 1, 16>}, {pipeline_mode = #tpu.pipeline_mode<synchronous>, transform_indices = @transform_4, window_bounds = array<i64: 4, 16>}, {pipeline_mode = #tpu.pipeline_mode<synchronous>, transform_indices = @transform_5, window_bounds = array<i64: 4, 1>}, {pipeline_mode = #tpu.pipeline_mode<synchronous>, transform_indices = @transform_6, window_bounds = array<i64: 4, 16>}, {pipeline_mode = #tpu.pipeline_mode<synchronous>, transform_indices = @transform_7, window_bounds = array<i64: 1, 16>}, {pipeline_mode = #tpu.pipeline_mode<synchronous>, transform_indices = @transform_8, window_bounds = array<i64: 16, 16>}, {pipeline_mode = #tpu.pipeline_mode<synchronous>, transform_indices = @transform_9, window_bounds = array<i64: 1, 16>}, {transform_indices = @transform_10, window_bounds = array<i64: 1, 80, 16>}]} {
    %c0 = arith.constant 0 : index
    %c0_0 = arith.constant 0 : index
    %c0_1 = arith.constant 0 : index
    %0 = vector.load %arg1[%c0, %c0_0, %c0_1] : memref<1x110x16xbf16, #tpu.memory_space<vmem>>, vector<1x80x16xbf16>
    %1 = vector.shape_cast %0 : vector<1x80x16xbf16> to vector<80x16xbf16>
    %2 = arith.extf %1 : vector<80x16xbf16> to vector<80x16xf32>
    %c0_2 = arith.constant 0 : index
    %c0_3 = arith.constant 0 : index
    %c0_4 = arith.constant 0 : index
    %3 = vector.load %arg3[%c0_2, %c0_3, %c0_4] : memref<9x1x16xf32, #tpu.memory_space<vmem>>, vector<1x1x16xf32>
    %4 = vector.shape_cast %3 : vector<1x1x16xf32> to vector<1x16xf32>
    %5 = vector.broadcast %4 : vector<1x16xf32> to vector<80x16xf32>
    %6 = arith.mulf %2, %5 : vector<80x16xf32>
    %c0_5 = arith.constant 0 : index
    %c1 = arith.constant 1 : index
    %c0_6 = arith.constant 0 : index
    %7 = vector.load %arg1[%c0_5, %c1, %c0_6] : memref<1x110x16xbf16, #tpu.memory_space<vmem>>, vector<1x80x16xbf16>
    %8 = vector.shape_cast %7 : vector<1x80x16xbf16> to vector<80x16xbf16>
    %9 = arith.extf %8 : vector<80x16xbf16> to vector<80x16xf32>
    %c1_7 = arith.constant 1 : index
    %c0_8 = arith.constant 0 : index
    %c0_9 = arith.constant 0 : index
    %10 = vector.load %arg3[%c1_7, %c0_8, %c0_9] : memref<9x1x16xf32, #tpu.memory_space<vmem>>, vector<1x1x16xf32>
    %11 = vector.shape_cast %10 : vector<1x1x16xf32> to vector<1x16xf32>
    %12 = vector.broadcast %11 : vector<1x16xf32> to vector<80x16xf32>
    %13 = arith.mulf %9, %12 : vector<80x16xf32>
    %14 = arith.addf %6, %13 : vector<80x16xf32>
    %c0_10 = arith.constant 0 : index
    %c2 = arith.constant 2 : index
    %c0_11 = arith.constant 0 : index
    %15 = vector.load %arg1[%c0_10, %c2, %c0_11] : memref<1x110x16xbf16, #tpu.memory_space<vmem>>, vector<1x80x16xbf16>
    %16 = vector.shape_cast %15 : vector<1x80x16xbf16> to vector<80x16xbf16>
    %17 = arith.extf %16 : vector<80x16xbf16> to vector<80x16xf32>
    %c2_12 = arith.constant 2 : index
    %c0_13 = arith.constant 0 : index
    %c0_14 = arith.constant 0 : index
    %18 = vector.load %arg3[%c2_12, %c0_13, %c0_14] : memref<9x1x16xf32, #tpu.memory_space<vmem>>, vector<1x1x16xf32>
    %19 = vector.shape_cast %18 : vector<1x1x16xf32> to vector<1x16xf32>
    %20 = vector.broadcast %19 : vector<1x16xf32> to vector<80x16xf32>
    %21 = arith.mulf %17, %20 : vector<80x16xf32>
    %22 = arith.addf %14, %21 : vector<80x16xf32>
    %c0_15 = arith.constant 0 : index
    %c10 = arith.constant 10 : index
    %c0_16 = arith.constant 0 : index
    %23 = vector.load %arg1[%c0_15, %c10, %c0_16] : memref<1x110x16xbf16, #tpu.memory_space<vmem>>, vector<1x80x16xbf16>
    %24 = vector.shape_cast %23 : vector<1x80x16xbf16> to vector<80x16xbf16>
    %25 = arith.extf %24 : vector<80x16xbf16> to vector<80x16xf32>
    %c3 = arith.constant 3 : index
    %c0_17 = arith.constant 0 : index
    %c0_18 = arith.constant 0 : index
    %26 = vector.load %arg3[%c3, %c0_17, %c0_18] : memref<9x1x16xf32, #tpu.memory_space<vmem>>, vector<1x1x16xf32>
    %27 = vector.shape_cast %26 : vector<1x1x16xf32> to vector<1x16xf32>
    %28 = vector.broadcast %27 : vector<1x16xf32> to vector<80x16xf32>
    %29 = arith.mulf %25, %28 : vector<80x16xf32>
    %30 = arith.addf %22, %29 : vector<80x16xf32>
    %c0_19 = arith.constant 0 : index
    %c11 = arith.constant 11 : index
    %c0_20 = arith.constant 0 : index
    %31 = vector.load %arg1[%c0_19, %c11, %c0_20] : memref<1x110x16xbf16, #tpu.memory_space<vmem>>, vector<1x80x16xbf16>
    %32 = vector.shape_cast %31 : vector<1x80x16xbf16> to vector<80x16xbf16>
    %33 = arith.extf %32 : vector<80x16xbf16> to vector<80x16xf32>
    %c4 = arith.constant 4 : index
    %c0_21 = arith.constant 0 : index
    %c0_22 = arith.constant 0 : index
    %34 = vector.load %arg3[%c4, %c0_21, %c0_22] : memref<9x1x16xf32, #tpu.memory_space<vmem>>, vector<1x1x16xf32>
    %35 = vector.shape_cast %34 : vector<1x1x16xf32> to vector<1x16xf32>
    %36 = vector.broadcast %35 : vector<1x16xf32> to vector<80x16xf32>
    %37 = arith.mulf %33, %36 : vector<80x16xf32>
    %38 = arith.addf %30, %37 : vector<80x16xf32>
    %c0_23 = arith.constant 0 : index
    %c12 = arith.constant 12 : index
    %c0_24 = arith.constant 0 : index
    %39 = vector.load %arg1[%c0_23, %c12, %c0_24] : memref<1x110x16xbf16, #tpu.memory_space<vmem>>, vector<1x80x16xbf16>
    %40 = vector.shape_cast %39 : vector<1x80x16xbf16> to vector<80x16xbf16>
    %41 = arith.extf %40 : vector<80x16xbf16> to vector<80x16xf32>
    %c5 = arith.constant 5 : index
    %c0_25 = arith.constant 0 : index
    %c0_26 = arith.constant 0 : index
    %42 = vector.load %arg3[%c5, %c0_25, %c0_26] : memref<9x1x16xf32, #tpu.memory_space<vmem>>, vector<1x1x16xf32>
    %43 = vector.shape_cast %42 : vector<1x1x16xf32> to vector<1x16xf32>
    %44 = vector.broadcast %43 : vector<1x16xf32> to vector<80x16xf32>
    %45 = arith.mulf %41, %44 : vector<80x16xf32>
    %46 = arith.addf %38, %45 : vector<80x16xf32>
    %c0_27 = arith.constant 0 : index
    %c20 = arith.constant 20 : index
    %c0_28 = arith.constant 0 : index
    %47 = vector.load %arg1[%c0_27, %c20, %c0_28] : memref<1x110x16xbf16, #tpu.memory_space<vmem>>, vector<1x80x16xbf16>
    %48 = vector.shape_cast %47 : vector<1x80x16xbf16> to vector<80x16xbf16>
    %49 = arith.extf %48 : vector<80x16xbf16> to vector<80x16xf32>
    %c6 = arith.constant 6 : index
    %c0_29 = arith.constant 0 : index
    %c0_30 = arith.constant 0 : index
    %50 = vector.load %arg3[%c6, %c0_29, %c0_30] : memref<9x1x16xf32, #tpu.memory_space<vmem>>, vector<1x1x16xf32>
    %51 = vector.shape_cast %50 : vector<1x1x16xf32> to vector<1x16xf32>
    %52 = vector.broadcast %51 : vector<1x16xf32> to vector<80x16xf32>
    %53 = arith.mulf %49, %52 : vector<80x16xf32>
    %54 = arith.addf %46, %53 : vector<80x16xf32>
    %c0_31 = arith.constant 0 : index
    %c21 = arith.constant 21 : index
    %c0_32 = arith.constant 0 : index
    %55 = vector.load %arg1[%c0_31, %c21, %c0_32] : memref<1x110x16xbf16, #tpu.memory_space<vmem>>, vector<1x80x16xbf16>
    %56 = vector.shape_cast %55 : vector<1x80x16xbf16> to vector<80x16xbf16>
    %57 = arith.extf %56 : vector<80x16xbf16> to vector<80x16xf32>
    %c7 = arith.constant 7 : index
    %c0_33 = arith.constant 0 : index
    %c0_34 = arith.constant 0 : index
    %58 = vector.load %arg3[%c7, %c0_33, %c0_34] : memref<9x1x16xf32, #tpu.memory_space<vmem>>, vector<1x1x16xf32>
    %59 = vector.shape_cast %58 : vector<1x1x16xf32> to vector<1x16xf32>
    %60 = vector.broadcast %59 : vector<1x16xf32> to vector<80x16xf32>
    %61 = arith.mulf %57, %60 : vector<80x16xf32>
    %62 = arith.addf %54, %61 : vector<80x16xf32>
    %c0_35 = arith.constant 0 : index
    %c22 = arith.constant 22 : index
    %c0_36 = arith.constant 0 : index
    %63 = vector.load %arg1[%c0_35, %c22, %c0_36] : memref<1x110x16xbf16, #tpu.memory_space<vmem>>, vector<1x80x16xbf16>
    %64 = vector.shape_cast %63 : vector<1x80x16xbf16> to vector<80x16xbf16>
    %65 = arith.extf %64 : vector<80x16xbf16> to vector<80x16xf32>
    %c8 = arith.constant 8 : index
    %c0_37 = arith.constant 0 : index
    %c0_38 = arith.constant 0 : index
    %66 = vector.load %arg3[%c8, %c0_37, %c0_38] : memref<9x1x16xf32, #tpu.memory_space<vmem>>, vector<1x1x16xf32>
    %67 = vector.shape_cast %66 : vector<1x1x16xf32> to vector<1x16xf32>
    %68 = vector.broadcast %67 : vector<1x16xf32> to vector<80x16xf32>
    %69 = arith.mulf %65, %68 : vector<80x16xf32>
    %70 = arith.addf %62, %69 : vector<80x16xf32>
    %c0_39 = arith.constant 0 : index
    %c0_40 = arith.constant 0 : index
    %71 = vector.load %arg4[%c0_39, %c0_40] : memref<1x16xf32, #tpu.memory_space<vmem>>, vector<1x16xf32>
    %72 = vector.broadcast %71 : vector<1x16xf32> to vector<80x16xf32>
    %73 = arith.addf %70, %72 : vector<80x16xf32>
    %74 = arith.negf %73 : vector<80x16xf32>
    %75 = math.exp %74 : vector<80x16xf32>
    %cst = arith.constant 1.000000e+00 : f32
    %76 = vector.broadcast %cst : f32 to vector<80x16xf32>
    %77 = arith.addf %76, %75 : vector<80x16xf32>
    %78 = arith.divf %76, %77 : vector<80x16xf32>
    %79 = arith.mulf %73, %78 : vector<80x16xf32>
    %c11_41 = arith.constant 11 : index
    %c0_42 = arith.constant 0 : index
    %80 = vector.load %arg2[%c11_41, %c0_42] : memref<110x1xf32, #tpu.memory_space<vmem>>, vector<80x1xf32>
    %81 = vector.broadcast %80 : vector<80x1xf32> to vector<80x16xf32>
    %82 = arith.mulf %79, %81 : vector<80x16xf32>
    %cst_43 = arith.constant dense<0.000000e+00> : vector<16xf32>
    %83 = vector.multi_reduction <add>, %82, %cst_43 [0] : vector<80x16xf32> to vector<16xf32>
    %84 = vector.shape_cast %83 : vector<16xf32> to vector<1x16xf32>
    %cst_44 = arith.constant 1.562500e-02 : f32
    %85 = vector.broadcast %cst_44 : f32 to vector<1x16xf32>
    %86 = arith.mulf %84, %85 : vector<1x16xf32>
    %c0_45 = arith.constant 0 : index
    %c0_46 = arith.constant 0 : index
    %87 = vector.load %arg5[%c0_45, %c0_46] : memref<4x16xf32, #tpu.memory_space<vmem>>, vector<4x16xf32>
    %88 = vector.broadcast %86 : vector<1x16xf32> to vector<4x16xf32>
    %89 = arith.mulf %87, %88 : vector<4x16xf32>
    %cst_47 = arith.constant dense<0.000000e+00> : vector<4xf32>
    %90 = vector.multi_reduction <add>, %89, %cst_47 [1] : vector<4x16xf32> to vector<4xf32>
    %91 = vector.shape_cast %90 : vector<4xf32> to vector<4x1xf32>
    %c0_48 = arith.constant 0 : index
    %c0_49 = arith.constant 0 : index
    %92 = vector.load %arg6[%c0_48, %c0_49] : memref<4x1xf32, #tpu.memory_space<vmem>>, vector<4x1xf32>
    %93 = arith.addf %91, %92 : vector<4x1xf32>
    %94 = arith.negf %93 : vector<4x1xf32>
    %95 = math.exp %94 : vector<4x1xf32>
    %cst_50 = arith.constant 1.000000e+00 : f32
    %96 = vector.broadcast %cst_50 : f32 to vector<4x1xf32>
    %97 = arith.addf %96, %95 : vector<4x1xf32>
    %98 = arith.divf %96, %97 : vector<4x1xf32>
    %99 = arith.mulf %93, %98 : vector<4x1xf32>
    %c0_51 = arith.constant 0 : index
    %c0_52 = arith.constant 0 : index
    %100 = vector.load %arg7[%c0_51, %c0_52] : memref<4x16xf32, #tpu.memory_space<vmem>>, vector<4x16xf32>
    %101 = vector.broadcast %99 : vector<4x1xf32> to vector<4x16xf32>
    %102 = arith.mulf %100, %101 : vector<4x16xf32>
    %cst_53 = arith.constant dense<0.000000e+00> : vector<16xf32>
    %103 = vector.multi_reduction <add>, %102, %cst_53 [0] : vector<4x16xf32> to vector<16xf32>
    %104 = vector.shape_cast %103 : vector<16xf32> to vector<1x16xf32>
    %c0_54 = arith.constant 0 : index
    %c0_55 = arith.constant 0 : index
    %105 = vector.load %arg8[%c0_54, %c0_55] : memref<1x16xf32, #tpu.memory_space<vmem>>, vector<1x16xf32>
    %106 = arith.addf %104, %105 : vector<1x16xf32>
    %107 = arith.negf %106 : vector<1x16xf32>
    %108 = math.exp %107 : vector<1x16xf32>
    %cst_56 = arith.constant 1.000000e+00 : f32
    %109 = vector.broadcast %cst_56 : f32 to vector<1x16xf32>
    %110 = arith.addf %109, %108 : vector<1x16xf32>
    %111 = arith.divf %109, %110 : vector<1x16xf32>
    %112 = vector.broadcast %111 : vector<1x16xf32> to vector<80x16xf32>
    %113 = arith.mulf %79, %112 : vector<80x16xf32>
    %114 = arith.truncf %113 : vector<80x16xf32> to vector<80x16xbf16>
    %c0_57 = arith.constant 0 : index
    %c0_58 = arith.constant 0 : index
    %115 = vector.load %arg9[%c0_57, %c0_58] : memref<16x16xbf16, #tpu.memory_space<vmem>>, vector<16x16xbf16>
    %cst_59 = arith.constant dense<0.000000e+00> : vector<80x16xf32>
    %116 = tpu.matmul %114, %115, %cst_59 {dimension_numbers = #tpu.dot_dimension_numbers<[1], [0], [0], [1], [0, 0, 1, 1], [], []>} : vector<80x16xbf16>, vector<16x16xbf16>, vector<80x16xf32> -> vector<80x16xf32>
    %c0_60 = arith.constant 0 : index
    %c0_61 = arith.constant 0 : index
    %117 = vector.load %arg10[%c0_60, %c0_61] : memref<1x16xf32, #tpu.memory_space<vmem>>, vector<1x16xf32>
    %118 = vector.broadcast %117 : vector<1x16xf32> to vector<80x16xf32>
    %119 = arith.addf %116, %118 : vector<80x16xf32>
    %c0_62 = arith.constant 0 : index
    %c11_63 = arith.constant 11 : index
    %c0_64 = arith.constant 0 : index
    %120 = vector.load %arg1[%c0_62, %c11_63, %c0_64] : memref<1x110x16xbf16, #tpu.memory_space<vmem>>, vector<1x80x16xbf16>
    %121 = vector.shape_cast %120 : vector<1x80x16xbf16> to vector<80x16xbf16>
    %122 = arith.extf %121 : vector<80x16xbf16> to vector<80x16xf32>
    %123 = arith.addf %119, %122 : vector<80x16xf32>
    %c0_65 = arith.constant 0 : index
    %c0_66 = arith.constant 0 : index
    %c0_67 = arith.constant 0 : index
    %124 = vector.load %arg11[%c0_65, %c0_66, %c0_67] : memref<1x80x16xf32, #tpu.memory_space<vmem>>, vector<1x80x16xf32>
    %125 = vector.shape_cast %124 : vector<1x80x16xf32> to vector<80x16xf32>
    %126 = vector.shape_cast %123 : vector<80x16xf32> to vector<1x80x16xf32>
    tpu.vector_store %arg11[%c0_65, %c0_66, %c0_67], %126 {strides = array<i32>} : memref<1x80x16xf32, #tpu.memory_space<vmem>>, vector<1x80x16xf32>,
    return
  }
  func.func @transform_0(%arg0: i32) -> (i32, i32, i32) {
    %c0_i32 = arith.constant 0 : i32
    %c0_i32_0 = arith.constant 0 : i32
    %c0_i32_1 = arith.constant 0 : i32
    return %arg0, %c0_i32, %c0_i32_0 : i32, i32, i32
  }
  func.func @transform_1(%arg0: i32) -> (i32, i32) {
    %c0_i32 = arith.constant 0 : i32
    %c0_i32_0 = arith.constant 0 : i32
    %c0_i32_1 = arith.constant 0 : i32
    return %c0_i32, %c0_i32_0 : i32, i32
  }
  func.func @transform_2(%arg0: i32) -> (i32, i32, i32) {
    %c0_i32 = arith.constant 0 : i32
    %c0_i32_0 = arith.constant 0 : i32
    %c0_i32_1 = arith.constant 0 : i32
    %c0_i32_2 = arith.constant 0 : i32
    return %c0_i32, %c0_i32_0, %c0_i32_1 : i32, i32, i32
  }
  func.func @transform_3(%arg0: i32) -> (i32, i32) {
    %c0_i32 = arith.constant 0 : i32
    %c0_i32_0 = arith.constant 0 : i32
    %c0_i32_1 = arith.constant 0 : i32
    return %c0_i32, %c0_i32_0 : i32, i32
  }
  func.func @transform_4(%arg0: i32) -> (i32, i32) {
    %c0_i32 = arith.constant 0 : i32
    %c0_i32_0 = arith.constant 0 : i32
    %c0_i32_1 = arith.constant 0 : i32
    return %c0_i32, %c0_i32_0 : i32, i32
  }
  func.func @transform_5(%arg0: i32) -> (i32, i32) {
    %c0_i32 = arith.constant 0 : i32
    %c0_i32_0 = arith.constant 0 : i32
    %c0_i32_1 = arith.constant 0 : i32
    return %c0_i32, %c0_i32_0 : i32, i32
  }
  func.func @transform_6(%arg0: i32) -> (i32, i32) {
    %c0_i32 = arith.constant 0 : i32
    %c0_i32_0 = arith.constant 0 : i32
    %c0_i32_1 = arith.constant 0 : i32
    return %c0_i32, %c0_i32_0 : i32, i32
  }
  func.func @transform_7(%arg0: i32) -> (i32, i32) {
    %c0_i32 = arith.constant 0 : i32
    %c0_i32_0 = arith.constant 0 : i32
    %c0_i32_1 = arith.constant 0 : i32
    return %c0_i32, %c0_i32_0 : i32, i32
  }
  func.func @transform_8(%arg0: i32) -> (i32, i32) {
    %c0_i32 = arith.constant 0 : i32
    %c0_i32_0 = arith.constant 0 : i32
    %c0_i32_1 = arith.constant 0 : i32
    return %c0_i32, %c0_i32_0 : i32, i32
  }
  func.func @transform_9(%arg0: i32) -> (i32, i32) {
    %c0_i32 = arith.constant 0 : i32
    %c0_i32_0 = arith.constant 0 : i32
    %c0_i32_1 = arith.constant 0 : i32
    return %c0_i32, %c0_i32_0 : i32, i32
  }
  func.func @transform_10(%arg0: i32) -> (i32, i32, i32) {
    %c0_i32 = arith.constant 0 : i32
    %c0_i32_0 = arith.constant 0 : i32
    %c0_i32_1 = arith.constant 0 : i32
    return %arg0, %c0_i32, %c0_i32_0 : i32, i32, i32
  }
}

module attributes {stable_mosaic.version = 11 : i64} {
  func.func @kernel(%arg0: i32, %arg1: memref<1x120x16xbf16, #tpu.memory_space<vmem>>, %arg2: memref<120x1xf32, #tpu.memory_space<vmem>>, %arg3: memref<16x64xbf16, #tpu.memory_space<vmem>>, %arg4: memref<1x64xf32, #tpu.memory_space<vmem>>, %arg5: memref<9x1x64xf32, #tpu.memory_space<vmem>>, %arg6: memref<1x64xf32, #tpu.memory_space<vmem>>, %arg7: memref<4x64xf32, #tpu.memory_space<vmem>>, %arg8: memref<4x1xf32, #tpu.memory_space<vmem>>, %arg9: memref<4x64xf32, #tpu.memory_space<vmem>>, %arg10: memref<1x64xf32, #tpu.memory_space<vmem>>, %arg11: memref<64x24xbf16, #tpu.memory_space<vmem>>, %arg12: memref<1x24xf32, #tpu.memory_space<vmem>>, %arg13: memref<1x20x24xf32, #tpu.memory_space<vmem>>, %arg14: memref<120x64xf32, #tpu.memory_space<vmem>>) attributes {dimension_semantics = [#tpu.dimension_semantics<parallel>], iteration_bounds = array<i64: 2>, scalar_prefetch = 0 : i64, scratch_operands = 1 : i64, tpu.core_type = #tpu.core_type<tc>, window_params = [{transform_indices = @transform_0, window_bounds = array<i64: 1, 120, 16>}, {pipeline_mode = #tpu.pipeline_mode<synchronous>, transform_indices = @transform_1, window_bounds = array<i64: 120, 1>}, {pipeline_mode = #tpu.pipeline_mode<synchronous>, transform_indices = @transform_2, window_bounds = array<i64: 16, 64>}, {pipeline_mode = #tpu.pipeline_mode<synchronous>, transform_indices = @transform_3, window_bounds = array<i64: 1, 64>}, {pipeline_mode = #tpu.pipeline_mode<synchronous>, transform_indices = @transform_4, window_bounds = array<i64: 9, 1, 64>}, {pipeline_mode = #tpu.pipeline_mode<synchronous>, transform_indices = @transform_5, window_bounds = array<i64: 1, 64>}, {pipeline_mode = #tpu.pipeline_mode<synchronous>, transform_indices = @transform_6, window_bounds = array<i64: 4, 64>}, {pipeline_mode = #tpu.pipeline_mode<synchronous>, transform_indices = @transform_7, window_bounds = array<i64: 4, 1>}, {pipeline_mode = #tpu.pipeline_mode<synchronous>, transform_indices = @transform_8, window_bounds = array<i64: 4, 64>}, {pipeline_mode = #tpu.pipeline_mode<synchronous>, transform_indices = @transform_9, window_bounds = array<i64: 1, 64>}, {pipeline_mode = #tpu.pipeline_mode<synchronous>, transform_indices = @transform_10, window_bounds = array<i64: 64, 24>}, {pipeline_mode = #tpu.pipeline_mode<synchronous>, transform_indices = @transform_11, window_bounds = array<i64: 1, 24>}, {transform_indices = @transform_12, window_bounds = array<i64: 1, 20, 24>}]} {
    %c0 = arith.constant 0 : index
    %c0_0 = arith.constant 0 : index
    %c0_1 = arith.constant 0 : index
    %0 = vector.load %arg1[%c0, %c0_0, %c0_1] : memref<1x120x16xbf16, #tpu.memory_space<vmem>>, vector<1x120x16xbf16>
    %1 = vector.shape_cast %0 : vector<1x120x16xbf16> to vector<120x16xbf16>
    %c0_2 = arith.constant 0 : index
    %c0_3 = arith.constant 0 : index
    %2 = vector.load %arg3[%c0_2, %c0_3] : memref<16x64xbf16, #tpu.memory_space<vmem>>, vector<16x64xbf16>
    %cst = arith.constant dense<0.000000e+00> : vector<120x64xf32>
    %3 = tpu.matmul %1, %2, %cst {dimension_numbers = #tpu.dot_dimension_numbers<[1], [0], [0], [1], [0, 0, 1, 1], [], []>} : vector<120x16xbf16>, vector<16x64xbf16>, vector<120x64xf32> -> vector<120x64xf32>
    %c0_4 = arith.constant 0 : index
    %c0_5 = arith.constant 0 : index
    %4 = vector.load %arg4[%c0_4, %c0_5] : memref<1x64xf32, #tpu.memory_space<vmem>>, vector<1x64xf32>
    %5 = vector.broadcast %4 : vector<1x64xf32> to vector<120x64xf32>
    %6 = arith.addf %3, %5 : vector<120x64xf32>
    %7 = arith.negf %6 : vector<120x64xf32>
    %8 = math.exp %7 : vector<120x64xf32>
    %cst_6 = arith.constant 1.000000e+00 : f32
    %9 = vector.broadcast %cst_6 : f32 to vector<120x64xf32>
    %10 = arith.addf %9, %8 : vector<120x64xf32>
    %11 = arith.divf %9, %10 : vector<120x64xf32>
    %12 = arith.mulf %6, %11 : vector<120x64xf32>
    %c0_7 = arith.constant 0 : index
    %c0_8 = arith.constant 0 : index
    %13 = vector.load %arg2[%c0_7, %c0_8] : memref<120x1xf32, #tpu.memory_space<vmem>>, vector<120x1xf32>
    %14 = vector.broadcast %13 : vector<120x1xf32> to vector<120x64xf32>
    %15 = arith.mulf %12, %14 : vector<120x64xf32>
    %c0_9 = arith.constant 0 : index
    %c0_10 = arith.constant 0 : index
    %16 = vector.load %arg14[%c0_9, %c0_10] : memref<120x64xf32, #tpu.memory_space<vmem>>, vector<120x64xf32>
    tpu.vector_store %arg14[%c0_9, %c0_10], %15 {strides = array<i32>} : memref<120x64xf32, #tpu.memory_space<vmem>>, vector<120x64xf32>,
    %c0_11 = arith.constant 0 : index
    %c0_12 = arith.constant 0 : index
    %17 = vector.load %arg14[%c0_11, %c0_12] : memref<120x64xf32, #tpu.memory_space<vmem>>, vector<20x64xf32>
    %c0_13 = arith.constant 0 : index
    %c0_14 = arith.constant 0 : index
    %c0_15 = arith.constant 0 : index
    %18 = vector.load %arg5[%c0_13, %c0_14, %c0_15] : memref<9x1x64xf32, #tpu.memory_space<vmem>>, vector<1x1x64xf32>
    %19 = vector.shape_cast %18 : vector<1x1x64xf32> to vector<1x64xf32>
    %20 = vector.broadcast %19 : vector<1x64xf32> to vector<20x64xf32>
    %21 = arith.mulf %17, %20 : vector<20x64xf32>
    %c30 = arith.constant 30 : index
    %c0_16 = arith.constant 0 : index
    %22 = vector.load %arg14[%c30, %c0_16] : memref<120x64xf32, #tpu.memory_space<vmem>>, vector<20x64xf32>
    %c1 = arith.constant 1 : index
    %c0_17 = arith.constant 0 : index
    %c0_18 = arith.constant 0 : index
    %23 = vector.load %arg5[%c1, %c0_17, %c0_18] : memref<9x1x64xf32, #tpu.memory_space<vmem>>, vector<1x1x64xf32>
    %24 = vector.shape_cast %23 : vector<1x1x64xf32> to vector<1x64xf32>
    %25 = vector.broadcast %24 : vector<1x64xf32> to vector<20x64xf32>
    %26 = arith.mulf %22, %25 : vector<20x64xf32>
    %27 = arith.addf %21, %26 : vector<20x64xf32>
    %c1_19 = arith.constant 1 : index
    %c0_20 = arith.constant 0 : index
    %28 = vector.load %arg14[%c1_19, %c0_20] : memref<120x64xf32, #tpu.memory_space<vmem>>, vector<20x64xf32>
    %c2 = arith.constant 2 : index
    %c0_21 = arith.constant 0 : index
    %c0_22 = arith.constant 0 : index
    %29 = vector.load %arg5[%c2, %c0_21, %c0_22] : memref<9x1x64xf32, #tpu.memory_space<vmem>>, vector<1x1x64xf32>
    %30 = vector.shape_cast %29 : vector<1x1x64xf32> to vector<1x64xf32>
    %31 = vector.broadcast %30 : vector<1x64xf32> to vector<20x64xf32>
    %32 = arith.mulf %28, %31 : vector<20x64xf32>
    %33 = arith.addf %27, %32 : vector<20x64xf32>
    %c60 = arith.constant 60 : index
    %c0_23 = arith.constant 0 : index
    %34 = vector.load %arg14[%c60, %c0_23] : memref<120x64xf32, #tpu.memory_space<vmem>>, vector<20x64xf32>
    %c3 = arith.constant 3 : index
    %c0_24 = arith.constant 0 : index
    %c0_25 = arith.constant 0 : index
    %35 = vector.load %arg5[%c3, %c0_24, %c0_25] : memref<9x1x64xf32, #tpu.memory_space<vmem>>, vector<1x1x64xf32>
    %36 = vector.shape_cast %35 : vector<1x1x64xf32> to vector<1x64xf32>
    %37 = vector.broadcast %36 : vector<1x64xf32> to vector<20x64xf32>
    %38 = arith.mulf %34, %37 : vector<20x64xf32>
    %39 = arith.addf %33, %38 : vector<20x64xf32>
    %c90 = arith.constant 90 : index
    %c0_26 = arith.constant 0 : index
    %40 = vector.load %arg14[%c90, %c0_26] : memref<120x64xf32, #tpu.memory_space<vmem>>, vector<20x64xf32>
    %c4 = arith.constant 4 : index
    %c0_27 = arith.constant 0 : index
    %c0_28 = arith.constant 0 : index
    %41 = vector.load %arg5[%c4, %c0_27, %c0_28] : memref<9x1x64xf32, #tpu.memory_space<vmem>>, vector<1x1x64xf32>
    %42 = vector.shape_cast %41 : vector<1x1x64xf32> to vector<1x64xf32>
    %43 = vector.broadcast %42 : vector<1x64xf32> to vector<20x64xf32>
    %44 = arith.mulf %40, %43 : vector<20x64xf32>
    %45 = arith.addf %39, %44 : vector<20x64xf32>
    %c61 = arith.constant 61 : index
    %c0_29 = arith.constant 0 : index
    %46 = vector.load %arg14[%c61, %c0_29] : memref<120x64xf32, #tpu.memory_space<vmem>>, vector<20x64xf32>
    %c5 = arith.constant 5 : index
    %c0_30 = arith.constant 0 : index
    %c0_31 = arith.constant 0 : index
    %47 = vector.load %arg5[%c5, %c0_30, %c0_31] : memref<9x1x64xf32, #tpu.memory_space<vmem>>, vector<1x1x64xf32>
    %48 = vector.shape_cast %47 : vector<1x1x64xf32> to vector<1x64xf32>
    %49 = vector.broadcast %48 : vector<1x64xf32> to vector<20x64xf32>
    %50 = arith.mulf %46, %49 : vector<20x64xf32>
    %51 = arith.addf %45, %50 : vector<20x64xf32>
    %c5_32 = arith.constant 5 : index
    %c0_33 = arith.constant 0 : index
    %52 = vector.load %arg14[%c5_32, %c0_33] : memref<120x64xf32, #tpu.memory_space<vmem>>, vector<20x64xf32>
    %c6 = arith.constant 6 : index
    %c0_34 = arith.constant 0 : index
    %c0_35 = arith.constant 0 : index
    %53 = vector.load %arg5[%c6, %c0_34, %c0_35] : memref<9x1x64xf32, #tpu.memory_space<vmem>>, vector<1x1x64xf32>
    %54 = vector.shape_cast %53 : vector<1x1x64xf32> to vector<1x64xf32>
    %55 = vector.broadcast %54 : vector<1x64xf32> to vector<20x64xf32>
    %56 = arith.mulf %52, %55 : vector<20x64xf32>
    %57 = arith.addf %51, %56 : vector<20x64xf32>
    %c35 = arith.constant 35 : index
    %c0_36 = arith.constant 0 : index
    %58 = vector.load %arg14[%c35, %c0_36] : memref<120x64xf32, #tpu.memory_space<vmem>>, vector<20x64xf32>
    %c7 = arith.constant 7 : index
    %c0_37 = arith.constant 0 : index
    %c0_38 = arith.constant 0 : index
    %59 = vector.load %arg5[%c7, %c0_37, %c0_38] : memref<9x1x64xf32, #tpu.memory_space<vmem>>, vector<1x1x64xf32>
    %60 = vector.shape_cast %59 : vector<1x1x64xf32> to vector<1x64xf32>
    %61 = vector.broadcast %60 : vector<1x64xf32> to vector<20x64xf32>
    %62 = arith.mulf %58, %61 : vector<20x64xf32>
    %63 = arith.addf %57, %62 : vector<20x64xf32>
    %c6_39 = arith.constant 6 : index
    %c0_40 = arith.constant 0 : index
    %64 = vector.load %arg14[%c6_39, %c0_40] : memref<120x64xf32, #tpu.memory_space<vmem>>, vector<20x64xf32>
    %c8 = arith.constant 8 : index
    %c0_41 = arith.constant 0 : index
    %c0_42 = arith.constant 0 : index
    %65 = vector.load %arg5[%c8, %c0_41, %c0_42] : memref<9x1x64xf32, #tpu.memory_space<vmem>>, vector<1x1x64xf32>
    %66 = vector.shape_cast %65 : vector<1x1x64xf32> to vector<1x64xf32>
    %67 = vector.broadcast %66 : vector<1x64xf32> to vector<20x64xf32>
    %68 = arith.mulf %64, %67 : vector<20x64xf32>
    %69 = arith.addf %63, %68 : vector<20x64xf32>
    %c0_43 = arith.constant 0 : index
    %c0_44 = arith.constant 0 : index
    %70 = vector.load %arg6[%c0_43, %c0_44] : memref<1x64xf32, #tpu.memory_space<vmem>>, vector<1x64xf32>
    %71 = vector.broadcast %70 : vector<1x64xf32> to vector<20x64xf32>
    %72 = arith.addf %69, %71 : vector<20x64xf32>
    %73 = arith.negf %72 : vector<20x64xf32>
    %74 = math.exp %73 : vector<20x64xf32>
    %cst_45 = arith.constant 1.000000e+00 : f32
    %75 = vector.broadcast %cst_45 : f32 to vector<20x64xf32>
    %76 = arith.addf %75, %74 : vector<20x64xf32>
    %77 = arith.divf %75, %76 : vector<20x64xf32>
    %78 = arith.mulf %72, %77 : vector<20x64xf32>
    %c90_46 = arith.constant 90 : index
    %c0_47 = arith.constant 0 : index
    %79 = vector.load %arg2[%c90_46, %c0_47] : memref<120x1xf32, #tpu.memory_space<vmem>>, vector<20x1xf32>
    %80 = vector.broadcast %79 : vector<20x1xf32> to vector<20x64xf32>
    %81 = arith.mulf %78, %80 : vector<20x64xf32>
    %cst_48 = arith.constant dense<0.000000e+00> : vector<64xf32>
    %82 = vector.multi_reduction <add>, %81, %cst_48 [0] : vector<20x64xf32> to vector<64xf32>
    %83 = vector.shape_cast %82 : vector<64xf32> to vector<1x64xf32>
    %cst_49 = arith.constant 6.250000e-02 : f32
    %84 = vector.broadcast %cst_49 : f32 to vector<1x64xf32>
    %85 = arith.mulf %83, %84 : vector<1x64xf32>
    %c0_50 = arith.constant 0 : index
    %c0_51 = arith.constant 0 : index
    %86 = vector.load %arg7[%c0_50, %c0_51] : memref<4x64xf32, #tpu.memory_space<vmem>>, vector<4x64xf32>
    %87 = vector.broadcast %85 : vector<1x64xf32> to vector<4x64xf32>
    %88 = arith.mulf %86, %87 : vector<4x64xf32>
    %cst_52 = arith.constant dense<0.000000e+00> : vector<4xf32>
    %89 = vector.multi_reduction <add>, %88, %cst_52 [1] : vector<4x64xf32> to vector<4xf32>
    %90 = vector.shape_cast %89 : vector<4xf32> to vector<4x1xf32>
    %c0_53 = arith.constant 0 : index
    %c0_54 = arith.constant 0 : index
    %91 = vector.load %arg8[%c0_53, %c0_54] : memref<4x1xf32, #tpu.memory_space<vmem>>, vector<4x1xf32>
    %92 = arith.addf %90, %91 : vector<4x1xf32>
    %93 = arith.negf %92 : vector<4x1xf32>
    %94 = math.exp %93 : vector<4x1xf32>
    %cst_55 = arith.constant 1.000000e+00 : f32
    %95 = vector.broadcast %cst_55 : f32 to vector<4x1xf32>
    %96 = arith.addf %95, %94 : vector<4x1xf32>
    %97 = arith.divf %95, %96 : vector<4x1xf32>
    %98 = arith.mulf %92, %97 : vector<4x1xf32>
    %c0_56 = arith.constant 0 : index
    %c0_57 = arith.constant 0 : index
    %99 = vector.load %arg9[%c0_56, %c0_57] : memref<4x64xf32, #tpu.memory_space<vmem>>, vector<4x64xf32>
    %100 = vector.broadcast %98 : vector<4x1xf32> to vector<4x64xf32>
    %101 = arith.mulf %99, %100 : vector<4x64xf32>
    %cst_58 = arith.constant dense<0.000000e+00> : vector<64xf32>
    %102 = vector.multi_reduction <add>, %101, %cst_58 [0] : vector<4x64xf32> to vector<64xf32>
    %103 = vector.shape_cast %102 : vector<64xf32> to vector<1x64xf32>
    %c0_59 = arith.constant 0 : index
    %c0_60 = arith.constant 0 : index
    %104 = vector.load %arg10[%c0_59, %c0_60] : memref<1x64xf32, #tpu.memory_space<vmem>>, vector<1x64xf32>
    %105 = arith.addf %103, %104 : vector<1x64xf32>
    %106 = arith.negf %105 : vector<1x64xf32>
    %107 = math.exp %106 : vector<1x64xf32>
    %cst_61 = arith.constant 1.000000e+00 : f32
    %108 = vector.broadcast %cst_61 : f32 to vector<1x64xf32>
    %109 = arith.addf %108, %107 : vector<1x64xf32>
    %110 = arith.divf %108, %109 : vector<1x64xf32>
    %111 = vector.broadcast %110 : vector<1x64xf32> to vector<20x64xf32>
    %112 = arith.mulf %78, %111 : vector<20x64xf32>
    %113 = arith.truncf %112 : vector<20x64xf32> to vector<20x64xbf16>
    %c0_62 = arith.constant 0 : index
    %c0_63 = arith.constant 0 : index
    %114 = vector.load %arg11[%c0_62, %c0_63] : memref<64x24xbf16, #tpu.memory_space<vmem>>, vector<64x24xbf16>
    %cst_64 = arith.constant dense<0.000000e+00> : vector<20x24xf32>
    %115 = tpu.matmul %113, %114, %cst_64 {dimension_numbers = #tpu.dot_dimension_numbers<[1], [0], [0], [1], [0, 0, 1, 1], [], []>} : vector<20x64xbf16>, vector<64x24xbf16>, vector<20x24xf32> -> vector<20x24xf32>
    %c0_65 = arith.constant 0 : index
    %c0_66 = arith.constant 0 : index
    %116 = vector.load %arg12[%c0_65, %c0_66] : memref<1x24xf32, #tpu.memory_space<vmem>>, vector<1x24xf32>
    %117 = vector.broadcast %116 : vector<1x24xf32> to vector<20x24xf32>
    %118 = arith.addf %115, %117 : vector<20x24xf32>
    %c0_67 = arith.constant 0 : index
    %c0_68 = arith.constant 0 : index
    %c0_69 = arith.constant 0 : index
    %119 = vector.load %arg13[%c0_67, %c0_68, %c0_69] : memref<1x20x24xf32, #tpu.memory_space<vmem>>, vector<1x20x24xf32>
    %120 = vector.shape_cast %119 : vector<1x20x24xf32> to vector<20x24xf32>
    %121 = vector.shape_cast %118 : vector<20x24xf32> to vector<1x20x24xf32>
    tpu.vector_store %arg13[%c0_67, %c0_68, %c0_69], %121 {strides = array<i32>} : memref<1x20x24xf32, #tpu.memory_space<vmem>>, vector<1x20x24xf32>,
    return
  }
  func.func @transform_0(%arg0: i32) -> (i32, i32, i32) {
    %c0_i32 = arith.constant 0 : i32
    %c0_i32_0 = arith.constant 0 : i32
    %c0_i32_1 = arith.constant 0 : i32
    return %arg0, %c0_i32, %c0_i32_0 : i32, i32, i32
  }
  func.func @transform_1(%arg0: i32) -> (i32, i32) {
    %c0_i32 = arith.constant 0 : i32
    %c0_i32_0 = arith.constant 0 : i32
    %c0_i32_1 = arith.constant 0 : i32
    return %c0_i32, %c0_i32_0 : i32, i32
  }
  func.func @transform_2(%arg0: i32) -> (i32, i32) {
    %c0_i32 = arith.constant 0 : i32
    %c0_i32_0 = arith.constant 0 : i32
    %c0_i32_1 = arith.constant 0 : i32
    return %c0_i32, %c0_i32_0 : i32, i32
  }
  func.func @transform_3(%arg0: i32) -> (i32, i32) {
    %c0_i32 = arith.constant 0 : i32
    %c0_i32_0 = arith.constant 0 : i32
    %c0_i32_1 = arith.constant 0 : i32
    return %c0_i32, %c0_i32_0 : i32, i32
  }
  func.func @transform_4(%arg0: i32) -> (i32, i32, i32) {
    %c0_i32 = arith.constant 0 : i32
    %c0_i32_0 = arith.constant 0 : i32
    %c0_i32_1 = arith.constant 0 : i32
    %c0_i32_2 = arith.constant 0 : i32
    return %c0_i32, %c0_i32_0, %c0_i32_1 : i32, i32, i32
  }
  func.func @transform_5(%arg0: i32) -> (i32, i32) {
    %c0_i32 = arith.constant 0 : i32
    %c0_i32_0 = arith.constant 0 : i32
    %c0_i32_1 = arith.constant 0 : i32
    return %c0_i32, %c0_i32_0 : i32, i32
  }
  func.func @transform_6(%arg0: i32) -> (i32, i32) {
    %c0_i32 = arith.constant 0 : i32
    %c0_i32_0 = arith.constant 0 : i32
    %c0_i32_1 = arith.constant 0 : i32
    return %c0_i32, %c0_i32_0 : i32, i32
  }
  func.func @transform_7(%arg0: i32) -> (i32, i32) {
    %c0_i32 = arith.constant 0 : i32
    %c0_i32_0 = arith.constant 0 : i32
    %c0_i32_1 = arith.constant 0 : i32
    return %c0_i32, %c0_i32_0 : i32, i32
  }
  func.func @transform_8(%arg0: i32) -> (i32, i32) {
    %c0_i32 = arith.constant 0 : i32
    %c0_i32_0 = arith.constant 0 : i32
    %c0_i32_1 = arith.constant 0 : i32
    return %c0_i32, %c0_i32_0 : i32, i32
  }
  func.func @transform_9(%arg0: i32) -> (i32, i32) {
    %c0_i32 = arith.constant 0 : i32
    %c0_i32_0 = arith.constant 0 : i32
    %c0_i32_1 = arith.constant 0 : i32
    return %c0_i32, %c0_i32_0 : i32, i32
  }
  func.func @transform_10(%arg0: i32) -> (i32, i32) {
    %c0_i32 = arith.constant 0 : i32
    %c0_i32_0 = arith.constant 0 : i32
    %c0_i32_1 = arith.constant 0 : i32
    return %c0_i32, %c0_i32_0 : i32, i32
  }
  func.func @transform_11(%arg0: i32) -> (i32, i32) {
    %c0_i32 = arith.constant 0 : i32
    %c0_i32_0 = arith.constant 0 : i32
    %c0_i32_1 = arith.constant 0 : i32
    return %c0_i32, %c0_i32_0 : i32, i32
  }
  func.func @transform_12(%arg0: i32) -> (i32, i32, i32) {
    %c0_i32 = arith.constant 0 : i32
    %c0_i32_0 = arith.constant 0 : i32
    %c0_i32_1 = arith.constant 0 : i32
    return %arg0, %c0_i32, %c0_i32_0 : i32, i32, i32
  }
}

module attributes {stable_mosaic.version = 11 : i64} {
  func.func @kernel(%arg0: i32, %arg1: memref<1x48x24xbf16, #tpu.memory_space<vmem>>, %arg2: memref<48x1xf32, #tpu.memory_space<vmem>>, %arg3: memref<24x96xbf16, #tpu.memory_space<vmem>>, %arg4: memref<1x96xf32, #tpu.memory_space<vmem>>, %arg5: memref<9x1x96xf32, #tpu.memory_space<vmem>>, %arg6: memref<1x96xf32, #tpu.memory_space<vmem>>, %arg7: memref<6x96xf32, #tpu.memory_space<vmem>>, %arg8: memref<6x1xf32, #tpu.memory_space<vmem>>, %arg9: memref<6x96xf32, #tpu.memory_space<vmem>>, %arg10: memref<1x96xf32, #tpu.memory_space<vmem>>, %arg11: memref<96x32xbf16, #tpu.memory_space<vmem>>, %arg12: memref<1x32xf32, #tpu.memory_space<vmem>>, %arg13: memref<1x6x32xf32, #tpu.memory_space<vmem>>, %arg14: memref<48x96xf32, #tpu.memory_space<vmem>>) attributes {dimension_semantics = [#tpu.dimension_semantics<parallel>], iteration_bounds = array<i64: 2>, scalar_prefetch = 0 : i64, scratch_operands = 1 : i64, tpu.core_type = #tpu.core_type<tc>, window_params = [{transform_indices = @transform_0, window_bounds = array<i64: 1, 48, 24>}, {pipeline_mode = #tpu.pipeline_mode<synchronous>, transform_indices = @transform_1, window_bounds = array<i64: 48, 1>}, {pipeline_mode = #tpu.pipeline_mode<synchronous>, transform_indices = @transform_2, window_bounds = array<i64: 24, 96>}, {pipeline_mode = #tpu.pipeline_mode<synchronous>, transform_indices = @transform_3, window_bounds = array<i64: 1, 96>}, {pipeline_mode = #tpu.pipeline_mode<synchronous>, transform_indices = @transform_4, window_bounds = array<i64: 9, 1, 96>}, {pipeline_mode = #tpu.pipeline_mode<synchronous>, transform_indices = @transform_5, window_bounds = array<i64: 1, 96>}, {pipeline_mode = #tpu.pipeline_mode<synchronous>, transform_indices = @transform_6, window_bounds = array<i64: 6, 96>}, {pipeline_mode = #tpu.pipeline_mode<synchronous>, transform_indices = @transform_7, window_bounds = array<i64: 6, 1>}, {pipeline_mode = #tpu.pipeline_mode<synchronous>, transform_indices = @transform_8, window_bounds = array<i64: 6, 96>}, {pipeline_mode = #tpu.pipeline_mode<synchronous>, transform_indices = @transform_9, window_bounds = array<i64: 1, 96>}, {pipeline_mode = #tpu.pipeline_mode<synchronous>, transform_indices = @transform_10, window_bounds = array<i64: 96, 32>}, {pipeline_mode = #tpu.pipeline_mode<synchronous>, transform_indices = @transform_11, window_bounds = array<i64: 1, 32>}, {transform_indices = @transform_12, window_bounds = array<i64: 1, 6, 32>}]} {
    %c0 = arith.constant 0 : index
    %c0_0 = arith.constant 0 : index
    %c0_1 = arith.constant 0 : index
    %0 = vector.load %arg1[%c0, %c0_0, %c0_1] : memref<1x48x24xbf16, #tpu.memory_space<vmem>>, vector<1x48x24xbf16>
    %1 = vector.shape_cast %0 : vector<1x48x24xbf16> to vector<48x24xbf16>
    %c0_2 = arith.constant 0 : index
    %c0_3 = arith.constant 0 : index
    %2 = vector.load %arg3[%c0_2, %c0_3] : memref<24x96xbf16, #tpu.memory_space<vmem>>, vector<24x96xbf16>
    %cst = arith.constant dense<0.000000e+00> : vector<48x96xf32>
    %3 = tpu.matmul %1, %2, %cst {dimension_numbers = #tpu.dot_dimension_numbers<[1], [0], [0], [1], [0, 0, 1, 1], [], []>} : vector<48x24xbf16>, vector<24x96xbf16>, vector<48x96xf32> -> vector<48x96xf32>
    %c0_4 = arith.constant 0 : index
    %c0_5 = arith.constant 0 : index
    %4 = vector.load %arg4[%c0_4, %c0_5] : memref<1x96xf32, #tpu.memory_space<vmem>>, vector<1x96xf32>
    %5 = vector.broadcast %4 : vector<1x96xf32> to vector<48x96xf32>
    %6 = arith.addf %3, %5 : vector<48x96xf32>
    %7 = arith.negf %6 : vector<48x96xf32>
    %8 = math.exp %7 : vector<48x96xf32>
    %cst_6 = arith.constant 1.000000e+00 : f32
    %9 = vector.broadcast %cst_6 : f32 to vector<48x96xf32>
    %10 = arith.addf %9, %8 : vector<48x96xf32>
    %11 = arith.divf %9, %10 : vector<48x96xf32>
    %12 = arith.mulf %6, %11 : vector<48x96xf32>
    %c0_7 = arith.constant 0 : index
    %c0_8 = arith.constant 0 : index
    %13 = vector.load %arg2[%c0_7, %c0_8] : memref<48x1xf32, #tpu.memory_space<vmem>>, vector<48x1xf32>
    %14 = vector.broadcast %13 : vector<48x1xf32> to vector<48x96xf32>
    %15 = arith.mulf %12, %14 : vector<48x96xf32>
    %c0_9 = arith.constant 0 : index
    %c0_10 = arith.constant 0 : index
    %16 = vector.load %arg14[%c0_9, %c0_10] : memref<48x96xf32, #tpu.memory_space<vmem>>, vector<48x96xf32>
    tpu.vector_store %arg14[%c0_9, %c0_10], %15 {strides = array<i32>} : memref<48x96xf32, #tpu.memory_space<vmem>>, vector<48x96xf32>,
    %c0_11 = arith.constant 0 : index
    %c0_12 = arith.constant 0 : index
    %17 = vector.load %arg14[%c0_11, %c0_12] : memref<48x96xf32, #tpu.memory_space<vmem>>, vector<6x96xf32>
    %c0_13 = arith.constant 0 : index
    %c0_14 = arith.constant 0 : index
    %c0_15 = arith.constant 0 : index
    %18 = vector.load %arg5[%c0_13, %c0_14, %c0_15] : memref<9x1x96xf32, #tpu.memory_space<vmem>>, vector<1x1x96xf32>
    %19 = vector.shape_cast %18 : vector<1x1x96xf32> to vector<1x96xf32>
    %20 = vector.broadcast %19 : vector<1x96xf32> to vector<6x96xf32>
    %21 = arith.mulf %17, %20 : vector<6x96xf32>
    %c12 = arith.constant 12 : index
    %c0_16 = arith.constant 0 : index
    %22 = vector.load %arg14[%c12, %c0_16] : memref<48x96xf32, #tpu.memory_space<vmem>>, vector<6x96xf32>
    %c1 = arith.constant 1 : index
    %c0_17 = arith.constant 0 : index
    %c0_18 = arith.constant 0 : index
    %23 = vector.load %arg5[%c1, %c0_17, %c0_18] : memref<9x1x96xf32, #tpu.memory_space<vmem>>, vector<1x1x96xf32>
    %24 = vector.shape_cast %23 : vector<1x1x96xf32> to vector<1x96xf32>
    %25 = vector.broadcast %24 : vector<1x96xf32> to vector<6x96xf32>
    %26 = arith.mulf %22, %25 : vector<6x96xf32>
    %27 = arith.addf %21, %26 : vector<6x96xf32>
    %c1_19 = arith.constant 1 : index
    %c0_20 = arith.constant 0 : index
    %28 = vector.load %arg14[%c1_19, %c0_20] : memref<48x96xf32, #tpu.memory_space<vmem>>, vector<6x96xf32>
    %c2 = arith.constant 2 : index
    %c0_21 = arith.constant 0 : index
    %c0_22 = arith.constant 0 : index
    %29 = vector.load %arg5[%c2, %c0_21, %c0_22] : memref<9x1x96xf32, #tpu.memory_space<vmem>>, vector<1x1x96xf32>
    %30 = vector.shape_cast %29 : vector<1x1x96xf32> to vector<1x96xf32>
    %31 = vector.broadcast %30 : vector<1x96xf32> to vector<6x96xf32>
    %32 = arith.mulf %28, %31 : vector<6x96xf32>
    %33 = arith.addf %27, %32 : vector<6x96xf32>
    %c24 = arith.constant 24 : index
    %c0_23 = arith.constant 0 : index
    %34 = vector.load %arg14[%c24, %c0_23] : memref<48x96xf32, #tpu.memory_space<vmem>>, vector<6x96xf32>
    %c3 = arith.constant 3 : index
    %c0_24 = arith.constant 0 : index
    %c0_25 = arith.constant 0 : index
    %35 = vector.load %arg5[%c3, %c0_24, %c0_25] : memref<9x1x96xf32, #tpu.memory_space<vmem>>, vector<1x1x96xf32>
    %36 = vector.shape_cast %35 : vector<1x1x96xf32> to vector<1x96xf32>
    %37 = vector.broadcast %36 : vector<1x96xf32> to vector<6x96xf32>
    %38 = arith.mulf %34, %37 : vector<6x96xf32>
    %39 = arith.addf %33, %38 : vector<6x96xf32>
    %c36 = arith.constant 36 : index
    %c0_26 = arith.constant 0 : index
    %40 = vector.load %arg14[%c36, %c0_26] : memref<48x96xf32, #tpu.memory_space<vmem>>, vector<6x96xf32>
    %c4 = arith.constant 4 : index
    %c0_27 = arith.constant 0 : index
    %c0_28 = arith.constant 0 : index
    %41 = vector.load %arg5[%c4, %c0_27, %c0_28] : memref<9x1x96xf32, #tpu.memory_space<vmem>>, vector<1x1x96xf32>
    %42 = vector.shape_cast %41 : vector<1x1x96xf32> to vector<1x96xf32>
    %43 = vector.broadcast %42 : vector<1x96xf32> to vector<6x96xf32>
    %44 = arith.mulf %40, %43 : vector<6x96xf32>
    %45 = arith.addf %39, %44 : vector<6x96xf32>
    %c25 = arith.constant 25 : index
    %c0_29 = arith.constant 0 : index
    %46 = vector.load %arg14[%c25, %c0_29] : memref<48x96xf32, #tpu.memory_space<vmem>>, vector<6x96xf32>
    %c5 = arith.constant 5 : index
    %c0_30 = arith.constant 0 : index
    %c0_31 = arith.constant 0 : index
    %47 = vector.load %arg5[%c5, %c0_30, %c0_31] : memref<9x1x96xf32, #tpu.memory_space<vmem>>, vector<1x1x96xf32>
    %48 = vector.shape_cast %47 : vector<1x1x96xf32> to vector<1x96xf32>
    %49 = vector.broadcast %48 : vector<1x96xf32> to vector<6x96xf32>
    %50 = arith.mulf %46, %49 : vector<6x96xf32>
    %51 = arith.addf %45, %50 : vector<6x96xf32>
    %c3_32 = arith.constant 3 : index
    %c0_33 = arith.constant 0 : index
    %52 = vector.load %arg14[%c3_32, %c0_33] : memref<48x96xf32, #tpu.memory_space<vmem>>, vector<6x96xf32>
    %c6 = arith.constant 6 : index
    %c0_34 = arith.constant 0 : index
    %c0_35 = arith.constant 0 : index
    %53 = vector.load %arg5[%c6, %c0_34, %c0_35] : memref<9x1x96xf32, #tpu.memory_space<vmem>>, vector<1x1x96xf32>
    %54 = vector.shape_cast %53 : vector<1x1x96xf32> to vector<1x96xf32>
    %55 = vector.broadcast %54 : vector<1x96xf32> to vector<6x96xf32>
    %56 = arith.mulf %52, %55 : vector<6x96xf32>
    %57 = arith.addf %51, %56 : vector<6x96xf32>
    %c15 = arith.constant 15 : index
    %c0_36 = arith.constant 0 : index
    %58 = vector.load %arg14[%c15, %c0_36] : memref<48x96xf32, #tpu.memory_space<vmem>>, vector<6x96xf32>
    %c7 = arith.constant 7 : index
    %c0_37 = arith.constant 0 : index
    %c0_38 = arith.constant 0 : index
    %59 = vector.load %arg5[%c7, %c0_37, %c0_38] : memref<9x1x96xf32, #tpu.memory_space<vmem>>, vector<1x1x96xf32>
    %60 = vector.shape_cast %59 : vector<1x1x96xf32> to vector<1x96xf32>
    %61 = vector.broadcast %60 : vector<1x96xf32> to vector<6x96xf32>
    %62 = arith.mulf %58, %61 : vector<6x96xf32>
    %63 = arith.addf %57, %62 : vector<6x96xf32>
    %c4_39 = arith.constant 4 : index
    %c0_40 = arith.constant 0 : index
    %64 = vector.load %arg14[%c4_39, %c0_40] : memref<48x96xf32, #tpu.memory_space<vmem>>, vector<6x96xf32>
    %c8 = arith.constant 8 : index
    %c0_41 = arith.constant 0 : index
    %c0_42 = arith.constant 0 : index
    %65 = vector.load %arg5[%c8, %c0_41, %c0_42] : memref<9x1x96xf32, #tpu.memory_space<vmem>>, vector<1x1x96xf32>
    %66 = vector.shape_cast %65 : vector<1x1x96xf32> to vector<1x96xf32>
    %67 = vector.broadcast %66 : vector<1x96xf32> to vector<6x96xf32>
    %68 = arith.mulf %64, %67 : vector<6x96xf32>
    %69 = arith.addf %63, %68 : vector<6x96xf32>
    %c0_43 = arith.constant 0 : index
    %c0_44 = arith.constant 0 : index
    %70 = vector.load %arg6[%c0_43, %c0_44] : memref<1x96xf32, #tpu.memory_space<vmem>>, vector<1x96xf32>
    %71 = vector.broadcast %70 : vector<1x96xf32> to vector<6x96xf32>
    %72 = arith.addf %69, %71 : vector<6x96xf32>
    %73 = arith.negf %72 : vector<6x96xf32>
    %74 = math.exp %73 : vector<6x96xf32>
    %cst_45 = arith.constant 1.000000e+00 : f32
    %75 = vector.broadcast %cst_45 : f32 to vector<6x96xf32>
    %76 = arith.addf %75, %74 : vector<6x96xf32>
    %77 = arith.divf %75, %76 : vector<6x96xf32>
    %78 = arith.mulf %72, %77 : vector<6x96xf32>
    %c36_46 = arith.constant 36 : index
    %c0_47 = arith.constant 0 : index
    %79 = vector.load %arg2[%c36_46, %c0_47] : memref<48x1xf32, #tpu.memory_space<vmem>>, vector<6x1xf32>
    %80 = vector.broadcast %79 : vector<6x1xf32> to vector<6x96xf32>
    %81 = arith.mulf %78, %80 : vector<6x96xf32>
    %cst_48 = arith.constant dense<0.000000e+00> : vector<96xf32>
    %82 = vector.multi_reduction <add>, %81, %cst_48 [0] : vector<6x96xf32> to vector<96xf32>
    %83 = vector.shape_cast %82 : vector<96xf32> to vector<1x96xf32>
    %cst_49 = arith.constant 2.500000e-01 : f32
    %84 = vector.broadcast %cst_49 : f32 to vector<1x96xf32>
    %85 = arith.mulf %83, %84 : vector<1x96xf32>
    %c0_50 = arith.constant 0 : index
    %c0_51 = arith.constant 0 : index
    %86 = vector.load %arg7[%c0_50, %c0_51] : memref<6x96xf32, #tpu.memory_space<vmem>>, vector<6x96xf32>
    %87 = vector.broadcast %85 : vector<1x96xf32> to vector<6x96xf32>
    %88 = arith.mulf %86, %87 : vector<6x96xf32>
    %cst_52 = arith.constant dense<0.000000e+00> : vector<6xf32>
    %89 = vector.multi_reduction <add>, %88, %cst_52 [1] : vector<6x96xf32> to vector<6xf32>
    %90 = vector.shape_cast %89 : vector<6xf32> to vector<6x1xf32>
    %c0_53 = arith.constant 0 : index
    %c0_54 = arith.constant 0 : index
    %91 = vector.load %arg8[%c0_53, %c0_54] : memref<6x1xf32, #tpu.memory_space<vmem>>, vector<6x1xf32>
    %92 = arith.addf %90, %91 : vector<6x1xf32>
    %93 = arith.negf %92 : vector<6x1xf32>
    %94 = math.exp %93 : vector<6x1xf32>
    %cst_55 = arith.constant 1.000000e+00 : f32
    %95 = vector.broadcast %cst_55 : f32 to vector<6x1xf32>
    %96 = arith.addf %95, %94 : vector<6x1xf32>
    %97 = arith.divf %95, %96 : vector<6x1xf32>
    %98 = arith.mulf %92, %97 : vector<6x1xf32>
    %c0_56 = arith.constant 0 : index
    %c0_57 = arith.constant 0 : index
    %99 = vector.load %arg9[%c0_56, %c0_57] : memref<6x96xf32, #tpu.memory_space<vmem>>, vector<6x96xf32>
    %100 = vector.broadcast %98 : vector<6x1xf32> to vector<6x96xf32>
    %101 = arith.mulf %99, %100 : vector<6x96xf32>
    %cst_58 = arith.constant dense<0.000000e+00> : vector<96xf32>
    %102 = vector.multi_reduction <add>, %101, %cst_58 [0] : vector<6x96xf32> to vector<96xf32>
    %103 = vector.shape_cast %102 : vector<96xf32> to vector<1x96xf32>
    %c0_59 = arith.constant 0 : index
    %c0_60 = arith.constant 0 : index
    %104 = vector.load %arg10[%c0_59, %c0_60] : memref<1x96xf32, #tpu.memory_space<vmem>>, vector<1x96xf32>
    %105 = arith.addf %103, %104 : vector<1x96xf32>
    %106 = arith.negf %105 : vector<1x96xf32>
    %107 = math.exp %106 : vector<1x96xf32>
    %cst_61 = arith.constant 1.000000e+00 : f32
    %108 = vector.broadcast %cst_61 : f32 to vector<1x96xf32>
    %109 = arith.addf %108, %107 : vector<1x96xf32>
    %110 = arith.divf %108, %109 : vector<1x96xf32>
    %111 = vector.broadcast %110 : vector<1x96xf32> to vector<6x96xf32>
    %112 = arith.mulf %78, %111 : vector<6x96xf32>
    %113 = arith.truncf %112 : vector<6x96xf32> to vector<6x96xbf16>
    %c0_62 = arith.constant 0 : index
    %c0_63 = arith.constant 0 : index
    %114 = vector.load %arg11[%c0_62, %c0_63] : memref<96x32xbf16, #tpu.memory_space<vmem>>, vector<96x32xbf16>
    %cst_64 = arith.constant dense<0.000000e+00> : vector<6x32xf32>
    %115 = tpu.matmul %113, %114, %cst_64 {dimension_numbers = #tpu.dot_dimension_numbers<[1], [0], [0], [1], [0, 0, 1, 1], [], []>} : vector<6x96xbf16>, vector<96x32xbf16>, vector<6x32xf32> -> vector<6x32xf32>
    %c0_65 = arith.constant 0 : index
    %c0_66 = arith.constant 0 : index
    %116 = vector.load %arg12[%c0_65, %c0_66] : memref<1x32xf32, #tpu.memory_space<vmem>>, vector<1x32xf32>
    %117 = vector.broadcast %116 : vector<1x32xf32> to vector<6x32xf32>
    %118 = arith.addf %115, %117 : vector<6x32xf32>
    %c0_67 = arith.constant 0 : index
    %c0_68 = arith.constant 0 : index
    %c0_69 = arith.constant 0 : index
    %119 = vector.load %arg13[%c0_67, %c0_68, %c0_69] : memref<1x6x32xf32, #tpu.memory_space<vmem>>, vector<1x6x32xf32>
    %120 = vector.shape_cast %119 : vector<1x6x32xf32> to vector<6x32xf32>
    %121 = vector.shape_cast %118 : vector<6x32xf32> to vector<1x6x32xf32>
    tpu.vector_store %arg13[%c0_67, %c0_68, %c0_69], %121 {strides = array<i32>} : memref<1x6x32xf32, #tpu.memory_space<vmem>>, vector<1x6x32xf32>,
    return
  }
  func.func @transform_0(%arg0: i32) -> (i32, i32, i32) {
    %c0_i32 = arith.constant 0 : i32
    %c0_i32_0 = arith.constant 0 : i32
    %c0_i32_1 = arith.constant 0 : i32
    return %arg0, %c0_i32, %c0_i32_0 : i32, i32, i32
  }
  func.func @transform_1(%arg0: i32) -> (i32, i32) {
    %c0_i32 = arith.constant 0 : i32
    %c0_i32_0 = arith.constant 0 : i32
    %c0_i32_1 = arith.constant 0 : i32
    return %c0_i32, %c0_i32_0 : i32, i32
  }
  func.func @transform_2(%arg0: i32) -> (i32, i32) {
    %c0_i32 = arith.constant 0 : i32
    %c0_i32_0 = arith.constant 0 : i32
    %c0_i32_1 = arith.constant 0 : i32
    return %c0_i32, %c0_i32_0 : i32, i32
  }
  func.func @transform_3(%arg0: i32) -> (i32, i32) {
    %c0_i32 = arith.constant 0 : i32
    %c0_i32_0 = arith.constant 0 : i32
    %c0_i32_1 = arith.constant 0 : i32
    return %c0_i32, %c0_i32_0 : i32, i32
  }
  func.func @transform_4(%arg0: i32) -> (i32, i32, i32) {
    %c0_i32 = arith.constant 0 : i32
    %c0_i32_0 = arith.constant 0 : i32
    %c0_i32_1 = arith.constant 0 : i32
    %c0_i32_2 = arith.constant 0 : i32
    return %c0_i32, %c0_i32_0, %c0_i32_1 : i32, i32, i32
  }
  func.func @transform_5(%arg0: i32) -> (i32, i32) {
    %c0_i32 = arith.constant 0 : i32
    %c0_i32_0 = arith.constant 0 : i32
    %c0_i32_1 = arith.constant 0 : i32
    return %c0_i32, %c0_i32_0 : i32, i32
  }
  func.func @transform_6(%arg0: i32) -> (i32, i32) {
    %c0_i32 = arith.constant 0 : i32
    %c0_i32_0 = arith.constant 0 : i32
    %c0_i32_1 = arith.constant 0 : i32
    return %c0_i32, %c0_i32_0 : i32, i32
  }
  func.func @transform_7(%arg0: i32) -> (i32, i32) {
    %c0_i32 = arith.constant 0 : i32
    %c0_i32_0 = arith.constant 0 : i32
    %c0_i32_1 = arith.constant 0 : i32
    return %c0_i32, %c0_i32_0 : i32, i32
  }
  func.func @transform_8(%arg0: i32) -> (i32, i32) {
    %c0_i32 = arith.constant 0 : i32
    %c0_i32_0 = arith.constant 0 : i32
    %c0_i32_1 = arith.constant 0 : i32
    return %c0_i32, %c0_i32_0 : i32, i32
  }
  func.func @transform_9(%arg0: i32) -> (i32, i32) {
    %c0_i32 = arith.constant 0 : i32
    %c0_i32_0 = arith.constant 0 : i32
    %c0_i32_1 = arith.constant 0 : i32
    return %c0_i32, %c0_i32_0 : i32, i32
  }
  func.func @transform_10(%arg0: i32) -> (i32, i32) {
    %c0_i32 = arith.constant 0 : i32
    %c0_i32_0 = arith.constant 0 : i32
    %c0_i32_1 = arith.constant 0 : i32
    return %c0_i32, %c0_i32_0 : i32, i32
  }
  func.func @transform_11(%arg0: i32) -> (i32, i32) {
    %c0_i32 = arith.constant 0 : i32
    %c0_i32_0 = arith.constant 0 : i32
    %c0_i32_1 = arith.constant 0 : i32
    return %c0_i32, %c0_i32_0 : i32, i32
  }
  func.func @transform_12(%arg0: i32) -> (i32, i32, i32) {
    %c0_i32 = arith.constant 0 : i32
    %c0_i32_0 = arith.constant 0 : i32
    %c0_i32_1 = arith.constant 0 : i32
    return %arg0, %c0_i32, %c0_i32_0 : i32, i32, i32
  }
}

module attributes {stable_mosaic.version = 11 : i64} {
  func.func @kernel(%arg0: i32, %arg1: memref<1x20x32xbf16, #tpu.memory_space<vmem>>, %arg2: memref<20x1xf32, #tpu.memory_space<vmem>>, %arg3: memref<32x128xbf16, #tpu.memory_space<vmem>>, %arg4: memref<1x128xf32, #tpu.memory_space<vmem>>, %arg5: memref<9x1x128xf32, #tpu.memory_space<vmem>>, %arg6: memref<1x128xf32, #tpu.memory_space<vmem>>, %arg7: memref<8x128xf32, #tpu.memory_space<vmem>>, %arg8: memref<8x1xf32, #tpu.memory_space<vmem>>, %arg9: memref<8x128xf32, #tpu.memory_space<vmem>>, %arg10: memref<1x128xf32, #tpu.memory_space<vmem>>, %arg11: memref<128x32xbf16, #tpu.memory_space<vmem>>, %arg12: memref<1x32xf32, #tpu.memory_space<vmem>>, %arg13: memref<1x8x32xf32, #tpu.memory_space<vmem>>, %arg14: memref<20x128xf32, #tpu.memory_space<vmem>>) attributes {dimension_semantics = [#tpu.dimension_semantics<parallel>], iteration_bounds = array<i64: 2>, scalar_prefetch = 0 : i64, scratch_operands = 1 : i64, tpu.core_type = #tpu.core_type<tc>, window_params = [{transform_indices = @transform_0, window_bounds = array<i64: 1, 20, 32>}, {pipeline_mode = #tpu.pipeline_mode<synchronous>, transform_indices = @transform_1, window_bounds = array<i64: 20, 1>}, {pipeline_mode = #tpu.pipeline_mode<synchronous>, transform_indices = @transform_2, window_bounds = array<i64: 32, 128>}, {pipeline_mode = #tpu.pipeline_mode<synchronous>, transform_indices = @transform_3, window_bounds = array<i64: 1, 128>}, {pipeline_mode = #tpu.pipeline_mode<synchronous>, transform_indices = @transform_4, window_bounds = array<i64: 9, 1, 128>}, {pipeline_mode = #tpu.pipeline_mode<synchronous>, transform_indices = @transform_5, window_bounds = array<i64: 1, 128>}, {pipeline_mode = #tpu.pipeline_mode<synchronous>, transform_indices = @transform_6, window_bounds = array<i64: 8, 128>}, {pipeline_mode = #tpu.pipeline_mode<synchronous>, transform_indices = @transform_7, window_bounds = array<i64: 8, 1>}, {pipeline_mode = #tpu.pipeline_mode<synchronous>, transform_indices = @transform_8, window_bounds = array<i64: 8, 128>}, {pipeline_mode = #tpu.pipeline_mode<synchronous>, transform_indices = @transform_9, window_bounds = array<i64: 1, 128>}, {pipeline_mode = #tpu.pipeline_mode<synchronous>, transform_indices = @transform_10, window_bounds = array<i64: 128, 32>}, {pipeline_mode = #tpu.pipeline_mode<synchronous>, transform_indices = @transform_11, window_bounds = array<i64: 1, 32>}, {transform_indices = @transform_12, window_bounds = array<i64: 1, 8, 32>}]} {
    %c0 = arith.constant 0 : index
    %c0_0 = arith.constant 0 : index
    %c0_1 = arith.constant 0 : index
    %0 = vector.load %arg1[%c0, %c0_0, %c0_1] : memref<1x20x32xbf16, #tpu.memory_space<vmem>>, vector<1x20x32xbf16>
    %1 = vector.shape_cast %0 : vector<1x20x32xbf16> to vector<20x32xbf16>
    %c0_2 = arith.constant 0 : index
    %c0_3 = arith.constant 0 : index
    %2 = vector.load %arg3[%c0_2, %c0_3] : memref<32x128xbf16, #tpu.memory_space<vmem>>, vector<32x128xbf16>
    %cst = arith.constant dense<0.000000e+00> : vector<20x128xf32>
    %3 = tpu.matmul %1, %2, %cst {dimension_numbers = #tpu.dot_dimension_numbers<[1], [0], [0], [1], [0, 0, 1, 1], [], []>} : vector<20x32xbf16>, vector<32x128xbf16>, vector<20x128xf32> -> vector<20x128xf32>
    %c0_4 = arith.constant 0 : index
    %c0_5 = arith.constant 0 : index
    %4 = vector.load %arg4[%c0_4, %c0_5] : memref<1x128xf32, #tpu.memory_space<vmem>>, vector<1x128xf32>
    %5 = vector.broadcast %4 : vector<1x128xf32> to vector<20x128xf32>
    %6 = arith.addf %3, %5 : vector<20x128xf32>
    %7 = arith.negf %6 : vector<20x128xf32>
    %8 = math.exp %7 : vector<20x128xf32>
    %cst_6 = arith.constant 1.000000e+00 : f32
    %9 = vector.broadcast %cst_6 : f32 to vector<20x128xf32>
    %10 = arith.addf %9, %8 : vector<20x128xf32>
    %11 = arith.divf %9, %10 : vector<20x128xf32>
    %12 = arith.mulf %6, %11 : vector<20x128xf32>
    %c0_7 = arith.constant 0 : index
    %c0_8 = arith.constant 0 : index
    %13 = vector.load %arg2[%c0_7, %c0_8] : memref<20x1xf32, #tpu.memory_space<vmem>>, vector<20x1xf32>
    %14 = vector.broadcast %13 : vector<20x1xf32> to vector<20x128xf32>
    %15 = arith.mulf %12, %14 : vector<20x128xf32>
    %c0_9 = arith.constant 0 : index
    %c0_10 = arith.constant 0 : index
    %16 = vector.load %arg14[%c0_9, %c0_10] : memref<20x128xf32, #tpu.memory_space<vmem>>, vector<20x128xf32>
    tpu.vector_store %arg14[%c0_9, %c0_10], %15 {strides = array<i32>} : memref<20x128xf32, #tpu.memory_space<vmem>>, vector<20x128xf32>,
    %c0_11 = arith.constant 0 : index
    %c0_12 = arith.constant 0 : index
    %17 = vector.load %arg14[%c0_11, %c0_12] : memref<20x128xf32, #tpu.memory_space<vmem>>, vector<8x128xf32>
    %c0_13 = arith.constant 0 : index
    %c0_14 = arith.constant 0 : index
    %c0_15 = arith.constant 0 : index
    %18 = vector.load %arg5[%c0_13, %c0_14, %c0_15] : memref<9x1x128xf32, #tpu.memory_space<vmem>>, vector<1x1x128xf32>
    %19 = vector.shape_cast %18 : vector<1x1x128xf32> to vector<1x128xf32>
    %20 = vector.broadcast %19 : vector<1x128xf32> to vector<8x128xf32>
    %21 = arith.mulf %17, %20 : vector<8x128xf32>
    %c1 = arith.constant 1 : index
    %c0_16 = arith.constant 0 : index
    %22 = vector.load %arg14[%c1, %c0_16] : memref<20x128xf32, #tpu.memory_space<vmem>>, vector<8x128xf32>
    %c1_17 = arith.constant 1 : index
    %c0_18 = arith.constant 0 : index
    %c0_19 = arith.constant 0 : index
    %23 = vector.load %arg5[%c1_17, %c0_18, %c0_19] : memref<9x1x128xf32, #tpu.memory_space<vmem>>, vector<1x1x128xf32>
    %24 = vector.shape_cast %23 : vector<1x1x128xf32> to vector<1x128xf32>
    %25 = vector.broadcast %24 : vector<1x128xf32> to vector<8x128xf32>
    %26 = arith.mulf %22, %25 : vector<8x128xf32>
    %27 = arith.addf %21, %26 : vector<8x128xf32>
    %c2 = arith.constant 2 : index
    %c0_20 = arith.constant 0 : index
    %28 = vector.load %arg14[%c2, %c0_20] : memref<20x128xf32, #tpu.memory_space<vmem>>, vector<8x128xf32>
    %c2_21 = arith.constant 2 : index
    %c0_22 = arith.constant 0 : index
    %c0_23 = arith.constant 0 : index
    %29 = vector.load %arg5[%c2_21, %c0_22, %c0_23] : memref<9x1x128xf32, #tpu.memory_space<vmem>>, vector<1x1x128xf32>
    %30 = vector.shape_cast %29 : vector<1x1x128xf32> to vector<1x128xf32>
    %31 = vector.broadcast %30 : vector<1x128xf32> to vector<8x128xf32>
    %32 = arith.mulf %28, %31 : vector<8x128xf32>
    %33 = arith.addf %27, %32 : vector<8x128xf32>
    %c4 = arith.constant 4 : index
    %c0_24 = arith.constant 0 : index
    %34 = vector.load %arg14[%c4, %c0_24] : memref<20x128xf32, #tpu.memory_space<vmem>>, vector<8x128xf32>
    %c3 = arith.constant 3 : index
    %c0_25 = arith.constant 0 : index
    %c0_26 = arith.constant 0 : index
    %35 = vector.load %arg5[%c3, %c0_25, %c0_26] : memref<9x1x128xf32, #tpu.memory_space<vmem>>, vector<1x1x128xf32>
    %36 = vector.shape_cast %35 : vector<1x1x128xf32> to vector<1x128xf32>
    %37 = vector.broadcast %36 : vector<1x128xf32> to vector<8x128xf32>
    %38 = arith.mulf %34, %37 : vector<8x128xf32>
    %39 = arith.addf %33, %38 : vector<8x128xf32>
    %c5 = arith.constant 5 : index
    %c0_27 = arith.constant 0 : index
    %40 = vector.load %arg14[%c5, %c0_27] : memref<20x128xf32, #tpu.memory_space<vmem>>, vector<8x128xf32>
    %c4_28 = arith.constant 4 : index
    %c0_29 = arith.constant 0 : index
    %c0_30 = arith.constant 0 : index
    %41 = vector.load %arg5[%c4_28, %c0_29, %c0_30] : memref<9x1x128xf32, #tpu.memory_space<vmem>>, vector<1x1x128xf32>
    %42 = vector.shape_cast %41 : vector<1x1x128xf32> to vector<1x128xf32>
    %43 = vector.broadcast %42 : vector<1x128xf32> to vector<8x128xf32>
    %44 = arith.mulf %40, %43 : vector<8x128xf32>
    %45 = arith.addf %39, %44 : vector<8x128xf32>
    %c6 = arith.constant 6 : index
    %c0_31 = arith.constant 0 : index
    %46 = vector.load %arg14[%c6, %c0_31] : memref<20x128xf32, #tpu.memory_space<vmem>>, vector<8x128xf32>
    %c5_32 = arith.constant 5 : index
    %c0_33 = arith.constant 0 : index
    %c0_34 = arith.constant 0 : index
    %47 = vector.load %arg5[%c5_32, %c0_33, %c0_34] : memref<9x1x128xf32, #tpu.memory_space<vmem>>, vector<1x1x128xf32>
    %48 = vector.shape_cast %47 : vector<1x1x128xf32> to vector<1x128xf32>
    %49 = vector.broadcast %48 : vector<1x128xf32> to vector<8x128xf32>
    %50 = arith.mulf %46, %49 : vector<8x128xf32>
    %51 = arith.addf %45, %50 : vector<8x128xf32>
    %c8 = arith.constant 8 : index
    %c0_35 = arith.constant 0 : index
    %52 = vector.load %arg14[%c8, %c0_35] : memref<20x128xf32, #tpu.memory_space<vmem>>, vector<8x128xf32>
    %c6_36 = arith.constant 6 : index
    %c0_37 = arith.constant 0 : index
    %c0_38 = arith.constant 0 : index
    %53 = vector.load %arg5[%c6_36, %c0_37, %c0_38] : memref<9x1x128xf32, #tpu.memory_space<vmem>>, vector<1x1x128xf32>
    %54 = vector.shape_cast %53 : vector<1x1x128xf32> to vector<1x128xf32>
    %55 = vector.broadcast %54 : vector<1x128xf32> to vector<8x128xf32>
    %56 = arith.mulf %52, %55 : vector<8x128xf32>
    %57 = arith.addf %51, %56 : vector<8x128xf32>
    %c9 = arith.constant 9 : index
    %c0_39 = arith.constant 0 : index
    %58 = vector.load %arg14[%c9, %c0_39] : memref<20x128xf32, #tpu.memory_space<vmem>>, vector<8x128xf32>
    %c7 = arith.constant 7 : index
    %c0_40 = arith.constant 0 : index
    %c0_41 = arith.constant 0 : index
    %59 = vector.load %arg5[%c7, %c0_40, %c0_41] : memref<9x1x128xf32, #tpu.memory_space<vmem>>, vector<1x1x128xf32>
    %60 = vector.shape_cast %59 : vector<1x1x128xf32> to vector<1x128xf32>
    %61 = vector.broadcast %60 : vector<1x128xf32> to vector<8x128xf32>
    %62 = arith.mulf %58, %61 : vector<8x128xf32>
    %63 = arith.addf %57, %62 : vector<8x128xf32>
    %c10 = arith.constant 10 : index
    %c0_42 = arith.constant 0 : index
    %64 = vector.load %arg14[%c10, %c0_42] : memref<20x128xf32, #tpu.memory_space<vmem>>, vector<8x128xf32>
    %c8_43 = arith.constant 8 : index
    %c0_44 = arith.constant 0 : index
    %c0_45 = arith.constant 0 : index
    %65 = vector.load %arg5[%c8_43, %c0_44, %c0_45] : memref<9x1x128xf32, #tpu.memory_space<vmem>>, vector<1x1x128xf32>
    %66 = vector.shape_cast %65 : vector<1x1x128xf32> to vector<1x128xf32>
    %67 = vector.broadcast %66 : vector<1x128xf32> to vector<8x128xf32>
    %68 = arith.mulf %64, %67 : vector<8x128xf32>
    %69 = arith.addf %63, %68 : vector<8x128xf32>
    %c0_46 = arith.constant 0 : index
    %c0_47 = arith.constant 0 : index
    %70 = vector.load %arg6[%c0_46, %c0_47] : memref<1x128xf32, #tpu.memory_space<vmem>>, vector<1x128xf32>
    %71 = vector.broadcast %70 : vector<1x128xf32> to vector<8x128xf32>
    %72 = arith.addf %69, %71 : vector<8x128xf32>
    %73 = arith.negf %72 : vector<8x128xf32>
    %74 = math.exp %73 : vector<8x128xf32>
    %cst_48 = arith.constant 1.000000e+00 : f32
    %75 = vector.broadcast %cst_48 : f32 to vector<8x128xf32>
    %76 = arith.addf %75, %74 : vector<8x128xf32>
    %77 = arith.divf %75, %76 : vector<8x128xf32>
    %78 = arith.mulf %72, %77 : vector<8x128xf32>
    %c5_49 = arith.constant 5 : index
    %c0_50 = arith.constant 0 : index
    %79 = vector.load %arg2[%c5_49, %c0_50] : memref<20x1xf32, #tpu.memory_space<vmem>>, vector<8x1xf32>
    %80 = vector.broadcast %79 : vector<8x1xf32> to vector<8x128xf32>
    %81 = arith.mulf %78, %80 : vector<8x128xf32>
    %cst_51 = arith.constant dense<0.000000e+00> : vector<128xf32>
    %82 = vector.multi_reduction <add>, %81, %cst_51 [0] : vector<8x128xf32> to vector<128xf32>
    %83 = vector.shape_cast %82 : vector<128xf32> to vector<1x128xf32>
    %cst_52 = arith.constant 2.500000e-01 : f32
    %84 = vector.broadcast %cst_52 : f32 to vector<1x128xf32>
    %85 = arith.mulf %83, %84 : vector<1x128xf32>
    %c0_53 = arith.constant 0 : index
    %c0_54 = arith.constant 0 : index
    %86 = vector.load %arg7[%c0_53, %c0_54] : memref<8x128xf32, #tpu.memory_space<vmem>>, vector<8x128xf32>
    %87 = vector.broadcast %85 : vector<1x128xf32> to vector<8x128xf32>
    %88 = arith.mulf %86, %87 : vector<8x128xf32>
    %cst_55 = arith.constant dense<0.000000e+00> : vector<8xf32>
    %89 = vector.multi_reduction <add>, %88, %cst_55 [1] : vector<8x128xf32> to vector<8xf32>
    %90 = vector.shape_cast %89 : vector<8xf32> to vector<8x1xf32>
    %c0_56 = arith.constant 0 : index
    %c0_57 = arith.constant 0 : index
    %91 = vector.load %arg8[%c0_56, %c0_57] : memref<8x1xf32, #tpu.memory_space<vmem>>, vector<8x1xf32>
    %92 = arith.addf %90, %91 : vector<8x1xf32>
    %93 = arith.negf %92 : vector<8x1xf32>
    %94 = math.exp %93 : vector<8x1xf32>
    %cst_58 = arith.constant 1.000000e+00 : f32
    %95 = vector.broadcast %cst_58 : f32 to vector<8x1xf32>
    %96 = arith.addf %95, %94 : vector<8x1xf32>
    %97 = arith.divf %95, %96 : vector<8x1xf32>
    %98 = arith.mulf %92, %97 : vector<8x1xf32>
    %c0_59 = arith.constant 0 : index
    %c0_60 = arith.constant 0 : index
    %99 = vector.load %arg9[%c0_59, %c0_60] : memref<8x128xf32, #tpu.memory_space<vmem>>, vector<8x128xf32>
    %100 = vector.broadcast %98 : vector<8x1xf32> to vector<8x128xf32>
    %101 = arith.mulf %99, %100 : vector<8x128xf32>
    %cst_61 = arith.constant dense<0.000000e+00> : vector<128xf32>
    %102 = vector.multi_reduction <add>, %101, %cst_61 [0] : vector<8x128xf32> to vector<128xf32>
    %103 = vector.shape_cast %102 : vector<128xf32> to vector<1x128xf32>
    %c0_62 = arith.constant 0 : index
    %c0_63 = arith.constant 0 : index
    %104 = vector.load %arg10[%c0_62, %c0_63] : memref<1x128xf32, #tpu.memory_space<vmem>>, vector<1x128xf32>
    %105 = arith.addf %103, %104 : vector<1x128xf32>
    %106 = arith.negf %105 : vector<1x128xf32>
    %107 = math.exp %106 : vector<1x128xf32>
    %cst_64 = arith.constant 1.000000e+00 : f32
    %108 = vector.broadcast %cst_64 : f32 to vector<1x128xf32>
    %109 = arith.addf %108, %107 : vector<1x128xf32>
    %110 = arith.divf %108, %109 : vector<1x128xf32>
    %111 = vector.broadcast %110 : vector<1x128xf32> to vector<8x128xf32>
    %112 = arith.mulf %78, %111 : vector<8x128xf32>
    %113 = arith.truncf %112 : vector<8x128xf32> to vector<8x128xbf16>
    %c0_65 = arith.constant 0 : index
    %c0_66 = arith.constant 0 : index
    %114 = vector.load %arg11[%c0_65, %c0_66] : memref<128x32xbf16, #tpu.memory_space<vmem>>, vector<128x32xbf16>
    %cst_67 = arith.constant dense<0.000000e+00> : vector<8x32xf32>
    %115 = tpu.matmul %113, %114, %cst_67 {dimension_numbers = #tpu.dot_dimension_numbers<[1], [0], [0], [1], [0, 0, 1, 1], [], []>} : vector<8x128xbf16>, vector<128x32xbf16>, vector<8x32xf32> -> vector<8x32xf32>
    %c0_68 = arith.constant 0 : index
    %c0_69 = arith.constant 0 : index
    %116 = vector.load %arg12[%c0_68, %c0_69] : memref<1x32xf32, #tpu.memory_space<vmem>>, vector<1x32xf32>
    %117 = vector.broadcast %116 : vector<1x32xf32> to vector<8x32xf32>
    %118 = arith.addf %115, %117 : vector<8x32xf32>
    %c0_70 = arith.constant 0 : index
    %c5_71 = arith.constant 5 : index
    %c0_72 = arith.constant 0 : index
    %119 = vector.load %arg1[%c0_70, %c5_71, %c0_72] : memref<1x20x32xbf16, #tpu.memory_space<vmem>>, vector<1x8x32xbf16>
    %120 = vector.shape_cast %119 : vector<1x8x32xbf16> to vector<8x32xbf16>
    %121 = arith.extf %120 : vector<8x32xbf16> to vector<8x32xf32>
    %122 = arith.addf %118, %121 : vector<8x32xf32>
    %c0_73 = arith.constant 0 : index
    %c0_74 = arith.constant 0 : index
    %c0_75 = arith.constant 0 : index
    %123 = vector.load %arg13[%c0_73, %c0_74, %c0_75] : memref<1x8x32xf32, #tpu.memory_space<vmem>>, vector<1x8x32xf32>
    %124 = vector.shape_cast %123 : vector<1x8x32xf32> to vector<8x32xf32>
    %125 = vector.shape_cast %122 : vector<8x32xf32> to vector<1x8x32xf32>
    tpu.vector_store %arg13[%c0_73, %c0_74, %c0_75], %125 {strides = array<i32>} : memref<1x8x32xf32, #tpu.memory_space<vmem>>, vector<1x8x32xf32>,
    return
  }
  func.func @transform_0(%arg0: i32) -> (i32, i32, i32) {
    %c0_i32 = arith.constant 0 : i32
    %c0_i32_0 = arith.constant 0 : i32
    %c0_i32_1 = arith.constant 0 : i32
    return %arg0, %c0_i32, %c0_i32_0 : i32, i32, i32
  }
  func.func @transform_1(%arg0: i32) -> (i32, i32) {
    %c0_i32 = arith.constant 0 : i32
    %c0_i32_0 = arith.constant 0 : i32
    %c0_i32_1 = arith.constant 0 : i32
    return %c0_i32, %c0_i32_0 : i32, i32
  }
  func.func @transform_2(%arg0: i32) -> (i32, i32) {
    %c0_i32 = arith.constant 0 : i32
    %c0_i32_0 = arith.constant 0 : i32
    %c0_i32_1 = arith.constant 0 : i32
    return %c0_i32, %c0_i32_0 : i32, i32
  }
  func.func @transform_3(%arg0: i32) -> (i32, i32) {
    %c0_i32 = arith.constant 0 : i32
    %c0_i32_0 = arith.constant 0 : i32
    %c0_i32_1 = arith.constant 0 : i32
    return %c0_i32, %c0_i32_0 : i32, i32
  }
  func.func @transform_4(%arg0: i32) -> (i32, i32, i32) {
    %c0_i32 = arith.constant 0 : i32
    %c0_i32_0 = arith.constant 0 : i32
    %c0_i32_1 = arith.constant 0 : i32
    %c0_i32_2 = arith.constant 0 : i32
    return %c0_i32, %c0_i32_0, %c0_i32_1 : i32, i32, i32
  }
  func.func @transform_5(%arg0: i32) -> (i32, i32) {
    %c0_i32 = arith.constant 0 : i32
    %c0_i32_0 = arith.constant 0 : i32
    %c0_i32_1 = arith.constant 0 : i32
    return %c0_i32, %c0_i32_0 : i32, i32
  }
  func.func @transform_6(%arg0: i32) -> (i32, i32) {
    %c0_i32 = arith.constant 0 : i32
    %c0_i32_0 = arith.constant 0 : i32
    %c0_i32_1 = arith.constant 0 : i32
    return %c0_i32, %c0_i32_0 : i32, i32
  }
  func.func @transform_7(%arg0: i32) -> (i32, i32) {
    %c0_i32 = arith.constant 0 : i32
    %c0_i32_0 = arith.constant 0 : i32
    %c0_i32_1 = arith.constant 0 : i32
    return %c0_i32, %c0_i32_0 : i32, i32
  }
  func.func @transform_8(%arg0: i32) -> (i32, i32) {
    %c0_i32 = arith.constant 0 : i32
    %c0_i32_0 = arith.constant 0 : i32
    %c0_i32_1 = arith.constant 0 : i32
    return %c0_i32, %c0_i32_0 : i32, i32
  }
  func.func @transform_9(%arg0: i32) -> (i32, i32) {
    %c0_i32 = arith.constant 0 : i32
    %c0_i32_0 = arith.constant 0 : i32
    %c0_i32_1 = arith.constant 0 : i32
    return %c0_i32, %c0_i32_0 : i32, i32
  }
  func.func @transform_10(%arg0: i32) -> (i32, i32) {
    %c0_i32 = arith.constant 0 : i32
    %c0_i32_0 = arith.constant 0 : i32
    %c0_i32_1 = arith.constant 0 : i32
    return %c0_i32, %c0_i32_0 : i32, i32
  }
  func.func @transform_11(%arg0: i32) -> (i32, i32) {
    %c0_i32 = arith.constant 0 : i32
    %c0_i32_0 = arith.constant 0 : i32
    %c0_i32_1 = arith.constant 0 : i32
    return %c0_i32, %c0_i32_0 : i32, i32
  }
  func.func @transform_12(%arg0: i32) -> (i32, i32, i32) {
    %c0_i32 = arith.constant 0 : i32
    %c0_i32_0 = arith.constant 0 : i32
    %c0_i32_1 = arith.constant 0 : i32
    return %arg0, %c0_i32, %c0_i32_0 : i32, i32, i32
  }
}

</mosaic_0001>

<llo_original>
// kernel: _lambda_.5
$region0: #{_lambda_.5}
  #allocation0 [shape = 'u32[]', space=smem, size = 0x4, offset = 0x4, fixed_abs, tag = 'smem constant byte address 0x4 - core index']
  #allocation1 [shape = 'u32[72,128]{1,0:T(1,128)}', space=vmem, size = 0x9000, scoped, tag = 'internal scratch']
  %s0 = inlined_call_operand.vmem [shape: bf16[2,360,3], index: 0, kind: input, shape index: {}]
  %s1 = inlined_call_operand.vmem [shape: bf16[9,3,16], index: 1, kind: input, shape index: {}]
  %s2 = inlined_call_operand.vmem [shape: f32[1,16], index: 2, kind: input, shape index: {}]
  %s3 = inlined_call_operand.vmem [shape: f32[2,72,16], index: 3, kind: output, shape index: {}]
  %s4 = sld [smem:[#allocation0]]
  $region45: #{_lambda_.5} parent=0
    _
  %s6 = ssub.s32 1, %s4
  %s7 = scalar_select 0, %s6, %s4
  loop: start=0, step=1, limit=4
  $region2: #{_lambda_.5} parent=0 // loop_pre_header
    _
  $region3: #{_lambda_.5} parent=0 // loop_header
    %s9 = sphi 0, %s13
    %p10 = scmp.ge.s32.totalorder %s9, 4
    %s19 = sphi 0, %s21
    %s22 = sphi 0, %s19
    %s23 = sphi 0, %s22
    %s39 = sphi 0, %s23
    %s43 = sphi 0, %s43
    %s45 = sphi 0, %s43
    %s46 = sphi 0, %s45
    %s60 = sphi 0, %s46
    %s64 = sphi 0, %s64
    %s66 = sphi 0, %s64
    %s67 = sphi 0, %s66
    %s81 = sphi 0, %s67
    %s87 = sphi 0, %s89
    %s90 = sphi 0, %s87
    %s91 = sphi 0, %s90
    %s107 = sphi 0, %s91
  $region4: #{_lambda_.5} parent=0 // loop_header_branch
    %12 = sbr.rel (%p10) target = $region8
  $region5: #{_lambda_.5} parent=0 // loop_body
    %s14 = ssub.s32 %s9, 1
    %s15 = ssub.s32 %s9, 2
    %s16 = sadd.s32 %s9, 1
    %s17 = ssub.s32 %s9, %s16
    %p18 = scmp.eq.s32.totalorder %s17, 0
    %s20 = sadd.s32 %s19, 1
    %s21 = scalar_select %p18, %s19, %s20
    %p24 = pneg %p18
    %p25 = scmp.eq.s32.totalorder %s9, 1
    %p26 = por %p24, %p25
    %p27 = scmp.ne.s32.totalorder %s19, %s22
    %p28 = scmp.eq.s32.totalorder %s9, 0
    %p29 = por %p27, %p28
    %p30 = scmp.ne.s32.totalorder %s19, %s22
    %p31 = scmp.eq.s32.totalorder %s14, 1
    %p32 = por %p30, %p31
    %p33 = scmp.ne.s32.totalorder %s22, %s23
    %p34 = scmp.eq.s32.totalorder %s14, 0
    %p35 = por %p33, %p34
    %p36 = scmp.ne.s32.totalorder %s22, %s23
    %p37 = scmp.eq.s32.totalorder %s15, 1
    %p38 = por %p36, %p37
    %p40 = scmp.ne.s32.totalorder %s23, %s39
    %p41 = scmp.eq.s32.totalorder %s15, 0
    %p42 = por %p40, %p41
    %s44 = sadd.s32 %s43, 1
    %p47 = scmp.eq.s32.totalorder %s9, 1
    %p48 = scmp.ne.s32.totalorder %s43, %s45
    %p49 = scmp.eq.s32.totalorder %s9, 0
    %p50 = por %p48, %p49
    %p51 = scmp.ne.s32.totalorder %s43, %s45
    %p52 = scmp.eq.s32.totalorder %s14, 1
    %p53 = por %p51, %p52
    %p54 = scmp.ne.s32.totalorder %s45, %s46
    %p55 = scmp.eq.s32.totalorder %s14, 0
    %p56 = por %p54, %p55
    %p57 = scmp.ne.s32.totalorder %s45, %s46
    %p58 = scmp.eq.s32.totalorder %s15, 1
    %p59 = por %p57, %p58
    %p61 = scmp.ne.s32.totalorder %s46, %s60
    %p62 = scmp.eq.s32.totalorder %s15, 0
    %p63 = por %p61, %p62
    %s65 = sadd.s32 %s64, 1
    %p68 = scmp.eq.s32.totalorder %s9, 1
    %p69 = scmp.ne.s32.totalorder %s64, %s66
    %p70 = scmp.eq.s32.totalorder %s9, 0
    %p71 = por %p69, %p70
    %p72 = scmp.ne.s32.totalorder %s64, %s66
    %p73 = scmp.eq.s32.totalorder %s14, 1
    %p74 = por %p72, %p73
    %p75 = scmp.ne.s32.totalorder %s66, %s67
    %p76 = scmp.eq.s32.totalorder %s14, 0
    %p77 = por %p75, %p76
    %p78 = scmp.ne.s32.totalorder %s66, %s67
    %p79 = scmp.eq.s32.totalorder %s15, 1
    %p80 = por %p78, %p79
    %p82 = scmp.ne.s32.totalorder %s67, %s81
    %p83 = scmp.eq.s32.totalorder %s15, 0
    %p84 = por %p82, %p83
    %s85 = ssub.s32 %s9, %s16
    %p86 = scmp.eq.s32.totalorder %s85, 0
    %s88 = sadd.s32 %s87, 1
    %s89 = scalar_select %p86, %s87, %s88
    %p92 = pneg %p86
    %p93 = scmp.eq.s32.totalorder %s9, 1
    %p94 = por %p92, %p93
    %p95 = scmp.ne.s32.totalorder %s87, %s90
    %p96 = scmp.eq.s32.totalorder %s9, 0
    %p97 = por %p95, %p96
    %p98 = scmp.ne.s32.totalorder %s87, %s90
    %p99 = scmp.eq.s32.totalorder %s14, 1
    %p100 = por %p98, %p99
    %p101 = scmp.ne.s32.totalorder %s90, %s91
    %p102 = scmp.eq.s32.totalorder %s14, 0
    %p103 = por %p101, %p102
    %p104 = scmp.ne.s32.totalorder %s90, %s91
    %p105 = scmp.eq.s32.totalorder %s15, 1
    %p106 = por %p104, %p105
    %p108 = scmp.ne.s32.totalorder %s91, %s107
    %p109 = scmp.eq.s32.totalorder %s15, 0
    %p110 = por %p108, %p109
    %p111 = scmp.le.s32.totalorder 1, %s9
    %p112 = scmp.lt.s32.totalorder %s9, 3
    %p113 = pnand %p111, %p112
    %p114 = pneg %p113
    // Predicated region
    $region9: #{_lambda_.5} parent=5 // pred_check
      _
    $region10: #{_lambda_.5} parent=5 // pred_check_branch
      %116 = sbr.rel (%p113) target = $region12
    $region11: #{_lambda_.5} parent=5 // pred_region
      %s117 = ssub.s32 %s9, 1
      // Predicated region
      $region13: #{_lambda_.5} parent=11 // pred_check
        %p118 = pneg %p56
      $region14: #{_lambda_.5} parent=11 // pred_check_branch
        %120 = sbr.rel (%p118) target = $region16
      $region15: #{_lambda_.5} parent=11 // pred_region
        _
      $region16: #{_lambda_.5} parent=11 // pred_fallthru
        _
      // Predicated region
      $region17: #{_lambda_.5} parent=11 // pred_check
        %p121 = pneg %p77
      $region18: #{_lambda_.5} parent=11 // pred_check_branch
        %123 = sbr.rel (%p121) target = $region20
      $region19: #{_lambda_.5} parent=11 // pred_region
        _
      $region20: #{_lambda_.5} parent=11 // pred_fallthru
        _
    $region12: #{_lambda_.5} parent=5 // pred_fallthru
      _
    %p124 = scmp.lt.s32.totalorder %s9, 2
    // Predicated region
    $region21: #{_lambda_.5} parent=5 // pred_check
      %p125 = pneg %p124
    $region22: #{_lambda_.5} parent=5 // pred_check_branch
      %127 = sbr.rel (%p125) target = $region24
    $region23: #{_lambda_.5} parent=5 // pred_region
      // Predicated region
      $region25: #{_lambda_.5} parent=23 // pred_check
        %p128 = pneg %p29
      $region26: #{_lambda_.5} parent=23 // pred_check_branch
        %130 = sbr.rel (%p128) target = $region28
      $region27: #{_lambda_.5} parent=23 // pred_region
        %p131 = scmp.lt.s32.totalorder %s9, 1
        %s132 = scalar_select %p131, %s9, 1
        %s133 = smul.addr %s132, 45
        %s134 = smul.addr %s133, 4
        %s135 = scalar_lea.vmem %s0, %s134
      $region28: #{_lambda_.5} parent=23 // pred_fallthru
        _
    $region24: #{_lambda_.5} parent=5 // pred_fallthru
      _
    %p136 = scmp.le.s32.totalorder 1, %s9
    %p137 = scmp.lt.s32.totalorder %s9, 3
    %p138 = pnand %p136, %p137
    %p139 = pneg %p138
    // Predicated region
    $region29: #{_lambda_.5} parent=5 // pred_check
      _
    $region30: #{_lambda_.5} parent=5 // pred_check_branch
      %141 = sbr.rel (%p138) target = $region32
    $region31: #{_lambda_.5} parent=5 // pred_region
      %s142 = ssub.s32 %s9, 1
      %p143 = scmp.lt.s32.totalorder %s14, 1
      %s144 = scalar_select %p143, %s14, 1
      %s145 = smul.addr %s144, 45
      %s146 = smul.addr %s145, 4
      %s147 = scalar_lea.vmem %s0, %s146
      %p148 = pneg %p35
      %p149 = pneg %p32
      %p150 = pneg %p56
      %p151 = pneg %p53
      %p152 = pneg %p77
      %p153 = pneg %p74
      %p154 = pneg %p103
      %p155 = pneg %p100
      %p156 = scmp.lt.s32.totalorder %s14, 1
      %s157 = scalar_select %p156, %s14, 1
      %s158 = smul.addr %s157, 9
      %s159 = smul.addr %s158, 8
      %s160 = scalar_lea.vmem %s3, %s159
      %p161 = scmp.lt.s32.totalorder %s14, 1
      %s162 = scalar_select %p161, %s14, 1
      %s163 = smul.addr %s162, 45
      %s164 = smul.addr %s163, 4
      %s165 = scalar_lea.vmem %s0, %s164
      %p166 = scmp.lt.s32.totalorder %s14, 1
      %s167 = scalar_select %p166, %s14, 1
      %s168 = smul.addr %s167, 9
      %s169 = smul.addr %s168, 8
      %s170 = scalar_lea.vmem %s3, %s169
      %v172 = vld [vmem:[%s165] sm:$0xf]
      %v173 = vld [vmem:[%s165 + $0x4] sm:$0xf]
      %v174 = vld [vmem:[%s165 + $0x8] sm:$0xf]
      %v175 = vld [vmem:[%s165 + $0xc] sm:$0xf]
      %v176 = vld [vmem:[%s165 + $0x10] sm:$0xf]
      %v177 = vld [vmem:[%s165 + $0x14] sm:$0xf]
      %v178 = vld [vmem:[%s165 + $0x18] sm:$0xf]
      %v179 = vld [vmem:[%s165 + $0x1c] sm:$0xf]
      %v180 = vld [vmem:[%s165 + $0x20] sm:$0xf]
      %v181 = vld [vmem:[%s1] sm:$0x3]
      %v182 = vld [vmem:[%s165 + $0x2c] sm:$0xe]
      %v183 = vld [vmem:[%s165 + $0x30] sm:$0xf]
      %v184 = vld [vmem:[%s165 + $0x34] sm:$0xf]
      %v185 = vld [vmem:[%s165 + $0x38] sm:$0xf]
      %v186 = vld [vmem:[%s165 + $0x3c] sm:$0xf]
      %v187 = vld [vmem:[%s165 + $0x40] sm:$0xf]
      %v188 = vld [vmem:[%s165 + $0x44] sm:$0xf]
      %v189 = vld [vmem:[%s165 + $0x48] sm:$0xf]
      %v190 = vld [vmem:[%s165 + $0x4c] sm:$0xf]
      %v191 = vld [vmem:[%s165 + $0x50] sm:$0x1]
      %s192 = scalar_lea.vmem %s1, 2
      %v193 = vld [vmem:[%s192] sm:$0x3]
      %v204 = vunpack.c.l.b16 %v182
      %v205 = vunpack.c.l.b16 %v183
      %v206 = vunpack.c.l.b16 %v184
      %v207 = vunpack.c.l.b16 %v185
      %v208 = vunpack.c.l.b16 %v186
      %v209 = vunpack.c.l.b16 %v187
      %v210 = vunpack.c.l.b16 %v188
      %v211 = vunpack.c.l.b16 %v189
      %v212 = vunpack.c.l.b16 %v190
      %v213 = vunpack.c.l.b16 %v191
      %v214 = vpack.c.b16 %v205, %v204
      %v215 = vpack.c.b16 %v207, %v206
      %v216 = vpack.c.b16 %v209, %v208
      %v217 = vpack.c.b16 %v211, %v210
      %v218 = vpack.c.b16 %v213, %v212
      %vm219 = vcmask 1046528
      %v220 = vrot.slane %v214, 1
      %v221 = vrot.slane %v215, 1
      %v222 = vsel %vm219, %v220, %v221
      %v223 = vrot.slane %v216, 1
      %v224 = vsel %vm219, %v221, %v223
      %v225 = vrot.slane %v217, 1
      %v226 = vsel %vm219, %v223, %v225
      %v227 = vrot.slane %v218, 1
      %v228 = vsel %vm219, %v225, %v227
      %vm229 = vcmask 23552
      %v231 = vsel %vm229, %v222, 0
      %v234 = vsel %vm229, %v224, 0
      %v237 = vsel %vm229, %v226, 0
      %v240 = vsel %vm229, %v228, 0
      %v243 = vsel %vm229, %v227, 0
      %vm245 = vcmask 1040384
      %vm246 = vcmask 1041408
      %v247 = vsel %vm245, 4294967295, 65535
      %v248 = vsel %vm246, %v247, 0
      %v250 = vand.u32 %v193, %v248
      %252 = vmatpush.bf16.msra.mxu0 0
      %253 = vmatpush.bf16.msra.mxu0 0
      %254 = vmatpush.bf16.msra.mxu0 0
      %255 = vmatpush.bf16.msra.mxu0 0
      %256 = vmatpush.bf16.msra.mxu0 0
      %257 = vmatpush.bf16.msra.mxu0 0
      %258 = vmatpush.bf16.msra.mxu0 0
      %259 = vmatpush.bf16.msra.mxu0 %v250
      %260 = vmatmul.bf16.gmra.mxu0 %v231
      %v261 = vpop.f32.mrf.mxu0
      %v262 = vadd.f32 0.0, %v261
      %v263 = vpop.f32.mrf.mxu0
      %v264 = vadd.f32 0.0, %v263
      %265 = vmatmul.bf16.gmra.mxu0 %v234
      %v266 = vpop.f32.mrf.mxu0
      %v267 = vadd.f32 0.0, %v266
      %v268 = vpop.f32.mrf.mxu0
      %v269 = vadd.f32 0.0, %v268
      %270 = vmatmul.bf16.gmra.mxu0 %v237
      %v271 = vpop.f32.mrf.mxu0
      %v272 = vadd.f32 0.0, %v271
      %v273 = vpop.f32.mrf.mxu0
      %v274 = vadd.f32 0.0, %v273
      %275 = vmatmul.bf16.gmra.mxu0 %v240
      %v276 = vpop.f32.mrf.mxu0
      %v277 = vadd.f32 0.0, %v276
      %v278 = vpop.f32.mrf.mxu0
      %v279 = vadd.f32 0.0, %v278
      %280 = vmatmul.bf16.gmra.mxu0 %v243
      %v281 = vpop.f32.mrf.mxu0
      %v282 = vadd.f32 0.0, %v281
      %v283 = vpop.f32.mrf.mxu0
      %284 = vdwg.mxu0
      %v294 = vunpack.c.l.b16 %v172
      %v295 = vunpack.c.l.b16 %v173
      %v296 = vunpack.c.l.b16 %v174
      %v297 = vunpack.c.l.b16 %v175
      %v298 = vunpack.c.l.b16 %v176
      %v299 = vunpack.c.l.b16 %v177
      %v300 = vunpack.c.l.b16 %v178
      %v301 = vunpack.c.l.b16 %v179
      %v302 = vunpack.c.l.b16 %v180
      %v303 = vpack.c.b16 %v295, %v294
      %v304 = vpack.c.b16 %v297, %v296
      %v305 = vpack.c.b16 %v299, %v298
      %v306 = vpack.c.b16 %v301, %v300
      %v307 = vpack.c.b16 %v302, %v302
      %v309 = vsel %vm229, %v303, 0
      %v312 = vsel %vm229, %v304, 0
      %v315 = vsel %vm229, %v305, 0
      %v318 = vsel %vm229, %v306, 0
      %v321 = vsel %vm229, %v307, 0
      %v324 = vand.u32 %v181, %v248
      %326 = vmatpush.bf16.msra.mxu0 0
      %327 = vmatpush.bf16.msra.mxu0 0
      %328 = vmatpush.bf16.msra.mxu0 0
      %329 = vmatpush.bf16.msra.mxu0 0
      %330 = vmatpush.bf16.msra.mxu0 0
      %331 = vmatpush.bf16.msra.mxu0 0
      %332 = vmatpush.bf16.msra.mxu0 0
      %333 = vmatpush.bf16.msra.mxu0 %v324
      %334 = vmatmul.bf16.gmra.mxu0 %v309
      %v335 = vpop.f32.mrf.mxu0
      %v336 = vadd.f32 %v262, %v335
      %v337 = vpop.f32.mrf.mxu0
      %v338 = vadd.f32 %v264, %v337
      %339 = vmatmul.bf16.gmra.mxu0 %v312
      %v340 = vpop.f32.mrf.mxu0
      %v341 = vadd.f32 %v267, %v340
      %v342 = vpop.f32.mrf.mxu0
      %v343 = vadd.f32 %v269, %v342
      %344 = vmatmul.bf16.gmra.mxu0 %v315
      %v345 = vpop.f32.mrf.mxu0
      %v346 = vadd.f32 %v272, %v345
      %v347 = vpop.f32.mrf.mxu0
      %v348 = vadd.f32 %v274, %v347
      %349 = vmatmul.bf16.gmra.mxu0 %v318
      %v350 = vpop.f32.mrf.mxu0
      %v351 = vadd.f32 %v277, %v350
      %v352 = vpop.f32.mrf.mxu0
      %v353 = vadd.f32 %v279, %v352
      %354 = vmatmul.bf16.gmra.mxu0 %v321
      %v355 = vpop.f32.mrf.mxu0
      %v356 = vadd.f32 %v282, %v355
      %v357 = vpop.f32.mrf.mxu0
      %358 = vdwg.mxu0
      %v359 = vld [vmem:[%s165] sm:$0xf]
      %v360 = vld [vmem:[%s165 + $0x4] sm:$0xf]
      %v361 = vld [vmem:[%s165 + $0x8] sm:$0xf]
      %v362 = vld [vmem:[%s165 + $0xc] sm:$0xf]
      %v363 = vld [vmem:[%s165 + $0x10] sm:$0xf]
      %v364 = vld [vmem:[%s165 + $0x14] sm:$0xf]
      %v365 = vld [vmem:[%s165 + $0x18] sm:$0xf]
      %v366 = vld [vmem:[%s165 + $0x1c] sm:$0xf]
      %v367 = vld [vmem:[%s165 + $0x20] sm:$0xf]
      %v368 = vld [vmem:[%s165 + $0x24] sm:$0x1]
      %s369 = scalar_lea.vmem %s1, 4
      %v370 = vld [vmem:[%s369] sm:$0x3]
      %v381 = vunpack.c.l.b16 %v359
      %v382 = vunpack.c.l.b16 %v360
      %v383 = vunpack.c.l.b16 %v361
      %v384 = vunpack.c.l.b16 %v362
      %v385 = vunpack.c.l.b16 %v363
      %v386 = vunpack.c.l.b16 %v364
      %v387 = vunpack.c.l.b16 %v365
      %v388 = vunpack.c.l.b16 %v366
      %v389 = vunpack.c.l.b16 %v367
      %v390 = vunpack.c.l.b16 %v368
      %v391 = vpack.c.b16 %v382, %v381
      %v392 = vpack.c.b16 %v384, %v383
      %v393 = vpack.c.b16 %v386, %v385
      %v394 = vpack.c.b16 %v388, %v387
      %v395 = vpack.c.b16 %v390, %v389
      %vm396 = vsmask.f32 7424
      %v398 = vshrl.u32 %v391, 16
      %v400 = vshll.u32 %v391, 16
      %v402 = vrot.slane %v400, 1
      %v403 = vor.u32 %v398, %v402
      %v405 = vshll.u32 %v392, 16
      %v407 = vrot.slane %v405, 1
      %v408 = vsel %vm396, %v403, %v407
      %v409 = vshrl.u32 %v392, 16
      %v411 = vor.u32 %v409, %v407
      %v413 = vshll.u32 %v393, 16
      %v415 = vrot.slane %v413, 1
      %v416 = vsel %vm396, %v411, %v415
      %v417 = vshrl.u32 %v393, 16
      %v419 = vor.u32 %v417, %v415
      %v421 = vshll.u32 %v394, 16
      %v423 = vrot.slane %v421, 1
      %v424 = vsel %vm396, %v419, %v423
      %v425 = vshrl.u32 %v394, 16
      %v427 = vor.u32 %v425, %v423
      %v429 = vshll.u32 %v395, 16
      %v431 = vrot.slane %v429, 1
      %v432 = vsel %vm396, %v427, %v431
      %v433 = vshrl.u32 %v395, 16
      %v435 = vor.u32 %v433, %v431
      %v437 = vsel %vm229, %v408, 0
      %v440 = vsel %vm229, %v416, 0
      %v443 = vsel %vm229, %v424, 0
      %v446 = vsel %vm229, %v432, 0
      %v449 = vsel %vm229, %v435, 0
      %v452 = vand.u32 %v370, %v248
      %454 = vmatpush.bf16.msra.mxu0 0
      %455 = vmatpush.bf16.msra.mxu0 0
      %456 = vmatpush.bf16.msra.mxu0 0
      %457 = vmatpush.bf16.msra.mxu0 0
      %458 = vmatpush.bf16.msra.mxu0 0
      %459 = vmatpush.bf16.msra.mxu0 0
      %460 = vmatpush.bf16.msra.mxu0 0
      %461 = vmatpush.bf16.msra.mxu0 %v452
      %462 = vmatmul.bf16.gmra.mxu0 %v437
      %v463 = vpop.f32.mrf.mxu0
      %v464 = vadd.f32 0.0, %v463
      %v465 = vpop.f32.mrf.mxu0
      %v466 = vadd.f32 0.0, %v465
      %467 = vmatmul.bf16.gmra.mxu0 %v440
      %v468 = vpop.f32.mrf.mxu0
      %v469 = vadd.f32 0.0, %v468
      %v470 = vpop.f32.mrf.mxu0
      %v471 = vadd.f32 0.0, %v470
      %472 = vmatmul.bf16.gmra.mxu0 %v443
      %v473 = vpop.f32.mrf.mxu0
      %v474 = vadd.f32 0.0, %v473
      %v475 = vpop.f32.mrf.mxu0
      %v476 = vadd.f32 0.0, %v475
      %477 = vmatmul.bf16.gmra.mxu0 %v446
      %v478 = vpop.f32.mrf.mxu0
      %v479 = vadd.f32 0.0, %v478
      %v480 = vpop.f32.mrf.mxu0
      %v481 = vadd.f32 0.0, %v480
      %482 = vmatmul.bf16.gmra.mxu0 %v449
      %v483 = vpop.f32.mrf.mxu0
      %v484 = vadd.f32 0.0, %v483
      %v485 = vpop.f32.mrf.mxu0
      %486 = vdwg.mxu0
      %v487 = vadd.f32 %v336, %v464
      %v488 = vadd.f32 %v338, %v466
      %v489 = vadd.f32 %v341, %v469
      %v490 = vadd.f32 %v343, %v471
      %v491 = vadd.f32 %v346, %v474
      %v492 = vadd.f32 %v348, %v476
      %v493 = vadd.f32 %v351, %v479
      %v494 = vadd.f32 %v353, %v481
      %v495 = vadd.f32 %v356, %v484
      %v496 = vld [vmem:[%s165 + $0x58] sm:$0xc]
      %v497 = vld [vmem:[%s165 + $0x5c] sm:$0xf]
      %v498 = vld [vmem:[%s165 + $0x60] sm:$0xf]
      %v499 = vld [vmem:[%s165 + $0x64] sm:$0xf]
      %v500 = vld [vmem:[%s165 + $0x68] sm:$0xf]
      %v501 = vld [vmem:[%s165 + $0x6c] sm:$0xf]
      %v502 = vld [vmem:[%s165 + $0x70] sm:$0xf]
      %v503 = vld [vmem:[%s165 + $0x74] sm:$0xf]
      %v504 = vld [vmem:[%s165 + $0x78] sm:$0xf]
      %v505 = vld [vmem:[%s165 + $0x7c] sm:$0x3]
      %s506 = scalar_lea.vmem %s1, 6
      %v507 = vld [vmem:[%s506] sm:$0x3]
      %v518 = vunpack.c.l.b16 %v496
      %v519 = vunpack.c.l.b16 %v497
      %v520 = vunpack.c.l.b16 %v498
      %v521 = vunpack.c.l.b16 %v499
      %v522 = vunpack.c.l.b16 %v500
      %v523 = vunpack.c.l.b16 %v501
      %v524 = vunpack.c.l.b16 %v502
      %v525 = vunpack.c.l.b16 %v503
      %v526 = vunpack.c.l.b16 %v504
      %v527 = vunpack.c.l.b16 %v505
      %v528 = vpack.c.b16 %v519, %v518
      %v529 = vpack.c.b16 %v521, %v520
      %v530 = vpack.c.b16 %v523, %v522
      %v531 = vpack.c.b16 %v525, %v524
      %v532 = vpack.c.b16 %v527, %v526
      %vm533 = vcmask 1045504
      %v534 = vrot.slane %v528, 2
      %v535 = vrot.slane %v529, 2
      %v536 = vsel %vm533, %v534, %v535
      %v537 = vrot.slane %v530, 2
      %v538 = vsel %vm533, %v535, %v537
      %v539 = vrot.slane %v531, 2
      %v540 = vsel %vm533, %v537, %v539
      %v541 = vrot.slane %v532, 2
      %v542 = vsel %vm533, %v539, %v541
      %v544 = vsel %vm229, %v536, 0
      %v547 = vsel %vm229, %v538, 0
      %v550 = vsel %vm229, %v540, 0
      %v553 = vsel %vm229, %v542, 0
      %v556 = vsel %vm229, %v541, 0
      %v559 = vand.u32 %v507, %v248
      %561 = vmatpush.bf16.msra.mxu0 0
      %562 = vmatpush.bf16.msra.mxu0 0
      %563 = vmatpush.bf16.msra.mxu0 0
      %564 = vmatpush.bf16.msra.mxu0 0
      %565 = vmatpush.bf16.msra.mxu0 0
      %566 = vmatpush.bf16.msra.mxu0 0
      %567 = vmatpush.bf16.msra.mxu0 0
      %568 = vmatpush.bf16.msra.mxu0 %v559
      %569 = vmatmul.bf16.gmra.mxu0 %v544
      %v570 = vpop.f32.mrf.mxu0
      %v571 = vadd.f32 0.0, %v570
      %v572 = vpop.f32.mrf.mxu0
      %v573 = vadd.f32 0.0, %v572
      %574 = vmatmul.bf16.gmra.mxu0 %v547
      %v575 = vpop.f32.mrf.mxu0
      %v576 = vadd.f32 0.0, %v575
      %v577 = vpop.f32.mrf.mxu0
      %v578 = vadd.f32 0.0, %v577
      %579 = vmatmul.bf16.gmra.mxu0 %v550
      %v580 = vpop.f32.mrf.mxu0
      %v581 = vadd.f32 0.0, %v580
      %v582 = vpop.f32.mrf.mxu0
      %v583 = vadd.f32 0.0, %v582
      %584 = vmatmul.bf16.gmra.mxu0 %v553
      %v585 = vpop.f32.mrf.mxu0
      %v586 = vadd.f32 0.0, %v585
      %v587 = vpop.f32.mrf.mxu0
      %v588 = vadd.f32 0.0, %v587
      %589 = vmatmul.bf16.gmra.mxu0 %v556
      %v590 = vpop.f32.mrf.mxu0
      %v591 = vadd.f32 0.0, %v590
      %v592 = vpop.f32.mrf.mxu0
      %593 = vdwg.mxu0
      %v594 = vadd.f32 %v487, %v571
      %v595 = vadd.f32 %v488, %v573
      %v596 = vadd.f32 %v489, %v576
      %v597 = vadd.f32 %v490, %v578
      %v598 = vadd.f32 %v491, %v581
      %v599 = vadd.f32 %v492, %v583
      %v600 = vadd.f32 %v493, %v586
      %v601 = vadd.f32 %v494, %v588
      %v602 = vadd.f32 %v495, %v591
      %v603 = vld [vmem:[%s165 + $0x84] sm:$0x8]
      %v604 = vld [vmem:[%s165 + $0x88] sm:$0xf]
      %v605 = vld [vmem:[%s165 + $0x8c] sm:$0xf]
      %v606 = vld [vmem:[%s165 + $0x90] sm:$0xf]
      %v607 = vld [vmem:[%s165 + $0x94] sm:$0xf]
      %v608 = vld [vmem:[%s165 + $0x98] sm:$0xf]
      %v609 = vld [vmem:[%s165 + $0x9c] sm:$0xf]
      %v610 = vld [vmem:[%s165 + $0xa0] sm:$0xf]
      %v611 = vld [vmem:[%s165 + $0xa4] sm:$0xf]
      %v612 = vld [vmem:[%s165 + $0xa8] sm:$0x7]
      %s613 = scalar_lea.vmem %s1, 8
      %v614 = vld [vmem:[%s613] sm:$0x3]
      %v625 = vunpack.c.l.b16 %v603
      %v626 = vunpack.c.l.b16 %v604
      %v627 = vunpack.c.l.b16 %v605
      %v628 = vunpack.c.l.b16 %v606
      %v629 = vunpack.c.l.b16 %v607
      %v630 = vunpack.c.l.b16 %v608
      %v631 = vunpack.c.l.b16 %v609
      %v632 = vunpack.c.l.b16 %v610
      %v633 = vunpack.c.l.b16 %v611
      %v634 = vunpack.c.l.b16 %v612
      %v635 = vpack.c.b16 %v626, %v625
      %v636 = vpack.c.b16 %v628, %v627
      %v637 = vpack.c.b16 %v630, %v629
      %v638 = vpack.c.b16 %v632, %v631
      %v639 = vpack.c.b16 %v634, %v633
      %vm640 = vcmask 1044480
      %v641 = vrot.slane %v635, 3
      %v642 = vrot.slane %v636, 3
      %v643 = vsel %vm640, %v641, %v642
      %v644 = vrot.slane %v637, 3
      %v645 = vsel %vm640, %v642, %v644
      %v646 = vrot.slane %v638, 3
      %v647 = vsel %vm640, %v644, %v646
      %v648 = vrot.slane %v639, 3
      %v649 = vsel %vm640, %v646, %v648
      %v651 = vsel %vm229, %v643, 0
      %v654 = vsel %vm229, %v645, 0
      %v657 = vsel %vm229, %v647, 0
      %v660 = vsel %vm229, %v649, 0
      %v663 = vsel %vm229, %v648, 0
      %v666 = vand.u32 %v614, %v248
      %668 = vmatpush.bf16.msra.mxu0 0
      %669 = vmatpush.bf16.msra.mxu0 0
      %670 = vmatpush.bf16.msra.mxu0 0
      %671 = vmatpush.bf16.msra.mxu0 0
      %672 = vmatpush.bf16.msra.mxu0 0
      %673 = vmatpush.bf16.msra.mxu0 0
      %674 = vmatpush.bf16.msra.mxu0 0
      %675 = vmatpush.bf16.msra.mxu0 %v666
      %676 = vmatmul.bf16.gmra.mxu0 %v651
      %v677 = vpop.f32.mrf.mxu0
      %v678 = vadd.f32 0.0, %v677
      %v679 = vpop.f32.mrf.mxu0
      %v680 = vadd.f32 0.0, %v679
      %681 = vmatmul.bf16.gmra.mxu0 %v654
      %v682 = vpop.f32.mrf.mxu0
      %v683 = vadd.f32 0.0, %v682
      %v684 = vpop.f32.mrf.mxu0
      %v685 = vadd.f32 0.0, %v684
      %686 = vmatmul.bf16.gmra.mxu0 %v657
      %v687 = vpop.f32.mrf.mxu0
      %v688 = vadd.f32 0.0, %v687
      %v689 = vpop.f32.mrf.mxu0
      %v690 = vadd.f32 0.0, %v689
      %691 = vmatmul.bf16.gmra.mxu0 %v660
      %v692 = vpop.f32.mrf.mxu0
      %v693 = vadd.f32 0.0, %v692
      %v694 = vpop.f32.mrf.mxu0
      %v695 = vadd.f32 0.0, %v694
      %696 = vmatmul.bf16.gmra.mxu0 %v663
      %v697 = vpop.f32.mrf.mxu0
      %v698 = vadd.f32 0.0, %v697
      %v699 = vpop.f32.mrf.mxu0
      %700 = vdwg.mxu0
      %v701 = vadd.f32 %v594, %v678
      %v702 = vadd.f32 %v595, %v680
      %v703 = vadd.f32 %v596, %v683
      %v704 = vadd.f32 %v597, %v685
      %v705 = vadd.f32 %v598, %v688
      %v706 = vadd.f32 %v599, %v690
      %v707 = vadd.f32 %v600, %v693
      %v708 = vadd.f32 %v601, %v695
      %v709 = vadd.f32 %v602, %v698
      %v710 = vld [vmem:[%s165 + $0x7c] sm:$0x7]
      %s711 = scalar_lea.vmem %s1, 10
      %v712 = vld [vmem:[%s711] sm:$0x3]
      %v714 = vunpack.c.l.b16 %v710
      %v715 = vpack.c.b16 %v714, %v526
      %vm716 = vsmask.f32 5376
      %v718 = vshrl.u32 %v528, 16
      %v720 = vrot.slane %v718, 2
      %v721 = vshll.u32 %v528, 16
      %v723 = vrot.slane %v721, 3
      %v724 = vor.u32 %v720, %v723
      %v726 = vshrl.u32 %v529, 16
      %v728 = vrot.slane %v726, 2
      %v729 = vshll.u32 %v529, 16
      %v731 = vrot.slane %v729, 3
      %v732 = vor.u32 %v728, %v731
      %v733 = vsel %vm716, %v724, %v732
      %v735 = vshrl.u32 %v530, 16
      %v737 = vrot.slane %v735, 2
      %v738 = vshll.u32 %v530, 16
      %v740 = vrot.slane %v738, 3
      %v741 = vor.u32 %v737, %v740
      %v742 = vsel %vm716, %v732, %v741
      %v744 = vshrl.u32 %v531, 16
      %v746 = vrot.slane %v744, 2
      %v747 = vshll.u32 %v531, 16
      %v749 = vrot.slane %v747, 3
      %v750 = vor.u32 %v746, %v749
      %v751 = vsel %vm716, %v741, %v750
      %v753 = vshrl.u32 %v715, 16
      %v755 = vrot.slane %v753, 2
      %v756 = vshll.u32 %v715, 16
      %v758 = vrot.slane %v756, 3
      %v759 = vor.u32 %v755, %v758
      %v760 = vsel %vm716, %v750, %v759
      %v762 = vsel %vm229, %v733, 0
      %v765 = vsel %vm229, %v742, 0
      %v768 = vsel %vm229, %v751, 0
      %v771 = vsel %vm229, %v760, 0
      %v774 = vsel %vm229, %v759, 0
      %v777 = vand.u32 %v712, %v248
      %779 = vmatpush.bf16.msra.mxu0 0
      %780 = vmatpush.bf16.msra.mxu0 0
      %781 = vmatpush.bf16.msra.mxu0 0
      %782 = vmatpush.bf16.msra.mxu0 0
      %783 = vmatpush.bf16.msra.mxu0 0
      %784 = vmatpush.bf16.msra.mxu0 0
      %785 = vmatpush.bf16.msra.mxu0 0
      %786 = vmatpush.bf16.msra.mxu0 %v777
      %787 = vmatmul.bf16.gmra.mxu0 %v762
      %v788 = vpop.f32.mrf.mxu0
      %v789 = vadd.f32 0.0, %v788
      %v790 = vpop.f32.mrf.mxu0
      %v791 = vadd.f32 0.0, %v790
      %792 = vmatmul.bf16.gmra.mxu0 %v765
      %v793 = vpop.f32.mrf.mxu0
      %v794 = vadd.f32 0.0, %v793
      %v795 = vpop.f32.mrf.mxu0
      %v796 = vadd.f32 0.0, %v795
      %797 = vmatmul.bf16.gmra.mxu0 %v768
      %v798 = vpop.f32.mrf.mxu0
      %v799 = vadd.f32 0.0, %v798
      %v800 = vpop.f32.mrf.mxu0
      %v801 = vadd.f32 0.0, %v800
      %802 = vmatmul.bf16.gmra.mxu0 %v771
      %v803 = vpop.f32.mrf.mxu0
      %v804 = vadd.f32 0.0, %v803
      %v805 = vpop.f32.mrf.mxu0
      %v806 = vadd.f32 0.0, %v805
      %807 = vmatmul.bf16.gmra.mxu0 %v774
      %v808 = vpop.f32.mrf.mxu0
      %v809 = vadd.f32 0.0, %v808
      %v810 = vpop.f32.mrf.mxu0
      %811 = vdwg.mxu0
      %v812 = vadd.f32 %v701, %v789
      %v813 = vadd.f32 %v702, %v791
      %v814 = vadd.f32 %v703, %v794
      %v815 = vadd.f32 %v704, %v796
      %v816 = vadd.f32 %v705, %v799
      %v817 = vadd.f32 %v706, %v801
      %v818 = vadd.f32 %v707, %v804
      %v819 = vadd.f32 %v708, %v806
      %v820 = vadd.f32 %v709, %v809
      %v821 = vld [vmem:[%s165 + $0x4] sm:$0xf]
      %v822 = vld [vmem:[%s165 + $0x8] sm:$0xf]
      %v823 = vld [vmem:[%s165 + $0xc] sm:$0xf]
      %v824 = vld [vmem:[%s165 + $0x10] sm:$0xf]
      %v825 = vld [vmem:[%s165 + $0x14] sm:$0xf]
      %v826 = vld [vmem:[%s165 + $0x18] sm:$0xf]
      %v827 = vld [vmem:[%s165 + $0x1c] sm:$0xf]
      %v828 = vld [vmem:[%s165 + $0x20] sm:$0xf]
      %v829 = vld [vmem:[%s165 + $0x24] sm:$0xf]
      %v830 = vld [vmem:[%s165 + $0x28] sm:$0x1]
      %s831 = scalar_lea.vmem %s1, 12
      %v832 = vld [vmem:[%s831] sm:$0x3]
      %v843 = vunpack.c.l.b16 %v821
      %v844 = vunpack.c.l.b16 %v822
      %v845 = vunpack.c.l.b16 %v823
      %v846 = vunpack.c.l.b16 %v824
      %v847 = vunpack.c.l.b16 %v825
      %v848 = vunpack.c.l.b16 %v826
      %v849 = vunpack.c.l.b16 %v827
      %v850 = vunpack.c.l.b16 %v828
      %v851 = vunpack.c.l.b16 %v829
      %v852 = vunpack.c.l.b16 %v830
      %v853 = vpack.c.b16 %v844, %v843
      %v854 = vpack.c.b16 %v846, %v845
      %v855 = vpack.c.b16 %v848, %v847
      %v856 = vpack.c.b16 %v850, %v849
      %v857 = vpack.c.b16 %v852, %v851
      %v859 = vshrl.u32 %v853, 16
      %v861 = vshll.u32 %v853, 16
      %v863 = vrot.slane %v861, 1
      %v864 = vor.u32 %v859, %v863
      %v866 = vshll.u32 %v854, 16
      %v868 = vrot.slane %v866, 1
      %v869 = vsel %vm396, %v864, %v868
      %v870 = vshrl.u32 %v854, 16
      %v872 = vor.u32 %v870, %v868
      %v874 = vshll.u32 %v855, 16
      %v876 = vrot.slane %v874, 1
      %v877 = vsel %vm396, %v872, %v876
      %v878 = vshrl.u32 %v855, 16
      %v880 = vor.u32 %v878, %v876
      %v882 = vshll.u32 %v856, 16
      %v884 = vrot.slane %v882, 1
      %v885 = vsel %vm396, %v880, %v884
      %v886 = vshrl.u32 %v856, 16
      %v888 = vor.u32 %v886, %v884
      %v890 = vshll.u32 %v857, 16
      %v892 = vrot.slane %v890, 1
      %v893 = vsel %vm396, %v888, %v892
      %v894 = vshrl.u32 %v857, 16
      %v896 = vor.u32 %v894, %v892
      %v898 = vsel %vm229, %v869, 0
      %v901 = vsel %vm229, %v877, 0
      %v904 = vsel %vm229, %v885, 0
      %v907 = vsel %vm229, %v893, 0
      %v910 = vsel %vm229, %v896, 0
      %v913 = vand.u32 %v832, %v248
      %915 = vmatpush.bf16.msra.mxu0 0
      %916 = vmatpush.bf16.msra.mxu0 0
      %917 = vmatpush.bf16.msra.mxu0 0
      %918 = vmatpush.bf16.msra.mxu0 0
      %919 = vmatpush.bf16.msra.mxu0 0
      %920 = vmatpush.bf16.msra.mxu0 0
      %921 = vmatpush.bf16.msra.mxu0 0
      %922 = vmatpush.bf16.msra.mxu0 %v913
      %923 = vmatmul.bf16.gmra.mxu0 %v898
      %v924 = vpop.f32.mrf.mxu0
      %v925 = vadd.f32 0.0, %v924
      %v926 = vpop.f32.mrf.mxu0
      %v927 = vadd.f32 0.0, %v926
      %928 = vmatmul.bf16.gmra.mxu0 %v901
      %v929 = vpop.f32.mrf.mxu0
      %v930 = vadd.f32 0.0, %v929
      %v931 = vpop.f32.mrf.mxu0
      %v932 = vadd.f32 0.0, %v931
      %933 = vmatmul.bf16.gmra.mxu0 %v904
      %v934 = vpop.f32.mrf.mxu0
      %v935 = vadd.f32 0.0, %v934
      %v936 = vpop.f32.mrf.mxu0
      %v937 = vadd.f32 0.0, %v936
      %938 = vmatmul.bf16.gmra.mxu0 %v907
      %v939 = vpop.f32.mrf.mxu0
      %v940 = vadd.f32 0.0, %v939
      %v941 = vpop.f32.mrf.mxu0
      %v942 = vadd.f32 0.0, %v941
      %943 = vmatmul.bf16.gmra.mxu0 %v910
      %v944 = vpop.f32.mrf.mxu0
      %v945 = vadd.f32 0.0, %v944
      %v946 = vpop.f32.mrf.mxu0
      %947 = vdwg.mxu0
      %v948 = vadd.f32 %v812, %v925
      %v949 = vadd.f32 %v813, %v927
      %v950 = vadd.f32 %v814, %v930
      %v951 = vadd.f32 %v815, %v932
      %v952 = vadd.f32 %v816, %v935
      %v953 = vadd.f32 %v817, %v937
      %v954 = vadd.f32 %v818, %v940
      %v955 = vadd.f32 %v819, %v942
      %v956 = vadd.f32 %v820, %v945
      %v957 = vld [vmem:[%s165 + $0x30] sm:$0xe]
      %v958 = vld [vmem:[%s165 + $0x34] sm:$0xf]
      %v959 = vld [vmem:[%s165 + $0x38] sm:$0xf]
      %v960 = vld [vmem:[%s165 + $0x3c] sm:$0xf]
      %v961 = vld [vmem:[%s165 + $0x40] sm:$0xf]
      %v962 = vld [vmem:[%s165 + $0x44] sm:$0xf]
      %v963 = vld [vmem:[%s165 + $0x48] sm:$0xf]
      %v964 = vld [vmem:[%s165 + $0x4c] sm:$0xf]
      %v965 = vld [vmem:[%s165 + $0x50] sm:$0xf]
      %v966 = vld [vmem:[%s165 + $0x54] sm:$0x3]
      %s967 = scalar_lea.vmem %s1, 14
      %v968 = vld [vmem:[%s967] sm:$0x3]
      %v979 = vunpack.c.l.b16 %v957
      %v980 = vunpack.c.l.b16 %v958
      %v981 = vunpack.c.l.b16 %v959
      %v982 = vunpack.c.l.b16 %v960
      %v983 = vunpack.c.l.b16 %v961
      %v984 = vunpack.c.l.b16 %v962
      %v985 = vunpack.c.l.b16 %v963
      %v986 = vunpack.c.l.b16 %v964
      %v987 = vunpack.c.l.b16 %v965
      %v988 = vunpack.c.l.b16 %v966
      %v989 = vpack.c.b16 %v980, %v979
      %v990 = vpack.c.b16 %v982, %v981
      %v991 = vpack.c.b16 %v984, %v983
      %v992 = vpack.c.b16 %v986, %v985
      %v993 = vpack.c.b16 %v988, %v987
      %vm994 = vsmask.f32 6400
      %v996 = vshrl.u32 %v989, 16
      %v998 = vrot.slane %v996, 1
      %v999 = vshll.u32 %v989, 16
      %v1001 = vrot.slane %v999, 2
      %v1002 = vor.u32 %v998, %v1001
      %v1004 = vshrl.u32 %v990, 16
      %v1006 = vrot.slane %v1004, 1
      %v1007 = vshll.u32 %v990, 16
      %v1009 = vrot.slane %v1007, 2
      %v1010 = vor.u32 %v1006, %v1009
      %v1011 = vsel %vm994, %v1002, %v1010
      %v1013 = vshrl.u32 %v991, 16
      %v1015 = vrot.slane %v1013, 1
      %v1016 = vshll.u32 %v991, 16
      %v1018 = vrot.slane %v1016, 2
      %v1019 = vor.u32 %v1015, %v1018
      %v1020 = vsel %vm994, %v1010, %v1019
      %v1022 = vshrl.u32 %v992, 16
      %v1024 = vrot.slane %v1022, 1
      %v1025 = vshll.u32 %v992, 16
      %v1027 = vrot.slane %v1025, 2
      %v1028 = vor.u32 %v1024, %v1027
      %v1029 = vsel %vm994, %v1019, %v1028
      %v1031 = vshrl.u32 %v993, 16
      %v1033 = vrot.slane %v1031, 1
      %v1034 = vshll.u32 %v993, 16
      %v1036 = vrot.slane %v1034, 2
      %v1037 = vor.u32 %v1033, %v1036
      %v1038 = vsel %vm994, %v1028, %v1037
      %v1040 = vsel %vm229, %v1011, 0
      %v1043 = vsel %vm229, %v1020, 0
      %v1046 = vsel %vm229, %v1029, 0
      %v1049 = vsel %vm229, %v1038, 0
      %v1052 = vsel %vm229, %v1037, 0
      %v1055 = vand.u32 %v968, %v248
      %1057 = vmatpush.bf16.msra.mxu0 0
      %1058 = vmatpush.bf16.msra.mxu0 0
      %1059 = vmatpush.bf16.msra.mxu0 0
      %1060 = vmatpush.bf16.msra.mxu0 0
      %1061 = vmatpush.bf16.msra.mxu0 0
      %1062 = vmatpush.bf16.msra.mxu0 0
      %1063 = vmatpush.bf16.msra.mxu0 0
      %1064 = vmatpush.bf16.msra.mxu0 %v1055
      %1065 = vmatmul.bf16.gmra.mxu0 %v1040
      %v1066 = vpop.f32.mrf.mxu0
      %v1067 = vadd.f32 0.0, %v1066
      %v1068 = vpop.f32.mrf.mxu0
      %v1069 = vadd.f32 0.0, %v1068
      %1070 = vmatmul.bf16.gmra.mxu0 %v1043
      %v1071 = vpop.f32.mrf.mxu0
      %v1072 = vadd.f32 0.0, %v1071
      %v1073 = vpop.f32.mrf.mxu0
      %v1074 = vadd.f32 0.0, %v1073
      %1075 = vmatmul.bf16.gmra.mxu0 %v1046
      %v1076 = vpop.f32.mrf.mxu0
      %v1077 = vadd.f32 0.0, %v1076
      %v1078 = vpop.f32.mrf.mxu0
      %v1079 = vadd.f32 0.0, %v1078
      %1080 = vmatmul.bf16.gmra.mxu0 %v1049
      %v1081 = vpop.f32.mrf.mxu0
      %v1082 = vadd.f32 0.0, %v1081
      %v1083 = vpop.f32.mrf.mxu0
      %v1084 = vadd.f32 0.0, %v1083
      %1085 = vmatmul.bf16.gmra.mxu0 %v1052
      %v1086 = vpop.f32.mrf.mxu0
      %v1087 = vadd.f32 0.0, %v1086
      %v1088 = vpop.f32.mrf.mxu0
      %1089 = vdwg.mxu0
      %v1090 = vadd.f32 %v948, %v1067
      %v1091 = vadd.f32 %v949, %v1069
      %v1092 = vadd.f32 %v950, %v1072
      %v1093 = vadd.f32 %v951, %v1074
      %v1094 = vadd.f32 %v952, %v1077
      %v1095 = vadd.f32 %v953, %v1079
      %v1096 = vadd.f32 %v954, %v1082
      %v1097 = vadd.f32 %v955, %v1084
      %v1098 = vadd.f32 %v956, %v1087
      %v1099 = vld [vmem:[%s165 + $0x4] sm:$0xe]
      %s1100 = scalar_lea.vmem %s1, 16
      %v1101 = vld [vmem:[%s1100] sm:$0x3]
      %v1103 = vunpack.c.l.b16 %v1099
      %v1104 = vpack.c.b16 %v844, %v1103
      %v1105 = vrot.slane %v1104, 1
      %v1106 = vrot.slane %v854, 1
      %v1107 = vsel %vm219, %v1105, %v1106
      %v1108 = vrot.slane %v855, 1
      %v1109 = vsel %vm219, %v1106, %v1108
      %v1110 = vrot.slane %v856, 1
      %v1111 = vsel %vm219, %v1108, %v1110
      %v1112 = vrot.slane %v857, 1
      %v1113 = vsel %vm219, %v1110, %v1112
      %v1115 = vsel %vm229, %v1107, 0
      %v1118 = vsel %vm229, %v1109, 0
      %v1121 = vsel %vm229, %v1111, 0
      %v1124 = vsel %vm229, %v1113, 0
      %v1127 = vsel %vm229, %v1112, 0
      %v1130 = vand.u32 %v1101, %v248
      %1132 = vmatpush.bf16.msra.mxu0 0
      %1133 = vmatpush.bf16.msra.mxu0 0
      %1134 = vmatpush.bf16.msra.mxu0 0
      %1135 = vmatpush.bf16.msra.mxu0 0
      %1136 = vmatpush.bf16.msra.mxu0 0
      %1137 = vmatpush.bf16.msra.mxu0 0
      %1138 = vmatpush.bf16.msra.mxu0 0
      %1139 = vmatpush.bf16.msra.mxu0 %v1130
      %1140 = vmatmul.bf16.gmra.mxu0 %v1115
      %v1141 = vpop.f32.mrf.mxu0
      %v1142 = vadd.f32 0.0, %v1141
      %v1143 = vpop.f32.mrf.mxu0
      %v1144 = vadd.f32 0.0, %v1143
      %1145 = vmatmul.bf16.gmra.mxu0 %v1118
      %v1146 = vpop.f32.mrf.mxu0
      %v1147 = vadd.f32 0.0, %v1146
      %v1148 = vpop.f32.mrf.mxu0
      %v1149 = vadd.f32 0.0, %v1148
      %1150 = vmatmul.bf16.gmra.mxu0 %v1121
      %v1151 = vpop.f32.mrf.mxu0
      %v1152 = vadd.f32 0.0, %v1151
      %v1153 = vpop.f32.mrf.mxu0
      %v1154 = vadd.f32 0.0, %v1153
      %1155 = vmatmul.bf16.gmra.mxu0 %v1124
      %v1156 = vpop.f32.mrf.mxu0
      %v1157 = vadd.f32 0.0, %v1156
      %v1158 = vpop.f32.mrf.mxu0
      %v1159 = vadd.f32 0.0, %v1158
      %1160 = vmatmul.bf16.gmra.mxu0 %v1127
      %v1161 = vpop.f32.mrf.mxu0
      %v1162 = vadd.f32 0.0, %v1161
      %v1163 = vpop.f32.mrf.mxu0
      %1164 = vdwg.mxu0
      %v1165 = vadd.f32 %v1090, %v1142
      %v1166 = vadd.f32 %v1091, %v1144
      %v1167 = vadd.f32 %v1092, %v1147
      %v1168 = vadd.f32 %v1093, %v1149
      %v1169 = vadd.f32 %v1094, %v1152
      %v1170 = vadd.f32 %v1095, %v1154
      %v1171 = vadd.f32 %v1096, %v1157
      %v1172 = vadd.f32 %v1097, %v1159
      %v1173 = vadd.f32 %v1098, %v1162
      %v1174 = vld [vmem:[%s2] sm:$0x1]
      %v1176 = vperm.slane %v1174, 0
      %v1178 = vadd.f32 %v1165, %v1176
      %v1179 = vadd.f32 %v1166, %v1176
      %v1180 = vadd.f32 %v1167, %v1176
      %v1181 = vadd.f32 %v1168, %v1176
      %v1182 = vadd.f32 %v1169, %v1176
      %v1183 = vadd.f32 %v1170, %v1176
      %v1184 = vadd.f32 %v1171, %v1176
      %v1185 = vadd.f32 %v1172, %v1176
      %v1186 = vadd.f32 %v1173, %v1176
      %v1187 = vxor.u32 %v1178, 2147483648
      %v1188 = vxor.u32 %v1179, 2147483648
      %v1189 = vxor.u32 %v1180, 2147483648
      %v1190 = vxor.u32 %v1181, 2147483648
      %v1191 = vxor.u32 %v1182, 2147483648
      %v1192 = vxor.u32 %v1183, 2147483648
      %v1193 = vxor.u32 %v1184, 2147483648
      %v1194 = vxor.u32 %v1185, 2147483648
      %v1195 = vxor.u32 %v1186, 2147483648
      %v1196 = vmul.f32 %v1187, 1.442695
      %v1197 = vpow.pop %v1196
      %v1198 = vmul.f32 %v1188, 1.442695
      %v1199 = vpow.pop %v1198
      %v1200 = vmul.f32 %v1189, 1.442695
      %v1201 = vpow.pop %v1200
      %v1202 = vmul.f32 %v1190, 1.442695
      %v1203 = vpow.pop %v1202
      %v1204 = vmul.f32 %v1191, 1.442695
      %v1205 = vpow.pop %v1204
      %v1206 = vmul.f32 %v1192, 1.442695
      %v1207 = vpow.pop %v1206
      %v1208 = vmul.f32 %v1193, 1.442695
      %v1209 = vpow.pop %v1208
      %v1210 = vmul.f32 %v1194, 1.442695
      %v1211 = vpow.pop %v1210
      %v1212 = vmul.f32 %v1195, 1.442695
      %v1213 = vpow.pop %v1212
      %v1214 = vadd.f32 %v1197, 1.0
      %v1215 = vadd.f32 %v1199, 1.0
      %v1216 = vadd.f32 %v1201, 1.0
      %v1217 = vadd.f32 %v1203, 1.0
      %v1218 = vadd.f32 %v1205, 1.0
      %v1219 = vadd.f32 %v1207, 1.0
      %v1220 = vadd.f32 %v1209, 1.0
      %v1221 = vadd.f32 %v1211, 1.0
      %v1222 = vadd.f32 %v1213, 1.0
      %v1223 = vrcp.pop %v1214
      %v1224 = vmul.f32 %v1214, %v1223
      %v1225 = vsub.f32 1.0, %v1224
      %v1226 = vmul.f32 %v1223, %v1225
      %v1227 = vadd.f32 %v1223, %v1226
      %vm1228 = vweird.f32 %v1214
      %vm1229 = vweird.f32 %v1223
      %vm1230 = vmor %vm1228, %vm1229
      %v1231 = vsel %vm1230, %v1223, %v1227
      %v1232 = vand.u32 2147483647, %v1214
      %vm1233 = vcmp.eq.f32.partialorder %v1232, 8.507059e+37
      %v1234 = vand.u32 %v1214, 2147483648
      %v1235 = vor.u32 1.1754944e-38, %v1234
      %v1236 = vsel %vm1233, %v1235, %v1231
      %v1237 = vmul.f32 1.0, %v1236
      %v1238 = vrcp.pop %v1215
      %v1239 = vmul.f32 %v1215, %v1238
      %v1240 = vsub.f32 1.0, %v1239
      %v1241 = vmul.f32 %v1238, %v1240
      %v1242 = vadd.f32 %v1238, %v1241
      %vm1243 = vweird.f32 %v1215
      %vm1244 = vweird.f32 %v1238
      %vm1245 = vmor %vm1243, %vm1244
      %v1246 = vsel %vm1245, %v1238, %v1242
      %v1247 = vand.u32 2147483647, %v1215
      %vm1248 = vcmp.eq.f32.partialorder %v1247, 8.507059e+37
      %v1249 = vand.u32 %v1215, 2147483648
      %v1250 = vor.u32 1.1754944e-38, %v1249
      %v1251 = vsel %vm1248, %v1250, %v1246
      %v1252 = vmul.f32 1.0, %v1251
      %v1253 = vrcp.pop %v1216
      %v1254 = vmul.f32 %v1216, %v1253
      %v1255 = vsub.f32 1.0, %v1254
      %v1256 = vmul.f32 %v1253, %v1255
      %v1257 = vadd.f32 %v1253, %v1256
      %vm1258 = vweird.f32 %v1216
      %vm1259 = vweird.f32 %v1253
      %vm1260 = vmor %vm1258, %vm1259
      %v1261 = vsel %vm1260, %v1253, %v1257
      %v1262 = vand.u32 2147483647, %v1216
      %vm1263 = vcmp.eq.f32.partialorder %v1262, 8.507059e+37
      %v1264 = vand.u32 %v1216, 2147483648
      %v1265 = vor.u32 1.1754944e-38, %v1264
      %v1266 = vsel %vm1263, %v1265, %v1261
      %v1267 = vmul.f32 1.0, %v1266
      %v1268 = vrcp.pop %v1217
      %v1269 = vmul.f32 %v1217, %v1268
      %v1270 = vsub.f32 1.0, %v1269
      %v1271 = vmul.f32 %v1268, %v1270
      %v1272 = vadd.f32 %v1268, %v1271
      %vm1273 = vweird.f32 %v1217
      %vm1274 = vweird.f32 %v1268
      %vm1275 = vmor %vm1273, %vm1274
      %v1276 = vsel %vm1275, %v1268, %v1272
      %v1277 = vand.u32 2147483647, %v1217
      %vm1278 = vcmp.eq.f32.partialorder %v1277, 8.507059e+37
      %v1279 = vand.u32 %v1217, 2147483648
      %v1280 = vor.u32 1.1754944e-38, %v1279
      %v1281 = vsel %vm1278, %v1280, %v1276
      %v1282 = vmul.f32 1.0, %v1281
      %v1283 = vrcp.pop %v1218
      %v1284 = vmul.f32 %v1218, %v1283
      %v1285 = vsub.f32 1.0, %v1284
      %v1286 = vmul.f32 %v1283, %v1285
      %v1287 = vadd.f32 %v1283, %v1286
      %vm1288 = vweird.f32 %v1218
      %vm1289 = vweird.f32 %v1283
      %vm1290 = vmor %vm1288, %vm1289
      %v1291 = vsel %vm1290, %v1283, %v1287
      %v1292 = vand.u32 2147483647, %v1218
      %vm1293 = vcmp.eq.f32.partialorder %v1292, 8.507059e+37
      %v1294 = vand.u32 %v1218, 2147483648
      %v1295 = vor.u32 1.1754944e-38, %v1294
      %v1296 = vsel %vm1293, %v1295, %v1291
      %v1297 = vmul.f32 1.0, %v1296
      %v1298 = vrcp.pop %v1219
      %v1299 = vmul.f32 %v1219, %v1298
      %v1300 = vsub.f32 1.0, %v1299
      %v1301 = vmul.f32 %v1298, %v1300
      %v1302 = vadd.f32 %v1298, %v1301
      %vm1303 = vweird.f32 %v1219
      %vm1304 = vweird.f32 %v1298
      %vm1305 = vmor %vm1303, %vm1304
      %v1306 = vsel %vm1305, %v1298, %v1302
      %v1307 = vand.u32 2147483647, %v1219
      %vm1308 = vcmp.eq.f32.partialorder %v1307, 8.507059e+37
      %v1309 = vand.u32 %v1219, 2147483648
      %v1310 = vor.u32 1.1754944e-38, %v1309
      %v1311 = vsel %vm1308, %v1310, %v1306
      %v1312 = vmul.f32 1.0, %v1311
      %v1313 = vrcp.pop %v1220
      %v1314 = vmul.f32 %v1220, %v1313
      %v1315 = vsub.f32 1.0, %v1314
      %v1316 = vmul.f32 %v1313, %v1315
      %v1317 = vadd.f32 %v1313, %v1316
      %vm1318 = vweird.f32 %v1220
      %vm1319 = vweird.f32 %v1313
      %vm1320 = vmor %vm1318, %vm1319
      %v1321 = vsel %vm1320, %v1313, %v1317
      %v1322 = vand.u32 2147483647, %v1220
      %vm1323 = vcmp.eq.f32.partialorder %v1322, 8.507059e+37
      %v1324 = vand.u32 %v1220, 2147483648
      %v1325 = vor.u32 1.1754944e-38, %v1324
      %v1326 = vsel %vm1323, %v1325, %v1321
      %v1327 = vmul.f32 1.0, %v1326
      %v1328 = vrcp.pop %v1221
      %v1329 = vmul.f32 %v1221, %v1328
      %v1330 = vsub.f32 1.0, %v1329
      %v1331 = vmul.f32 %v1328, %v1330
      %v1332 = vadd.f32 %v1328, %v1331
      %vm1333 = vweird.f32 %v1221
      %vm1334 = vweird.f32 %v1328
      %vm1335 = vmor %vm1333, %vm1334
      %v1336 = vsel %vm1335, %v1328, %v1332
      %v1337 = vand.u32 2147483647, %v1221
      %vm1338 = vcmp.eq.f32.partialorder %v1337, 8.507059e+37
      %v1339 = vand.u32 %v1221, 2147483648
      %v1340 = vor.u32 1.1754944e-38, %v1339
      %v1341 = vsel %vm1338, %v1340, %v1336
      %v1342 = vmul.f32 1.0, %v1341
      %v1343 = vrcp.pop %v1222
      %v1344 = vmul.f32 %v1222, %v1343
      %v1345 = vsub.f32 1.0, %v1344
      %v1346 = vmul.f32 %v1343, %v1345
      %v1347 = vadd.f32 %v1343, %v1346
      %vm1348 = vweird.f32 %v1222
      %vm1349 = vweird.f32 %v1343
      %vm1350 = vmor %vm1348, %vm1349
      %v1351 = vsel %vm1350, %v1343, %v1347
      %v1352 = vand.u32 2147483647, %v1222
      %vm1353 = vcmp.eq.f32.partialorder %v1352, 8.507059e+37
      %v1354 = vand.u32 %v1222, 2147483648
      %v1355 = vor.u32 1.1754944e-38, %v1354
      %v1356 = vsel %vm1353, %v1355, %v1351
      %v1357 = vmul.f32 1.0, %v1356
      %v1358 = vmul.f32 %v1178, %v1237
      %v1359 = vmul.f32 %v1179, %v1252
      %v1360 = vmul.f32 %v1180, %v1267
      %v1361 = vmul.f32 %v1181, %v1282
      %v1362 = vmul.f32 %v1182, %v1297
      %v1363 = vmul.f32 %v1183, %v1312
      %v1364 = vmul.f32 %v1184, %v1327
      %v1365 = vmul.f32 %v1185, %v1342
      %v1366 = vmul.f32 %v1186, %v1357
      %vm1367 = vcmask 130048
      %1368 = vst.msk [vmem:[%s170] sm:$0xff] %vm1367, %v1358
      %1369 = vst.msk [vmem:[%s170 + $0x8] sm:$0xff] %vm1367, %v1359
      %1370 = vst.msk [vmem:[%s170 + $0x10] sm:$0xff] %vm1367, %v1360
      %1371 = vst.msk [vmem:[%s170 + $0x18] sm:$0xff] %vm1367, %v1361
      %1372 = vst.msk [vmem:[%s170 + $0x20] sm:$0xff] %vm1367, %v1362
      %1373 = vst.msk [vmem:[%s170 + $0x28] sm:$0xff] %vm1367, %v1363
      %1374 = vst.msk [vmem:[%s170 + $0x30] sm:$0xff] %vm1367, %v1364
      %1375 = vst.msk [vmem:[%s170 + $0x38] sm:$0xff] %vm1367, %v1365
      %1376 = vst.msk [vmem:[%s170 + $0x40] sm:$0xff] %vm1367, %v1366
      %p1377 = scmp.lt.s32.totalorder %s14, 1
      %s1378 = scalar_select %p1377, %s14, 1
      %s1379 = smul.addr %s1378, 9
      %s1380 = smul.addr %s1379, 8
      %s1381 = scalar_lea.vmem %s3, %s1380
      // Predicated region
      $region33: #{_lambda_.5} parent=31 // pred_check
        %p1382 = pneg %p100
      $region34: #{_lambda_.5} parent=31 // pred_check_branch
        %1384 = sbr.rel (%p1382) target = $region36
      $region35: #{_lambda_.5} parent=31 // pred_region
        _
      $region36: #{_lambda_.5} parent=31 // pred_fallthru
        _
    $region32: #{_lambda_.5} parent=5 // pred_fallthru
      _
    %p1385 = scmp.le.s32.totalorder 2, %s9
    // Predicated region
    $region37: #{_lambda_.5} parent=5 // pred_check
      %p1386 = pneg %p1385
    $region38: #{_lambda_.5} parent=5 // pred_check_branch
      %1388 = sbr.rel (%p1386) target = $region40
    $region39: #{_lambda_.5} parent=5 // pred_region
      %s1389 = ssub.s32 %s9, 2
      // Predicated region
      $region41: #{_lambda_.5} parent=39 // pred_check
        %p1390 = pneg %p106
      $region42: #{_lambda_.5} parent=39 // pred_check_branch
        %1392 = sbr.rel (%p1390) target = $region44
      $region43: #{_lambda_.5} parent=39 // pred_region
        %p1393 = scmp.lt.s32.totalorder %s15, 1
        %s1394 = scalar_select %p1393, %s15, 1
        %s1395 = smul.addr %s1394, 9
        %s1396 = smul.addr %s1395, 8
        %s1397 = scalar_lea.vmem %s3, %s1396
      $region44: #{_lambda_.5} parent=39 // pred_fallthru
        _
    $region40: #{_lambda_.5} parent=5 // pred_fallthru
      _
  $region6: #{_lambda_.5} parent=0 // loop_footer
    %s13 = sadd.s32 1, %s9
  $region7: #{_lambda_.5} parent=0 // loop_footer_branch
    %8 = sbr.rel target = $region3
  $region8: #{_lambda_.5} parent=0 // loop_exit
    _

// kernel: _lambda_.6
$region0: #{_lambda_.6}
  #allocation0 [shape = 'u32[]', space=smem, size = 0x4, offset = 0x4, fixed_abs, tag = 'smem constant byte address 0x4 - core index']
  #allocation1 [shape = 'u32[72,128]{1,0:T(1,128)}', space=vmem, size = 0x9000, scoped, tag = 'internal scratch']
  %s0 = inlined_call_operand.vmem [shape: bf16[2,110,16], index: 0, kind: input, shape index: {}]
  %s1 = inlined_call_operand.vmem [shape: f32[110,1], index: 1, kind: input, shape index: {}]
  %s2 = inlined_call_operand.vmem [shape: f32[9,1,16], index: 2, kind: input, shape index: {}]
  %s3 = inlined_call_operand.vmem [shape: f32[1,16], index: 3, kind: input, shape index: {}]
  %s4 = inlined_call_operand.vmem [shape: f32[4,16], index: 4, kind: input, shape index: {}]
  %s5 = inlined_call_operand.vmem [shape: f32[4,1], index: 5, kind: input, shape index: {}]
  %s6 = inlined_call_operand.vmem [shape: f32[4,16], index: 6, kind: input, shape index: {}]
  %s7 = inlined_call_operand.vmem [shape: f32[1,16], index: 7, kind: input, shape index: {}]
  %s8 = inlined_call_operand.vmem [shape: bf16[16,16], index: 8, kind: input, shape index: {}]
  %s9 = inlined_call_operand.vmem [shape: f32[1,16], index: 9, kind: input, shape index: {}]
  %s10 = inlined_call_operand.vmem [shape: f32[2,80,16], index: 10, kind: output, shape index: {}]
  %s11 = sld [smem:[#allocation0]]
  $region73: #{_lambda_.6} parent=0
    _
  %s13 = ssub.s32 1, %s11
  %s14 = scalar_select 0, %s13, %s11
  loop: start=0, step=1, limit=4
  $region2: #{_lambda_.6} parent=0 // loop_pre_header
    _
  $region3: #{_lambda_.6} parent=0 // loop_header
    %s16 = sphi 0, %s20
    %p17 = scmp.ge.s32.totalorder %s16, 4
    %s26 = sphi 0, %s28
    %s29 = sphi 0, %s26
    %s30 = sphi 0, %s29
    %s46 = sphi 0, %s30
    %s50 = sphi 0, %s50
    %s52 = sphi 0, %s50
    %s53 = sphi 0, %s52
    %s67 = sphi 0, %s53
    %s71 = sphi 0, %s71
    %s73 = sphi 0, %s71
    %s74 = sphi 0, %s73
    %s88 = sphi 0, %s74
    %s92 = sphi 0, %s92
    %s94 = sphi 0, %s92
    %s95 = sphi 0, %s94
    %s109 = sphi 0, %s95
    %s113 = sphi 0, %s113
    %s115 = sphi 0, %s113
    %s116 = sphi 0, %s115
    %s130 = sphi 0, %s116
    %s134 = sphi 0, %s134
    %s136 = sphi 0, %s134
    %s137 = sphi 0, %s136
    %s151 = sphi 0, %s137
    %s155 = sphi 0, %s155
    %s157 = sphi 0, %s155
    %s158 = sphi 0, %s157
    %s172 = sphi 0, %s158
    %s176 = sphi 0, %s176
    %s178 = sphi 0, %s176
    %s179 = sphi 0, %s178
    %s193 = sphi 0, %s179
    %s197 = sphi 0, %s197
    %s199 = sphi 0, %s197
    %s200 = sphi 0, %s199
    %s214 = sphi 0, %s200
    %s218 = sphi 0, %s218
    %s220 = sphi 0, %s218
    %s221 = sphi 0, %s220
    %s235 = sphi 0, %s221
    %s241 = sphi 0, %s243
    %s244 = sphi 0, %s241
    %s245 = sphi 0, %s244
    %s261 = sphi 0, %s245
  $region4: #{_lambda_.6} parent=0 // loop_header_branch
    %19 = sbr.rel (%p17) target = $region8
  $region5: #{_lambda_.6} parent=0 // loop_body
    %s21 = ssub.s32 %s16, 1
    %s22 = ssub.s32 %s16, 2
    %s23 = sadd.s32 %s16, 1
    %s24 = ssub.s32 %s16, %s23
    %p25 = scmp.eq.s32.totalorder %s24, 0
    %s27 = sadd.s32 %s26, 1
    %s28 = scalar_select %p25, %s26, %s27
    %p31 = pneg %p25
    %p32 = scmp.eq.s32.totalorder %s16, 1
    %p33 = por %p31, %p32
    %p34 = scmp.ne.s32.totalorder %s26, %s29
    %p35 = scmp.eq.s32.totalorder %s16, 0
    %p36 = por %p34, %p35
    %p37 = scmp.ne.s32.totalorder %s26, %s29
    %p38 = scmp.eq.s32.totalorder %s21, 1
    %p39 = por %p37, %p38
    %p40 = scmp.ne.s32.totalorder %s29, %s30
    %p41 = scmp.eq.s32.totalorder %s21, 0
    %p42 = por %p40, %p41
    %p43 = scmp.ne.s32.totalorder %s29, %s30
    %p44 = scmp.eq.s32.totalorder %s22, 1
    %p45 = por %p43, %p44
    %p47 = scmp.ne.s32.totalorder %s30, %s46
    %p48 = scmp.eq.s32.totalorder %s22, 0
    %p49 = por %p47, %p48
    %s51 = sadd.s32 %s50, 1
    %p54 = scmp.eq.s32.totalorder %s16, 1
    %p55 = scmp.ne.s32.totalorder %s50, %s52
    %p56 = scmp.eq.s32.totalorder %s16, 0
    %p57 = por %p55, %p56
    %p58 = scmp.ne.s32.totalorder %s50, %s52
    %p59 = scmp.eq.s32.totalorder %s21, 1
    %p60 = por %p58, %p59
    %p61 = scmp.ne.s32.totalorder %s52, %s53
    %p62 = scmp.eq.s32.totalorder %s21, 0
    %p63 = por %p61, %p62
    %p64 = scmp.ne.s32.totalorder %s52, %s53
    %p65 = scmp.eq.s32.totalorder %s22, 1
    %p66 = por %p64, %p65
    %p68 = scmp.ne.s32.totalorder %s53, %s67
    %p69 = scmp.eq.s32.totalorder %s22, 0
    %p70 = por %p68, %p69
    %s72 = sadd.s32 %s71, 1
    %p75 = scmp.eq.s32.totalorder %s16, 1
    %p76 = scmp.ne.s32.totalorder %s71, %s73
    %p77 = scmp.eq.s32.totalorder %s16, 0
    %p78 = por %p76, %p77
    %p79 = scmp.ne.s32.totalorder %s71, %s73
    %p80 = scmp.eq.s32.totalorder %s21, 1
    %p81 = por %p79, %p80
    %p82 = scmp.ne.s32.totalorder %s73, %s74
    %p83 = scmp.eq.s32.totalorder %s21, 0
    %p84 = por %p82, %p83
    %p85 = scmp.ne.s32.totalorder %s73, %s74
    %p86 = scmp.eq.s32.totalorder %s22, 1
    %p87 = por %p85, %p86
    %p89 = scmp.ne.s32.totalorder %s74, %s88
    %p90 = scmp.eq.s32.totalorder %s22, 0
    %p91 = por %p89, %p90
    %s93 = sadd.s32 %s92, 1
    %p96 = scmp.eq.s32.totalorder %s16, 1
    %p97 = scmp.ne.s32.totalorder %s92, %s94
    %p98 = scmp.eq.s32.totalorder %s16, 0
    %p99 = por %p97, %p98
    %p100 = scmp.ne.s32.totalorder %s92, %s94
    %p101 = scmp.eq.s32.totalorder %s21, 1
    %p102 = por %p100, %p101
    %p103 = scmp.ne.s32.totalorder %s94, %s95
    %p104 = scmp.eq.s32.totalorder %s21, 0
    %p105 = por %p103, %p104
    %p106 = scmp.ne.s32.totalorder %s94, %s95
    %p107 = scmp.eq.s32.totalorder %s22, 1
    %p108 = por %p106, %p107
    %p110 = scmp.ne.s32.totalorder %s95, %s109
    %p111 = scmp.eq.s32.totalorder %s22, 0
    %p112 = por %p110, %p111
    %s114 = sadd.s32 %s113, 1
    %p117 = scmp.eq.s32.totalorder %s16, 1
    %p118 = scmp.ne.s32.totalorder %s113, %s115
    %p119 = scmp.eq.s32.totalorder %s16, 0
    %p120 = por %p118, %p119
    %p121 = scmp.ne.s32.totalorder %s113, %s115
    %p122 = scmp.eq.s32.totalorder %s21, 1
    %p123 = por %p121, %p122
    %p124 = scmp.ne.s32.totalorder %s115, %s116
    %p125 = scmp.eq.s32.totalorder %s21, 0
    %p126 = por %p124, %p125
    %p127 = scmp.ne.s32.totalorder %s115, %s116
    %p128 = scmp.eq.s32.totalorder %s22, 1
    %p129 = por %p127, %p128
    %p131 = scmp.ne.s32.totalorder %s116, %s130
    %p132 = scmp.eq.s32.totalorder %s22, 0
    %p133 = por %p131, %p132
    %s135 = sadd.s32 %s134, 1
    %p138 = scmp.eq.s32.totalorder %s16, 1
    %p139 = scmp.ne.s32.totalorder %s134, %s136
    %p140 = scmp.eq.s32.totalorder %s16, 0
    %p141 = por %p139, %p140
    %p142 = scmp.ne.s32.totalorder %s134, %s136
    %p143 = scmp.eq.s32.totalorder %s21, 1
    %p144 = por %p142, %p143
    %p145 = scmp.ne.s32.totalorder %s136, %s137
    %p146 = scmp.eq.s32.totalorder %s21, 0
    %p147 = por %p145, %p146
    %p148 = scmp.ne.s32.totalorder %s136, %s137
    %p149 = scmp.eq.s32.totalorder %s22, 1
    %p150 = por %p148, %p149
    %p152 = scmp.ne.s32.totalorder %s137, %s151
    %p153 = scmp.eq.s32.totalorder %s22, 0
    %p154 = por %p152, %p153
    %s156 = sadd.s32 %s155, 1
    %p159 = scmp.eq.s32.totalorder %s16, 1
    %p160 = scmp.ne.s32.totalorder %s155, %s157
    %p161 = scmp.eq.s32.totalorder %s16, 0
    %p162 = por %p160, %p161
    %p163 = scmp.ne.s32.totalorder %s155, %s157
    %p164 = scmp.eq.s32.totalorder %s21, 1
    %p165 = por %p163, %p164
    %p166 = scmp.ne.s32.totalorder %s157, %s158
    %p167 = scmp.eq.s32.totalorder %s21, 0
    %p168 = por %p166, %p167
    %p169 = scmp.ne.s32.totalorder %s157, %s158
    %p170 = scmp.eq.s32.totalorder %s22, 1
    %p171 = por %p169, %p170
    %p173 = scmp.ne.s32.totalorder %s158, %s172
    %p174 = scmp.eq.s32.totalorder %s22, 0
    %p175 = por %p173, %p174
    %s177 = sadd.s32 %s176, 1
    %p180 = scmp.eq.s32.totalorder %s16, 1
    %p181 = scmp.ne.s32.totalorder %s176, %s178
    %p182 = scmp.eq.s32.totalorder %s16, 0
    %p183 = por %p181, %p182
    %p184 = scmp.ne.s32.totalorder %s176, %s178
    %p185 = scmp.eq.s32.totalorder %s21, 1
    %p186 = por %p184, %p185
    %p187 = scmp.ne.s32.totalorder %s178, %s179
    %p188 = scmp.eq.s32.totalorder %s21, 0
    %p189 = por %p187, %p188
    %p190 = scmp.ne.s32.totalorder %s178, %s179
    %p191 = scmp.eq.s32.totalorder %s22, 1
    %p192 = por %p190, %p191
    %p194 = scmp.ne.s32.totalorder %s179, %s193
    %p195 = scmp.eq.s32.totalorder %s22, 0
    %p196 = por %p194, %p195
    %s198 = sadd.s32 %s197, 1
    %p201 = scmp.eq.s32.totalorder %s16, 1
    %p202 = scmp.ne.s32.totalorder %s197, %s199
    %p203 = scmp.eq.s32.totalorder %s16, 0
    %p204 = por %p202, %p203
    %p205 = scmp.ne.s32.totalorder %s197, %s199
    %p206 = scmp.eq.s32.totalorder %s21, 1
    %p207 = por %p205, %p206
    %p208 = scmp.ne.s32.totalorder %s199, %s200
    %p209 = scmp.eq.s32.totalorder %s21, 0
    %p210 = por %p208, %p209
    %p211 = scmp.ne.s32.totalorder %s199, %s200
    %p212 = scmp.eq.s32.totalorder %s22, 1
    %p213 = por %p211, %p212
    %p215 = scmp.ne.s32.totalorder %s200, %s214
    %p216 = scmp.eq.s32.totalorder %s22, 0
    %p217 = por %p215, %p216
    %s219 = sadd.s32 %s218, 1
    %p222 = scmp.eq.s32.totalorder %s16, 1
    %p223 = scmp.ne.s32.totalorder %s218, %s220
    %p224 = scmp.eq.s32.totalorder %s16, 0
    %p225 = por %p223, %p224
    %p226 = scmp.ne.s32.totalorder %s218, %s220
    %p227 = scmp.eq.s32.totalorder %s21, 1
    %p228 = por %p226, %p227
    %p229 = scmp.ne.s32.totalorder %s220, %s221
    %p230 = scmp.eq.s32.totalorder %s21, 0
    %p231 = por %p229, %p230
    %p232 = scmp.ne.s32.totalorder %s220, %s221
    %p233 = scmp.eq.s32.totalorder %s22, 1
    %p234 = por %p232, %p233
    %p236 = scmp.ne.s32.totalorder %s221, %s235
    %p237 = scmp.eq.s32.totalorder %s22, 0
    %p238 = por %p236, %p237
    %s239 = ssub.s32 %s16, %s23
    %p240 = scmp.eq.s32.totalorder %s239, 0
    %s242 = sadd.s32 %s241, 1
    %s243 = scalar_select %p240, %s241, %s242
    %p246 = pneg %p240
    %p247 = scmp.eq.s32.totalorder %s16, 1
    %p248 = por %p246, %p247
    %p249 = scmp.ne.s32.totalorder %s241, %s244
    %p250 = scmp.eq.s32.totalorder %s16, 0
    %p251 = por %p249, %p250
    %p252 = scmp.ne.s32.totalorder %s241, %s244
    %p253 = scmp.eq.s32.totalorder %s21, 1
    %p254 = por %p252, %p253
    %p255 = scmp.ne.s32.totalorder %s244, %s245
    %p256 = scmp.eq.s32.totalorder %s21, 0
    %p257 = por %p255, %p256
    %p258 = scmp.ne.s32.totalorder %s244, %s245
    %p259 = scmp.eq.s32.totalorder %s22, 1
    %p260 = por %p258, %p259
    %p262 = scmp.ne.s32.totalorder %s245, %s261
    %p263 = scmp.eq.s32.totalorder %s22, 0
    %p264 = por %p262, %p263
    %p265 = scmp.le.s32.totalorder 1, %s16
    %p266 = scmp.lt.s32.totalorder %s16, 3
    %p267 = pnand %p265, %p266
    %p268 = pneg %p267
    // Predicated region
    $region9: #{_lambda_.6} parent=5 // pred_check
      _
    $region10: #{_lambda_.6} parent=5 // pred_check_branch
      %270 = sbr.rel (%p267) target = $region12
    $region11: #{_lambda_.6} parent=5 // pred_region
      %s271 = ssub.s32 %s16, 1
      // Predicated region
      $region13: #{_lambda_.6} parent=11 // pred_check
        %p272 = pneg %p63
      $region14: #{_lambda_.6} parent=11 // pred_check_branch
        %274 = sbr.rel (%p272) target = $region16
      $region15: #{_lambda_.6} parent=11 // pred_region
        _
      $region16: #{_lambda_.6} parent=11 // pred_fallthru
        _
      // Predicated region
      $region17: #{_lambda_.6} parent=11 // pred_check
        %p275 = pneg %p84
      $region18: #{_lambda_.6} parent=11 // pred_check_branch
        %277 = sbr.rel (%p275) target = $region20
      $region19: #{_lambda_.6} parent=11 // pred_region
        _
      $region20: #{_lambda_.6} parent=11 // pred_fallthru
        _
      // Predicated region
      $region21: #{_lambda_.6} parent=11 // pred_check
        %p278 = pneg %p105
      $region22: #{_lambda_.6} parent=11 // pred_check_branch
        %280 = sbr.rel (%p278) target = $region24
      $region23: #{_lambda_.6} parent=11 // pred_region
        _
      $region24: #{_lambda_.6} parent=11 // pred_fallthru
        _
      // Predicated region
      $region25: #{_lambda_.6} parent=11 // pred_check
        %p281 = pneg %p126
      $region26: #{_lambda_.6} parent=11 // pred_check_branch
        %283 = sbr.rel (%p281) target = $region28
      $region27: #{_lambda_.6} parent=11 // pred_region
        _
      $region28: #{_lambda_.6} parent=11 // pred_fallthru
        _
      // Predicated region
      $region29: #{_lambda_.6} parent=11 // pred_check
        %p284 = pneg %p147
      $region30: #{_lambda_.6} parent=11 // pred_check_branch
        %286 = sbr.rel (%p284) target = $region32
      $region31: #{_lambda_.6} parent=11 // pred_region
        _
      $region32: #{_lambda_.6} parent=11 // pred_fallthru
        _
      // Predicated region
      $region33: #{_lambda_.6} parent=11 // pred_check
        %p287 = pneg %p168
      $region34: #{_lambda_.6} parent=11 // pred_check_branch
        %289 = sbr.rel (%p287) target = $region36
      $region35: #{_lambda_.6} parent=11 // pred_region
        _
      $region36: #{_lambda_.6} parent=11 // pred_fallthru
        _
      // Predicated region
      $region37: #{_lambda_.6} parent=11 // pred_check
        %p290 = pneg %p189
      $region38: #{_lambda_.6} parent=11 // pred_check_branch
        %292 = sbr.rel (%p290) target = $region40
      $region39: #{_lambda_.6} parent=11 // pred_region
        _
      $region40: #{_lambda_.6} parent=11 // pred_fallthru
        _
      // Predicated region
      $region41: #{_lambda_.6} parent=11 // pred_check
        %p293 = pneg %p210
      $region42: #{_lambda_.6} parent=11 // pred_check_branch
        %295 = sbr.rel (%p293) target = $region44
      $region43: #{_lambda_.6} parent=11 // pred_region
        _
      $region44: #{_lambda_.6} parent=11 // pred_fallthru
        _
      // Predicated region
      $region45: #{_lambda_.6} parent=11 // pred_check
        %p296 = pneg %p231
      $region46: #{_lambda_.6} parent=11 // pred_check_branch
        %298 = sbr.rel (%p296) target = $region48
      $region47: #{_lambda_.6} parent=11 // pred_region
        _
      $region48: #{_lambda_.6} parent=11 // pred_fallthru
        _
    $region12: #{_lambda_.6} parent=5 // pred_fallthru
      _
    %p299 = scmp.lt.s32.totalorder %s16, 2
    // Predicated region
    $region49: #{_lambda_.6} parent=5 // pred_check
      %p300 = pneg %p299
    $region50: #{_lambda_.6} parent=5 // pred_check_branch
      %302 = sbr.rel (%p300) target = $region52
    $region51: #{_lambda_.6} parent=5 // pred_region
      // Predicated region
      $region53: #{_lambda_.6} parent=51 // pred_check
        %p303 = pneg %p36
      $region54: #{_lambda_.6} parent=51 // pred_check_branch
        %305 = sbr.rel (%p303) target = $region56
      $region55: #{_lambda_.6} parent=51 // pred_region
        %p306 = scmp.lt.s32.totalorder %s16, 1
        %s307 = scalar_select %p306, %s16, 1
        %s308 = smul.addr %s307, 14
        %s309 = smul.addr %s308, 4
        %s310 = scalar_lea.vmem %s0, %s309
      $region56: #{_lambda_.6} parent=51 // pred_fallthru
        _
    $region52: #{_lambda_.6} parent=5 // pred_fallthru
      _
    %p311 = scmp.le.s32.totalorder 1, %s16
    %p312 = scmp.lt.s32.totalorder %s16, 3
    %p313 = pnand %p311, %p312
    %p314 = pneg %p313
    // Predicated region
    $region57: #{_lambda_.6} parent=5 // pred_check
      _
    $region58: #{_lambda_.6} parent=5 // pred_check_branch
      %316 = sbr.rel (%p313) target = $region60
    $region59: #{_lambda_.6} parent=5 // pred_region
      %s317 = ssub.s32 %s16, 1
      %p318 = scmp.lt.s32.totalorder %s21, 1
      %s319 = scalar_select %p318, %s21, 1
      %s320 = smul.addr %s319, 14
      %s321 = smul.addr %s320, 4
      %s322 = scalar_lea.vmem %s0, %s321
      %p323 = pneg %p42
      %p324 = pneg %p39
      %p325 = pneg %p63
      %p326 = pneg %p60
      %p327 = pneg %p84
      %p328 = pneg %p81
      %p329 = pneg %p105
      %p330 = pneg %p102
      %p331 = pneg %p126
      %p332 = pneg %p123
      %p333 = pneg %p147
      %p334 = pneg %p144
      %p335 = pneg %p168
      %p336 = pneg %p165
      %p337 = pneg %p189
      %p338 = pneg %p186
      %p339 = pneg %p210
      %p340 = pneg %p207
      %p341 = pneg %p231
      %p342 = pneg %p228
      %p343 = pneg %p257
      %p344 = pneg %p254
      %p345 = scmp.lt.s32.totalorder %s21, 1
      %s346 = scalar_select %p345, %s21, 1
      %s347 = smul.addr %s346, 10
      %s348 = smul.addr %s347, 8
      %s349 = scalar_lea.vmem %s10, %s348
      %p350 = scmp.lt.s32.totalorder %s21, 1
      %s351 = scalar_select %p350, %s21, 1
      %s352 = smul.addr %s351, 14
      %s353 = smul.addr %s352, 4
      %s354 = scalar_lea.vmem %s0, %s353
      %p355 = scmp.lt.s32.totalorder %s21, 1
      %s356 = scalar_select %p355, %s21, 1
      %s357 = smul.addr %s356, 10
      %s358 = smul.addr %s357, 8
      %s359 = scalar_lea.vmem %s10, %s358
      %v361 = vld [vmem:[%s354] sm:$0xf]
      %v362 = vld [vmem:[%s354 + $0x4] sm:$0xf]
      %v363 = vld [vmem:[%s354 + $0x8] sm:$0xf]
      %v364 = vld [vmem:[%s354 + $0xc] sm:$0xf]
      %v365 = vld [vmem:[%s354 + $0x10] sm:$0xf]
      %v366 = vld [vmem:[%s354 + $0x14] sm:$0xf]
      %v367 = vld [vmem:[%s354 + $0x18] sm:$0xf]
      %v368 = vld [vmem:[%s354 + $0x1c] sm:$0xf]
      %v369 = vld [vmem:[%s354 + $0x20] sm:$0xf]
      %v370 = vld [vmem:[%s354 + $0x24] sm:$0xf]
      %v371 = vunpack.c.l.bf16 %v361
      %v372 = vunpack.c.l.bf16 %v362
      %v373 = vunpack.c.l.bf16 %v363
      %v374 = vunpack.c.l.bf16 %v364
      %v375 = vunpack.c.l.bf16 %v365
      %v376 = vunpack.c.l.bf16 %v366
      %v377 = vunpack.c.l.bf16 %v367
      %v378 = vunpack.c.l.bf16 %v368
      %v379 = vunpack.c.l.bf16 %v369
      %v380 = vunpack.c.l.bf16 %v370
      %v381 = vld [vmem:[%s2] sm:$0x1]
      %v383 = vperm.slane %v381, 0
      %v385 = vmul.f32 %v371, %v383
      %v386 = vmul.f32 %v372, %v383
      %v387 = vmul.f32 %v373, %v383
      %v388 = vmul.f32 %v374, %v383
      %v389 = vmul.f32 %v375, %v383
      %v390 = vmul.f32 %v376, %v383
      %v391 = vmul.f32 %v377, %v383
      %v392 = vmul.f32 %v378, %v383
      %v393 = vmul.f32 %v379, %v383
      %v394 = vmul.f32 %v380, %v383
      %v395 = vld [vmem:[%s354 + $0x28] sm:$0x1]
      %v396 = vunpack.c.l.bf16 %v395
      %s397 = scalar_lea.vmem %s2, 1
      %v398 = vld [vmem:[%s397] sm:$0x1]
      %v400 = vperm.slane %v398, 0
      %v402 = vmul.f32 %v371, %v400
      %v403 = vmul.f32 %v372, %v400
      %v404 = vmul.f32 %v373, %v400
      %v405 = vmul.f32 %v374, %v400
      %v406 = vmul.f32 %v375, %v400
      %v407 = vmul.f32 %v376, %v400
      %v408 = vmul.f32 %v377, %v400
      %v409 = vmul.f32 %v378, %v400
      %v410 = vmul.f32 %v379, %v400
      %v411 = vmul.f32 %v380, %v400
      %v412 = vmul.f32 %v396, %v400
      %vm424 = vcmask 1046528
      %v425 = vrot.slane %v402, 1
      %v426 = vrot.slane %v403, 1
      %v427 = vsel %vm424, %v425, %v426
      %v428 = vrot.slane %v404, 1
      %v429 = vsel %vm424, %v426, %v428
      %v430 = vrot.slane %v405, 1
      %v431 = vsel %vm424, %v428, %v430
      %v432 = vrot.slane %v406, 1
      %v433 = vsel %vm424, %v430, %v432
      %v434 = vrot.slane %v407, 1
      %v435 = vsel %vm424, %v432, %v434
      %v436 = vrot.slane %v408, 1
      %v437 = vsel %vm424, %v434, %v436
      %v438 = vrot.slane %v409, 1
      %v439 = vsel %vm424, %v436, %v438
      %v440 = vrot.slane %v410, 1
      %v441 = vsel %vm424, %v438, %v440
      %v442 = vrot.slane %v411, 1
      %v443 = vsel %vm424, %v440, %v442
      %v444 = vrot.slane %v412, 1
      %v445 = vsel %vm424, %v442, %v444
      %v456 = vadd.f32 %v385, %v427
      %v457 = vadd.f32 %v386, %v429
      %v458 = vadd.f32 %v387, %v431
      %v459 = vadd.f32 %v388, %v433
      %v460 = vadd.f32 %v389, %v435
      %v461 = vadd.f32 %v390, %v437
      %v462 = vadd.f32 %v391, %v439
      %v463 = vadd.f32 %v392, %v441
      %v464 = vadd.f32 %v393, %v443
      %v465 = vadd.f32 %v394, %v445
      %v466 = vld [vmem:[%s354] sm:$0xe]
      %v467 = vunpack.c.l.bf16 %v466
      %s468 = scalar_lea.vmem %s2, 2
      %v469 = vld [vmem:[%s468] sm:$0x1]
      %v471 = vperm.slane %v469, 0
      %v473 = vmul.f32 %v467, %v471
      %v474 = vmul.f32 %v372, %v471
      %v475 = vmul.f32 %v373, %v471
      %v476 = vmul.f32 %v374, %v471
      %v477 = vmul.f32 %v375, %v471
      %v478 = vmul.f32 %v376, %v471
      %v479 = vmul.f32 %v377, %v471
      %v480 = vmul.f32 %v378, %v471
      %v481 = vmul.f32 %v379, %v471
      %v482 = vmul.f32 %v380, %v471
      %v483 = vmul.f32 %v396, %v471
      %vm495 = vcmask 1045504
      %v496 = vrot.slane %v473, 2
      %v497 = vrot.slane %v474, 2
      %v498 = vsel %vm495, %v496, %v497
      %v499 = vrot.slane %v475, 2
      %v500 = vsel %vm495, %v497, %v499
      %v501 = vrot.slane %v476, 2
      %v502 = vsel %vm495, %v499, %v501
      %v503 = vrot.slane %v477, 2
      %v504 = vsel %vm495, %v501, %v503
      %v505 = vrot.slane %v478, 2
      %v506 = vsel %vm495, %v503, %v505
      %v507 = vrot.slane %v479, 2
      %v508 = vsel %vm495, %v505, %v507
      %v509 = vrot.slane %v480, 2
      %v510 = vsel %vm495, %v507, %v509
      %v511 = vrot.slane %v481, 2
      %v512 = vsel %vm495, %v509, %v511
      %v513 = vrot.slane %v482, 2
      %v514 = vsel %vm495, %v511, %v513
      %v515 = vrot.slane %v483, 2
      %v516 = vsel %vm495, %v513, %v515
      %v527 = vadd.f32 %v456, %v498
      %v528 = vadd.f32 %v457, %v500
      %v529 = vadd.f32 %v458, %v502
      %v530 = vadd.f32 %v459, %v504
      %v531 = vadd.f32 %v460, %v506
      %v532 = vadd.f32 %v461, %v508
      %v533 = vadd.f32 %v462, %v510
      %v534 = vadd.f32 %v463, %v512
      %v535 = vadd.f32 %v464, %v514
      %v536 = vadd.f32 %v465, %v516
      %v537 = vld [vmem:[%s354 + $0x4] sm:$0xe]
      %v538 = vld [vmem:[%s354 + $0x28] sm:$0xf]
      %v539 = vld [vmem:[%s354 + $0x2c] sm:$0x1]
      %v540 = vunpack.c.l.bf16 %v537
      %v541 = vunpack.c.l.bf16 %v538
      %v542 = vunpack.c.l.bf16 %v539
      %s543 = scalar_lea.vmem %s2, 3
      %v544 = vld [vmem:[%s543] sm:$0x1]
      %v546 = vperm.slane %v544, 0
      %v548 = vmul.f32 %v540, %v546
      %v549 = vmul.f32 %v373, %v546
      %v550 = vmul.f32 %v374, %v546
      %v551 = vmul.f32 %v375, %v546
      %v552 = vmul.f32 %v376, %v546
      %v553 = vmul.f32 %v377, %v546
      %v554 = vmul.f32 %v378, %v546
      %v555 = vmul.f32 %v379, %v546
      %v556 = vmul.f32 %v380, %v546
      %v557 = vmul.f32 %v541, %v546
      %v558 = vmul.f32 %v542, %v546
      %v570 = vrot.slane %v548, 2
      %v571 = vrot.slane %v549, 2
      %v572 = vsel %vm495, %v570, %v571
      %v573 = vrot.slane %v550, 2
      %v574 = vsel %vm495, %v571, %v573
      %v575 = vrot.slane %v551, 2
      %v576 = vsel %vm495, %v573, %v575
      %v577 = vrot.slane %v552, 2
      %v578 = vsel %vm495, %v575, %v577
      %v579 = vrot.slane %v553, 2
      %v580 = vsel %vm495, %v577, %v579
      %v581 = vrot.slane %v554, 2
      %v582 = vsel %vm495, %v579, %v581
      %v583 = vrot.slane %v555, 2
      %v584 = vsel %vm495, %v581, %v583
      %v585 = vrot.slane %v556, 2
      %v586 = vsel %vm495, %v583, %v585
      %v587 = vrot.slane %v557, 2
      %v588 = vsel %vm495, %v585, %v587
      %v589 = vrot.slane %v558, 2
      %v590 = vsel %vm495, %v587, %v589
      %v601 = vadd.f32 %v527, %v572
      %v602 = vadd.f32 %v528, %v574
      %v603 = vadd.f32 %v529, %v576
      %v604 = vadd.f32 %v530, %v578
      %v605 = vadd.f32 %v531, %v580
      %v606 = vadd.f32 %v532, %v582
      %v607 = vadd.f32 %v533, %v584
      %v608 = vadd.f32 %v534, %v586
      %v609 = vadd.f32 %v535, %v588
      %v610 = vadd.f32 %v536, %v590
      %v611 = vld [vmem:[%s354 + $0x2c] sm:$0x3]
      %v612 = vunpack.c.l.bf16 %v611
      %s613 = scalar_lea.vmem %s2, 4
      %v614 = vld [vmem:[%s613] sm:$0x1]
      %v616 = vperm.slane %v614, 0
      %v618 = vmul.f32 %v540, %v616
      %v619 = vmul.f32 %v373, %v616
      %v620 = vmul.f32 %v374, %v616
      %v621 = vmul.f32 %v375, %v616
      %v622 = vmul.f32 %v376, %v616
      %v623 = vmul.f32 %v377, %v616
      %v624 = vmul.f32 %v378, %v616
      %v625 = vmul.f32 %v379, %v616
      %v626 = vmul.f32 %v380, %v616
      %v627 = vmul.f32 %v541, %v616
      %v628 = vmul.f32 %v612, %v616
      %vm640 = vcmask 1044480
      %v641 = vrot.slane %v618, 3
      %v642 = vrot.slane %v619, 3
      %v643 = vsel %vm640, %v641, %v642
      %v644 = vrot.slane %v620, 3
      %v645 = vsel %vm640, %v642, %v644
      %v646 = vrot.slane %v621, 3
      %v647 = vsel %vm640, %v644, %v646
      %v648 = vrot.slane %v622, 3
      %v649 = vsel %vm640, %v646, %v648
      %v650 = vrot.slane %v623, 3
      %v651 = vsel %vm640, %v648, %v650
      %v652 = vrot.slane %v624, 3
      %v653 = vsel %vm640, %v650, %v652
      %v654 = vrot.slane %v625, 3
      %v655 = vsel %vm640, %v652, %v654
      %v656 = vrot.slane %v626, 3
      %v657 = vsel %vm640, %v654, %v656
      %v658 = vrot.slane %v627, 3
      %v659 = vsel %vm640, %v656, %v658
      %v660 = vrot.slane %v628, 3
      %v661 = vsel %vm640, %v658, %v660
      %v672 = vadd.f32 %v601, %v643
      %v673 = vadd.f32 %v602, %v645
      %v674 = vadd.f32 %v603, %v647
      %v675 = vadd.f32 %v604, %v649
      %v676 = vadd.f32 %v605, %v651
      %v677 = vadd.f32 %v606, %v653
      %v678 = vadd.f32 %v607, %v655
      %v679 = vadd.f32 %v608, %v657
      %v680 = vadd.f32 %v609, %v659
      %v681 = vadd.f32 %v610, %v661
      %v682 = vld [vmem:[%s354 + $0x4] sm:$0xc]
      %v683 = vunpack.c.l.bf16 %v682
      %s684 = scalar_lea.vmem %s2, 5
      %v685 = vld [vmem:[%s684] sm:$0x1]
      %v687 = vperm.slane %v685, 0
      %v689 = vmul.f32 %v683, %v687
      %v690 = vmul.f32 %v373, %v687
      %v691 = vmul.f32 %v374, %v687
      %v692 = vmul.f32 %v375, %v687
      %v693 = vmul.f32 %v376, %v687
      %v694 = vmul.f32 %v377, %v687
      %v695 = vmul.f32 %v378, %v687
      %v696 = vmul.f32 %v379, %v687
      %v697 = vmul.f32 %v380, %v687
      %v698 = vmul.f32 %v541, %v687
      %v699 = vmul.f32 %v612, %v687
      %vm711 = vcmask 1043456
      %v712 = vrot.slane %v689, 4
      %v713 = vrot.slane %v690, 4
      %v714 = vsel %vm711, %v712, %v713
      %v715 = vrot.slane %v691, 4
      %v716 = vsel %vm711, %v713, %v715
      %v717 = vrot.slane %v692, 4
      %v718 = vsel %vm711, %v715, %v717
      %v719 = vrot.slane %v693, 4
      %v720 = vsel %vm711, %v717, %v719
      %v721 = vrot.slane %v694, 4
      %v722 = vsel %vm711, %v719, %v721
      %v723 = vrot.slane %v695, 4
      %v724 = vsel %vm711, %v721, %v723
      %v725 = vrot.slane %v696, 4
      %v726 = vsel %vm711, %v723, %v725
      %v727 = vrot.slane %v697, 4
      %v728 = vsel %vm711, %v725, %v727
      %v729 = vrot.slane %v698, 4
      %v730 = vsel %vm711, %v727, %v729
      %v731 = vrot.slane %v699, 4
      %v732 = vsel %vm711, %v729, %v731
      %v743 = vadd.f32 %v672, %v714
      %v744 = vadd.f32 %v673, %v716
      %v745 = vadd.f32 %v674, %v718
      %v746 = vadd.f32 %v675, %v720
      %v747 = vadd.f32 %v676, %v722
      %v748 = vadd.f32 %v677, %v724
      %v749 = vadd.f32 %v678, %v726
      %v750 = vadd.f32 %v679, %v728
      %v751 = vadd.f32 %v680, %v730
      %v752 = vadd.f32 %v681, %v732
      %v753 = vld [vmem:[%s354 + $0x8] sm:$0xc]
      %v754 = vld [vmem:[%s354 + $0x2c] sm:$0xf]
      %v755 = vld [vmem:[%s354 + $0x30] sm:$0x3]
      %v756 = vunpack.c.l.bf16 %v753
      %v757 = vunpack.c.l.bf16 %v754
      %v758 = vunpack.c.l.bf16 %v755
      %s759 = scalar_lea.vmem %s2, 6
      %v760 = vld [vmem:[%s759] sm:$0x1]
      %v762 = vperm.slane %v760, 0
      %v764 = vmul.f32 %v756, %v762
      %v765 = vmul.f32 %v374, %v762
      %v766 = vmul.f32 %v375, %v762
      %v767 = vmul.f32 %v376, %v762
      %v768 = vmul.f32 %v377, %v762
      %v769 = vmul.f32 %v378, %v762
      %v770 = vmul.f32 %v379, %v762
      %v771 = vmul.f32 %v380, %v762
      %v772 = vmul.f32 %v541, %v762
      %v773 = vmul.f32 %v757, %v762
      %v774 = vmul.f32 %v758, %v762
      %v786 = vrot.slane %v764, 4
      %v787 = vrot.slane %v765, 4
      %v788 = vsel %vm711, %v786, %v787
      %v789 = vrot.slane %v766, 4
      %v790 = vsel %vm711, %v787, %v789
      %v791 = vrot.slane %v767, 4
      %v792 = vsel %vm711, %v789, %v791
      %v793 = vrot.slane %v768, 4
      %v794 = vsel %vm711, %v791, %v793
      %v795 = vrot.slane %v769, 4
      %v796 = vsel %vm711, %v793, %v795
      %v797 = vrot.slane %v770, 4
      %v798 = vsel %vm711, %v795, %v797
      %v799 = vrot.slane %v771, 4
      %v800 = vsel %vm711, %v797, %v799
      %v801 = vrot.slane %v772, 4
      %v802 = vsel %vm711, %v799, %v801
      %v803 = vrot.slane %v773, 4
      %v804 = vsel %vm711, %v801, %v803
      %v805 = vrot.slane %v774, 4
      %v806 = vsel %vm711, %v803, %v805
      %v817 = vadd.f32 %v743, %v788
      %v818 = vadd.f32 %v744, %v790
      %v819 = vadd.f32 %v745, %v792
      %v820 = vadd.f32 %v746, %v794
      %v821 = vadd.f32 %v747, %v796
      %v822 = vadd.f32 %v748, %v798
      %v823 = vadd.f32 %v749, %v800
      %v824 = vadd.f32 %v750, %v802
      %v825 = vadd.f32 %v751, %v804
      %v826 = vadd.f32 %v752, %v806
      %v827 = vld [vmem:[%s354 + $0x30] sm:$0x7]
      %v828 = vunpack.c.l.bf16 %v827
      %s829 = scalar_lea.vmem %s2, 7
      %v830 = vld [vmem:[%s829] sm:$0x1]
      %v832 = vperm.slane %v830, 0
      %v834 = vmul.f32 %v756, %v832
      %v835 = vmul.f32 %v374, %v832
      %v836 = vmul.f32 %v375, %v832
      %v837 = vmul.f32 %v376, %v832
      %v838 = vmul.f32 %v377, %v832
      %v839 = vmul.f32 %v378, %v832
      %v840 = vmul.f32 %v379, %v832
      %v841 = vmul.f32 %v380, %v832
      %v842 = vmul.f32 %v541, %v832
      %v843 = vmul.f32 %v757, %v832
      %v844 = vmul.f32 %v828, %v832
      %vm856 = vcmask 1042432
      %v857 = vrot.slane %v834, 5
      %v858 = vrot.slane %v835, 5
      %v859 = vsel %vm856, %v857, %v858
      %v860 = vrot.slane %v836, 5
      %v861 = vsel %vm856, %v858, %v860
      %v862 = vrot.slane %v837, 5
      %v863 = vsel %vm856, %v860, %v862
      %v864 = vrot.slane %v838, 5
      %v865 = vsel %vm856, %v862, %v864
      %v866 = vrot.slane %v839, 5
      %v867 = vsel %vm856, %v864, %v866
      %v868 = vrot.slane %v840, 5
      %v869 = vsel %vm856, %v866, %v868
      %v870 = vrot.slane %v841, 5
      %v871 = vsel %vm856, %v868, %v870
      %v872 = vrot.slane %v842, 5
      %v873 = vsel %vm856, %v870, %v872
      %v874 = vrot.slane %v843, 5
      %v875 = vsel %vm856, %v872, %v874
      %v876 = vrot.slane %v844, 5
      %v877 = vsel %vm856, %v874, %v876
      %v888 = vadd.f32 %v817, %v859
      %v889 = vadd.f32 %v818, %v861
      %v890 = vadd.f32 %v819, %v863
      %v891 = vadd.f32 %v820, %v865
      %v892 = vadd.f32 %v821, %v867
      %v893 = vadd.f32 %v822, %v869
      %v894 = vadd.f32 %v823, %v871
      %v895 = vadd.f32 %v824, %v873
      %v896 = vadd.f32 %v825, %v875
      %v897 = vadd.f32 %v826, %v877
      %v898 = vld [vmem:[%s354 + $0x8] sm:$0x8]
      %v899 = vunpack.c.l.bf16 %v898
      %s900 = scalar_lea.vmem %s2, 8
      %v901 = vld [vmem:[%s900] sm:$0x1]
      %v903 = vperm.slane %v901, 0
      %v905 = vmul.f32 %v899, %v903
      %v906 = vmul.f32 %v374, %v903
      %v907 = vmul.f32 %v375, %v903
      %v908 = vmul.f32 %v376, %v903
      %v909 = vmul.f32 %v377, %v903
      %v910 = vmul.f32 %v378, %v903
      %v911 = vmul.f32 %v379, %v903
      %v912 = vmul.f32 %v380, %v903
      %v913 = vmul.f32 %v541, %v903
      %v914 = vmul.f32 %v757, %v903
      %v915 = vmul.f32 %v828, %v903
      %vm927 = vcmask 1041408
      %v928 = vrot.slane %v905, 6
      %v929 = vrot.slane %v906, 6
      %v930 = vsel %vm927, %v928, %v929
      %v931 = vrot.slane %v907, 6
      %v932 = vsel %vm927, %v929, %v931
      %v933 = vrot.slane %v908, 6
      %v934 = vsel %vm927, %v931, %v933
      %v935 = vrot.slane %v909, 6
      %v936 = vsel %vm927, %v933, %v935
      %v937 = vrot.slane %v910, 6
      %v938 = vsel %vm927, %v935, %v937
      %v939 = vrot.slane %v911, 6
      %v940 = vsel %vm927, %v937, %v939
      %v941 = vrot.slane %v912, 6
      %v942 = vsel %vm927, %v939, %v941
      %v943 = vrot.slane %v913, 6
      %v944 = vsel %vm927, %v941, %v943
      %v945 = vrot.slane %v914, 6
      %v946 = vsel %vm927, %v943, %v945
      %v947 = vrot.slane %v915, 6
      %v948 = vsel %vm927, %v945, %v947
      %v959 = vadd.f32 %v888, %v930
      %v960 = vadd.f32 %v889, %v932
      %v961 = vadd.f32 %v890, %v934
      %v962 = vadd.f32 %v891, %v936
      %v963 = vadd.f32 %v892, %v938
      %v964 = vadd.f32 %v893, %v940
      %v965 = vadd.f32 %v894, %v942
      %v966 = vadd.f32 %v895, %v944
      %v967 = vadd.f32 %v896, %v946
      %v968 = vadd.f32 %v897, %v948
      %v969 = vld [vmem:[%s3] sm:$0x1]
      %v971 = vperm.slane %v969, 0
      %v973 = vadd.f32 %v959, %v971
      %v974 = vadd.f32 %v960, %v971
      %v975 = vadd.f32 %v961, %v971
      %v976 = vadd.f32 %v962, %v971
      %v977 = vadd.f32 %v963, %v971
      %v978 = vadd.f32 %v964, %v971
      %v979 = vadd.f32 %v965, %v971
      %v980 = vadd.f32 %v966, %v971
      %v981 = vadd.f32 %v967, %v971
      %v982 = vadd.f32 %v968, %v971
      %v983 = vxor.u32 %v973, 2147483648
      %v984 = vxor.u32 %v974, 2147483648
      %v985 = vxor.u32 %v975, 2147483648
      %v986 = vxor.u32 %v976, 2147483648
      %v987 = vxor.u32 %v977, 2147483648
      %v988 = vxor.u32 %v978, 2147483648
      %v989 = vxor.u32 %v979, 2147483648
      %v990 = vxor.u32 %v980, 2147483648
      %v991 = vxor.u32 %v981, 2147483648
      %v992 = vxor.u32 %v982, 2147483648
      %v993 = vmul.f32 %v983, 1.442695
      %v994 = vpow.pop %v993
      %v995 = vmul.f32 %v984, 1.442695
      %v996 = vpow.pop %v995
      %v997 = vmul.f32 %v985, 1.442695
      %v998 = vpow.pop %v997
      %v999 = vmul.f32 %v986, 1.442695
      %v1000 = vpow.pop %v999
      %v1001 = vmul.f32 %v987, 1.442695
      %v1002 = vpow.pop %v1001
      %v1003 = vmul.f32 %v988, 1.442695
      %v1004 = vpow.pop %v1003
      %v1005 = vmul.f32 %v989, 1.442695
      %v1006 = vpow.pop %v1005
      %v1007 = vmul.f32 %v990, 1.442695
      %v1008 = vpow.pop %v1007
      %v1009 = vmul.f32 %v991, 1.442695
      %v1010 = vpow.pop %v1009
      %v1011 = vmul.f32 %v992, 1.442695
      %v1012 = vpow.pop %v1011
      %v1013 = vadd.f32 %v994, 1.0
      %v1014 = vadd.f32 %v996, 1.0
      %v1015 = vadd.f32 %v998, 1.0
      %v1016 = vadd.f32 %v1000, 1.0
      %v1017 = vadd.f32 %v1002, 1.0
      %v1018 = vadd.f32 %v1004, 1.0
      %v1019 = vadd.f32 %v1006, 1.0
      %v1020 = vadd.f32 %v1008, 1.0
      %v1021 = vadd.f32 %v1010, 1.0
      %v1022 = vadd.f32 %v1012, 1.0
      %v1023 = vrcp.pop %v1013
      %v1024 = vmul.f32 %v1013, %v1023
      %v1025 = vsub.f32 1.0, %v1024
      %v1026 = vmul.f32 %v1023, %v1025
      %v1027 = vadd.f32 %v1023, %v1026
      %vm1028 = vweird.f32 %v1013
      %vm1029 = vweird.f32 %v1023
      %vm1030 = vmor %vm1028, %vm1029
      %v1031 = vsel %vm1030, %v1023, %v1027
      %v1032 = vand.u32 2147483647, %v1013
      %vm1033 = vcmp.eq.f32.partialorder %v1032, 8.507059e+37
      %v1034 = vand.u32 %v1013, 2147483648
      %v1035 = vor.u32 1.1754944e-38, %v1034
      %v1036 = vsel %vm1033, %v1035, %v1031
      %v1037 = vmul.f32 1.0, %v1036
      %v1038 = vrcp.pop %v1014
      %v1039 = vmul.f32 %v1014, %v1038
      %v1040 = vsub.f32 1.0, %v1039
      %v1041 = vmul.f32 %v1038, %v1040
      %v1042 = vadd.f32 %v1038, %v1041
      %vm1043 = vweird.f32 %v1014
      %vm1044 = vweird.f32 %v1038
      %vm1045 = vmor %vm1043, %vm1044
      %v1046 = vsel %vm1045, %v1038, %v1042
      %v1047 = vand.u32 2147483647, %v1014
      %vm1048 = vcmp.eq.f32.partialorder %v1047, 8.507059e+37
      %v1049 = vand.u32 %v1014, 2147483648
      %v1050 = vor.u32 1.1754944e-38, %v1049
      %v1051 = vsel %vm1048, %v1050, %v1046
      %v1052 = vmul.f32 1.0, %v1051
      %v1053 = vrcp.pop %v1015
      %v1054 = vmul.f32 %v1015, %v1053
      %v1055 = vsub.f32 1.0, %v1054
      %v1056 = vmul.f32 %v1053, %v1055
      %v1057 = vadd.f32 %v1053, %v1056
      %vm1058 = vweird.f32 %v1015
      %vm1059 = vweird.f32 %v1053
      %vm1060 = vmor %vm1058, %vm1059
      %v1061 = vsel %vm1060, %v1053, %v1057
      %v1062 = vand.u32 2147483647, %v1015
      %vm1063 = vcmp.eq.f32.partialorder %v1062, 8.507059e+37
      %v1064 = vand.u32 %v1015, 2147483648
      %v1065 = vor.u32 1.1754944e-38, %v1064
      %v1066 = vsel %vm1063, %v1065, %v1061
      %v1067 = vmul.f32 1.0, %v1066
      %v1068 = vrcp.pop %v1016
      %v1069 = vmul.f32 %v1016, %v1068
      %v1070 = vsub.f32 1.0, %v1069
      %v1071 = vmul.f32 %v1068, %v1070
      %v1072 = vadd.f32 %v1068, %v1071
      %vm1073 = vweird.f32 %v1016
      %vm1074 = vweird.f32 %v1068
      %vm1075 = vmor %vm1073, %vm1074
      %v1076 = vsel %vm1075, %v1068, %v1072
      %v1077 = vand.u32 2147483647, %v1016
      %vm1078 = vcmp.eq.f32.partialorder %v1077, 8.507059e+37
      %v1079 = vand.u32 %v1016, 2147483648
      %v1080 = vor.u32 1.1754944e-38, %v1079
      %v1081 = vsel %vm1078, %v1080, %v1076
      %v1082 = vmul.f32 1.0, %v1081
      %v1083 = vrcp.pop %v1017
      %v1084 = vmul.f32 %v1017, %v1083
      %v1085 = vsub.f32 1.0, %v1084
      %v1086 = vmul.f32 %v1083, %v1085
      %v1087 = vadd.f32 %v1083, %v1086
      %vm1088 = vweird.f32 %v1017
      %vm1089 = vweird.f32 %v1083
      %vm1090 = vmor %vm1088, %vm1089
      %v1091 = vsel %vm1090, %v1083, %v1087
      %v1092 = vand.u32 2147483647, %v1017
      %vm1093 = vcmp.eq.f32.partialorder %v1092, 8.507059e+37
      %v1094 = vand.u32 %v1017, 2147483648
      %v1095 = vor.u32 1.1754944e-38, %v1094
      %v1096 = vsel %vm1093, %v1095, %v1091
      %v1097 = vmul.f32 1.0, %v1096
      %v1098 = vrcp.pop %v1018
      %v1099 = vmul.f32 %v1018, %v1098
      %v1100 = vsub.f32 1.0, %v1099
      %v1101 = vmul.f32 %v1098, %v1100
      %v1102 = vadd.f32 %v1098, %v1101
      %vm1103 = vweird.f32 %v1018
      %vm1104 = vweird.f32 %v1098
      %vm1105 = vmor %vm1103, %vm1104
      %v1106 = vsel %vm1105, %v1098, %v1102
      %v1107 = vand.u32 2147483647, %v1018
      %vm1108 = vcmp.eq.f32.partialorder %v1107, 8.507059e+37
      %v1109 = vand.u32 %v1018, 2147483648
      %v1110 = vor.u32 1.1754944e-38, %v1109
      %v1111 = vsel %vm1108, %v1110, %v1106
      %v1112 = vmul.f32 1.0, %v1111
      %v1113 = vrcp.pop %v1019
      %v1114 = vmul.f32 %v1019, %v1113
      %v1115 = vsub.f32 1.0, %v1114
      %v1116 = vmul.f32 %v1113, %v1115
      %v1117 = vadd.f32 %v1113, %v1116
      %vm1118 = vweird.f32 %v1019
      %vm1119 = vweird.f32 %v1113
      %vm1120 = vmor %vm1118, %vm1119
      %v1121 = vsel %vm1120, %v1113, %v1117
      %v1122 = vand.u32 2147483647, %v1019
      %vm1123 = vcmp.eq.f32.partialorder %v1122, 8.507059e+37
      %v1124 = vand.u32 %v1019, 2147483648
      %v1125 = vor.u32 1.1754944e-38, %v1124
      %v1126 = vsel %vm1123, %v1125, %v1121
      %v1127 = vmul.f32 1.0, %v1126
      %v1128 = vrcp.pop %v1020
      %v1129 = vmul.f32 %v1020, %v1128
      %v1130 = vsub.f32 1.0, %v1129
      %v1131 = vmul.f32 %v1128, %v1130
      %v1132 = vadd.f32 %v1128, %v1131
      %vm1133 = vweird.f32 %v1020
      %vm1134 = vweird.f32 %v1128
      %vm1135 = vmor %vm1133, %vm1134
      %v1136 = vsel %vm1135, %v1128, %v1132
      %v1137 = vand.u32 2147483647, %v1020
      %vm1138 = vcmp.eq.f32.partialorder %v1137, 8.507059e+37
      %v1139 = vand.u32 %v1020, 2147483648
      %v1140 = vor.u32 1.1754944e-38, %v1139
      %v1141 = vsel %vm1138, %v1140, %v1136
      %v1142 = vmul.f32 1.0, %v1141
      %v1143 = vrcp.pop %v1021
      %v1144 = vmul.f32 %v1021, %v1143
      %v1145 = vsub.f32 1.0, %v1144
      %v1146 = vmul.f32 %v1143, %v1145
      %v1147 = vadd.f32 %v1143, %v1146
      %vm1148 = vweird.f32 %v1021
      %vm1149 = vweird.f32 %v1143
      %vm1150 = vmor %vm1148, %vm1149
      %v1151 = vsel %vm1150, %v1143, %v1147
      %v1152 = vand.u32 2147483647, %v1021
      %vm1153 = vcmp.eq.f32.partialorder %v1152, 8.507059e+37
      %v1154 = vand.u32 %v1021, 2147483648
      %v1155 = vor.u32 1.1754944e-38, %v1154
      %v1156 = vsel %vm1153, %v1155, %v1151
      %v1157 = vmul.f32 1.0, %v1156
      %v1158 = vrcp.pop %v1022
      %v1159 = vmul.f32 %v1022, %v1158
      %v1160 = vsub.f32 1.0, %v1159
      %v1161 = vmul.f32 %v1158, %v1160
      %v1162 = vadd.f32 %v1158, %v1161
      %vm1163 = vweird.f32 %v1022
      %vm1164 = vweird.f32 %v1158
      %vm1165 = vmor %vm1163, %vm1164
      %v1166 = vsel %vm1165, %v1158, %v1162
      %v1167 = vand.u32 2147483647, %v1022
      %vm1168 = vcmp.eq.f32.partialorder %v1167, 8.507059e+37
      %v1169 = vand.u32 %v1022, 2147483648
      %v1170 = vor.u32 1.1754944e-38, %v1169
      %v1171 = vsel %vm1168, %v1170, %v1166
      %v1172 = vmul.f32 1.0, %v1171
      %v1173 = vmul.f32 %v973, %v1037
      %v1174 = vmul.f32 %v974, %v1052
      %v1175 = vmul.f32 %v975, %v1067
      %v1176 = vmul.f32 %v976, %v1082
      %v1177 = vmul.f32 %v977, %v1097
      %v1178 = vmul.f32 %v978, %v1112
      %v1179 = vmul.f32 %v979, %v1127
      %v1180 = vmul.f32 %v980, %v1142
      %v1181 = vmul.f32 %v981, %v1157
      %v1182 = vmul.f32 %v982, %v1172
      %v1183 = vld [vmem:[%s1 + $0xb] sm:$0xff]
      %v1184 = vld [vmem:[%s1 + $0x13] sm:$0xff]
      %v1185 = vld [vmem:[%s1 + $0x1b] sm:$0xff]
      %v1186 = vld [vmem:[%s1 + $0x23] sm:$0xff]
      %v1187 = vld [vmem:[%s1 + $0x2b] sm:$0xff]
      %v1188 = vld [vmem:[%s1 + $0x33] sm:$0xff]
      %v1189 = vld [vmem:[%s1 + $0x3b] sm:$0xff]
      %v1190 = vld [vmem:[%s1 + $0x43] sm:$0xff]
      %v1191 = vld [vmem:[%s1 + $0x4b] sm:$0xff]
      %v1192 = vld [vmem:[%s1 + $0x53] sm:$0xff]
      %1194 = vset.pattern.permute.xlu0 0
      %1195 = vperm.xlu0 %1194, %v1183
      %v1196 = vpop.permute.xlu0 %1195
      %1199 = vset.pattern.permute.xlu0 0
      %1200 = vperm.xlu0 %1199, %v1184
      %v1201 = vpop.permute.xlu0 %1200
      %1204 = vset.pattern.permute.xlu0 0
      %1205 = vperm.xlu0 %1204, %v1185
      %v1206 = vpop.permute.xlu0 %1205
      %1209 = vset.pattern.permute.xlu0 0
      %1210 = vperm.xlu0 %1209, %v1186
      %v1211 = vpop.permute.xlu0 %1210
      %1214 = vset.pattern.permute.xlu0 0
      %1215 = vperm.xlu0 %1214, %v1187
      %v1216 = vpop.permute.xlu0 %1215
      %1219 = vset.pattern.permute.xlu0 0
      %1220 = vperm.xlu0 %1219, %v1188
      %v1221 = vpop.permute.xlu0 %1220
      %1224 = vset.pattern.permute.xlu0 0
      %1225 = vperm.xlu0 %1224, %v1189
      %v1226 = vpop.permute.xlu0 %1225
      %1229 = vset.pattern.permute.xlu0 0
      %1230 = vperm.xlu0 %1229, %v1190
      %v1231 = vpop.permute.xlu0 %1230
      %1234 = vset.pattern.permute.xlu0 0
      %1235 = vperm.xlu0 %1234, %v1191
      %v1236 = vpop.permute.xlu0 %1235
      %1239 = vset.pattern.permute.xlu0 0
      %1240 = vperm.xlu0 %1239, %v1192
      %v1241 = vpop.permute.xlu0 %1240
      %v1243 = vmul.f32 %v1173, %v1196
      %v1244 = vmul.f32 %v1174, %v1201
      %v1245 = vmul.f32 %v1175, %v1206
      %v1246 = vmul.f32 %v1176, %v1211
      %v1247 = vmul.f32 %v1177, %v1216
      %v1248 = vmul.f32 %v1178, %v1221
      %v1249 = vmul.f32 %v1179, %v1226
      %v1250 = vmul.f32 %v1180, %v1231
      %v1251 = vmul.f32 %v1181, %v1236
      %v1252 = vmul.f32 %v1182, %v1241
      %vm1253 = vcmask 130048
      %v1254 = vsel %vm1253, %v1243, 0.0
      %v1255 = vsel %vm1253, %v1244, 0.0
      %v1256 = vadd.f32 %v1254, %v1255
      %v1257 = vsel %vm1253, %v1245, 0.0
      %v1258 = vadd.f32 %v1256, %v1257
      %v1259 = vsel %vm1253, %v1246, 0.0
      %v1260 = vadd.f32 %v1258, %v1259
      %v1261 = vsel %vm1253, %v1247, 0.0
      %v1262 = vadd.f32 %v1260, %v1261
      %v1263 = vsel %vm1253, %v1248, 0.0
      %v1264 = vadd.f32 %v1262, %v1263
      %v1265 = vsel %vm1253, %v1249, 0.0
      %v1266 = vadd.f32 %v1264, %v1265
      %v1267 = vsel %vm1253, %v1250, 0.0
      %v1268 = vadd.f32 %v1266, %v1267
      %v1269 = vsel %vm1253, %v1251, 0.0
      %v1270 = vadd.f32 %v1268, %v1269
      %v1271 = vsel %vm1253, %v1252, 0.0
      %v1272 = vadd.f32 %v1270, %v1271
      %v1273 = vrot.slane %v1272, 4
      %v1274 = vadd.f32 %v1272, %v1273
      %v1275 = vrot.slane %v1274, 2
      %v1276 = vadd.f32 %v1274, %v1275
      %v1277 = vrot.slane %v1276, 1
      %v1278 = vadd.f32 %v1276, %v1277
      %v1279 = vmul.f32 %v1278, 0.015625
      %v1280 = vld [vmem:[%s4] sm:$0xf]
      %v1281 = vmul.f32 %v1280, %v1279
      %vm1282 = vcmask 125952
      %v1283 = vsel %vm1282, %v1281, 0.0
      %1284 = vadd.xlane.f32.xlu0 %v1283
      %v1285 = vpop.xlane.xlu0 %1284
      %v1286 = vld [vmem:[%s5] sm:$0xf]
      %v1287 = vadd.f32 %v1285, %v1286
      %v1288 = vxor.u32 %v1287, 2147483648
      %v1289 = vmul.f32 %v1288, 1.442695
      %v1290 = vpow.pop %v1289
      %v1291 = vadd.f32 %v1290, 1.0
      %v1292 = vrcp.pop %v1291
      %v1293 = vmul.f32 %v1291, %v1292
      %v1294 = vsub.f32 1.0, %v1293
      %v1295 = vmul.f32 %v1292, %v1294
      %v1296 = vadd.f32 %v1292, %v1295
      %vm1297 = vweird.f32 %v1291
      %vm1298 = vweird.f32 %v1292
      %vm1299 = vmor %vm1297, %vm1298
      %v1300 = vsel %vm1299, %v1292, %v1296
      %v1301 = vand.u32 2147483647, %v1291
      %vm1302 = vcmp.eq.f32.partialorder %v1301, 8.507059e+37
      %v1303 = vand.u32 %v1291, 2147483648
      %v1304 = vor.u32 1.1754944e-38, %v1303
      %v1305 = vsel %vm1302, %v1304, %v1300
      %v1306 = vmul.f32 1.0, %v1305
      %v1307 = vmul.f32 %v1287, %v1306
      %v1308 = vld [vmem:[%s6] sm:$0xf]
      %1310 = vset.pattern.permute.xlu0 0
      %1311 = vperm.xlu0 %1310, %v1307
      %v1312 = vpop.permute.xlu0 %1311
      %v1314 = vmul.f32 %v1308, %v1312
      %v1315 = vsel %vm1282, %v1314, 0.0
      %v1316 = vrot.slane %v1315, 4
      %v1317 = vadd.f32 %v1315, %v1316
      %v1318 = vrot.slane %v1317, 2
      %v1319 = vadd.f32 %v1317, %v1318
      %v1320 = vrot.slane %v1319, 1
      %v1321 = vadd.f32 %v1319, %v1320
      %v1322 = vld [vmem:[%s7] sm:$0x1]
      %v1323 = vadd.f32 %v1321, %v1322
      %v1324 = vxor.u32 %v1323, 2147483648
      %v1325 = vmul.f32 %v1324, 1.442695
      %v1326 = vpow.pop %v1325
      %v1327 = vadd.f32 %v1326, 1.0
      %v1328 = vrcp.pop %v1327
      %v1329 = vmul.f32 %v1327, %v1328
      %v1330 = vsub.f32 1.0, %v1329
      %v1331 = vmul.f32 %v1328, %v1330
      %v1332 = vadd.f32 %v1328, %v1331
      %vm1333 = vweird.f32 %v1327
      %vm1334 = vweird.f32 %v1328
      %vm1335 = vmor %vm1333, %vm1334
      %v1336 = vsel %vm1335, %v1328, %v1332
      %v1337 = vand.u32 2147483647, %v1327
      %vm1338 = vcmp.eq.f32.partialorder %v1337, 8.507059e+37
      %v1339 = vand.u32 %v1327, 2147483648
      %v1340 = vor.u32 1.1754944e-38, %v1339
      %v1341 = vsel %vm1338, %v1340, %v1336
      %v1342 = vmul.f32 1.0, %v1341
      %v1343 = vperm.slane %v1342, 0
      %v1344 = vmul.f32 %v1173, %v1343
      %v1345 = vmul.f32 %v1174, %v1343
      %v1346 = vmul.f32 %v1175, %v1343
      %v1347 = vmul.f32 %v1176, %v1343
      %v1348 = vmul.f32 %v1177, %v1343
      %v1349 = vmul.f32 %v1178, %v1343
      %v1350 = vmul.f32 %v1179, %v1343
      %v1351 = vmul.f32 %v1180, %v1343
      %v1352 = vmul.f32 %v1181, %v1343
      %v1353 = vmul.f32 %v1182, %v1343
      %v1354 = vpack.c.bf16 %v1345, %v1344
      %v1355 = vpack.c.bf16 %v1347, %v1346
      %v1356 = vpack.c.bf16 %v1349, %v1348
      %v1357 = vpack.c.bf16 %v1351, %v1350
      %v1358 = vpack.c.bf16 %v1353, %v1352
      %v1359 = vld [vmem:[%s8] sm:$0xf]
      %v1360 = vld [vmem:[%s8 + $0x4] sm:$0xf]
      %v1361 = vld [vmem:[%s9] sm:$0x1]
      %v1363 = vperm.slane %v1361, 0
      %v1367 = vunpack.c.l.b16 %v1359
      %v1368 = vunpack.c.l.b16 %v1360
      %v1369 = vpack.c.b16 %v1368, %v1367
      %v1372 = vsel %vm1253, %v1354, 0
      %v1375 = vsel %vm1253, %v1355, 0
      %v1378 = vsel %vm1253, %v1356, 0
      %v1381 = vsel %vm1253, %v1357, 0
      %v1384 = vsel %vm1253, %v1358, 0
      %1386 = vmatpush.bf16.msra.mxu0 0
      %1387 = vmatpush.bf16.msra.mxu0 0
      %1388 = vmatpush.bf16.msra.mxu0 0
      %1389 = vmatpush.bf16.msra.mxu0 0
      %1390 = vmatpush.bf16.msra.mxu0 0
      %1391 = vmatpush.bf16.msra.mxu0 0
      %1392 = vmatpush.bf16.msra.mxu0 0
      %1393 = vmatpush.bf16.msra.mxu0 %v1369
      %1394 = vmatmul.bf16.gmra.mxu0 %v1372
      %v1395 = vpop.f32.mrf.mxu0
      %v1396 = vadd.f32 %v1363, %v1395
      %v1397 = vpop.f32.mrf.mxu0
      %v1398 = vadd.f32 %v1363, %v1397
      %1399 = vmatmul.bf16.gmra.mxu0 %v1375
      %v1400 = vpop.f32.mrf.mxu0
      %v1401 = vadd.f32 %v1363, %v1400
      %v1402 = vpop.f32.mrf.mxu0
      %v1403 = vadd.f32 %v1363, %v1402
      %1404 = vmatmul.bf16.gmra.mxu0 %v1378
      %v1405 = vpop.f32.mrf.mxu0
      %v1406 = vadd.f32 %v1363, %v1405
      %v1407 = vpop.f32.mrf.mxu0
      %v1408 = vadd.f32 %v1363, %v1407
      %1409 = vmatmul.bf16.gmra.mxu0 %v1381
      %v1410 = vpop.f32.mrf.mxu0
      %v1411 = vadd.f32 %v1363, %v1410
      %v1412 = vpop.f32.mrf.mxu0
      %v1413 = vadd.f32 %v1363, %v1412
      %1414 = vmatmul.bf16.gmra.mxu0 %v1384
      %v1415 = vpop.f32.mrf.mxu0
      %v1416 = vadd.f32 %v1363, %v1415
      %v1417 = vpop.f32.mrf.mxu0
      %v1418 = vadd.f32 %v1363, %v1417
      %1419 = vdwg.mxu0
      %v1431 = vrot.slane %v540, 3
      %v1432 = vrot.slane %v373, 3
      %v1433 = vsel %vm640, %v1431, %v1432
      %v1434 = vrot.slane %v374, 3
      %v1435 = vsel %vm640, %v1432, %v1434
      %v1436 = vrot.slane %v375, 3
      %v1437 = vsel %vm640, %v1434, %v1436
      %v1438 = vrot.slane %v376, 3
      %v1439 = vsel %vm640, %v1436, %v1438
      %v1440 = vrot.slane %v377, 3
      %v1441 = vsel %vm640, %v1438, %v1440
      %v1442 = vrot.slane %v378, 3
      %v1443 = vsel %vm640, %v1440, %v1442
      %v1444 = vrot.slane %v379, 3
      %v1445 = vsel %vm640, %v1442, %v1444
      %v1446 = vrot.slane %v380, 3
      %v1447 = vsel %vm640, %v1444, %v1446
      %v1448 = vrot.slane %v541, 3
      %v1449 = vsel %vm640, %v1446, %v1448
      %v1450 = vrot.slane %v612, 3
      %v1451 = vsel %vm640, %v1448, %v1450
      %v1462 = vadd.f32 %v1396, %v1433
      %v1463 = vadd.f32 %v1398, %v1435
      %v1464 = vadd.f32 %v1401, %v1437
      %v1465 = vadd.f32 %v1403, %v1439
      %v1466 = vadd.f32 %v1406, %v1441
      %v1467 = vadd.f32 %v1408, %v1443
      %v1468 = vadd.f32 %v1411, %v1445
      %v1469 = vadd.f32 %v1413, %v1447
      %v1470 = vadd.f32 %v1416, %v1449
      %v1471 = vadd.f32 %v1418, %v1451
      %1472 = vst.msk [vmem:[%s359] sm:$0xff] %vm1253, %v1462
      %1473 = vst.msk [vmem:[%s359 + $0x8] sm:$0xff] %vm1253, %v1463
      %1474 = vst.msk [vmem:[%s359 + $0x10] sm:$0xff] %vm1253, %v1464
      %1475 = vst.msk [vmem:[%s359 + $0x18] sm:$0xff] %vm1253, %v1465
      %1476 = vst.msk [vmem:[%s359 + $0x20] sm:$0xff] %vm1253, %v1466
      %1477 = vst.msk [vmem:[%s359 + $0x28] sm:$0xff] %vm1253, %v1467
      %1478 = vst.msk [vmem:[%s359 + $0x30] sm:$0xff] %vm1253, %v1468
      %1479 = vst.msk [vmem:[%s359 + $0x38] sm:$0xff] %vm1253, %v1469
      %1480 = vst.msk [vmem:[%s359 + $0x40] sm:$0xff] %vm1253, %v1470
      %1481 = vst.msk [vmem:[%s359 + $0x48] sm:$0xff] %vm1253, %v1471
      %p1482 = scmp.lt.s32.totalorder %s21, 1
      %s1483 = scalar_select %p1482, %s21, 1
      %s1484 = smul.addr %s1483, 10
      %s1485 = smul.addr %s1484, 8
      %s1486 = scalar_lea.vmem %s10, %s1485
      // Predicated region
      $region61: #{_lambda_.6} parent=59 // pred_check
        %p1487 = pneg %p254
      $region62: #{_lambda_.6} parent=59 // pred_check_branch
        %1489 = sbr.rel (%p1487) target = $region64
      $region63: #{_lambda_.6} parent=59 // pred_region
        _
      $region64: #{_lambda_.6} parent=59 // pred_fallthru
        _
    $region60: #{_lambda_.6} parent=5 // pred_fallthru
      _
    %p1490 = scmp.le.s32.totalorder 2, %s16
    // Predicated region
    $region65: #{_lambda_.6} parent=5 // pred_check
      %p1491 = pneg %p1490
    $region66: #{_lambda_.6} parent=5 // pred_check_branch
      %1493 = sbr.rel (%p1491) target = $region68
    $region67: #{_lambda_.6} parent=5 // pred_region
      %s1494 = ssub.s32 %s16, 2
      // Predicated region
      $region69: #{_lambda_.6} parent=67 // pred_check
        %p1495 = pneg %p260
      $region70: #{_lambda_.6} parent=67 // pred_check_branch
        %1497 = sbr.rel (%p1495) target = $region72
      $region71: #{_lambda_.6} parent=67 // pred_region
        %p1498 = scmp.lt.s32.totalorder %s22, 1
        %s1499 = scalar_select %p1498, %s22, 1
        %s1500 = smul.addr %s1499, 10
        %s1501 = smul.addr %s1500, 8
        %s1502 = scalar_lea.vmem %s10, %s1501
      $region72: #{_lambda_.6} parent=67 // pred_fallthru
        _
    $region68: #{_lambda_.6} parent=5 // pred_fallthru
      _
  $region6: #{_lambda_.6} parent=0 // loop_footer
    %s20 = sadd.s32 1, %s16
  $region7: #{_lambda_.6} parent=0 // loop_footer_branch
    %15 = sbr.rel target = $region3
  $region8: #{_lambda_.6} parent=0 // loop_exit
    _

// kernel: _lambda_.7
$region0: #{_lambda_.7}
  #allocation0 [shape = 'u32[]', space=smem, size = 0x4, offset = 0x4, fixed_abs, tag = 'smem constant byte address 0x4 - core index']
  #allocation1 [shape = 'u32[72,128]{1,0:T(1,128)}', space=vmem, size = 0x9000, scoped, tag = 'internal scratch']
  #allocation2 [shape = 'f32[120,64]{1,0:T(8,128)}', space=vmem, size = 0xf000, scoped, tag = 'scratch operand']
  %s0 = inlined_call_operand.vmem [shape: bf16[2,120,16], index: 0, kind: input, shape index: {}]
  %s1 = inlined_call_operand.vmem [shape: f32[120,1], index: 1, kind: input, shape index: {}]
  %s2 = inlined_call_operand.vmem [shape: bf16[16,64], index: 2, kind: input, shape index: {}]
  %s3 = inlined_call_operand.vmem [shape: f32[1,64], index: 3, kind: input, shape index: {}]
  %s4 = inlined_call_operand.vmem [shape: f32[9,1,64], index: 4, kind: input, shape index: {}]
  %s5 = inlined_call_operand.vmem [shape: f32[1,64], index: 5, kind: input, shape index: {}]
  %s6 = inlined_call_operand.vmem [shape: f32[4,64], index: 6, kind: input, shape index: {}]
  %s7 = inlined_call_operand.vmem [shape: f32[4,1], index: 7, kind: input, shape index: {}]
  %s8 = inlined_call_operand.vmem [shape: f32[4,64], index: 8, kind: input, shape index: {}]
  %s9 = inlined_call_operand.vmem [shape: f32[1,64], index: 9, kind: input, shape index: {}]
  %s10 = inlined_call_operand.vmem [shape: bf16[64,24], index: 10, kind: input, shape index: {}]
  %s11 = inlined_call_operand.vmem [shape: f32[1,24], index: 11, kind: input, shape index: {}]
  %s12 = inlined_call_operand.vmem [shape: f32[2,20,24], index: 12, kind: output, shape index: {}]
  %s13 = sld [smem:[#allocation0]]
  $region81: #{_lambda_.7} parent=0
    _
  %s15 = ssub.s32 1, %s13
  %s16 = scalar_select 0, %s15, %s13
  loop: start=0, step=1, limit=4
  $region2: #{_lambda_.7} parent=0 // loop_pre_header
    _
  $region3: #{_lambda_.7} parent=0 // loop_header
    %s18 = sphi 0, %s22
    %p19 = scmp.ge.s32.totalorder %s18, 4
    %s28 = sphi 0, %s30
    %s31 = sphi 0, %s28
    %s32 = sphi 0, %s31
    %s48 = sphi 0, %s32
    %s52 = sphi 0, %s52
    %s54 = sphi 0, %s52
    %s55 = sphi 0, %s54
    %s69 = sphi 0, %s55
    %s73 = sphi 0, %s73
    %s75 = sphi 0, %s73
    %s76 = sphi 0, %s75
    %s90 = sphi 0, %s76
    %s94 = sphi 0, %s94
    %s96 = sphi 0, %s94
    %s97 = sphi 0, %s96
    %s111 = sphi 0, %s97
    %s115 = sphi 0, %s115
    %s117 = sphi 0, %s115
    %s118 = sphi 0, %s117
    %s132 = sphi 0, %s118
    %s136 = sphi 0, %s136
    %s138 = sphi 0, %s136
    %s139 = sphi 0, %s138
    %s153 = sphi 0, %s139
    %s157 = sphi 0, %s157
    %s159 = sphi 0, %s157
    %s160 = sphi 0, %s159
    %s174 = sphi 0, %s160
    %s178 = sphi 0, %s178
    %s180 = sphi 0, %s178
    %s181 = sphi 0, %s180
    %s195 = sphi 0, %s181
    %s199 = sphi 0, %s199
    %s201 = sphi 0, %s199
    %s202 = sphi 0, %s201
    %s216 = sphi 0, %s202
    %s220 = sphi 0, %s220
    %s222 = sphi 0, %s220
    %s223 = sphi 0, %s222
    %s237 = sphi 0, %s223
    %s241 = sphi 0, %s241
    %s243 = sphi 0, %s241
    %s244 = sphi 0, %s243
    %s258 = sphi 0, %s244
    %s262 = sphi 0, %s262
    %s264 = sphi 0, %s262
    %s265 = sphi 0, %s264
    %s279 = sphi 0, %s265
    %s285 = sphi 0, %s287
    %s288 = sphi 0, %s285
    %s289 = sphi 0, %s288
    %s305 = sphi 0, %s289
  $region4: #{_lambda_.7} parent=0 // loop_header_branch
    %21 = sbr.rel (%p19) target = $region8
  $region5: #{_lambda_.7} parent=0 // loop_body
    %s23 = ssub.s32 %s18, 1
    %s24 = ssub.s32 %s18, 2
    %s25 = sadd.s32 %s18, 1
    %s26 = ssub.s32 %s18, %s25
    %p27 = scmp.eq.s32.totalorder %s26, 0
    %s29 = sadd.s32 %s28, 1
    %s30 = scalar_select %p27, %s28, %s29
    %p33 = pneg %p27
    %p34 = scmp.eq.s32.totalorder %s18, 1
    %p35 = por %p33, %p34
    %p36 = scmp.ne.s32.totalorder %s28, %s31
    %p37 = scmp.eq.s32.totalorder %s18, 0
    %p38 = por %p36, %p37
    %p39 = scmp.ne.s32.totalorder %s28, %s31
    %p40 = scmp.eq.s32.totalorder %s23, 1
    %p41 = por %p39, %p40
    %p42 = scmp.ne.s32.totalorder %s31, %s32
    %p43 = scmp.eq.s32.totalorder %s23, 0
    %p44 = por %p42, %p43
    %p45 = scmp.ne.s32.totalorder %s31, %s32
    %p46 = scmp.eq.s32.totalorder %s24, 1
    %p47 = por %p45, %p46
    %p49 = scmp.ne.s32.totalorder %s32, %s48
    %p50 = scmp.eq.s32.totalorder %s24, 0
    %p51 = por %p49, %p50
    %s53 = sadd.s32 %s52, 1
    %p56 = scmp.eq.s32.totalorder %s18, 1
    %p57 = scmp.ne.s32.totalorder %s52, %s54
    %p58 = scmp.eq.s32.totalorder %s18, 0
    %p59 = por %p57, %p58
    %p60 = scmp.ne.s32.totalorder %s52, %s54
    %p61 = scmp.eq.s32.totalorder %s23, 1
    %p62 = por %p60, %p61
    %p63 = scmp.ne.s32.totalorder %s54, %s55
    %p64 = scmp.eq.s32.totalorder %s23, 0
    %p65 = por %p63, %p64
    %p66 = scmp.ne.s32.totalorder %s54, %s55
    %p67 = scmp.eq.s32.totalorder %s24, 1
    %p68 = por %p66, %p67
    %p70 = scmp.ne.s32.totalorder %s55, %s69
    %p71 = scmp.eq.s32.totalorder %s24, 0
    %p72 = por %p70, %p71
    %s74 = sadd.s32 %s73, 1
    %p77 = scmp.eq.s32.totalorder %s18, 1
    %p78 = scmp.ne.s32.totalorder %s73, %s75
    %p79 = scmp.eq.s32.totalorder %s18, 0
    %p80 = por %p78, %p79
    %p81 = scmp.ne.s32.totalorder %s73, %s75
    %p82 = scmp.eq.s32.totalorder %s23, 1
    %p83 = por %p81, %p82
    %p84 = scmp.ne.s32.totalorder %s75, %s76
    %p85 = scmp.eq.s32.totalorder %s23, 0
    %p86 = por %p84, %p85
    %p87 = scmp.ne.s32.totalorder %s75, %s76
    %p88 = scmp.eq.s32.totalorder %s24, 1
    %p89 = por %p87, %p88
    %p91 = scmp.ne.s32.totalorder %s76, %s90
    %p92 = scmp.eq.s32.totalorder %s24, 0
    %p93 = por %p91, %p92
    %s95 = sadd.s32 %s94, 1
    %p98 = scmp.eq.s32.totalorder %s18, 1
    %p99 = scmp.ne.s32.totalorder %s94, %s96
    %p100 = scmp.eq.s32.totalorder %s18, 0
    %p101 = por %p99, %p100
    %p102 = scmp.ne.s32.totalorder %s94, %s96
    %p103 = scmp.eq.s32.totalorder %s23, 1
    %p104 = por %p102, %p103
    %p105 = scmp.ne.s32.totalorder %s96, %s97
    %p106 = scmp.eq.s32.totalorder %s23, 0
    %p107 = por %p105, %p106
    %p108 = scmp.ne.s32.totalorder %s96, %s97
    %p109 = scmp.eq.s32.totalorder %s24, 1
    %p110 = por %p108, %p109
    %p112 = scmp.ne.s32.totalorder %s97, %s111
    %p113 = scmp.eq.s32.totalorder %s24, 0
    %p114 = por %p112, %p113
    %s116 = sadd.s32 %s115, 1
    %p119 = scmp.eq.s32.totalorder %s18, 1
    %p120 = scmp.ne.s32.totalorder %s115, %s117
    %p121 = scmp.eq.s32.totalorder %s18, 0
    %p122 = por %p120, %p121
    %p123 = scmp.ne.s32.totalorder %s115, %s117
    %p124 = scmp.eq.s32.totalorder %s23, 1
    %p125 = por %p123, %p124
    %p126 = scmp.ne.s32.totalorder %s117, %s118
    %p127 = scmp.eq.s32.totalorder %s23, 0
    %p128 = por %p126, %p127
    %p129 = scmp.ne.s32.totalorder %s117, %s118
    %p130 = scmp.eq.s32.totalorder %s24, 1
    %p131 = por %p129, %p130
    %p133 = scmp.ne.s32.totalorder %s118, %s132
    %p134 = scmp.eq.s32.totalorder %s24, 0
    %p135 = por %p133, %p134
    %s137 = sadd.s32 %s136, 1
    %p140 = scmp.eq.s32.totalorder %s18, 1
    %p141 = scmp.ne.s32.totalorder %s136, %s138
    %p142 = scmp.eq.s32.totalorder %s18, 0
    %p143 = por %p141, %p142
    %p144 = scmp.ne.s32.totalorder %s136, %s138
    %p145 = scmp.eq.s32.totalorder %s23, 1
    %p146 = por %p144, %p145
    %p147 = scmp.ne.s32.totalorder %s138, %s139
    %p148 = scmp.eq.s32.totalorder %s23, 0
    %p149 = por %p147, %p148
    %p150 = scmp.ne.s32.totalorder %s138, %s139
    %p151 = scmp.eq.s32.totalorder %s24, 1
    %p152 = por %p150, %p151
    %p154 = scmp.ne.s32.totalorder %s139, %s153
    %p155 = scmp.eq.s32.totalorder %s24, 0
    %p156 = por %p154, %p155
    %s158 = sadd.s32 %s157, 1
    %p161 = scmp.eq.s32.totalorder %s18, 1
    %p162 = scmp.ne.s32.totalorder %s157, %s159
    %p163 = scmp.eq.s32.totalorder %s18, 0
    %p164 = por %p162, %p163
    %p165 = scmp.ne.s32.totalorder %s157, %s159
    %p166 = scmp.eq.s32.totalorder %s23, 1
    %p167 = por %p165, %p166
    %p168 = scmp.ne.s32.totalorder %s159, %s160
    %p169 = scmp.eq.s32.totalorder %s23, 0
    %p170 = por %p168, %p169
    %p171 = scmp.ne.s32.totalorder %s159, %s160
    %p172 = scmp.eq.s32.totalorder %s24, 1
    %p173 = por %p171, %p172
    %p175 = scmp.ne.s32.totalorder %s160, %s174
    %p176 = scmp.eq.s32.totalorder %s24, 0
    %p177 = por %p175, %p176
    %s179 = sadd.s32 %s178, 1
    %p182 = scmp.eq.s32.totalorder %s18, 1
    %p183 = scmp.ne.s32.totalorder %s178, %s180
    %p184 = scmp.eq.s32.totalorder %s18, 0
    %p185 = por %p183, %p184
    %p186 = scmp.ne.s32.totalorder %s178, %s180
    %p187 = scmp.eq.s32.totalorder %s23, 1
    %p188 = por %p186, %p187
    %p189 = scmp.ne.s32.totalorder %s180, %s181
    %p190 = scmp.eq.s32.totalorder %s23, 0
    %p191 = por %p189, %p190
    %p192 = scmp.ne.s32.totalorder %s180, %s181
    %p193 = scmp.eq.s32.totalorder %s24, 1
    %p194 = por %p192, %p193
    %p196 = scmp.ne.s32.totalorder %s181, %s195
    %p197 = scmp.eq.s32.totalorder %s24, 0
    %p198 = por %p196, %p197
    %s200 = sadd.s32 %s199, 1
    %p203 = scmp.eq.s32.totalorder %s18, 1
    %p204 = scmp.ne.s32.totalorder %s199, %s201
    %p205 = scmp.eq.s32.totalorder %s18, 0
    %p206 = por %p204, %p205
    %p207 = scmp.ne.s32.totalorder %s199, %s201
    %p208 = scmp.eq.s32.totalorder %s23, 1
    %p209 = por %p207, %p208
    %p210 = scmp.ne.s32.totalorder %s201, %s202
    %p211 = scmp.eq.s32.totalorder %s23, 0
    %p212 = por %p210, %p211
    %p213 = scmp.ne.s32.totalorder %s201, %s202
    %p214 = scmp.eq.s32.totalorder %s24, 1
    %p215 = por %p213, %p214
    %p217 = scmp.ne.s32.totalorder %s202, %s216
    %p218 = scmp.eq.s32.totalorder %s24, 0
    %p219 = por %p217, %p218
    %s221 = sadd.s32 %s220, 1
    %p224 = scmp.eq.s32.totalorder %s18, 1
    %p225 = scmp.ne.s32.totalorder %s220, %s222
    %p226 = scmp.eq.s32.totalorder %s18, 0
    %p227 = por %p225, %p226
    %p228 = scmp.ne.s32.totalorder %s220, %s222
    %p229 = scmp.eq.s32.totalorder %s23, 1
    %p230 = por %p228, %p229
    %p231 = scmp.ne.s32.totalorder %s222, %s223
    %p232 = scmp.eq.s32.totalorder %s23, 0
    %p233 = por %p231, %p232
    %p234 = scmp.ne.s32.totalorder %s222, %s223
    %p235 = scmp.eq.s32.totalorder %s24, 1
    %p236 = por %p234, %p235
    %p238 = scmp.ne.s32.totalorder %s223, %s237
    %p239 = scmp.eq.s32.totalorder %s24, 0
    %p240 = por %p238, %p239
    %s242 = sadd.s32 %s241, 1
    %p245 = scmp.eq.s32.totalorder %s18, 1
    %p246 = scmp.ne.s32.totalorder %s241, %s243
    %p247 = scmp.eq.s32.totalorder %s18, 0
    %p248 = por %p246, %p247
    %p249 = scmp.ne.s32.totalorder %s241, %s243
    %p250 = scmp.eq.s32.totalorder %s23, 1
    %p251 = por %p249, %p250
    %p252 = scmp.ne.s32.totalorder %s243, %s244
    %p253 = scmp.eq.s32.totalorder %s23, 0
    %p254 = por %p252, %p253
    %p255 = scmp.ne.s32.totalorder %s243, %s244
    %p256 = scmp.eq.s32.totalorder %s24, 1
    %p257 = por %p255, %p256
    %p259 = scmp.ne.s32.totalorder %s244, %s258
    %p260 = scmp.eq.s32.totalorder %s24, 0
    %p261 = por %p259, %p260
    %s263 = sadd.s32 %s262, 1
    %p266 = scmp.eq.s32.totalorder %s18, 1
    %p267 = scmp.ne.s32.totalorder %s262, %s264
    %p268 = scmp.eq.s32.totalorder %s18, 0
    %p269 = por %p267, %p268
    %p270 = scmp.ne.s32.totalorder %s262, %s264
    %p271 = scmp.eq.s32.totalorder %s23, 1
    %p272 = por %p270, %p271
    %p273 = scmp.ne.s32.totalorder %s264, %s265
    %p274 = scmp.eq.s32.totalorder %s23, 0
    %p275 = por %p273, %p274
    %p276 = scmp.ne.s32.totalorder %s264, %s265
    %p277 = scmp.eq.s32.totalorder %s24, 1
    %p278 = por %p276, %p277
    %p280 = scmp.ne.s32.totalorder %s265, %s279
    %p281 = scmp.eq.s32.totalorder %s24, 0
    %p282 = por %p280, %p281
    %s283 = ssub.s32 %s18, %s25
    %p284 = scmp.eq.s32.totalorder %s283, 0
    %s286 = sadd.s32 %s285, 1
    %s287 = scalar_select %p284, %s285, %s286
    %p290 = pneg %p284
    %p291 = scmp.eq.s32.totalorder %s18, 1
    %p292 = por %p290, %p291
    %p293 = scmp.ne.s32.totalorder %s285, %s288
    %p294 = scmp.eq.s32.totalorder %s18, 0
    %p295 = por %p293, %p294
    %p296 = scmp.ne.s32.totalorder %s285, %s288
    %p297 = scmp.eq.s32.totalorder %s23, 1
    %p298 = por %p296, %p297
    %p299 = scmp.ne.s32.totalorder %s288, %s289
    %p300 = scmp.eq.s32.totalorder %s23, 0
    %p301 = por %p299, %p300
    %p302 = scmp.ne.s32.totalorder %s288, %s289
    %p303 = scmp.eq.s32.totalorder %s24, 1
    %p304 = por %p302, %p303
    %p306 = scmp.ne.s32.totalorder %s289, %s305
    %p307 = scmp.eq.s32.totalorder %s24, 0
    %p308 = por %p306, %p307
    %p309 = scmp.le.s32.totalorder 1, %s18
    %p310 = scmp.lt.s32.totalorder %s18, 3
    %p311 = pnand %p309, %p310
    %p312 = pneg %p311
    // Predicated region
    $region9: #{_lambda_.7} parent=5 // pred_check
      _
    $region10: #{_lambda_.7} parent=5 // pred_check_branch
      %314 = sbr.rel (%p311) target = $region12
    $region11: #{_lambda_.7} parent=5 // pred_region
      %s315 = ssub.s32 %s18, 1
      // Predicated region
      $region13: #{_lambda_.7} parent=11 // pred_check
        %p316 = pneg %p65
      $region14: #{_lambda_.7} parent=11 // pred_check_branch
        %318 = sbr.rel (%p316) target = $region16
      $region15: #{_lambda_.7} parent=11 // pred_region
        _
      $region16: #{_lambda_.7} parent=11 // pred_fallthru
        _
      // Predicated region
      $region17: #{_lambda_.7} parent=11 // pred_check
        %p319 = pneg %p86
      $region18: #{_lambda_.7} parent=11 // pred_check_branch
        %321 = sbr.rel (%p319) target = $region20
      $region19: #{_lambda_.7} parent=11 // pred_region
        _
      $region20: #{_lambda_.7} parent=11 // pred_fallthru
        _
      // Predicated region
      $region21: #{_lambda_.7} parent=11 // pred_check
        %p322 = pneg %p107
      $region22: #{_lambda_.7} parent=11 // pred_check_branch
        %324 = sbr.rel (%p322) target = $region24
      $region23: #{_lambda_.7} parent=11 // pred_region
        _
      $region24: #{_lambda_.7} parent=11 // pred_fallthru
        _
      // Predicated region
      $region25: #{_lambda_.7} parent=11 // pred_check
        %p325 = pneg %p128
      $region26: #{_lambda_.7} parent=11 // pred_check_branch
        %327 = sbr.rel (%p325) target = $region28
      $region27: #{_lambda_.7} parent=11 // pred_region
        _
      $region28: #{_lambda_.7} parent=11 // pred_fallthru
        _
      // Predicated region
      $region29: #{_lambda_.7} parent=11 // pred_check
        %p328 = pneg %p149
      $region30: #{_lambda_.7} parent=11 // pred_check_branch
        %330 = sbr.rel (%p328) target = $region32
      $region31: #{_lambda_.7} parent=11 // pred_region
        _
      $region32: #{_lambda_.7} parent=11 // pred_fallthru
        _
      // Predicated region
      $region33: #{_lambda_.7} parent=11 // pred_check
        %p331 = pneg %p170
      $region34: #{_lambda_.7} parent=11 // pred_check_branch
        %333 = sbr.rel (%p331) target = $region36
      $region35: #{_lambda_.7} parent=11 // pred_region
        _
      $region36: #{_lambda_.7} parent=11 // pred_fallthru
        _
      // Predicated region
      $region37: #{_lambda_.7} parent=11 // pred_check
        %p334 = pneg %p191
      $region38: #{_lambda_.7} parent=11 // pred_check_branch
        %336 = sbr.rel (%p334) target = $region40
      $region39: #{_lambda_.7} parent=11 // pred_region
        _
      $region40: #{_lambda_.7} parent=11 // pred_fallthru
        _
      // Predicated region
      $region41: #{_lambda_.7} parent=11 // pred_check
        %p337 = pneg %p212
      $region42: #{_lambda_.7} parent=11 // pred_check_branch
        %339 = sbr.rel (%p337) target = $region44
      $region43: #{_lambda_.7} parent=11 // pred_region
        _
      $region44: #{_lambda_.7} parent=11 // pred_fallthru
        _
      // Predicated region
      $region45: #{_lambda_.7} parent=11 // pred_check
        %p340 = pneg %p233
      $region46: #{_lambda_.7} parent=11 // pred_check_branch
        %342 = sbr.rel (%p340) target = $region48
      $region47: #{_lambda_.7} parent=11 // pred_region
        _
      $region48: #{_lambda_.7} parent=11 // pred_fallthru
        _
      // Predicated region
      $region49: #{_lambda_.7} parent=11 // pred_check
        %p343 = pneg %p254
      $region50: #{_lambda_.7} parent=11 // pred_check_branch
        %345 = sbr.rel (%p343) target = $region52
      $region51: #{_lambda_.7} parent=11 // pred_region
        _
      $region52: #{_lambda_.7} parent=11 // pred_fallthru
        _
      // Predicated region
      $region53: #{_lambda_.7} parent=11 // pred_check
        %p346 = pneg %p275
      $region54: #{_lambda_.7} parent=11 // pred_check_branch
        %348 = sbr.rel (%p346) target = $region56
      $region55: #{_lambda_.7} parent=11 // pred_region
        _
      $region56: #{_lambda_.7} parent=11 // pred_fallthru
        _
    $region12: #{_lambda_.7} parent=5 // pred_fallthru
      _
    %p349 = scmp.lt.s32.totalorder %s18, 2
    // Predicated region
    $region57: #{_lambda_.7} parent=5 // pred_check
      %p350 = pneg %p349
    $region58: #{_lambda_.7} parent=5 // pred_check_branch
      %352 = sbr.rel (%p350) target = $region60
    $region59: #{_lambda_.7} parent=5 // pred_region
      // Predicated region
      $region61: #{_lambda_.7} parent=59 // pred_check
        %p353 = pneg %p38
      $region62: #{_lambda_.7} parent=59 // pred_check_branch
        %355 = sbr.rel (%p353) target = $region64
      $region63: #{_lambda_.7} parent=59 // pred_region
        %p356 = scmp.lt.s32.totalorder %s18, 1
        %s357 = scalar_select %p356, %s18, 1
        %s358 = smul.addr %s357, 15
        %s359 = smul.addr %s358, 4
        %s360 = scalar_lea.vmem %s0, %s359
      $region64: #{_lambda_.7} parent=59 // pred_fallthru
        _
    $region60: #{_lambda_.7} parent=5 // pred_fallthru
      _
    %p361 = scmp.le.s32.totalorder 1, %s18
    %p362 = scmp.lt.s32.totalorder %s18, 3
    %p363 = pnand %p361, %p362
    %p364 = pneg %p363
    // Predicated region
    $region65: #{_lambda_.7} parent=5 // pred_check
      _
    $region66: #{_lambda_.7} parent=5 // pred_check_branch
      %366 = sbr.rel (%p363) target = $region68
    $region67: #{_lambda_.7} parent=5 // pred_region
      %s367 = ssub.s32 %s18, 1
      %p368 = scmp.lt.s32.totalorder %s23, 1
      %s369 = scalar_select %p368, %s23, 1
      %s370 = smul.addr %s369, 15
      %s371 = smul.addr %s370, 4
      %s372 = scalar_lea.vmem %s0, %s371
      %p373 = pneg %p44
      %p374 = pneg %p41
      %p375 = pneg %p65
      %p376 = pneg %p62
      %p377 = pneg %p86
      %p378 = pneg %p83
      %p379 = pneg %p107
      %p380 = pneg %p104
      %p381 = pneg %p128
      %p382 = pneg %p125
      %p383 = pneg %p149
      %p384 = pneg %p146
      %p385 = pneg %p170
      %p386 = pneg %p167
      %p387 = pneg %p191
      %p388 = pneg %p188
      %p389 = pneg %p212
      %p390 = pneg %p209
      %p391 = pneg %p233
      %p392 = pneg %p230
      %p393 = pneg %p254
      %p394 = pneg %p251
      %p395 = pneg %p275
      %p396 = pneg %p272
      %p397 = pneg %p301
      %p398 = pneg %p298
      %p399 = scmp.lt.s32.totalorder %s23, 1
      %s400 = scalar_select %p399, %s23, 1
      %s401 = smul.addr %s400, 3
      %s402 = smul.addr %s401, 8
      %s403 = scalar_lea.vmem %s12, %s402
      %p404 = scmp.lt.s32.totalorder %s23, 1
      %s405 = scalar_select %p404, %s23, 1
      %s406 = smul.addr %s405, 15
      %s407 = smul.addr %s406, 4
      %s408 = scalar_lea.vmem %s0, %s407
      %p409 = scmp.lt.s32.totalorder %s23, 1
      %s410 = scalar_select %p409, %s23, 1
      %s411 = smul.addr %s410, 3
      %s412 = smul.addr %s411, 8
      %s413 = scalar_lea.vmem %s12, %s412
      %v415 = vld [vmem:[%s408] sm:$0xf]
      %v416 = vld [vmem:[%s408 + $0x4] sm:$0xf]
      %v417 = vld [vmem:[%s408 + $0x8] sm:$0xf]
      %v418 = vld [vmem:[%s408 + $0xc] sm:$0xf]
      %v419 = vld [vmem:[%s408 + $0x10] sm:$0xf]
      %v420 = vld [vmem:[%s408 + $0x14] sm:$0xf]
      %v421 = vld [vmem:[%s408 + $0x18] sm:$0xf]
      %v422 = vld [vmem:[%s408 + $0x1c] sm:$0xf]
      %v423 = vld [vmem:[%s408 + $0x20] sm:$0xf]
      %v424 = vld [vmem:[%s408 + $0x24] sm:$0xf]
      %v425 = vld [vmem:[%s408 + $0x28] sm:$0xf]
      %v426 = vld [vmem:[%s408 + $0x2c] sm:$0xf]
      %v427 = vld [vmem:[%s408 + $0x30] sm:$0xf]
      %v428 = vld [vmem:[%s408 + $0x34] sm:$0xf]
      %v429 = vld [vmem:[%s408 + $0x38] sm:$0xf]
      %v430 = vld [vmem:[%s2] sm:$0xf]
      %v431 = vld [vmem:[%s2 + $0x4] sm:$0xf]
      %v432 = vld [vmem:[%s3] sm:$0x1]
      %v434 = vperm.slane %v432, 0
      %v451 = vunpack.c.l.b16 %v415
      %v452 = vunpack.c.l.b16 %v416
      %v453 = vunpack.c.l.b16 %v417
      %v454 = vunpack.c.l.b16 %v418
      %v455 = vunpack.c.l.b16 %v419
      %v456 = vunpack.c.l.b16 %v420
      %v457 = vunpack.c.l.b16 %v421
      %v458 = vunpack.c.l.b16 %v422
      %v459 = vunpack.c.l.b16 %v423
      %v460 = vunpack.c.l.b16 %v424
      %v461 = vunpack.c.l.b16 %v425
      %v462 = vunpack.c.l.b16 %v426
      %v463 = vunpack.c.l.b16 %v427
      %v464 = vunpack.c.l.b16 %v428
      %v465 = vunpack.c.l.b16 %v429
      %v466 = vpack.c.b16 %v452, %v451
      %v467 = vpack.c.b16 %v454, %v453
      %v468 = vpack.c.b16 %v456, %v455
      %v469 = vpack.c.b16 %v458, %v457
      %v470 = vpack.c.b16 %v460, %v459
      %v471 = vpack.c.b16 %v462, %v461
      %v472 = vpack.c.b16 %v464, %v463
      %v473 = vpack.c.b16 %v465, %v465
      %v476 = vunpack.c.l.b16 %v430
      %v477 = vunpack.c.l.b16 %v431
      %v478 = vpack.c.b16 %v477, %v476
      %vm480 = vcmask 130048
      %v482 = vsel %vm480, %v466, 0
      %v485 = vsel %vm480, %v467, 0
      %v488 = vsel %vm480, %v468, 0
      %v491 = vsel %vm480, %v469, 0
      %v494 = vsel %vm480, %v470, 0
      %v497 = vsel %vm480, %v471, 0
      %v500 = vsel %vm480, %v472, 0
      %v503 = vsel %vm480, %v473, 0
      %505 = vmatpush.bf16.msra.mxu0 0
      %506 = vmatpush.bf16.msra.mxu0 0
      %507 = vmatpush.bf16.msra.mxu0 0
      %508 = vmatpush.bf16.msra.mxu0 0
      %509 = vmatpush.bf16.msra.mxu0 0
      %510 = vmatpush.bf16.msra.mxu0 0
      %511 = vmatpush.bf16.msra.mxu0 0
      %512 = vmatpush.bf16.msra.mxu0 %v478
      %513 = vmatmul.bf16.gmra.mxu0 %v482
      %v514 = vpop.f32.mrf.mxu0
      %v515 = vadd.f32 %v434, %v514
      %v516 = vpop.f32.mrf.mxu0
      %v517 = vadd.f32 %v434, %v516
      %518 = vmatmul.bf16.gmra.mxu0 %v485
      %v519 = vpop.f32.mrf.mxu0
      %v520 = vadd.f32 %v434, %v519
      %v521 = vpop.f32.mrf.mxu0
      %v522 = vadd.f32 %v434, %v521
      %523 = vmatmul.bf16.gmra.mxu0 %v488
      %v524 = vpop.f32.mrf.mxu0
      %v525 = vadd.f32 %v434, %v524
      %v526 = vpop.f32.mrf.mxu0
      %v527 = vadd.f32 %v434, %v526
      %528 = vmatmul.bf16.gmra.mxu0 %v491
      %v529 = vpop.f32.mrf.mxu0
      %v530 = vadd.f32 %v434, %v529
      %v531 = vpop.f32.mrf.mxu0
      %v532 = vadd.f32 %v434, %v531
      %533 = vmatmul.bf16.gmra.mxu0 %v494
      %v534 = vpop.f32.mrf.mxu0
      %v535 = vadd.f32 %v434, %v534
      %v536 = vpop.f32.mrf.mxu0
      %v537 = vadd.f32 %v434, %v536
      %538 = vmatmul.bf16.gmra.mxu0 %v497
      %v539 = vpop.f32.mrf.mxu0
      %v540 = vadd.f32 %v434, %v539
      %v541 = vpop.f32.mrf.mxu0
      %v542 = vadd.f32 %v434, %v541
      %543 = vmatmul.bf16.gmra.mxu0 %v500
      %v544 = vpop.f32.mrf.mxu0
      %v545 = vadd.f32 %v434, %v544
      %v546 = vpop.f32.mrf.mxu0
      %v547 = vadd.f32 %v434, %v546
      %548 = vmatmul.bf16.gmra.mxu0 %v503
      %v549 = vpop.f32.mrf.mxu0
      %v550 = vadd.f32 %v434, %v549
      %v551 = vpop.f32.mrf.mxu0
      %552 = vdwg.mxu0
      %v553 = vxor.u32 %v515, 2147483648
      %v554 = vxor.u32 %v517, 2147483648
      %v555 = vxor.u32 %v520, 2147483648
      %v556 = vxor.u32 %v522, 2147483648
      %v557 = vxor.u32 %v525, 2147483648
      %v558 = vxor.u32 %v527, 2147483648
      %v559 = vxor.u32 %v530, 2147483648
      %v560 = vxor.u32 %v532, 2147483648
      %v561 = vxor.u32 %v535, 2147483648
      %v562 = vxor.u32 %v537, 2147483648
      %v563 = vxor.u32 %v540, 2147483648
      %v564 = vxor.u32 %v542, 2147483648
      %v565 = vxor.u32 %v545, 2147483648
      %v566 = vxor.u32 %v547, 2147483648
      %v567 = vxor.u32 %v550, 2147483648
      %v568 = vmul.f32 %v553, 1.442695
      %v569 = vpow.pop %v568
      %v570 = vmul.f32 %v554, 1.442695
      %v571 = vpow.pop %v570
      %v572 = vmul.f32 %v555, 1.442695
      %v573 = vpow.pop %v572
      %v574 = vmul.f32 %v556, 1.442695
      %v575 = vpow.pop %v574
      %v576 = vmul.f32 %v557, 1.442695
      %v577 = vpow.pop %v576
      %v578 = vmul.f32 %v558, 1.442695
      %v579 = vpow.pop %v578
      %v580 = vmul.f32 %v559, 1.442695
      %v581 = vpow.pop %v580
      %v582 = vmul.f32 %v560, 1.442695
      %v583 = vpow.pop %v582
      %v584 = vmul.f32 %v561, 1.442695
      %v585 = vpow.pop %v584
      %v586 = vmul.f32 %v562, 1.442695
      %v587 = vpow.pop %v586
      %v588 = vmul.f32 %v563, 1.442695
      %v589 = vpow.pop %v588
      %v590 = vmul.f32 %v564, 1.442695
      %v591 = vpow.pop %v590
      %v592 = vmul.f32 %v565, 1.442695
      %v593 = vpow.pop %v592
      %v594 = vmul.f32 %v566, 1.442695
      %v595 = vpow.pop %v594
      %v596 = vmul.f32 %v567, 1.442695
      %v597 = vpow.pop %v596
      %v598 = vadd.f32 %v569, 1.0
      %v599 = vadd.f32 %v571, 1.0
      %v600 = vadd.f32 %v573, 1.0
      %v601 = vadd.f32 %v575, 1.0
      %v602 = vadd.f32 %v577, 1.0
      %v603 = vadd.f32 %v579, 1.0
      %v604 = vadd.f32 %v581, 1.0
      %v605 = vadd.f32 %v583, 1.0
      %v606 = vadd.f32 %v585, 1.0
      %v607 = vadd.f32 %v587, 1.0
      %v608 = vadd.f32 %v589, 1.0
      %v609 = vadd.f32 %v591, 1.0
      %v610 = vadd.f32 %v593, 1.0
      %v611 = vadd.f32 %v595, 1.0
      %v612 = vadd.f32 %v597, 1.0
      %v613 = vrcp.pop %v598
      %v614 = vmul.f32 %v598, %v613
      %v615 = vsub.f32 1.0, %v614
      %v616 = vmul.f32 %v613, %v615
      %v617 = vadd.f32 %v613, %v616
      %vm618 = vweird.f32 %v598
      %vm619 = vweird.f32 %v613
      %vm620 = vmor %vm618, %vm619
      %v621 = vsel %vm620, %v613, %v617
      %v622 = vand.u32 2147483647, %v598
      %vm623 = vcmp.eq.f32.partialorder %v622, 8.507059e+37
      %v624 = vand.u32 %v598, 2147483648
      %v625 = vor.u32 1.1754944e-38, %v624
      %v626 = vsel %vm623, %v625, %v621
      %v627 = vmul.f32 1.0, %v626
      %v628 = vrcp.pop %v599
      %v629 = vmul.f32 %v599, %v628
      %v630 = vsub.f32 1.0, %v629
      %v631 = vmul.f32 %v628, %v630
      %v632 = vadd.f32 %v628, %v631
      %vm633 = vweird.f32 %v599
      %vm634 = vweird.f32 %v628
      %vm635 = vmor %vm633, %vm634
      %v636 = vsel %vm635, %v628, %v632
      %v637 = vand.u32 2147483647, %v599
      %vm638 = vcmp.eq.f32.partialorder %v637, 8.507059e+37
      %v639 = vand.u32 %v599, 2147483648
      %v640 = vor.u32 1.1754944e-38, %v639
      %v641 = vsel %vm638, %v640, %v636
      %v642 = vmul.f32 1.0, %v641
      %v643 = vrcp.pop %v600
      %v644 = vmul.f32 %v600, %v643
      %v645 = vsub.f32 1.0, %v644
      %v646 = vmul.f32 %v643, %v645
      %v647 = vadd.f32 %v643, %v646
      %vm648 = vweird.f32 %v600
      %vm649 = vweird.f32 %v643
      %vm650 = vmor %vm648, %vm649
      %v651 = vsel %vm650, %v643, %v647
      %v652 = vand.u32 2147483647, %v600
      %vm653 = vcmp.eq.f32.partialorder %v652, 8.507059e+37
      %v654 = vand.u32 %v600, 2147483648
      %v655 = vor.u32 1.1754944e-38, %v654
      %v656 = vsel %vm653, %v655, %v651
      %v657 = vmul.f32 1.0, %v656
      %v658 = vrcp.pop %v601
      %v659 = vmul.f32 %v601, %v658
      %v660 = vsub.f32 1.0, %v659
      %v661 = vmul.f32 %v658, %v660
      %v662 = vadd.f32 %v658, %v661
      %vm663 = vweird.f32 %v601
      %vm664 = vweird.f32 %v658
      %vm665 = vmor %vm663, %vm664
      %v666 = vsel %vm665, %v658, %v662
      %v667 = vand.u32 2147483647, %v601
      %vm668 = vcmp.eq.f32.partialorder %v667, 8.507059e+37
      %v669 = vand.u32 %v601, 2147483648
      %v670 = vor.u32 1.1754944e-38, %v669
      %v671 = vsel %vm668, %v670, %v666
      %v672 = vmul.f32 1.0, %v671
      %v673 = vrcp.pop %v602
      %v674 = vmul.f32 %v602, %v673
      %v675 = vsub.f32 1.0, %v674
      %v676 = vmul.f32 %v673, %v675
      %v677 = vadd.f32 %v673, %v676
      %vm678 = vweird.f32 %v602
      %vm679 = vweird.f32 %v673
      %vm680 = vmor %vm678, %vm679
      %v681 = vsel %vm680, %v673, %v677
      %v682 = vand.u32 2147483647, %v602
      %vm683 = vcmp.eq.f32.partialorder %v682, 8.507059e+37
      %v684 = vand.u32 %v602, 2147483648
      %v685 = vor.u32 1.1754944e-38, %v684
      %v686 = vsel %vm683, %v685, %v681
      %v687 = vmul.f32 1.0, %v686
      %v688 = vrcp.pop %v603
      %v689 = vmul.f32 %v603, %v688
      %v690 = vsub.f32 1.0, %v689
      %v691 = vmul.f32 %v688, %v690
      %v692 = vadd.f32 %v688, %v691
      %vm693 = vweird.f32 %v603
      %vm694 = vweird.f32 %v688
      %vm695 = vmor %vm693, %vm694
      %v696 = vsel %vm695, %v688, %v692
      %v697 = vand.u32 2147483647, %v603
      %vm698 = vcmp.eq.f32.partialorder %v697, 8.507059e+37
      %v699 = vand.u32 %v603, 2147483648
      %v700 = vor.u32 1.1754944e-38, %v699
      %v701 = vsel %vm698, %v700, %v696
      %v702 = vmul.f32 1.0, %v701
      %v703 = vrcp.pop %v604
      %v704 = vmul.f32 %v604, %v703
      %v705 = vsub.f32 1.0, %v704
      %v706 = vmul.f32 %v703, %v705
      %v707 = vadd.f32 %v703, %v706
      %vm708 = vweird.f32 %v604
      %vm709 = vweird.f32 %v703
      %vm710 = vmor %vm708, %vm709
      %v711 = vsel %vm710, %v703, %v707
      %v712 = vand.u32 2147483647, %v604
      %vm713 = vcmp.eq.f32.partialorder %v712, 8.507059e+37
      %v714 = vand.u32 %v604, 2147483648
      %v715 = vor.u32 1.1754944e-38, %v714
      %v716 = vsel %vm713, %v715, %v711
      %v717 = vmul.f32 1.0, %v716
      %v718 = vrcp.pop %v605
      %v719 = vmul.f32 %v605, %v718
      %v720 = vsub.f32 1.0, %v719
      %v721 = vmul.f32 %v718, %v720
      %v722 = vadd.f32 %v718, %v721
      %vm723 = vweird.f32 %v605
      %vm724 = vweird.f32 %v718
      %vm725 = vmor %vm723, %vm724
      %v726 = vsel %vm725, %v718, %v722
      %v727 = vand.u32 2147483647, %v605
      %vm728 = vcmp.eq.f32.partialorder %v727, 8.507059e+37
      %v729 = vand.u32 %v605, 2147483648
      %v730 = vor.u32 1.1754944e-38, %v729
      %v731 = vsel %vm728, %v730, %v726
      %v732 = vmul.f32 1.0, %v731
      %v733 = vrcp.pop %v606
      %v734 = vmul.f32 %v606, %v733
      %v735 = vsub.f32 1.0, %v734
      %v736 = vmul.f32 %v733, %v735
      %v737 = vadd.f32 %v733, %v736
      %vm738 = vweird.f32 %v606
      %vm739 = vweird.f32 %v733
      %vm740 = vmor %vm738, %vm739
      %v741 = vsel %vm740, %v733, %v737
      %v742 = vand.u32 2147483647, %v606
      %vm743 = vcmp.eq.f32.partialorder %v742, 8.507059e+37
      %v744 = vand.u32 %v606, 2147483648
      %v745 = vor.u32 1.1754944e-38, %v744
      %v746 = vsel %vm743, %v745, %v741
      %v747 = vmul.f32 1.0, %v746
      %v748 = vrcp.pop %v607
      %v749 = vmul.f32 %v607, %v748
      %v750 = vsub.f32 1.0, %v749
      %v751 = vmul.f32 %v748, %v750
      %v752 = vadd.f32 %v748, %v751
      %vm753 = vweird.f32 %v607
      %vm754 = vweird.f32 %v748
      %vm755 = vmor %vm753, %vm754
      %v756 = vsel %vm755, %v748, %v752
      %v757 = vand.u32 2147483647, %v607
      %vm758 = vcmp.eq.f32.partialorder %v757, 8.507059e+37
      %v759 = vand.u32 %v607, 2147483648
      %v760 = vor.u32 1.1754944e-38, %v759
      %v761 = vsel %vm758, %v760, %v756
      %v762 = vmul.f32 1.0, %v761
      %v763 = vrcp.pop %v608
      %v764 = vmul.f32 %v608, %v763
      %v765 = vsub.f32 1.0, %v764
      %v766 = vmul.f32 %v763, %v765
      %v767 = vadd.f32 %v763, %v766
      %vm768 = vweird.f32 %v608
      %vm769 = vweird.f32 %v763
      %vm770 = vmor %vm768, %vm769
      %v771 = vsel %vm770, %v763, %v767
      %v772 = vand.u32 2147483647, %v608
      %vm773 = vcmp.eq.f32.partialorder %v772, 8.507059e+37
      %v774 = vand.u32 %v608, 2147483648
      %v775 = vor.u32 1.1754944e-38, %v774
      %v776 = vsel %vm773, %v775, %v771
      %v777 = vmul.f32 1.0, %v776
      %v778 = vrcp.pop %v609
      %v779 = vmul.f32 %v609, %v778
      %v780 = vsub.f32 1.0, %v779
      %v781 = vmul.f32 %v778, %v780
      %v782 = vadd.f32 %v778, %v781
      %vm783 = vweird.f32 %v609
      %vm784 = vweird.f32 %v778
      %vm785 = vmor %vm783, %vm784
      %v786 = vsel %vm785, %v778, %v782
      %v787 = vand.u32 2147483647, %v609
      %vm788 = vcmp.eq.f32.partialorder %v787, 8.507059e+37
      %v789 = vand.u32 %v609, 2147483648
      %v790 = vor.u32 1.1754944e-38, %v789
      %v791 = vsel %vm788, %v790, %v786
      %v792 = vmul.f32 1.0, %v791
      %v793 = vrcp.pop %v610
      %v794 = vmul.f32 %v610, %v793
      %v795 = vsub.f32 1.0, %v794
      %v796 = vmul.f32 %v793, %v795
      %v797 = vadd.f32 %v793, %v796
      %vm798 = vweird.f32 %v610
      %vm799 = vweird.f32 %v793
      %vm800 = vmor %vm798, %vm799
      %v801 = vsel %vm800, %v793, %v797
      %v802 = vand.u32 2147483647, %v610
      %vm803 = vcmp.eq.f32.partialorder %v802, 8.507059e+37
      %v804 = vand.u32 %v610, 2147483648
      %v805 = vor.u32 1.1754944e-38, %v804
      %v806 = vsel %vm803, %v805, %v801
      %v807 = vmul.f32 1.0, %v806
      %v808 = vrcp.pop %v611
      %v809 = vmul.f32 %v611, %v808
      %v810 = vsub.f32 1.0, %v809
      %v811 = vmul.f32 %v808, %v810
      %v812 = vadd.f32 %v808, %v811
      %vm813 = vweird.f32 %v611
      %vm814 = vweird.f32 %v808
      %vm815 = vmor %vm813, %vm814
      %v816 = vsel %vm815, %v808, %v812
      %v817 = vand.u32 2147483647, %v611
      %vm818 = vcmp.eq.f32.partialorder %v817, 8.507059e+37
      %v819 = vand.u32 %v611, 2147483648
      %v820 = vor.u32 1.1754944e-38, %v819
      %v821 = vsel %vm818, %v820, %v816
      %v822 = vmul.f32 1.0, %v821
      %v823 = vrcp.pop %v612
      %v824 = vmul.f32 %v612, %v823
      %v825 = vsub.f32 1.0, %v824
      %v826 = vmul.f32 %v823, %v825
      %v827 = vadd.f32 %v823, %v826
      %vm828 = vweird.f32 %v612
      %vm829 = vweird.f32 %v823
      %vm830 = vmor %vm828, %vm829
      %v831 = vsel %vm830, %v823, %v827
      %v832 = vand.u32 2147483647, %v612
      %vm833 = vcmp.eq.f32.partialorder %v832, 8.507059e+37
      %v834 = vand.u32 %v612, 2147483648
      %v835 = vor.u32 1.1754944e-38, %v834
      %v836 = vsel %vm833, %v835, %v831
      %v837 = vmul.f32 1.0, %v836
      %v838 = vmul.f32 %v515, %v627
      %v839 = vmul.f32 %v517, %v642
      %v840 = vmul.f32 %v520, %v657
      %v841 = vmul.f32 %v522, %v672
      %v842 = vmul.f32 %v525, %v687
      %v843 = vmul.f32 %v527, %v702
      %v844 = vmul.f32 %v530, %v717
      %v845 = vmul.f32 %v532, %v732
      %v846 = vmul.f32 %v535, %v747
      %v847 = vmul.f32 %v537, %v762
      %v848 = vmul.f32 %v540, %v777
      %v849 = vmul.f32 %v542, %v792
      %v850 = vmul.f32 %v545, %v807
      %v851 = vmul.f32 %v547, %v822
      %v852 = vmul.f32 %v550, %v837
      %v853 = vld [vmem:[%s1] sm:$0xff]
      %v854 = vld [vmem:[%s1 + $0x8] sm:$0xff]
      %v855 = vld [vmem:[%s1 + $0x10] sm:$0xff]
      %v856 = vld [vmem:[%s1 + $0x18] sm:$0xff]
      %v857 = vld [vmem:[%s1 + $0x20] sm:$0xff]
      %v858 = vld [vmem:[%s1 + $0x28] sm:$0xff]
      %v859 = vld [vmem:[%s1 + $0x30] sm:$0xff]
      %v860 = vld [vmem:[%s1 + $0x38] sm:$0xff]
      %v861 = vld [vmem:[%s1 + $0x40] sm:$0xff]
      %v862 = vld [vmem:[%s1 + $0x48] sm:$0xff]
      %v863 = vld [vmem:[%s1 + $0x50] sm:$0xff]
      %v864 = vld [vmem:[%s1 + $0x58] sm:$0xff]
      %v865 = vld [vmem:[%s1 + $0x60] sm:$0xff]
      %v866 = vld [vmem:[%s1 + $0x68] sm:$0xff]
      %v867 = vld [vmem:[%s1 + $0x70] sm:$0xff]
      %869 = vset.pattern.permute.xlu0 0
      %870 = vperm.xlu0 %869, %v853
      %v871 = vpop.permute.xlu0 %870
      %874 = vset.pattern.permute.xlu0 0
      %875 = vperm.xlu0 %874, %v854
      %v876 = vpop.permute.xlu0 %875
      %879 = vset.pattern.permute.xlu0 0
      %880 = vperm.xlu0 %879, %v855
      %v881 = vpop.permute.xlu0 %880
      %884 = vset.pattern.permute.xlu0 0
      %885 = vperm.xlu0 %884, %v856
      %v886 = vpop.permute.xlu0 %885
      %889 = vset.pattern.permute.xlu0 0
      %890 = vperm.xlu0 %889, %v857
      %v891 = vpop.permute.xlu0 %890
      %894 = vset.pattern.permute.xlu0 0
      %895 = vperm.xlu0 %894, %v858
      %v896 = vpop.permute.xlu0 %895
      %899 = vset.pattern.permute.xlu0 0
      %900 = vperm.xlu0 %899, %v859
      %v901 = vpop.permute.xlu0 %900
      %904 = vset.pattern.permute.xlu0 0
      %905 = vperm.xlu0 %904, %v860
      %v906 = vpop.permute.xlu0 %905
      %909 = vset.pattern.permute.xlu0 0
      %910 = vperm.xlu0 %909, %v861
      %v911 = vpop.permute.xlu0 %910
      %914 = vset.pattern.permute.xlu0 0
      %915 = vperm.xlu0 %914, %v862
      %v916 = vpop.permute.xlu0 %915
      %919 = vset.pattern.permute.xlu0 0
      %920 = vperm.xlu0 %919, %v863
      %v921 = vpop.permute.xlu0 %920
      %924 = vset.pattern.permute.xlu0 0
      %925 = vperm.xlu0 %924, %v864
      %v926 = vpop.permute.xlu0 %925
      %929 = vset.pattern.permute.xlu0 0
      %930 = vperm.xlu0 %929, %v865
      %v931 = vpop.permute.xlu0 %930
      %934 = vset.pattern.permute.xlu0 0
      %935 = vperm.xlu0 %934, %v866
      %v936 = vpop.permute.xlu0 %935
      %939 = vset.pattern.permute.xlu0 0
      %940 = vperm.xlu0 %939, %v867
      %v941 = vpop.permute.xlu0 %940
      %v943 = vmul.f32 %v838, %v871
      %v944 = vmul.f32 %v839, %v876
      %v945 = vmul.f32 %v840, %v881
      %v946 = vmul.f32 %v841, %v886
      %v947 = vmul.f32 %v842, %v891
      %v948 = vmul.f32 %v843, %v896
      %v949 = vmul.f32 %v844, %v901
      %v950 = vmul.f32 %v845, %v906
      %v951 = vmul.f32 %v846, %v911
      %v952 = vmul.f32 %v847, %v916
      %v953 = vmul.f32 %v848, %v921
      %v954 = vmul.f32 %v849, %v926
      %v955 = vmul.f32 %v850, %v931
      %v956 = vmul.f32 %v851, %v936
      %v957 = vmul.f32 %v852, %v941
      %vm958 = vcmask 523264
      %959 = vst.msk [vmem:[#allocation2] sm:$0xff] %vm958, %v943
      %960 = vst.msk [vmem:[#allocation2 + $0x8] sm:$0xff] %vm958, %v944
      %961 = vst.msk [vmem:[#allocation2 + $0x10] sm:$0xff] %vm958, %v945
      %962 = vst.msk [vmem:[#allocation2 + $0x18] sm:$0xff] %vm958, %v946
      %963 = vst.msk [vmem:[#allocation2 + $0x20] sm:$0xff] %vm958, %v947
      %964 = vst.msk [vmem:[#allocation2 + $0x28] sm:$0xff] %vm958, %v948
      %965 = vst.msk [vmem:[#allocation2 + $0x30] sm:$0xff] %vm958, %v949
      %966 = vst.msk [vmem:[#allocation2 + $0x38] sm:$0xff] %vm958, %v950
      %967 = vst.msk [vmem:[#allocation2 + $0x40] sm:$0xff] %vm958, %v951
      %968 = vst.msk [vmem:[#allocation2 + $0x48] sm:$0xff] %vm958, %v952
      %969 = vst.msk [vmem:[#allocation2 + $0x50] sm:$0xff] %vm958, %v953
      %970 = vst.msk [vmem:[#allocation2 + $0x58] sm:$0xff] %vm958, %v954
      %971 = vst.msk [vmem:[#allocation2 + $0x60] sm:$0xff] %vm958, %v955
      %972 = vst.msk [vmem:[#allocation2 + $0x68] sm:$0xff] %vm958, %v956
      %973 = vst.msk [vmem:[#allocation2 + $0x70] sm:$0xff] %vm958, %v957
      %v974 = vld [vmem:[#allocation2] sm:$0xff]
      %v975 = vld [vmem:[#allocation2 + $0x8] sm:$0xff]
      %v976 = vld [vmem:[#allocation2 + $0x10] sm:$0xf]
      %v977 = vld [vmem:[%s4] sm:$0x1]
      %v979 = vperm.slane %v977, 0
      %v981 = vmul.f32 %v974, %v979
      %v982 = vmul.f32 %v975, %v979
      %v983 = vmul.f32 %v976, %v979
      %v984 = vld [vmem:[#allocation2 + $0x1e] sm:$0xff]
      %v985 = vld [vmem:[#allocation2 + $0x26] sm:$0xff]
      %v986 = vld [vmem:[#allocation2 + $0x2e] sm:$0xf]
      %s987 = scalar_lea.vmem %s4, 1
      %v988 = vld [vmem:[%s987] sm:$0x1]
      %v990 = vperm.slane %v988, 0
      %v992 = vmul.f32 %v984, %v990
      %v993 = vmul.f32 %v985, %v990
      %v994 = vmul.f32 %v986, %v990
      %v995 = vadd.f32 %v981, %v992
      %v996 = vadd.f32 %v982, %v993
      %v997 = vadd.f32 %v983, %v994
      %v998 = vld [vmem:[#allocation2 + $0x1] sm:$0xff]
      %v999 = vld [vmem:[#allocation2 + $0x9] sm:$0xff]
      %v1000 = vld [vmem:[#allocation2 + $0x11] sm:$0xf]
      %s1001 = scalar_lea.vmem %s4, 2
      %v1002 = vld [vmem:[%s1001] sm:$0x1]
      %v1004 = vperm.slane %v1002, 0
      %v1006 = vmul.f32 %v998, %v1004
      %v1007 = vmul.f32 %v999, %v1004
      %v1008 = vmul.f32 %v1000, %v1004
      %v1009 = vadd.f32 %v995, %v1006
      %v1010 = vadd.f32 %v996, %v1007
      %v1011 = vadd.f32 %v997, %v1008
      %v1012 = vld [vmem:[#allocation2 + $0x3c] sm:$0xff]
      %v1013 = vld [vmem:[#allocation2 + $0x44] sm:$0xff]
      %v1014 = vld [vmem:[#allocation2 + $0x4c] sm:$0xf]
      %s1015 = scalar_lea.vmem %s4, 3
      %v1016 = vld [vmem:[%s1015] sm:$0x1]
      %v1018 = vperm.slane %v1016, 0
      %v1020 = vmul.f32 %v1012, %v1018
      %v1021 = vmul.f32 %v1013, %v1018
      %v1022 = vmul.f32 %v1014, %v1018
      %v1023 = vadd.f32 %v1009, %v1020
      %v1024 = vadd.f32 %v1010, %v1021
      %v1025 = vadd.f32 %v1011, %v1022
      %v1026 = vld [vmem:[#allocation2 + $0x5a] sm:$0xff]
      %v1027 = vld [vmem:[#allocation2 + $0x62] sm:$0xff]
      %v1028 = vld [vmem:[#allocation2 + $0x6a] sm:$0xf]
      %s1029 = scalar_lea.vmem %s4, 4
      %v1030 = vld [vmem:[%s1029] sm:$0x1]
      %v1032 = vperm.slane %v1030, 0
      %v1034 = vmul.f32 %v1026, %v1032
      %v1035 = vmul.f32 %v1027, %v1032
      %v1036 = vmul.f32 %v1028, %v1032
      %v1037 = vadd.f32 %v1023, %v1034
      %v1038 = vadd.f32 %v1024, %v1035
      %v1039 = vadd.f32 %v1025, %v1036
      %v1040 = vld [vmem:[#allocation2 + $0x3d] sm:$0xff]
      %v1041 = vld [vmem:[#allocation2 + $0x45] sm:$0xff]
      %v1042 = vld [vmem:[#allocation2 + $0x4d] sm:$0xf]
      %s1043 = scalar_lea.vmem %s4, 5
      %v1044 = vld [vmem:[%s1043] sm:$0x1]
      %v1046 = vperm.slane %v1044, 0
      %v1048 = vmul.f32 %v1040, %v1046
      %v1049 = vmul.f32 %v1041, %v1046
      %v1050 = vmul.f32 %v1042, %v1046
      %v1051 = vadd.f32 %v1037, %v1048
      %v1052 = vadd.f32 %v1038, %v1049
      %v1053 = vadd.f32 %v1039, %v1050
      %v1054 = vld [vmem:[#allocation2 + $0x5] sm:$0xff]
      %v1055 = vld [vmem:[#allocation2 + $0xd] sm:$0xff]
      %v1056 = vld [vmem:[#allocation2 + $0x15] sm:$0xf]
      %s1057 = scalar_lea.vmem %s4, 6
      %v1058 = vld [vmem:[%s1057] sm:$0x1]
      %v1060 = vperm.slane %v1058, 0
      %v1062 = vmul.f32 %v1054, %v1060
      %v1063 = vmul.f32 %v1055, %v1060
      %v1064 = vmul.f32 %v1056, %v1060
      %v1065 = vadd.f32 %v1051, %v1062
      %v1066 = vadd.f32 %v1052, %v1063
      %v1067 = vadd.f32 %v1053, %v1064
      %v1068 = vld [vmem:[#allocation2 + $0x23] sm:$0xff]
      %v1069 = vld [vmem:[#allocation2 + $0x2b] sm:$0xff]
      %v1070 = vld [vmem:[#allocation2 + $0x33] sm:$0xf]
      %s1071 = scalar_lea.vmem %s4, 7
      %v1072 = vld [vmem:[%s1071] sm:$0x1]
      %v1074 = vperm.slane %v1072, 0
      %v1076 = vmul.f32 %v1068, %v1074
      %v1077 = vmul.f32 %v1069, %v1074
      %v1078 = vmul.f32 %v1070, %v1074
      %v1079 = vadd.f32 %v1065, %v1076
      %v1080 = vadd.f32 %v1066, %v1077
      %v1081 = vadd.f32 %v1067, %v1078
      %v1082 = vld [vmem:[#allocation2 + $0x6] sm:$0xff]
      %v1083 = vld [vmem:[#allocation2 + $0xe] sm:$0xff]
      %v1084 = vld [vmem:[#allocation2 + $0x16] sm:$0xf]
      %s1085 = scalar_lea.vmem %s4, 8
      %v1086 = vld [vmem:[%s1085] sm:$0x1]
      %v1088 = vperm.slane %v1086, 0
      %v1090 = vmul.f32 %v1082, %v1088
      %v1091 = vmul.f32 %v1083, %v1088
      %v1092 = vmul.f32 %v1084, %v1088
      %v1093 = vadd.f32 %v1079, %v1090
      %v1094 = vadd.f32 %v1080, %v1091
      %v1095 = vadd.f32 %v1081, %v1092
      %v1096 = vld [vmem:[%s5] sm:$0x1]
      %v1098 = vperm.slane %v1096, 0
      %v1100 = vadd.f32 %v1093, %v1098
      %v1101 = vadd.f32 %v1094, %v1098
      %v1102 = vadd.f32 %v1095, %v1098
      %v1103 = vxor.u32 %v1100, 2147483648
      %v1104 = vxor.u32 %v1101, 2147483648
      %v1105 = vxor.u32 %v1102, 2147483648
      %v1106 = vmul.f32 %v1103, 1.442695
      %v1107 = vpow.pop %v1106
      %v1108 = vmul.f32 %v1104, 1.442695
      %v1109 = vpow.pop %v1108
      %v1110 = vmul.f32 %v1105, 1.442695
      %v1111 = vpow.pop %v1110
      %v1112 = vadd.f32 %v1107, 1.0
      %v1113 = vadd.f32 %v1109, 1.0
      %v1114 = vadd.f32 %v1111, 1.0
      %v1115 = vrcp.pop %v1112
      %v1116 = vmul.f32 %v1112, %v1115
      %v1117 = vsub.f32 1.0, %v1116
      %v1118 = vmul.f32 %v1115, %v1117
      %v1119 = vadd.f32 %v1115, %v1118
      %vm1120 = vweird.f32 %v1112
      %vm1121 = vweird.f32 %v1115
      %vm1122 = vmor %vm1120, %vm1121
      %v1123 = vsel %vm1122, %v1115, %v1119
      %v1124 = vand.u32 2147483647, %v1112
      %vm1125 = vcmp.eq.f32.partialorder %v1124, 8.507059e+37
      %v1126 = vand.u32 %v1112, 2147483648
      %v1127 = vor.u32 1.1754944e-38, %v1126
      %v1128 = vsel %vm1125, %v1127, %v1123
      %v1129 = vmul.f32 1.0, %v1128
      %v1130 = vrcp.pop %v1113
      %v1131 = vmul.f32 %v1113, %v1130
      %v1132 = vsub.f32 1.0, %v1131
      %v1133 = vmul.f32 %v1130, %v1132
      %v1134 = vadd.f32 %v1130, %v1133
      %vm1135 = vweird.f32 %v1113
      %vm1136 = vweird.f32 %v1130
      %vm1137 = vmor %vm1135, %vm1136
      %v1138 = vsel %vm1137, %v1130, %v1134
      %v1139 = vand.u32 2147483647, %v1113
      %vm1140 = vcmp.eq.f32.partialorder %v1139, 8.507059e+37
      %v1141 = vand.u32 %v1113, 2147483648
      %v1142 = vor.u32 1.1754944e-38, %v1141
      %v1143 = vsel %vm1140, %v1142, %v1138
      %v1144 = vmul.f32 1.0, %v1143
      %v1145 = vrcp.pop %v1114
      %v1146 = vmul.f32 %v1114, %v1145
      %v1147 = vsub.f32 1.0, %v1146
      %v1148 = vmul.f32 %v1145, %v1147
      %v1149 = vadd.f32 %v1145, %v1148
      %vm1150 = vweird.f32 %v1114
      %vm1151 = vweird.f32 %v1145
      %vm1152 = vmor %vm1150, %vm1151
      %v1153 = vsel %vm1152, %v1145, %v1149
      %v1154 = vand.u32 2147483647, %v1114
      %vm1155 = vcmp.eq.f32.partialorder %v1154, 8.507059e+37
      %v1156 = vand.u32 %v1114, 2147483648
      %v1157 = vor.u32 1.1754944e-38, %v1156
      %v1158 = vsel %vm1155, %v1157, %v1153
      %v1159 = vmul.f32 1.0, %v1158
      %v1160 = vmul.f32 %v1100, %v1129
      %v1161 = vmul.f32 %v1101, %v1144
      %v1162 = vmul.f32 %v1102, %v1159
      %v1163 = vld [vmem:[%s1 + $0x5a] sm:$0xff]
      %v1164 = vld [vmem:[%s1 + $0x62] sm:$0xff]
      %v1165 = vld [vmem:[%s1 + $0x6a] sm:$0xf]
      %1167 = vset.pattern.permute.xlu0 0
      %1168 = vperm.xlu0 %1167, %v1163
      %v1169 = vpop.permute.xlu0 %1168
      %1172 = vset.pattern.permute.xlu0 0
      %1173 = vperm.xlu0 %1172, %v1164
      %v1174 = vpop.permute.xlu0 %1173
      %1177 = vset.pattern.permute.xlu0 0
      %1178 = vperm.xlu0 %1177, %v1165
      %v1179 = vpop.permute.xlu0 %1178
      %v1181 = vmul.f32 %v1160, %v1169
      %v1182 = vmul.f32 %v1161, %v1174
      %v1183 = vmul.f32 %v1162, %v1179
      %v1184 = vsel %vm958, %v1181, 0.0
      %v1185 = vsel %vm958, %v1182, 0.0
      %v1186 = vadd.f32 %v1184, %v1185
      %vm1187 = vcmask 519168
      %v1188 = vsel %vm1187, %v1183, 0.0
      %v1189 = vadd.f32 %v1186, %v1188
      %v1190 = vrot.slane %v1189, 4
      %v1191 = vadd.f32 %v1189, %v1190
      %v1192 = vrot.slane %v1191, 2
      %v1193 = vadd.f32 %v1191, %v1192
      %v1194 = vrot.slane %v1193, 1
      %v1195 = vadd.f32 %v1193, %v1194
      %v1196 = vmul.f32 %v1195, 0.0625
      %v1197 = vld [vmem:[%s6] sm:$0xf]
      %v1198 = vmul.f32 %v1197, %v1196
      %v1199 = vsel %vm1187, %v1198, 0.0
      %1200 = vadd.xlane.f32.xlu0 %v1199
      %v1201 = vpop.xlane.xlu0 %1200
      %v1202 = vld [vmem:[%s7] sm:$0xf]
      %v1203 = vadd.f32 %v1201, %v1202
      %v1204 = vxor.u32 %v1203, 2147483648
      %v1205 = vmul.f32 %v1204, 1.442695
      %v1206 = vpow.pop %v1205
      %v1207 = vadd.f32 %v1206, 1.0
      %v1208 = vrcp.pop %v1207
      %v1209 = vmul.f32 %v1207, %v1208
      %v1210 = vsub.f32 1.0, %v1209
      %v1211 = vmul.f32 %v1208, %v1210
      %v1212 = vadd.f32 %v1208, %v1211
      %vm1213 = vweird.f32 %v1207
      %vm1214 = vweird.f32 %v1208
      %vm1215 = vmor %vm1213, %vm1214
      %v1216 = vsel %vm1215, %v1208, %v1212
      %v1217 = vand.u32 2147483647, %v1207
      %vm1218 = vcmp.eq.f32.partialorder %v1217, 8.507059e+37
      %v1219 = vand.u32 %v1207, 2147483648
      %v1220 = vor.u32 1.1754944e-38, %v1219
      %v1221 = vsel %vm1218, %v1220, %v1216
      %v1222 = vmul.f32 1.0, %v1221
      %v1223 = vmul.f32 %v1203, %v1222
      %v1224 = vld [vmem:[%s8] sm:$0xf]
      %1226 = vset.pattern.permute.xlu0 0
      %1227 = vperm.xlu0 %1226, %v1223
      %v1228 = vpop.permute.xlu0 %1227
      %v1230 = vmul.f32 %v1224, %v1228
      %v1231 = vsel %vm1187, %v1230, 0.0
      %v1232 = vrot.slane %v1231, 4
      %v1233 = vadd.f32 %v1231, %v1232
      %v1234 = vrot.slane %v1233, 2
      %v1235 = vadd.f32 %v1233, %v1234
      %v1236 = vrot.slane %v1235, 1
      %v1237 = vadd.f32 %v1235, %v1236
      %v1238 = vld [vmem:[%s9] sm:$0x1]
      %v1239 = vadd.f32 %v1237, %v1238
      %v1240 = vxor.u32 %v1239, 2147483648
      %v1241 = vmul.f32 %v1240, 1.442695
      %v1242 = vpow.pop %v1241
      %v1243 = vadd.f32 %v1242, 1.0
      %v1244 = vrcp.pop %v1243
      %v1245 = vmul.f32 %v1243, %v1244
      %v1246 = vsub.f32 1.0, %v1245
      %v1247 = vmul.f32 %v1244, %v1246
      %v1248 = vadd.f32 %v1244, %v1247
      %vm1249 = vweird.f32 %v1243
      %vm1250 = vweird.f32 %v1244
      %vm1251 = vmor %vm1249, %vm1250
      %v1252 = vsel %vm1251, %v1244, %v1248
      %v1253 = vand.u32 2147483647, %v1243
      %vm1254 = vcmp.eq.f32.partialorder %v1253, 8.507059e+37
      %v1255 = vand.u32 %v1243, 2147483648
      %v1256 = vor.u32 1.1754944e-38, %v1255
      %v1257 = vsel %vm1254, %v1256, %v1252
      %v1258 = vmul.f32 1.0, %v1257
      %v1259 = vperm.slane %v1258, 0
      %v1260 = vmul.f32 %v1160, %v1259
      %v1261 = vmul.f32 %v1161, %v1259
      %v1262 = vmul.f32 %v1162, %v1259
      %v1263 = vpack.c.bf16 %v1261, %v1260
      %v1264 = vpack.c.bf16 %v1262, %v1262
      %v1265 = vld [vmem:[%s10] sm:$0xf]
      %v1266 = vld [vmem:[%s10 + $0x4] sm:$0xf]
      %v1267 = vld [vmem:[%s10 + $0x8] sm:$0xf]
      %v1268 = vld [vmem:[%s10 + $0xc] sm:$0xf]
      %v1269 = vld [vmem:[%s10 + $0x10] sm:$0xf]
      %v1270 = vld [vmem:[%s10 + $0x14] sm:$0xf]
      %v1271 = vld [vmem:[%s10 + $0x18] sm:$0xf]
      %v1272 = vld [vmem:[%s10 + $0x1c] sm:$0xf]
      %v1273 = vld [vmem:[%s11] sm:$0x1]
      %v1275 = vperm.slane %v1273, 0
      %v1285 = vunpack.c.l.b16 %v1265
      %v1286 = vunpack.c.l.b16 %v1266
      %v1287 = vunpack.c.l.b16 %v1267
      %v1288 = vunpack.c.l.b16 %v1268
      %v1289 = vunpack.c.l.b16 %v1269
      %v1290 = vunpack.c.l.b16 %v1270
      %v1291 = vunpack.c.l.b16 %v1271
      %v1292 = vunpack.c.l.b16 %v1272
      %v1293 = vpack.c.b16 %v1286, %v1285
      %v1294 = vpack.c.b16 %v1288, %v1287
      %v1295 = vpack.c.b16 %v1290, %v1289
      %v1296 = vpack.c.b16 %v1292, %v1291
      %v1302 = vsel %vm958, %v1263, 0
      %v1305 = vsel %vm958, %v1264, 0
      %1307 = vmatpush.bf16.msra.mxu0 0
      %1308 = vmatpush.bf16.msra.mxu0 0
      %1309 = vmatpush.bf16.msra.mxu0 0
      %1310 = vmatpush.bf16.msra.mxu0 0
      %1311 = vmatpush.bf16.msra.mxu0 %v1296
      %1312 = vmatpush.bf16.msra.mxu0 %v1295
      %1313 = vmatpush.bf16.msra.mxu0 %v1294
      %1314 = vmatpush.bf16.msra.mxu0 %v1293
      %1315 = vmatmul.bf16.gmra.mxu0 %v1302
      %v1316 = vpop.f32.mrf.mxu0
      %v1317 = vadd.f32 %v1275, %v1316
      %v1318 = vpop.f32.mrf.mxu0
      %v1319 = vadd.f32 %v1275, %v1318
      %1320 = vmatmul.bf16.gmra.mxu0 %v1305
      %v1321 = vpop.f32.mrf.mxu0
      %v1322 = vadd.f32 %v1275, %v1321
      %v1323 = vpop.f32.mrf.mxu0
      %1324 = vdwg.mxu0
      %vm1325 = vcmask 195584
      %1326 = vst.msk [vmem:[%s413] sm:$0xff] %vm1325, %v1317
      %1327 = vst.msk [vmem:[%s413 + $0x8] sm:$0xff] %vm1325, %v1319
      %vm1328 = vcmask 191488
      %1329 = vst.msk [vmem:[%s413 + $0x10] sm:$0xf] %vm1328, %v1322
      %p1330 = scmp.lt.s32.totalorder %s23, 1
      %s1331 = scalar_select %p1330, %s23, 1
      %s1332 = smul.addr %s1331, 3
      %s1333 = smul.addr %s1332, 8
      %s1334 = scalar_lea.vmem %s12, %s1333
      // Predicated region
      $region69: #{_lambda_.7} parent=67 // pred_check
        %p1335 = pneg %p298
      $region70: #{_lambda_.7} parent=67 // pred_check_branch
        %1337 = sbr.rel (%p1335) target = $region72
      $region71: #{_lambda_.7} parent=67 // pred_region
        _
      $region72: #{_lambda_.7} parent=67 // pred_fallthru
        _
    $region68: #{_lambda_.7} parent=5 // pred_fallthru
      _
    %p1338 = scmp.le.s32.totalorder 2, %s18
    // Predicated region
    $region73: #{_lambda_.7} parent=5 // pred_check
      %p1339 = pneg %p1338
    $region74: #{_lambda_.7} parent=5 // pred_check_branch
      %1341 = sbr.rel (%p1339) target = $region76
    $region75: #{_lambda_.7} parent=5 // pred_region
      %s1342 = ssub.s32 %s18, 2
      // Predicated region
      $region77: #{_lambda_.7} parent=75 // pred_check
        %p1343 = pneg %p304
      $region78: #{_lambda_.7} parent=75 // pred_check_branch
        %1345 = sbr.rel (%p1343) target = $region80
      $region79: #{_lambda_.7} parent=75 // pred_region
        %p1346 = scmp.lt.s32.totalorder %s24, 1
        %s1347 = scalar_select %p1346, %s24, 1
        %s1348 = smul.addr %s1347, 3
        %s1349 = smul.addr %s1348, 8
        %s1350 = scalar_lea.vmem %s12, %s1349
      $region80: #{_lambda_.7} parent=75 // pred_fallthru
        _
    $region76: #{_lambda_.7} parent=5 // pred_fallthru
      _
  $region6: #{_lambda_.7} parent=0 // loop_footer
    %s22 = sadd.s32 1, %s18
  $region7: #{_lambda_.7} parent=0 // loop_footer_branch
    %17 = sbr.rel target = $region3
  $region8: #{_lambda_.7} parent=0 // loop_exit
    _

// kernel: _lambda_.8
$region0: #{_lambda_.8}
  #allocation0 [shape = 'u32[]', space=smem, size = 0x4, offset = 0x4, fixed_abs, tag = 'smem constant byte address 0x4 - core index']
  #allocation1 [shape = 'u32[72,128]{1,0:T(1,128)}', space=vmem, size = 0x9000, scoped, tag = 'internal scratch']
  #allocation2 [shape = 'f32[48,96]{1,0:T(8,128)}', space=vmem, size = 0x6000, scoped, tag = 'scratch operand']
  %s0 = inlined_call_operand.vmem [shape: bf16[2,48,24], index: 0, kind: input, shape index: {}]
  %s1 = inlined_call_operand.vmem [shape: f32[48,1], index: 1, kind: input, shape index: {}]
  %s2 = inlined_call_operand.vmem [shape: bf16[24,96], index: 2, kind: input, shape index: {}]
  %s3 = inlined_call_operand.vmem [shape: f32[1,96], index: 3, kind: input, shape index: {}]
  %s4 = inlined_call_operand.vmem [shape: f32[9,1,96], index: 4, kind: input, shape index: {}]
  %s5 = inlined_call_operand.vmem [shape: f32[1,96], index: 5, kind: input, shape index: {}]
  %s6 = inlined_call_operand.vmem [shape: f32[6,96], index: 6, kind: input, shape index: {}]
  %s7 = inlined_call_operand.vmem [shape: f32[6,1], index: 7, kind: input, shape index: {}]
  %s8 = inlined_call_operand.vmem [shape: f32[6,96], index: 8, kind: input, shape index: {}]
  %s9 = inlined_call_operand.vmem [shape: f32[1,96], index: 9, kind: input, shape index: {}]
  %s10 = inlined_call_operand.vmem [shape: bf16[96,32], index: 10, kind: input, shape index: {}]
  %s11 = inlined_call_operand.vmem [shape: f32[1,32], index: 11, kind: input, shape index: {}]
  %s12 = inlined_call_operand.vmem [shape: f32[2,6,32], index: 12, kind: output, shape index: {}]
  %s13 = sld [smem:[#allocation0]]
  $region81: #{_lambda_.8} parent=0
    _
  %s15 = ssub.s32 1, %s13
  %s16 = scalar_select 0, %s15, %s13
  loop: start=0, step=1, limit=4
  $region2: #{_lambda_.8} parent=0 // loop_pre_header
    _
  $region3: #{_lambda_.8} parent=0 // loop_header
    %s18 = sphi 0, %s22
    %p19 = scmp.ge.s32.totalorder %s18, 4
    %s28 = sphi 0, %s30
    %s31 = sphi 0, %s28
    %s32 = sphi 0, %s31
    %s48 = sphi 0, %s32
    %s52 = sphi 0, %s52
    %s54 = sphi 0, %s52
    %s55 = sphi 0, %s54
    %s69 = sphi 0, %s55
    %s73 = sphi 0, %s73
    %s75 = sphi 0, %s73
    %s76 = sphi 0, %s75
    %s90 = sphi 0, %s76
    %s94 = sphi 0, %s94
    %s96 = sphi 0, %s94
    %s97 = sphi 0, %s96
    %s111 = sphi 0, %s97
    %s115 = sphi 0, %s115
    %s117 = sphi 0, %s115
    %s118 = sphi 0, %s117
    %s132 = sphi 0, %s118
    %s136 = sphi 0, %s136
    %s138 = sphi 0, %s136
    %s139 = sphi 0, %s138
    %s153 = sphi 0, %s139
    %s157 = sphi 0, %s157
    %s159 = sphi 0, %s157
    %s160 = sphi 0, %s159
    %s174 = sphi 0, %s160
    %s178 = sphi 0, %s178
    %s180 = sphi 0, %s178
    %s181 = sphi 0, %s180
    %s195 = sphi 0, %s181
    %s199 = sphi 0, %s199
    %s201 = sphi 0, %s199
    %s202 = sphi 0, %s201
    %s216 = sphi 0, %s202
    %s220 = sphi 0, %s220
    %s222 = sphi 0, %s220
    %s223 = sphi 0, %s222
    %s237 = sphi 0, %s223
    %s241 = sphi 0, %s241
    %s243 = sphi 0, %s241
    %s244 = sphi 0, %s243
    %s258 = sphi 0, %s244
    %s262 = sphi 0, %s262
    %s264 = sphi 0, %s262
    %s265 = sphi 0, %s264
    %s279 = sphi 0, %s265
    %s285 = sphi 0, %s287
    %s288 = sphi 0, %s285
    %s289 = sphi 0, %s288
    %s305 = sphi 0, %s289
  $region4: #{_lambda_.8} parent=0 // loop_header_branch
    %21 = sbr.rel (%p19) target = $region8
  $region5: #{_lambda_.8} parent=0 // loop_body
    %s23 = ssub.s32 %s18, 1
    %s24 = ssub.s32 %s18, 2
    %s25 = sadd.s32 %s18, 1
    %s26 = ssub.s32 %s18, %s25
    %p27 = scmp.eq.s32.totalorder %s26, 0
    %s29 = sadd.s32 %s28, 1
    %s30 = scalar_select %p27, %s28, %s29
    %p33 = pneg %p27
    %p34 = scmp.eq.s32.totalorder %s18, 1
    %p35 = por %p33, %p34
    %p36 = scmp.ne.s32.totalorder %s28, %s31
    %p37 = scmp.eq.s32.totalorder %s18, 0
    %p38 = por %p36, %p37
    %p39 = scmp.ne.s32.totalorder %s28, %s31
    %p40 = scmp.eq.s32.totalorder %s23, 1
    %p41 = por %p39, %p40
    %p42 = scmp.ne.s32.totalorder %s31, %s32
    %p43 = scmp.eq.s32.totalorder %s23, 0
    %p44 = por %p42, %p43
    %p45 = scmp.ne.s32.totalorder %s31, %s32
    %p46 = scmp.eq.s32.totalorder %s24, 1
    %p47 = por %p45, %p46
    %p49 = scmp.ne.s32.totalorder %s32, %s48
    %p50 = scmp.eq.s32.totalorder %s24, 0
    %p51 = por %p49, %p50
    %s53 = sadd.s32 %s52, 1
    %p56 = scmp.eq.s32.totalorder %s18, 1
    %p57 = scmp.ne.s32.totalorder %s52, %s54
    %p58 = scmp.eq.s32.totalorder %s18, 0
    %p59 = por %p57, %p58
    %p60 = scmp.ne.s32.totalorder %s52, %s54
    %p61 = scmp.eq.s32.totalorder %s23, 1
    %p62 = por %p60, %p61
    %p63 = scmp.ne.s32.totalorder %s54, %s55
    %p64 = scmp.eq.s32.totalorder %s23, 0
    %p65 = por %p63, %p64
    %p66 = scmp.ne.s32.totalorder %s54, %s55
    %p67 = scmp.eq.s32.totalorder %s24, 1
    %p68 = por %p66, %p67
    %p70 = scmp.ne.s32.totalorder %s55, %s69
    %p71 = scmp.eq.s32.totalorder %s24, 0
    %p72 = por %p70, %p71
    %s74 = sadd.s32 %s73, 1
    %p77 = scmp.eq.s32.totalorder %s18, 1
    %p78 = scmp.ne.s32.totalorder %s73, %s75
    %p79 = scmp.eq.s32.totalorder %s18, 0
    %p80 = por %p78, %p79
    %p81 = scmp.ne.s32.totalorder %s73, %s75
    %p82 = scmp.eq.s32.totalorder %s23, 1
    %p83 = por %p81, %p82
    %p84 = scmp.ne.s32.totalorder %s75, %s76
    %p85 = scmp.eq.s32.totalorder %s23, 0
    %p86 = por %p84, %p85
    %p87 = scmp.ne.s32.totalorder %s75, %s76
    %p88 = scmp.eq.s32.totalorder %s24, 1
    %p89 = por %p87, %p88
    %p91 = scmp.ne.s32.totalorder %s76, %s90
    %p92 = scmp.eq.s32.totalorder %s24, 0
    %p93 = por %p91, %p92
    %s95 = sadd.s32 %s94, 1
    %p98 = scmp.eq.s32.totalorder %s18, 1
    %p99 = scmp.ne.s32.totalorder %s94, %s96
    %p100 = scmp.eq.s32.totalorder %s18, 0
    %p101 = por %p99, %p100
    %p102 = scmp.ne.s32.totalorder %s94, %s96
    %p103 = scmp.eq.s32.totalorder %s23, 1
    %p104 = por %p102, %p103
    %p105 = scmp.ne.s32.totalorder %s96, %s97
    %p106 = scmp.eq.s32.totalorder %s23, 0
    %p107 = por %p105, %p106
    %p108 = scmp.ne.s32.totalorder %s96, %s97
    %p109 = scmp.eq.s32.totalorder %s24, 1
    %p110 = por %p108, %p109
    %p112 = scmp.ne.s32.totalorder %s97, %s111
    %p113 = scmp.eq.s32.totalorder %s24, 0
    %p114 = por %p112, %p113
    %s116 = sadd.s32 %s115, 1
    %p119 = scmp.eq.s32.totalorder %s18, 1
    %p120 = scmp.ne.s32.totalorder %s115, %s117
    %p121 = scmp.eq.s32.totalorder %s18, 0
    %p122 = por %p120, %p121
    %p123 = scmp.ne.s32.totalorder %s115, %s117
    %p124 = scmp.eq.s32.totalorder %s23, 1
    %p125 = por %p123, %p124
    %p126 = scmp.ne.s32.totalorder %s117, %s118
    %p127 = scmp.eq.s32.totalorder %s23, 0
    %p128 = por %p126, %p127
    %p129 = scmp.ne.s32.totalorder %s117, %s118
    %p130 = scmp.eq.s32.totalorder %s24, 1
    %p131 = por %p129, %p130
    %p133 = scmp.ne.s32.totalorder %s118, %s132
    %p134 = scmp.eq.s32.totalorder %s24, 0
    %p135 = por %p133, %p134
    %s137 = sadd.s32 %s136, 1
    %p140 = scmp.eq.s32.totalorder %s18, 1
    %p141 = scmp.ne.s32.totalorder %s136, %s138
    %p142 = scmp.eq.s32.totalorder %s18, 0
    %p143 = por %p141, %p142
    %p144 = scmp.ne.s32.totalorder %s136, %s138
    %p145 = scmp.eq.s32.totalorder %s23, 1
    %p146 = por %p144, %p145
    %p147 = scmp.ne.s32.totalorder %s138, %s139
    %p148 = scmp.eq.s32.totalorder %s23, 0
    %p149 = por %p147, %p148
    %p150 = scmp.ne.s32.totalorder %s138, %s139
    %p151 = scmp.eq.s32.totalorder %s24, 1
    %p152 = por %p150, %p151
    %p154 = scmp.ne.s32.totalorder %s139, %s153
    %p155 = scmp.eq.s32.totalorder %s24, 0
    %p156 = por %p154, %p155
    %s158 = sadd.s32 %s157, 1
    %p161 = scmp.eq.s32.totalorder %s18, 1
    %p162 = scmp.ne.s32.totalorder %s157, %s159
    %p163 = scmp.eq.s32.totalorder %s18, 0
    %p164 = por %p162, %p163
    %p165 = scmp.ne.s32.totalorder %s157, %s159
    %p166 = scmp.eq.s32.totalorder %s23, 1
    %p167 = por %p165, %p166
    %p168 = scmp.ne.s32.totalorder %s159, %s160
    %p169 = scmp.eq.s32.totalorder %s23, 0
    %p170 = por %p168, %p169
    %p171 = scmp.ne.s32.totalorder %s159, %s160
    %p172 = scmp.eq.s32.totalorder %s24, 1
    %p173 = por %p171, %p172
    %p175 = scmp.ne.s32.totalorder %s160, %s174
    %p176 = scmp.eq.s32.totalorder %s24, 0
    %p177 = por %p175, %p176
    %s179 = sadd.s32 %s178, 1
    %p182 = scmp.eq.s32.totalorder %s18, 1
    %p183 = scmp.ne.s32.totalorder %s178, %s180
    %p184 = scmp.eq.s32.totalorder %s18, 0
    %p185 = por %p183, %p184
    %p186 = scmp.ne.s32.totalorder %s178, %s180
    %p187 = scmp.eq.s32.totalorder %s23, 1
    %p188 = por %p186, %p187
    %p189 = scmp.ne.s32.totalorder %s180, %s181
    %p190 = scmp.eq.s32.totalorder %s23, 0
    %p191 = por %p189, %p190
    %p192 = scmp.ne.s32.totalorder %s180, %s181
    %p193 = scmp.eq.s32.totalorder %s24, 1
    %p194 = por %p192, %p193
    %p196 = scmp.ne.s32.totalorder %s181, %s195
    %p197 = scmp.eq.s32.totalorder %s24, 0
    %p198 = por %p196, %p197
    %s200 = sadd.s32 %s199, 1
    %p203 = scmp.eq.s32.totalorder %s18, 1
    %p204 = scmp.ne.s32.totalorder %s199, %s201
    %p205 = scmp.eq.s32.totalorder %s18, 0
    %p206 = por %p204, %p205
    %p207 = scmp.ne.s32.totalorder %s199, %s201
    %p208 = scmp.eq.s32.totalorder %s23, 1
    %p209 = por %p207, %p208
    %p210 = scmp.ne.s32.totalorder %s201, %s202
    %p211 = scmp.eq.s32.totalorder %s23, 0
    %p212 = por %p210, %p211
    %p213 = scmp.ne.s32.totalorder %s201, %s202
    %p214 = scmp.eq.s32.totalorder %s24, 1
    %p215 = por %p213, %p214
    %p217 = scmp.ne.s32.totalorder %s202, %s216
    %p218 = scmp.eq.s32.totalorder %s24, 0
    %p219 = por %p217, %p218
    %s221 = sadd.s32 %s220, 1
    %p224 = scmp.eq.s32.totalorder %s18, 1
    %p225 = scmp.ne.s32.totalorder %s220, %s222
    %p226 = scmp.eq.s32.totalorder %s18, 0
    %p227 = por %p225, %p226
    %p228 = scmp.ne.s32.totalorder %s220, %s222
    %p229 = scmp.eq.s32.totalorder %s23, 1
    %p230 = por %p228, %p229
    %p231 = scmp.ne.s32.totalorder %s222, %s223
    %p232 = scmp.eq.s32.totalorder %s23, 0
    %p233 = por %p231, %p232
    %p234 = scmp.ne.s32.totalorder %s222, %s223
    %p235 = scmp.eq.s32.totalorder %s24, 1
    %p236 = por %p234, %p235
    %p238 = scmp.ne.s32.totalorder %s223, %s237
    %p239 = scmp.eq.s32.totalorder %s24, 0
    %p240 = por %p238, %p239
    %s242 = sadd.s32 %s241, 1
    %p245 = scmp.eq.s32.totalorder %s18, 1
    %p246 = scmp.ne.s32.totalorder %s241, %s243
    %p247 = scmp.eq.s32.totalorder %s18, 0
    %p248 = por %p246, %p247
    %p249 = scmp.ne.s32.totalorder %s241, %s243
    %p250 = scmp.eq.s32.totalorder %s23, 1
    %p251 = por %p249, %p250
    %p252 = scmp.ne.s32.totalorder %s243, %s244
    %p253 = scmp.eq.s32.totalorder %s23, 0
    %p254 = por %p252, %p253
    %p255 = scmp.ne.s32.totalorder %s243, %s244
    %p256 = scmp.eq.s32.totalorder %s24, 1
    %p257 = por %p255, %p256
    %p259 = scmp.ne.s32.totalorder %s244, %s258
    %p260 = scmp.eq.s32.totalorder %s24, 0
    %p261 = por %p259, %p260
    %s263 = sadd.s32 %s262, 1
    %p266 = scmp.eq.s32.totalorder %s18, 1
    %p267 = scmp.ne.s32.totalorder %s262, %s264
    %p268 = scmp.eq.s32.totalorder %s18, 0
    %p269 = por %p267, %p268
    %p270 = scmp.ne.s32.totalorder %s262, %s264
    %p271 = scmp.eq.s32.totalorder %s23, 1
    %p272 = por %p270, %p271
    %p273 = scmp.ne.s32.totalorder %s264, %s265
    %p274 = scmp.eq.s32.totalorder %s23, 0
    %p275 = por %p273, %p274
    %p276 = scmp.ne.s32.totalorder %s264, %s265
    %p277 = scmp.eq.s32.totalorder %s24, 1
    %p278 = por %p276, %p277
    %p280 = scmp.ne.s32.totalorder %s265, %s279
    %p281 = scmp.eq.s32.totalorder %s24, 0
    %p282 = por %p280, %p281
    %s283 = ssub.s32 %s18, %s25
    %p284 = scmp.eq.s32.totalorder %s283, 0
    %s286 = sadd.s32 %s285, 1
    %s287 = scalar_select %p284, %s285, %s286
    %p290 = pneg %p284
    %p291 = scmp.eq.s32.totalorder %s18, 1
    %p292 = por %p290, %p291
    %p293 = scmp.ne.s32.totalorder %s285, %s288
    %p294 = scmp.eq.s32.totalorder %s18, 0
    %p295 = por %p293, %p294
    %p296 = scmp.ne.s32.totalorder %s285, %s288
    %p297 = scmp.eq.s32.totalorder %s23, 1
    %p298 = por %p296, %p297
    %p299 = scmp.ne.s32.totalorder %s288, %s289
    %p300 = scmp.eq.s32.totalorder %s23, 0
    %p301 = por %p299, %p300
    %p302 = scmp.ne.s32.totalorder %s288, %s289
    %p303 = scmp.eq.s32.totalorder %s24, 1
    %p304 = por %p302, %p303
    %p306 = scmp.ne.s32.totalorder %s289, %s305
    %p307 = scmp.eq.s32.totalorder %s24, 0
    %p308 = por %p306, %p307
    %p309 = scmp.le.s32.totalorder 1, %s18
    %p310 = scmp.lt.s32.totalorder %s18, 3
    %p311 = pnand %p309, %p310
    %p312 = pneg %p311
    // Predicated region
    $region9: #{_lambda_.8} parent=5 // pred_check
      _
    $region10: #{_lambda_.8} parent=5 // pred_check_branch
      %314 = sbr.rel (%p311) target = $region12
    $region11: #{_lambda_.8} parent=5 // pred_region
      %s315 = ssub.s32 %s18, 1
      // Predicated region
      $region13: #{_lambda_.8} parent=11 // pred_check
        %p316 = pneg %p65
      $region14: #{_lambda_.8} parent=11 // pred_check_branch
        %318 = sbr.rel (%p316) target = $region16
      $region15: #{_lambda_.8} parent=11 // pred_region
        _
      $region16: #{_lambda_.8} parent=11 // pred_fallthru
        _
      // Predicated region
      $region17: #{_lambda_.8} parent=11 // pred_check
        %p319 = pneg %p86
      $region18: #{_lambda_.8} parent=11 // pred_check_branch
        %321 = sbr.rel (%p319) target = $region20
      $region19: #{_lambda_.8} parent=11 // pred_region
        _
      $region20: #{_lambda_.8} parent=11 // pred_fallthru
        _
      // Predicated region
      $region21: #{_lambda_.8} parent=11 // pred_check
        %p322 = pneg %p107
      $region22: #{_lambda_.8} parent=11 // pred_check_branch
        %324 = sbr.rel (%p322) target = $region24
      $region23: #{_lambda_.8} parent=11 // pred_region
        _
      $region24: #{_lambda_.8} parent=11 // pred_fallthru
        _
      // Predicated region
      $region25: #{_lambda_.8} parent=11 // pred_check
        %p325 = pneg %p128
      $region26: #{_lambda_.8} parent=11 // pred_check_branch
        %327 = sbr.rel (%p325) target = $region28
      $region27: #{_lambda_.8} parent=11 // pred_region
        _
      $region28: #{_lambda_.8} parent=11 // pred_fallthru
        _
      // Predicated region
      $region29: #{_lambda_.8} parent=11 // pred_check
        %p328 = pneg %p149
      $region30: #{_lambda_.8} parent=11 // pred_check_branch
        %330 = sbr.rel (%p328) target = $region32
      $region31: #{_lambda_.8} parent=11 // pred_region
        _
      $region32: #{_lambda_.8} parent=11 // pred_fallthru
        _
      // Predicated region
      $region33: #{_lambda_.8} parent=11 // pred_check
        %p331 = pneg %p170
      $region34: #{_lambda_.8} parent=11 // pred_check_branch
        %333 = sbr.rel (%p331) target = $region36
      $region35: #{_lambda_.8} parent=11 // pred_region
        _
      $region36: #{_lambda_.8} parent=11 // pred_fallthru
        _
      // Predicated region
      $region37: #{_lambda_.8} parent=11 // pred_check
        %p334 = pneg %p191
      $region38: #{_lambda_.8} parent=11 // pred_check_branch
        %336 = sbr.rel (%p334) target = $region40
      $region39: #{_lambda_.8} parent=11 // pred_region
        _
      $region40: #{_lambda_.8} parent=11 // pred_fallthru
        _
      // Predicated region
      $region41: #{_lambda_.8} parent=11 // pred_check
        %p337 = pneg %p212
      $region42: #{_lambda_.8} parent=11 // pred_check_branch
        %339 = sbr.rel (%p337) target = $region44
      $region43: #{_lambda_.8} parent=11 // pred_region
        _
      $region44: #{_lambda_.8} parent=11 // pred_fallthru
        _
      // Predicated region
      $region45: #{_lambda_.8} parent=11 // pred_check
        %p340 = pneg %p233
      $region46: #{_lambda_.8} parent=11 // pred_check_branch
        %342 = sbr.rel (%p340) target = $region48
      $region47: #{_lambda_.8} parent=11 // pred_region
        _
      $region48: #{_lambda_.8} parent=11 // pred_fallthru
        _
      // Predicated region
      $region49: #{_lambda_.8} parent=11 // pred_check
        %p343 = pneg %p254
      $region50: #{_lambda_.8} parent=11 // pred_check_branch
        %345 = sbr.rel (%p343) target = $region52
      $region51: #{_lambda_.8} parent=11 // pred_region
        _
      $region52: #{_lambda_.8} parent=11 // pred_fallthru
        _
      // Predicated region
      $region53: #{_lambda_.8} parent=11 // pred_check
        %p346 = pneg %p275
      $region54: #{_lambda_.8} parent=11 // pred_check_branch
        %348 = sbr.rel (%p346) target = $region56
      $region55: #{_lambda_.8} parent=11 // pred_region
        _
      $region56: #{_lambda_.8} parent=11 // pred_fallthru
        _
    $region12: #{_lambda_.8} parent=5 // pred_fallthru
      _
    %p349 = scmp.lt.s32.totalorder %s18, 2
    // Predicated region
    $region57: #{_lambda_.8} parent=5 // pred_check
      %p350 = pneg %p349
    $region58: #{_lambda_.8} parent=5 // pred_check_branch
      %352 = sbr.rel (%p350) target = $region60
    $region59: #{_lambda_.8} parent=5 // pred_region
      // Predicated region
      $region61: #{_lambda_.8} parent=59 // pred_check
        %p353 = pneg %p38
      $region62: #{_lambda_.8} parent=59 // pred_check_branch
        %355 = sbr.rel (%p353) target = $region64
      $region63: #{_lambda_.8} parent=59 // pred_region
        %p356 = scmp.lt.s32.totalorder %s18, 1
        %s357 = scalar_select %p356, %s18, 1
        %s358 = smul.addr %s357, 6
        %s359 = smul.addr %s358, 4
        %s360 = scalar_lea.vmem %s0, %s359
      $region64: #{_lambda_.8} parent=59 // pred_fallthru
        _
    $region60: #{_lambda_.8} parent=5 // pred_fallthru
      _
    %p361 = scmp.le.s32.totalorder 1, %s18
    %p362 = scmp.lt.s32.totalorder %s18, 3
    %p363 = pnand %p361, %p362
    %p364 = pneg %p363
    // Predicated region
    $region65: #{_lambda_.8} parent=5 // pred_check
      _
    $region66: #{_lambda_.8} parent=5 // pred_check_branch
      %366 = sbr.rel (%p363) target = $region68
    $region67: #{_lambda_.8} parent=5 // pred_region
      %s367 = ssub.s32 %s18, 1
      %p368 = scmp.lt.s32.totalorder %s23, 1
      %s369 = scalar_select %p368, %s23, 1
      %s370 = smul.addr %s369, 6
      %s371 = smul.addr %s370, 4
      %s372 = scalar_lea.vmem %s0, %s371
      %p373 = pneg %p44
      %p374 = pneg %p41
      %p375 = pneg %p65
      %p376 = pneg %p62
      %p377 = pneg %p86
      %p378 = pneg %p83
      %p379 = pneg %p107
      %p380 = pneg %p104
      %p381 = pneg %p128
      %p382 = pneg %p125
      %p383 = pneg %p149
      %p384 = pneg %p146
      %p385 = pneg %p170
      %p386 = pneg %p167
      %p387 = pneg %p191
      %p388 = pneg %p188
      %p389 = pneg %p212
      %p390 = pneg %p209
      %p391 = pneg %p233
      %p392 = pneg %p230
      %p393 = pneg %p254
      %p394 = pneg %p251
      %p395 = pneg %p275
      %p396 = pneg %p272
      %p397 = pneg %p301
      %p398 = pneg %p298
      %p399 = scmp.lt.s32.totalorder %s23, 1
      %s400 = scalar_select %p399, %s23, 1
      %s401 = smul.addr %s400, 8
      %s402 = scalar_lea.vmem %s12, %s401
      %p403 = scmp.lt.s32.totalorder %s23, 1
      %s404 = scalar_select %p403, %s23, 1
      %s405 = smul.addr %s404, 6
      %s406 = smul.addr %s405, 4
      %s407 = scalar_lea.vmem %s0, %s406
      %p408 = scmp.lt.s32.totalorder %s23, 1
      %s409 = scalar_select %p408, %s23, 1
      %s410 = smul.addr %s409, 8
      %s411 = scalar_lea.vmem %s12, %s410
      %v413 = vld [vmem:[%s407] sm:$0xf]
      %v414 = vld [vmem:[%s407 + $0x4] sm:$0xf]
      %v415 = vld [vmem:[%s407 + $0x8] sm:$0xf]
      %v416 = vld [vmem:[%s407 + $0xc] sm:$0xf]
      %v417 = vld [vmem:[%s407 + $0x10] sm:$0xf]
      %v418 = vld [vmem:[%s407 + $0x14] sm:$0xf]
      %v419 = vld [vmem:[%s2] sm:$0xf]
      %v420 = vld [vmem:[%s2 + $0x4] sm:$0xf]
      %v421 = vld [vmem:[%s2 + $0x8] sm:$0xf]
      %v422 = vld [vmem:[%s3] sm:$0x1]
      %v424 = vperm.slane %v422, 0
      %v432 = vunpack.c.l.b16 %v413
      %v433 = vunpack.c.l.b16 %v414
      %v434 = vunpack.c.l.b16 %v415
      %v435 = vunpack.c.l.b16 %v416
      %v436 = vunpack.c.l.b16 %v417
      %v437 = vunpack.c.l.b16 %v418
      %v438 = vpack.c.b16 %v433, %v432
      %v439 = vpack.c.b16 %v435, %v434
      %v440 = vpack.c.b16 %v437, %v436
      %v444 = vunpack.c.l.b16 %v419
      %v445 = vunpack.c.l.b16 %v420
      %v446 = vunpack.c.l.b16 %v421
      %v447 = vpack.c.b16 %v445, %v444
      %v448 = vpack.c.b16 %v446, %v446
      %vm450 = vcmask 195584
      %v452 = vsel %vm450, %v438, 0
      %v455 = vsel %vm450, %v439, 0
      %v458 = vsel %vm450, %v440, 0
      %vm460 = vcmask 1043456
      %v462 = vsel %vm460, %v448, 0
      %464 = vmatpush.bf16.msra.mxu0 0
      %465 = vmatpush.bf16.msra.mxu0 0
      %466 = vmatpush.bf16.msra.mxu0 0
      %467 = vmatpush.bf16.msra.mxu0 0
      %468 = vmatpush.bf16.msra.mxu0 0
      %469 = vmatpush.bf16.msra.mxu0 0
      %470 = vmatpush.bf16.msra.mxu0 %v462
      %471 = vmatpush.bf16.msra.mxu0 %v447
      %472 = vmatmul.bf16.gmra.mxu0 %v452
      %v473 = vpop.f32.mrf.mxu0
      %v474 = vadd.f32 %v424, %v473
      %v475 = vpop.f32.mrf.mxu0
      %v476 = vadd.f32 %v424, %v475
      %477 = vmatmul.bf16.gmra.mxu0 %v455
      %v478 = vpop.f32.mrf.mxu0
      %v479 = vadd.f32 %v424, %v478
      %v480 = vpop.f32.mrf.mxu0
      %v481 = vadd.f32 %v424, %v480
      %482 = vmatmul.bf16.gmra.mxu0 %v458
      %v483 = vpop.f32.mrf.mxu0
      %v484 = vadd.f32 %v424, %v483
      %v485 = vpop.f32.mrf.mxu0
      %v486 = vadd.f32 %v424, %v485
      %487 = vdwg.mxu0
      %v488 = vxor.u32 %v474, 2147483648
      %v489 = vxor.u32 %v476, 2147483648
      %v490 = vxor.u32 %v479, 2147483648
      %v491 = vxor.u32 %v481, 2147483648
      %v492 = vxor.u32 %v484, 2147483648
      %v493 = vxor.u32 %v486, 2147483648
      %v494 = vmul.f32 %v488, 1.442695
      %v495 = vpow.pop %v494
      %v496 = vmul.f32 %v489, 1.442695
      %v497 = vpow.pop %v496
      %v498 = vmul.f32 %v490, 1.442695
      %v499 = vpow.pop %v498
      %v500 = vmul.f32 %v491, 1.442695
      %v501 = vpow.pop %v500
      %v502 = vmul.f32 %v492, 1.442695
      %v503 = vpow.pop %v502
      %v504 = vmul.f32 %v493, 1.442695
      %v505 = vpow.pop %v504
      %v506 = vadd.f32 %v495, 1.0
      %v507 = vadd.f32 %v497, 1.0
      %v508 = vadd.f32 %v499, 1.0
      %v509 = vadd.f32 %v501, 1.0
      %v510 = vadd.f32 %v503, 1.0
      %v511 = vadd.f32 %v505, 1.0
      %v512 = vrcp.pop %v506
      %v513 = vmul.f32 %v506, %v512
      %v514 = vsub.f32 1.0, %v513
      %v515 = vmul.f32 %v512, %v514
      %v516 = vadd.f32 %v512, %v515
      %vm517 = vweird.f32 %v506
      %vm518 = vweird.f32 %v512
      %vm519 = vmor %vm517, %vm518
      %v520 = vsel %vm519, %v512, %v516
      %v521 = vand.u32 2147483647, %v506
      %vm522 = vcmp.eq.f32.partialorder %v521, 8.507059e+37
      %v523 = vand.u32 %v506, 2147483648
      %v524 = vor.u32 1.1754944e-38, %v523
      %v525 = vsel %vm522, %v524, %v520
      %v526 = vmul.f32 1.0, %v525
      %v527 = vrcp.pop %v507
      %v528 = vmul.f32 %v507, %v527
      %v529 = vsub.f32 1.0, %v528
      %v530 = vmul.f32 %v527, %v529
      %v531 = vadd.f32 %v527, %v530
      %vm532 = vweird.f32 %v507
      %vm533 = vweird.f32 %v527
      %vm534 = vmor %vm532, %vm533
      %v535 = vsel %vm534, %v527, %v531
      %v536 = vand.u32 2147483647, %v507
      %vm537 = vcmp.eq.f32.partialorder %v536, 8.507059e+37
      %v538 = vand.u32 %v507, 2147483648
      %v539 = vor.u32 1.1754944e-38, %v538
      %v540 = vsel %vm537, %v539, %v535
      %v541 = vmul.f32 1.0, %v540
      %v542 = vrcp.pop %v508
      %v543 = vmul.f32 %v508, %v542
      %v544 = vsub.f32 1.0, %v543
      %v545 = vmul.f32 %v542, %v544
      %v546 = vadd.f32 %v542, %v545
      %vm547 = vweird.f32 %v508
      %vm548 = vweird.f32 %v542
      %vm549 = vmor %vm547, %vm548
      %v550 = vsel %vm549, %v542, %v546
      %v551 = vand.u32 2147483647, %v508
      %vm552 = vcmp.eq.f32.partialorder %v551, 8.507059e+37
      %v553 = vand.u32 %v508, 2147483648
      %v554 = vor.u32 1.1754944e-38, %v553
      %v555 = vsel %vm552, %v554, %v550
      %v556 = vmul.f32 1.0, %v555
      %v557 = vrcp.pop %v509
      %v558 = vmul.f32 %v509, %v557
      %v559 = vsub.f32 1.0, %v558
      %v560 = vmul.f32 %v557, %v559
      %v561 = vadd.f32 %v557, %v560
      %vm562 = vweird.f32 %v509
      %vm563 = vweird.f32 %v557
      %vm564 = vmor %vm562, %vm563
      %v565 = vsel %vm564, %v557, %v561
      %v566 = vand.u32 2147483647, %v509
      %vm567 = vcmp.eq.f32.partialorder %v566, 8.507059e+37
      %v568 = vand.u32 %v509, 2147483648
      %v569 = vor.u32 1.1754944e-38, %v568
      %v570 = vsel %vm567, %v569, %v565
      %v571 = vmul.f32 1.0, %v570
      %v572 = vrcp.pop %v510
      %v573 = vmul.f32 %v510, %v572
      %v574 = vsub.f32 1.0, %v573
      %v575 = vmul.f32 %v572, %v574
      %v576 = vadd.f32 %v572, %v575
      %vm577 = vweird.f32 %v510
      %vm578 = vweird.f32 %v572
      %vm579 = vmor %vm577, %vm578
      %v580 = vsel %vm579, %v572, %v576
      %v581 = vand.u32 2147483647, %v510
      %vm582 = vcmp.eq.f32.partialorder %v581, 8.507059e+37
      %v583 = vand.u32 %v510, 2147483648
      %v584 = vor.u32 1.1754944e-38, %v583
      %v585 = vsel %vm582, %v584, %v580
      %v586 = vmul.f32 1.0, %v585
      %v587 = vrcp.pop %v511
      %v588 = vmul.f32 %v511, %v587
      %v589 = vsub.f32 1.0, %v588
      %v590 = vmul.f32 %v587, %v589
      %v591 = vadd.f32 %v587, %v590
      %vm592 = vweird.f32 %v511
      %vm593 = vweird.f32 %v587
      %vm594 = vmor %vm592, %vm593
      %v595 = vsel %vm594, %v587, %v591
      %v596 = vand.u32 2147483647, %v511
      %vm597 = vcmp.eq.f32.partialorder %v596, 8.507059e+37
      %v598 = vand.u32 %v511, 2147483648
      %v599 = vor.u32 1.1754944e-38, %v598
      %v600 = vsel %vm597, %v599, %v595
      %v601 = vmul.f32 1.0, %v600
      %v602 = vmul.f32 %v474, %v526
      %v603 = vmul.f32 %v476, %v541
      %v604 = vmul.f32 %v479, %v556
      %v605 = vmul.f32 %v481, %v571
      %v606 = vmul.f32 %v484, %v586
      %v607 = vmul.f32 %v486, %v601
      %v608 = vld [vmem:[%s1] sm:$0xff]
      %v609 = vld [vmem:[%s1 + $0x8] sm:$0xff]
      %v610 = vld [vmem:[%s1 + $0x10] sm:$0xff]
      %v611 = vld [vmem:[%s1 + $0x18] sm:$0xff]
      %v612 = vld [vmem:[%s1 + $0x20] sm:$0xff]
      %v613 = vld [vmem:[%s1 + $0x28] sm:$0xff]
      %615 = vset.pattern.permute.xlu0 0
      %616 = vperm.xlu0 %615, %v608
      %v617 = vpop.permute.xlu0 %616
      %620 = vset.pattern.permute.xlu0 0
      %621 = vperm.xlu0 %620, %v609
      %v622 = vpop.permute.xlu0 %621
      %625 = vset.pattern.permute.xlu0 0
      %626 = vperm.xlu0 %625, %v610
      %v627 = vpop.permute.xlu0 %626
      %630 = vset.pattern.permute.xlu0 0
      %631 = vperm.xlu0 %630, %v611
      %v632 = vpop.permute.xlu0 %631
      %635 = vset.pattern.permute.xlu0 0
      %636 = vperm.xlu0 %635, %v612
      %v637 = vpop.permute.xlu0 %636
      %640 = vset.pattern.permute.xlu0 0
      %641 = vperm.xlu0 %640, %v613
      %v642 = vpop.permute.xlu0 %641
      %v644 = vmul.f32 %v602, %v617
      %v645 = vmul.f32 %v603, %v622
      %v646 = vmul.f32 %v604, %v627
      %v647 = vmul.f32 %v605, %v632
      %v648 = vmul.f32 %v606, %v637
      %v649 = vmul.f32 %v607, %v642
      %vm650 = vcmask 785408
      %651 = vst.msk [vmem:[#allocation2] sm:$0xff] %vm650, %v644
      %652 = vst.msk [vmem:[#allocation2 + $0x8] sm:$0xff] %vm650, %v645
      %653 = vst.msk [vmem:[#allocation2 + $0x10] sm:$0xff] %vm650, %v646
      %654 = vst.msk [vmem:[#allocation2 + $0x18] sm:$0xff] %vm650, %v647
      %655 = vst.msk [vmem:[#allocation2 + $0x20] sm:$0xff] %vm650, %v648
      %656 = vst.msk [vmem:[#allocation2 + $0x28] sm:$0xff] %vm650, %v649
      %v657 = vld [vmem:[#allocation2] sm:$0x3f]
      %v658 = vld [vmem:[%s4] sm:$0x1]
      %v660 = vperm.slane %v658, 0
      %v662 = vmul.f32 %v657, %v660
      %v663 = vld [vmem:[#allocation2 + $0xc] sm:$0x3f]
      %s664 = scalar_lea.vmem %s4, 1
      %v665 = vld [vmem:[%s664] sm:$0x1]
      %v667 = vperm.slane %v665, 0
      %v669 = vmul.f32 %v663, %v667
      %v670 = vadd.f32 %v662, %v669
      %v671 = vld [vmem:[#allocation2 + $0x1] sm:$0x3f]
      %s672 = scalar_lea.vmem %s4, 2
      %v673 = vld [vmem:[%s672] sm:$0x1]
      %v675 = vperm.slane %v673, 0
      %v677 = vmul.f32 %v671, %v675
      %v678 = vadd.f32 %v670, %v677
      %v679 = vld [vmem:[#allocation2 + $0x18] sm:$0x3f]
      %s680 = scalar_lea.vmem %s4, 3
      %v681 = vld [vmem:[%s680] sm:$0x1]
      %v683 = vperm.slane %v681, 0
      %v685 = vmul.f32 %v679, %v683
      %v686 = vadd.f32 %v678, %v685
      %v687 = vld [vmem:[#allocation2 + $0x24] sm:$0x3f]
      %s688 = scalar_lea.vmem %s4, 4
      %v689 = vld [vmem:[%s688] sm:$0x1]
      %v691 = vperm.slane %v689, 0
      %v693 = vmul.f32 %v687, %v691
      %v694 = vadd.f32 %v686, %v693
      %v695 = vld [vmem:[#allocation2 + $0x19] sm:$0x3f]
      %s696 = scalar_lea.vmem %s4, 5
      %v697 = vld [vmem:[%s696] sm:$0x1]
      %v699 = vperm.slane %v697, 0
      %v701 = vmul.f32 %v695, %v699
      %v702 = vadd.f32 %v694, %v701
      %v703 = vld [vmem:[#allocation2 + $0x3] sm:$0x3f]
      %s704 = scalar_lea.vmem %s4, 6
      %v705 = vld [vmem:[%s704] sm:$0x1]
      %v707 = vperm.slane %v705, 0
      %v709 = vmul.f32 %v703, %v707
      %v710 = vadd.f32 %v702, %v709
      %v711 = vld [vmem:[#allocation2 + $0xf] sm:$0x3f]
      %s712 = scalar_lea.vmem %s4, 7
      %v713 = vld [vmem:[%s712] sm:$0x1]
      %v715 = vperm.slane %v713, 0
      %v717 = vmul.f32 %v711, %v715
      %v718 = vadd.f32 %v710, %v717
      %v719 = vld [vmem:[#allocation2 + $0x4] sm:$0x3f]
      %s720 = scalar_lea.vmem %s4, 8
      %v721 = vld [vmem:[%s720] sm:$0x1]
      %v723 = vperm.slane %v721, 0
      %v725 = vmul.f32 %v719, %v723
      %v726 = vadd.f32 %v718, %v725
      %v727 = vld [vmem:[%s5] sm:$0x1]
      %v729 = vperm.slane %v727, 0
      %v731 = vadd.f32 %v726, %v729
      %v732 = vxor.u32 %v731, 2147483648
      %v733 = vmul.f32 %v732, 1.442695
      %v734 = vpow.pop %v733
      %v735 = vadd.f32 %v734, 1.0
      %v736 = vrcp.pop %v735
      %v737 = vmul.f32 %v735, %v736
      %v738 = vsub.f32 1.0, %v737
      %v739 = vmul.f32 %v736, %v738
      %v740 = vadd.f32 %v736, %v739
      %vm741 = vweird.f32 %v735
      %vm742 = vweird.f32 %v736
      %vm743 = vmor %vm741, %vm742
      %v744 = vsel %vm743, %v736, %v740
      %v745 = vand.u32 2147483647, %v735
      %vm746 = vcmp.eq.f32.partialorder %v745, 8.507059e+37
      %v747 = vand.u32 %v735, 2147483648
      %v748 = vor.u32 1.1754944e-38, %v747
      %v749 = vsel %vm746, %v748, %v744
      %v750 = vmul.f32 1.0, %v749
      %v751 = vmul.f32 %v731, %v750
      %v752 = vld [vmem:[%s1 + $0x24] sm:$0x3f]
      %754 = vset.pattern.permute.xlu0 0
      %755 = vperm.xlu0 %754, %v752
      %v756 = vpop.permute.xlu0 %755
      %v758 = vmul.f32 %v751, %v756
      %vm759 = vcmask 783360
      %v760 = vsel %vm759, %v758, 0.0
      %v761 = vrot.slane %v760, 4
      %v762 = vadd.f32 %v760, %v761
      %v763 = vrot.slane %v762, 2
      %v764 = vadd.f32 %v762, %v763
      %v765 = vrot.slane %v764, 1
      %v766 = vadd.f32 %v764, %v765
      %v767 = vmul.f32 %v766, 0.25
      %v768 = vld [vmem:[%s6] sm:$0x3f]
      %v769 = vmul.f32 %v768, %v767
      %v770 = vsel %vm759, %v769, 0.0
      %771 = vadd.xlane.f32.xlu0 %v770
      %v772 = vpop.xlane.xlu0 %771
      %v773 = vld [vmem:[%s7] sm:$0x3f]
      %v774 = vadd.f32 %v772, %v773
      %v775 = vxor.u32 %v774, 2147483648
      %v776 = vmul.f32 %v775, 1.442695
      %v777 = vpow.pop %v776
      %v778 = vadd.f32 %v777, 1.0
      %v779 = vrcp.pop %v778
      %v780 = vmul.f32 %v778, %v779
      %v781 = vsub.f32 1.0, %v780
      %v782 = vmul.f32 %v779, %v781
      %v783 = vadd.f32 %v779, %v782
      %vm784 = vweird.f32 %v778
      %vm785 = vweird.f32 %v779
      %vm786 = vmor %vm784, %vm785
      %v787 = vsel %vm786, %v779, %v783
      %v788 = vand.u32 2147483647, %v778
      %vm789 = vcmp.eq.f32.partialorder %v788, 8.507059e+37
      %v790 = vand.u32 %v778, 2147483648
      %v791 = vor.u32 1.1754944e-38, %v790
      %v792 = vsel %vm789, %v791, %v787
      %v793 = vmul.f32 1.0, %v792
      %v794 = vmul.f32 %v774, %v793
      %v795 = vld [vmem:[%s8] sm:$0x3f]
      %797 = vset.pattern.permute.xlu0 0
      %798 = vperm.xlu0 %797, %v794
      %v799 = vpop.permute.xlu0 %798
      %v801 = vmul.f32 %v795, %v799
      %v802 = vsel %vm759, %v801, 0.0
      %v803 = vrot.slane %v802, 4
      %v804 = vadd.f32 %v802, %v803
      %v805 = vrot.slane %v804, 2
      %v806 = vadd.f32 %v804, %v805
      %v807 = vrot.slane %v806, 1
      %v808 = vadd.f32 %v806, %v807
      %v809 = vld [vmem:[%s9] sm:$0x1]
      %v810 = vadd.f32 %v808, %v809
      %v811 = vxor.u32 %v810, 2147483648
      %v812 = vmul.f32 %v811, 1.442695
      %v813 = vpow.pop %v812
      %v814 = vadd.f32 %v813, 1.0
      %v815 = vrcp.pop %v814
      %v816 = vmul.f32 %v814, %v815
      %v817 = vsub.f32 1.0, %v816
      %v818 = vmul.f32 %v815, %v817
      %v819 = vadd.f32 %v815, %v818
      %vm820 = vweird.f32 %v814
      %vm821 = vweird.f32 %v815
      %vm822 = vmor %vm820, %vm821
      %v823 = vsel %vm822, %v815, %v819
      %v824 = vand.u32 2147483647, %v814
      %vm825 = vcmp.eq.f32.partialorder %v824, 8.507059e+37
      %v826 = vand.u32 %v814, 2147483648
      %v827 = vor.u32 1.1754944e-38, %v826
      %v828 = vsel %vm825, %v827, %v823
      %v829 = vmul.f32 1.0, %v828
      %v830 = vperm.slane %v829, 0
      %v831 = vmul.f32 %v751, %v830
      %v832 = vpack.c.bf16 %v831, %v831
      %v833 = vld [vmem:[%s10] sm:$0xf]
      %v834 = vld [vmem:[%s10 + $0x4] sm:$0xf]
      %v835 = vld [vmem:[%s10 + $0x8] sm:$0xf]
      %v836 = vld [vmem:[%s10 + $0xc] sm:$0xf]
      %v837 = vld [vmem:[%s10 + $0x10] sm:$0xf]
      %v838 = vld [vmem:[%s10 + $0x14] sm:$0xf]
      %v839 = vld [vmem:[%s10 + $0x18] sm:$0xf]
      %v840 = vld [vmem:[%s10 + $0x1c] sm:$0xf]
      %v841 = vld [vmem:[%s10 + $0x20] sm:$0xf]
      %v842 = vld [vmem:[%s10 + $0x24] sm:$0xf]
      %v843 = vld [vmem:[%s10 + $0x28] sm:$0xf]
      %v844 = vld [vmem:[%s10 + $0x2c] sm:$0xf]
      %v845 = vld [vmem:[%s11] sm:$0x1]
      %v847 = vperm.slane %v845, 0
      %v861 = vunpack.c.l.b16 %v833
      %v862 = vunpack.c.l.b16 %v834
      %v863 = vunpack.c.l.b16 %v835
      %v864 = vunpack.c.l.b16 %v836
      %v865 = vunpack.c.l.b16 %v837
      %v866 = vunpack.c.l.b16 %v838
      %v867 = vunpack.c.l.b16 %v839
      %v868 = vunpack.c.l.b16 %v840
      %v869 = vunpack.c.l.b16 %v841
      %v870 = vunpack.c.l.b16 %v842
      %v871 = vunpack.c.l.b16 %v843
      %v872 = vunpack.c.l.b16 %v844
      %v873 = vpack.c.b16 %v862, %v861
      %v874 = vpack.c.b16 %v864, %v863
      %v875 = vpack.c.b16 %v866, %v865
      %v876 = vpack.c.b16 %v868, %v867
      %v877 = vpack.c.b16 %v870, %v869
      %v878 = vpack.c.b16 %v872, %v871
      %v886 = vsel %vm650, %v832, 0
      %888 = vmatpush.bf16.msra.mxu0 0
      %889 = vmatpush.bf16.msra.mxu0 0
      %890 = vmatpush.bf16.msra.mxu0 %v878
      %891 = vmatpush.bf16.msra.mxu0 %v877
      %892 = vmatpush.bf16.msra.mxu0 %v876
      %893 = vmatpush.bf16.msra.mxu0 %v875
      %894 = vmatpush.bf16.msra.mxu0 %v874
      %895 = vmatpush.bf16.msra.mxu0 %v873
      %896 = vmatmul.bf16.gmra.mxu0 %v886
      %v897 = vpop.f32.mrf.mxu0
      %v898 = vadd.f32 %v847, %v897
      %v899 = vpop.f32.mrf.mxu0
      %900 = vdwg.mxu0
      %vm901 = vcmask 259072
      %902 = vst.msk [vmem:[%s411] sm:$0x3f] %vm901, %v898
      %p903 = scmp.lt.s32.totalorder %s23, 1
      %s904 = scalar_select %p903, %s23, 1
      %s905 = smul.addr %s904, 8
      %s906 = scalar_lea.vmem %s12, %s905
      // Predicated region
      $region69: #{_lambda_.8} parent=67 // pred_check
        %p907 = pneg %p298
      $region70: #{_lambda_.8} parent=67 // pred_check_branch
        %909 = sbr.rel (%p907) target = $region72
      $region71: #{_lambda_.8} parent=67 // pred_region
        _
      $region72: #{_lambda_.8} parent=67 // pred_fallthru
        _
    $region68: #{_lambda_.8} parent=5 // pred_fallthru
      _
    %p910 = scmp.le.s32.totalorder 2, %s18
    // Predicated region
    $region73: #{_lambda_.8} parent=5 // pred_check
      %p911 = pneg %p910
    $region74: #{_lambda_.8} parent=5 // pred_check_branch
      %913 = sbr.rel (%p911) target = $region76
    $region75: #{_lambda_.8} parent=5 // pred_region
      %s914 = ssub.s32 %s18, 2
      // Predicated region
      $region77: #{_lambda_.8} parent=75 // pred_check
        %p915 = pneg %p304
      $region78: #{_lambda_.8} parent=75 // pred_check_branch
        %917 = sbr.rel (%p915) target = $region80
      $region79: #{_lambda_.8} parent=75 // pred_region
        %p918 = scmp.lt.s32.totalorder %s24, 1
        %s919 = scalar_select %p918, %s24, 1
        %s920 = smul.addr %s919, 8
        %s921 = scalar_lea.vmem %s12, %s920
      $region80: #{_lambda_.8} parent=75 // pred_fallthru
        _
    $region76: #{_lambda_.8} parent=5 // pred_fallthru
      _
  $region6: #{_lambda_.8} parent=0 // loop_footer
    %s22 = sadd.s32 1, %s18
  $region7: #{_lambda_.8} parent=0 // loop_footer_branch
    %17 = sbr.rel target = $region3
  $region8: #{_lambda_.8} parent=0 // loop_exit
    _

// kernel: _lambda_.9
$region0: #{_lambda_.9}
  #allocation0 [shape = 'u32[]', space=smem, size = 0x4, offset = 0x4, fixed_abs, tag = 'smem constant byte address 0x4 - core index']
  #allocation1 [shape = 'u32[72,128]{1,0:T(1,128)}', space=vmem, size = 0x9000, scoped, tag = 'internal scratch']
  #allocation2 [shape = 'f32[20,128]{1,0:T(8,128)}', space=vmem, size = 0x3000, scoped, tag = 'scratch operand']
  %s0 = inlined_call_operand.vmem [shape: bf16[2,20,32], index: 0, kind: input, shape index: {}]
  %s1 = inlined_call_operand.vmem [shape: f32[20,1], index: 1, kind: input, shape index: {}]
  %s2 = inlined_call_operand.vmem [shape: bf16[32,128], index: 2, kind: input, shape index: {}]
  %s3 = inlined_call_operand.vmem [shape: f32[1,128], index: 3, kind: input, shape index: {}]
  %s4 = inlined_call_operand.vmem [shape: f32[9,1,128], index: 4, kind: input, shape index: {}]
  %s5 = inlined_call_operand.vmem [shape: f32[1,128], index: 5, kind: input, shape index: {}]
  %s6 = inlined_call_operand.vmem [shape: f32[8,128], index: 6, kind: input, shape index: {}]
  %s7 = inlined_call_operand.vmem [shape: f32[8,1], index: 7, kind: input, shape index: {}]
  %s8 = inlined_call_operand.vmem [shape: f32[8,128], index: 8, kind: input, shape index: {}]
  %s9 = inlined_call_operand.vmem [shape: f32[1,128], index: 9, kind: input, shape index: {}]
  %s10 = inlined_call_operand.vmem [shape: bf16[128,32], index: 10, kind: input, shape index: {}]
  %s11 = inlined_call_operand.vmem [shape: f32[1,32], index: 11, kind: input, shape index: {}]
  %s12 = inlined_call_operand.vmem [shape: f32[2,8,32], index: 12, kind: output, shape index: {}]
  %s13 = sld [smem:[#allocation0]]
  $region81: #{_lambda_.9} parent=0
    _
  %s15 = ssub.s32 1, %s13
  %s16 = scalar_select 0, %s15, %s13
  loop: start=0, step=1, limit=4
  $region2: #{_lambda_.9} parent=0 // loop_pre_header
    _
  $region3: #{_lambda_.9} parent=0 // loop_header
    %s18 = sphi 0, %s22
    %p19 = scmp.ge.s32.totalorder %s18, 4
    %s28 = sphi 0, %s30
    %s31 = sphi 0, %s28
    %s32 = sphi 0, %s31
    %s48 = sphi 0, %s32
    %s52 = sphi 0, %s52
    %s54 = sphi 0, %s52
    %s55 = sphi 0, %s54
    %s69 = sphi 0, %s55
    %s73 = sphi 0, %s73
    %s75 = sphi 0, %s73
    %s76 = sphi 0, %s75
    %s90 = sphi 0, %s76
    %s94 = sphi 0, %s94
    %s96 = sphi 0, %s94
    %s97 = sphi 0, %s96
    %s111 = sphi 0, %s97
    %s115 = sphi 0, %s115
    %s117 = sphi 0, %s115
    %s118 = sphi 0, %s117
    %s132 = sphi 0, %s118
    %s136 = sphi 0, %s136
    %s138 = sphi 0, %s136
    %s139 = sphi 0, %s138
    %s153 = sphi 0, %s139
    %s157 = sphi 0, %s157
    %s159 = sphi 0, %s157
    %s160 = sphi 0, %s159
    %s174 = sphi 0, %s160
    %s178 = sphi 0, %s178
    %s180 = sphi 0, %s178
    %s181 = sphi 0, %s180
    %s195 = sphi 0, %s181
    %s199 = sphi 0, %s199
    %s201 = sphi 0, %s199
    %s202 = sphi 0, %s201
    %s216 = sphi 0, %s202
    %s220 = sphi 0, %s220
    %s222 = sphi 0, %s220
    %s223 = sphi 0, %s222
    %s237 = sphi 0, %s223
    %s241 = sphi 0, %s241
    %s243 = sphi 0, %s241
    %s244 = sphi 0, %s243
    %s258 = sphi 0, %s244
    %s262 = sphi 0, %s262
    %s264 = sphi 0, %s262
    %s265 = sphi 0, %s264
    %s279 = sphi 0, %s265
    %s285 = sphi 0, %s287
    %s288 = sphi 0, %s285
    %s289 = sphi 0, %s288
    %s305 = sphi 0, %s289
  $region4: #{_lambda_.9} parent=0 // loop_header_branch
    %21 = sbr.rel (%p19) target = $region8
  $region5: #{_lambda_.9} parent=0 // loop_body
    %s23 = ssub.s32 %s18, 1
    %s24 = ssub.s32 %s18, 2
    %s25 = sadd.s32 %s18, 1
    %s26 = ssub.s32 %s18, %s25
    %p27 = scmp.eq.s32.totalorder %s26, 0
    %s29 = sadd.s32 %s28, 1
    %s30 = scalar_select %p27, %s28, %s29
    %p33 = pneg %p27
    %p34 = scmp.eq.s32.totalorder %s18, 1
    %p35 = por %p33, %p34
    %p36 = scmp.ne.s32.totalorder %s28, %s31
    %p37 = scmp.eq.s32.totalorder %s18, 0
    %p38 = por %p36, %p37
    %p39 = scmp.ne.s32.totalorder %s28, %s31
    %p40 = scmp.eq.s32.totalorder %s23, 1
    %p41 = por %p39, %p40
    %p42 = scmp.ne.s32.totalorder %s31, %s32
    %p43 = scmp.eq.s32.totalorder %s23, 0
    %p44 = por %p42, %p43
    %p45 = scmp.ne.s32.totalorder %s31, %s32
    %p46 = scmp.eq.s32.totalorder %s24, 1
    %p47 = por %p45, %p46
    %p49 = scmp.ne.s32.totalorder %s32, %s48
    %p50 = scmp.eq.s32.totalorder %s24, 0
    %p51 = por %p49, %p50
    %s53 = sadd.s32 %s52, 1
    %p56 = scmp.eq.s32.totalorder %s18, 1
    %p57 = scmp.ne.s32.totalorder %s52, %s54
    %p58 = scmp.eq.s32.totalorder %s18, 0
    %p59 = por %p57, %p58
    %p60 = scmp.ne.s32.totalorder %s52, %s54
    %p61 = scmp.eq.s32.totalorder %s23, 1
    %p62 = por %p60, %p61
    %p63 = scmp.ne.s32.totalorder %s54, %s55
    %p64 = scmp.eq.s32.totalorder %s23, 0
    %p65 = por %p63, %p64
    %p66 = scmp.ne.s32.totalorder %s54, %s55
    %p67 = scmp.eq.s32.totalorder %s24, 1
    %p68 = por %p66, %p67
    %p70 = scmp.ne.s32.totalorder %s55, %s69
    %p71 = scmp.eq.s32.totalorder %s24, 0
    %p72 = por %p70, %p71
    %s74 = sadd.s32 %s73, 1
    %p77 = scmp.eq.s32.totalorder %s18, 1
    %p78 = scmp.ne.s32.totalorder %s73, %s75
    %p79 = scmp.eq.s32.totalorder %s18, 0
    %p80 = por %p78, %p79
    %p81 = scmp.ne.s32.totalorder %s73, %s75
    %p82 = scmp.eq.s32.totalorder %s23, 1
    %p83 = por %p81, %p82
    %p84 = scmp.ne.s32.totalorder %s75, %s76
    %p85 = scmp.eq.s32.totalorder %s23, 0
    %p86 = por %p84, %p85
    %p87 = scmp.ne.s32.totalorder %s75, %s76
    %p88 = scmp.eq.s32.totalorder %s24, 1
    %p89 = por %p87, %p88
    %p91 = scmp.ne.s32.totalorder %s76, %s90
    %p92 = scmp.eq.s32.totalorder %s24, 0
    %p93 = por %p91, %p92
    %s95 = sadd.s32 %s94, 1
    %p98 = scmp.eq.s32.totalorder %s18, 1
    %p99 = scmp.ne.s32.totalorder %s94, %s96
    %p100 = scmp.eq.s32.totalorder %s18, 0
    %p101 = por %p99, %p100
    %p102 = scmp.ne.s32.totalorder %s94, %s96
    %p103 = scmp.eq.s32.totalorder %s23, 1
    %p104 = por %p102, %p103
    %p105 = scmp.ne.s32.totalorder %s96, %s97
    %p106 = scmp.eq.s32.totalorder %s23, 0
    %p107 = por %p105, %p106
    %p108 = scmp.ne.s32.totalorder %s96, %s97
    %p109 = scmp.eq.s32.totalorder %s24, 1
    %p110 = por %p108, %p109
    %p112 = scmp.ne.s32.totalorder %s97, %s111
    %p113 = scmp.eq.s32.totalorder %s24, 0
    %p114 = por %p112, %p113
    %s116 = sadd.s32 %s115, 1
    %p119 = scmp.eq.s32.totalorder %s18, 1
    %p120 = scmp.ne.s32.totalorder %s115, %s117
    %p121 = scmp.eq.s32.totalorder %s18, 0
    %p122 = por %p120, %p121
    %p123 = scmp.ne.s32.totalorder %s115, %s117
    %p124 = scmp.eq.s32.totalorder %s23, 1
    %p125 = por %p123, %p124
    %p126 = scmp.ne.s32.totalorder %s117, %s118
    %p127 = scmp.eq.s32.totalorder %s23, 0
    %p128 = por %p126, %p127
    %p129 = scmp.ne.s32.totalorder %s117, %s118
    %p130 = scmp.eq.s32.totalorder %s24, 1
    %p131 = por %p129, %p130
    %p133 = scmp.ne.s32.totalorder %s118, %s132
    %p134 = scmp.eq.s32.totalorder %s24, 0
    %p135 = por %p133, %p134
    %s137 = sadd.s32 %s136, 1
    %p140 = scmp.eq.s32.totalorder %s18, 1
    %p141 = scmp.ne.s32.totalorder %s136, %s138
    %p142 = scmp.eq.s32.totalorder %s18, 0
    %p143 = por %p141, %p142
    %p144 = scmp.ne.s32.totalorder %s136, %s138
    %p145 = scmp.eq.s32.totalorder %s23, 1
    %p146 = por %p144, %p145
    %p147 = scmp.ne.s32.totalorder %s138, %s139
    %p148 = scmp.eq.s32.totalorder %s23, 0
    %p149 = por %p147, %p148
    %p150 = scmp.ne.s32.totalorder %s138, %s139
    %p151 = scmp.eq.s32.totalorder %s24, 1
    %p152 = por %p150, %p151
    %p154 = scmp.ne.s32.totalorder %s139, %s153
    %p155 = scmp.eq.s32.totalorder %s24, 0
    %p156 = por %p154, %p155
    %s158 = sadd.s32 %s157, 1
    %p161 = scmp.eq.s32.totalorder %s18, 1
    %p162 = scmp.ne.s32.totalorder %s157, %s159
    %p163 = scmp.eq.s32.totalorder %s18, 0
    %p164 = por %p162, %p163
    %p165 = scmp.ne.s32.totalorder %s157, %s159
    %p166 = scmp.eq.s32.totalorder %s23, 1
    %p167 = por %p165, %p166
    %p168 = scmp.ne.s32.totalorder %s159, %s160
    %p169 = scmp.eq.s32.totalorder %s23, 0
    %p170 = por %p168, %p169
    %p171 = scmp.ne.s32.totalorder %s159, %s160
    %p172 = scmp.eq.s32.totalorder %s24, 1
    %p173 = por %p171, %p172
    %p175 = scmp.ne.s32.totalorder %s160, %s174
    %p176 = scmp.eq.s32.totalorder %s24, 0
    %p177 = por %p175, %p176
    %s179 = sadd.s32 %s178, 1
    %p182 = scmp.eq.s32.totalorder %s18, 1
    %p183 = scmp.ne.s32.totalorder %s178, %s180
    %p184 = scmp.eq.s32.totalorder %s18, 0
    %p185 = por %p183, %p184
    %p186 = scmp.ne.s32.totalorder %s178, %s180
    %p187 = scmp.eq.s32.totalorder %s23, 1
    %p188 = por %p186, %p187
    %p189 = scmp.ne.s32.totalorder %s180, %s181
    %p190 = scmp.eq.s32.totalorder %s23, 0
    %p191 = por %p189, %p190
    %p192 = scmp.ne.s32.totalorder %s180, %s181
    %p193 = scmp.eq.s32.totalorder %s24, 1
    %p194 = por %p192, %p193
    %p196 = scmp.ne.s32.totalorder %s181, %s195
    %p197 = scmp.eq.s32.totalorder %s24, 0
    %p198 = por %p196, %p197
    %s200 = sadd.s32 %s199, 1
    %p203 = scmp.eq.s32.totalorder %s18, 1
    %p204 = scmp.ne.s32.totalorder %s199, %s201
    %p205 = scmp.eq.s32.totalorder %s18, 0
    %p206 = por %p204, %p205
    %p207 = scmp.ne.s32.totalorder %s199, %s201
    %p208 = scmp.eq.s32.totalorder %s23, 1
    %p209 = por %p207, %p208
    %p210 = scmp.ne.s32.totalorder %s201, %s202
    %p211 = scmp.eq.s32.totalorder %s23, 0
    %p212 = por %p210, %p211
    %p213 = scmp.ne.s32.totalorder %s201, %s202
    %p214 = scmp.eq.s32.totalorder %s24, 1
    %p215 = por %p213, %p214
    %p217 = scmp.ne.s32.totalorder %s202, %s216
    %p218 = scmp.eq.s32.totalorder %s24, 0
    %p219 = por %p217, %p218
    %s221 = sadd.s32 %s220, 1
    %p224 = scmp.eq.s32.totalorder %s18, 1
    %p225 = scmp.ne.s32.totalorder %s220, %s222
    %p226 = scmp.eq.s32.totalorder %s18, 0
    %p227 = por %p225, %p226
    %p228 = scmp.ne.s32.totalorder %s220, %s222
    %p229 = scmp.eq.s32.totalorder %s23, 1
    %p230 = por %p228, %p229
    %p231 = scmp.ne.s32.totalorder %s222, %s223
    %p232 = scmp.eq.s32.totalorder %s23, 0
    %p233 = por %p231, %p232
    %p234 = scmp.ne.s32.totalorder %s222, %s223
    %p235 = scmp.eq.s32.totalorder %s24, 1
    %p236 = por %p234, %p235
    %p238 = scmp.ne.s32.totalorder %s223, %s237
    %p239 = scmp.eq.s32.totalorder %s24, 0
    %p240 = por %p238, %p239
    %s242 = sadd.s32 %s241, 1
    %p245 = scmp.eq.s32.totalorder %s18, 1
    %p246 = scmp.ne.s32.totalorder %s241, %s243
    %p247 = scmp.eq.s32.totalorder %s18, 0
    %p248 = por %p246, %p247
    %p249 = scmp.ne.s32.totalorder %s241, %s243
    %p250 = scmp.eq.s32.totalorder %s23, 1
    %p251 = por %p249, %p250
    %p252 = scmp.ne.s32.totalorder %s243, %s244
    %p253 = scmp.eq.s32.totalorder %s23, 0
    %p254 = por %p252, %p253
    %p255 = scmp.ne.s32.totalorder %s243, %s244
    %p256 = scmp.eq.s32.totalorder %s24, 1
    %p257 = por %p255, %p256
    %p259 = scmp.ne.s32.totalorder %s244, %s258
    %p260 = scmp.eq.s32.totalorder %s24, 0
    %p261 = por %p259, %p260
    %s263 = sadd.s32 %s262, 1
    %p266 = scmp.eq.s32.totalorder %s18, 1
    %p267 = scmp.ne.s32.totalorder %s262, %s264
    %p268 = scmp.eq.s32.totalorder %s18, 0
    %p269 = por %p267, %p268
    %p270 = scmp.ne.s32.totalorder %s262, %s264
    %p271 = scmp.eq.s32.totalorder %s23, 1
    %p272 = por %p270, %p271
    %p273 = scmp.ne.s32.totalorder %s264, %s265
    %p274 = scmp.eq.s32.totalorder %s23, 0
    %p275 = por %p273, %p274
    %p276 = scmp.ne.s32.totalorder %s264, %s265
    %p277 = scmp.eq.s32.totalorder %s24, 1
    %p278 = por %p276, %p277
    %p280 = scmp.ne.s32.totalorder %s265, %s279
    %p281 = scmp.eq.s32.totalorder %s24, 0
    %p282 = por %p280, %p281
    %s283 = ssub.s32 %s18, %s25
    %p284 = scmp.eq.s32.totalorder %s283, 0
    %s286 = sadd.s32 %s285, 1
    %s287 = scalar_select %p284, %s285, %s286
    %p290 = pneg %p284
    %p291 = scmp.eq.s32.totalorder %s18, 1
    %p292 = por %p290, %p291
    %p293 = scmp.ne.s32.totalorder %s285, %s288
    %p294 = scmp.eq.s32.totalorder %s18, 0
    %p295 = por %p293, %p294
    %p296 = scmp.ne.s32.totalorder %s285, %s288
    %p297 = scmp.eq.s32.totalorder %s23, 1
    %p298 = por %p296, %p297
    %p299 = scmp.ne.s32.totalorder %s288, %s289
    %p300 = scmp.eq.s32.totalorder %s23, 0
    %p301 = por %p299, %p300
    %p302 = scmp.ne.s32.totalorder %s288, %s289
    %p303 = scmp.eq.s32.totalorder %s24, 1
    %p304 = por %p302, %p303
    %p306 = scmp.ne.s32.totalorder %s289, %s305
    %p307 = scmp.eq.s32.totalorder %s24, 0
    %p308 = por %p306, %p307
    %p309 = scmp.le.s32.totalorder 1, %s18
    %p310 = scmp.lt.s32.totalorder %s18, 3
    %p311 = pnand %p309, %p310
    %p312 = pneg %p311
    // Predicated region
    $region9: #{_lambda_.9} parent=5 // pred_check
      _
    $region10: #{_lambda_.9} parent=5 // pred_check_branch
      %314 = sbr.rel (%p311) target = $region12
    $region11: #{_lambda_.9} parent=5 // pred_region
      %s315 = ssub.s32 %s18, 1
      // Predicated region
      $region13: #{_lambda_.9} parent=11 // pred_check
        %p316 = pneg %p65
      $region14: #{_lambda_.9} parent=11 // pred_check_branch
        %318 = sbr.rel (%p316) target = $region16
      $region15: #{_lambda_.9} parent=11 // pred_region
        _
      $region16: #{_lambda_.9} parent=11 // pred_fallthru
        _
      // Predicated region
      $region17: #{_lambda_.9} parent=11 // pred_check
        %p319 = pneg %p86
      $region18: #{_lambda_.9} parent=11 // pred_check_branch
        %321 = sbr.rel (%p319) target = $region20
      $region19: #{_lambda_.9} parent=11 // pred_region
        _
      $region20: #{_lambda_.9} parent=11 // pred_fallthru
        _
      // Predicated region
      $region21: #{_lambda_.9} parent=11 // pred_check
        %p322 = pneg %p107
      $region22: #{_lambda_.9} parent=11 // pred_check_branch
        %324 = sbr.rel (%p322) target = $region24
      $region23: #{_lambda_.9} parent=11 // pred_region
        _
      $region24: #{_lambda_.9} parent=11 // pred_fallthru
        _
      // Predicated region
      $region25: #{_lambda_.9} parent=11 // pred_check
        %p325 = pneg %p128
      $region26: #{_lambda_.9} parent=11 // pred_check_branch
        %327 = sbr.rel (%p325) target = $region28
      $region27: #{_lambda_.9} parent=11 // pred_region
        _
      $region28: #{_lambda_.9} parent=11 // pred_fallthru
        _
      // Predicated region
      $region29: #{_lambda_.9} parent=11 // pred_check
        %p328 = pneg %p149
      $region30: #{_lambda_.9} parent=11 // pred_check_branch
        %330 = sbr.rel (%p328) target = $region32
      $region31: #{_lambda_.9} parent=11 // pred_region
        _
      $region32: #{_lambda_.9} parent=11 // pred_fallthru
        _
      // Predicated region
      $region33: #{_lambda_.9} parent=11 // pred_check
        %p331 = pneg %p170
      $region34: #{_lambda_.9} parent=11 // pred_check_branch
        %333 = sbr.rel (%p331) target = $region36
      $region35: #{_lambda_.9} parent=11 // pred_region
        _
      $region36: #{_lambda_.9} parent=11 // pred_fallthru
        _
      // Predicated region
      $region37: #{_lambda_.9} parent=11 // pred_check
        %p334 = pneg %p191
      $region38: #{_lambda_.9} parent=11 // pred_check_branch
        %336 = sbr.rel (%p334) target = $region40
      $region39: #{_lambda_.9} parent=11 // pred_region
        _
      $region40: #{_lambda_.9} parent=11 // pred_fallthru
        _
      // Predicated region
      $region41: #{_lambda_.9} parent=11 // pred_check
        %p337 = pneg %p212
      $region42: #{_lambda_.9} parent=11 // pred_check_branch
        %339 = sbr.rel (%p337) target = $region44
      $region43: #{_lambda_.9} parent=11 // pred_region
        _
      $region44: #{_lambda_.9} parent=11 // pred_fallthru
        _
      // Predicated region
      $region45: #{_lambda_.9} parent=11 // pred_check
        %p340 = pneg %p233
      $region46: #{_lambda_.9} parent=11 // pred_check_branch
        %342 = sbr.rel (%p340) target = $region48
      $region47: #{_lambda_.9} parent=11 // pred_region
        _
      $region48: #{_lambda_.9} parent=11 // pred_fallthru
        _
      // Predicated region
      $region49: #{_lambda_.9} parent=11 // pred_check
        %p343 = pneg %p254
      $region50: #{_lambda_.9} parent=11 // pred_check_branch
        %345 = sbr.rel (%p343) target = $region52
      $region51: #{_lambda_.9} parent=11 // pred_region
        _
      $region52: #{_lambda_.9} parent=11 // pred_fallthru
        _
      // Predicated region
      $region53: #{_lambda_.9} parent=11 // pred_check
        %p346 = pneg %p275
      $region54: #{_lambda_.9} parent=11 // pred_check_branch
        %348 = sbr.rel (%p346) target = $region56
      $region55: #{_lambda_.9} parent=11 // pred_region
        _
      $region56: #{_lambda_.9} parent=11 // pred_fallthru
        _
    $region12: #{_lambda_.9} parent=5 // pred_fallthru
      _
    %p349 = scmp.lt.s32.totalorder %s18, 2
    // Predicated region
    $region57: #{_lambda_.9} parent=5 // pred_check
      %p350 = pneg %p349
    $region58: #{_lambda_.9} parent=5 // pred_check_branch
      %352 = sbr.rel (%p350) target = $region60
    $region59: #{_lambda_.9} parent=5 // pred_region
      // Predicated region
      $region61: #{_lambda_.9} parent=59 // pred_check
        %p353 = pneg %p38
      $region62: #{_lambda_.9} parent=59 // pred_check_branch
        %355 = sbr.rel (%p353) target = $region64
      $region63: #{_lambda_.9} parent=59 // pred_region
        %p356 = scmp.lt.s32.totalorder %s18, 1
        %s357 = scalar_select %p356, %s18, 1
        %s358 = smul.addr %s357, 3
        %s359 = smul.addr %s358, 4
        %s360 = scalar_lea.vmem %s0, %s359
      $region64: #{_lambda_.9} parent=59 // pred_fallthru
        _
    $region60: #{_lambda_.9} parent=5 // pred_fallthru
      _
    %p361 = scmp.le.s32.totalorder 1, %s18
    %p362 = scmp.lt.s32.totalorder %s18, 3
    %p363 = pnand %p361, %p362
    %p364 = pneg %p363
    // Predicated region
    $region65: #{_lambda_.9} parent=5 // pred_check
      _
    $region66: #{_lambda_.9} parent=5 // pred_check_branch
      %366 = sbr.rel (%p363) target = $region68
    $region67: #{_lambda_.9} parent=5 // pred_region
      %s367 = ssub.s32 %s18, 1
      %p368 = scmp.lt.s32.totalorder %s23, 1
      %s369 = scalar_select %p368, %s23, 1
      %s370 = smul.addr %s369, 3
      %s371 = smul.addr %s370, 4
      %s372 = scalar_lea.vmem %s0, %s371
      %p373 = pneg %p44
      %p374 = pneg %p41
      %p375 = pneg %p65
      %p376 = pneg %p62
      %p377 = pneg %p86
      %p378 = pneg %p83
      %p379 = pneg %p107
      %p380 = pneg %p104
      %p381 = pneg %p128
      %p382 = pneg %p125
      %p383 = pneg %p149
      %p384 = pneg %p146
      %p385 = pneg %p170
      %p386 = pneg %p167
      %p387 = pneg %p191
      %p388 = pneg %p188
      %p389 = pneg %p212
      %p390 = pneg %p209
      %p391 = pneg %p233
      %p392 = pneg %p230
      %p393 = pneg %p254
      %p394 = pneg %p251
      %p395 = pneg %p275
      %p396 = pneg %p272
      %p397 = pneg %p301
      %p398 = pneg %p298
      %p399 = scmp.lt.s32.totalorder %s23, 1
      %s400 = scalar_select %p399, %s23, 1
      %s401 = smul.addr %s400, 8
      %s402 = scalar_lea.vmem %s12, %s401
      %p403 = scmp.lt.s32.totalorder %s23, 1
      %s404 = scalar_select %p403, %s23, 1
      %s405 = smul.addr %s404, 3
      %s406 = smul.addr %s405, 4
      %s407 = scalar_lea.vmem %s0, %s406
      %p408 = scmp.lt.s32.totalorder %s23, 1
      %s409 = scalar_select %p408, %s23, 1
      %s410 = smul.addr %s409, 8
      %s411 = scalar_lea.vmem %s12, %s410
      %v413 = vld [vmem:[%s407] sm:$0xf]
      %v414 = vld [vmem:[%s407 + $0x4] sm:$0xf]
      %v415 = vld [vmem:[%s407 + $0x8] sm:$0x3]
      %v416 = vld [vmem:[%s2] sm:$0xf]
      %v417 = vld [vmem:[%s2 + $0x4] sm:$0xf]
      %v418 = vld [vmem:[%s2 + $0x8] sm:$0xf]
      %v419 = vld [vmem:[%s2 + $0xc] sm:$0xf]
      %v420 = vld [vmem:[%s3] sm:$0x1]
      %v422 = vperm.slane %v420, 0
      %v427 = vunpack.c.l.b16 %v413
      %v428 = vunpack.c.l.b16 %v414
      %v429 = vunpack.c.l.b16 %v415
      %v430 = vpack.c.b16 %v428, %v427
      %v431 = vpack.c.b16 %v429, %v429
      %v436 = vunpack.c.l.b16 %v416
      %v437 = vunpack.c.l.b16 %v417
      %v438 = vunpack.c.l.b16 %v418
      %v439 = vunpack.c.l.b16 %v419
      %v440 = vpack.c.b16 %v437, %v436
      %v441 = vpack.c.b16 %v439, %v438
      %vm444 = vcmask 261120
      %v446 = vsel %vm444, %v430, 0
      %v449 = vsel %vm444, %v431, 0
      %451 = vmatpush.bf16.msra.mxu0 0
      %452 = vmatpush.bf16.msra.mxu0 0
      %453 = vmatpush.bf16.msra.mxu0 0
      %454 = vmatpush.bf16.msra.mxu0 0
      %455 = vmatpush.bf16.msra.mxu0 0
      %456 = vmatpush.bf16.msra.mxu0 0
      %457 = vmatpush.bf16.msra.mxu0 %v441
      %458 = vmatpush.bf16.msra.mxu0 %v440
      %459 = vmatmul.bf16.gmra.mxu0 %v446
      %v460 = vpop.f32.mrf.mxu0
      %v461 = vadd.f32 %v422, %v460
      %v462 = vpop.f32.mrf.mxu0
      %v463 = vadd.f32 %v422, %v462
      %464 = vmatmul.bf16.gmra.mxu0 %v449
      %v465 = vpop.f32.mrf.mxu0
      %v466 = vadd.f32 %v422, %v465
      %v467 = vpop.f32.mrf.mxu0
      %468 = vdwg.mxu0
      %v469 = vxor.u32 %v461, 2147483648
      %v470 = vxor.u32 %v463, 2147483648
      %v471 = vxor.u32 %v466, 2147483648
      %v472 = vmul.f32 %v469, 1.442695
      %v473 = vpow.pop %v472
      %v474 = vmul.f32 %v470, 1.442695
      %v475 = vpow.pop %v474
      %v476 = vmul.f32 %v471, 1.442695
      %v477 = vpow.pop %v476
      %v478 = vadd.f32 %v473, 1.0
      %v479 = vadd.f32 %v475, 1.0
      %v480 = vadd.f32 %v477, 1.0
      %v481 = vrcp.pop %v478
      %v482 = vmul.f32 %v478, %v481
      %v483 = vsub.f32 1.0, %v482
      %v484 = vmul.f32 %v481, %v483
      %v485 = vadd.f32 %v481, %v484
      %vm486 = vweird.f32 %v478
      %vm487 = vweird.f32 %v481
      %vm488 = vmor %vm486, %vm487
      %v489 = vsel %vm488, %v481, %v485
      %v490 = vand.u32 2147483647, %v478
      %vm491 = vcmp.eq.f32.partialorder %v490, 8.507059e+37
      %v492 = vand.u32 %v478, 2147483648
      %v493 = vor.u32 1.1754944e-38, %v492
      %v494 = vsel %vm491, %v493, %v489
      %v495 = vmul.f32 1.0, %v494
      %v496 = vrcp.pop %v479
      %v497 = vmul.f32 %v479, %v496
      %v498 = vsub.f32 1.0, %v497
      %v499 = vmul.f32 %v496, %v498
      %v500 = vadd.f32 %v496, %v499
      %vm501 = vweird.f32 %v479
      %vm502 = vweird.f32 %v496
      %vm503 = vmor %vm501, %vm502
      %v504 = vsel %vm503, %v496, %v500
      %v505 = vand.u32 2147483647, %v479
      %vm506 = vcmp.eq.f32.partialorder %v505, 8.507059e+37
      %v507 = vand.u32 %v479, 2147483648
      %v508 = vor.u32 1.1754944e-38, %v507
      %v509 = vsel %vm506, %v508, %v504
      %v510 = vmul.f32 1.0, %v509
      %v511 = vrcp.pop %v480
      %v512 = vmul.f32 %v480, %v511
      %v513 = vsub.f32 1.0, %v512
      %v514 = vmul.f32 %v511, %v513
      %v515 = vadd.f32 %v511, %v514
      %vm516 = vweird.f32 %v480
      %vm517 = vweird.f32 %v511
      %vm518 = vmor %vm516, %vm517
      %v519 = vsel %vm518, %v511, %v515
      %v520 = vand.u32 2147483647, %v480
      %vm521 = vcmp.eq.f32.partialorder %v520, 8.507059e+37
      %v522 = vand.u32 %v480, 2147483648
      %v523 = vor.u32 1.1754944e-38, %v522
      %v524 = vsel %vm521, %v523, %v519
      %v525 = vmul.f32 1.0, %v524
      %v526 = vmul.f32 %v461, %v495
      %v527 = vmul.f32 %v463, %v510
      %v528 = vmul.f32 %v466, %v525
      %v529 = vld [vmem:[%s1] sm:$0xff]
      %v530 = vld [vmem:[%s1 + $0x8] sm:$0xff]
      %v531 = vld [vmem:[%s1 + $0x10] sm:$0xf]
      %533 = vset.pattern.permute.xlu0 0
      %534 = vperm.xlu0 %533, %v529
      %v535 = vpop.permute.xlu0 %534
      %538 = vset.pattern.permute.xlu0 0
      %539 = vperm.xlu0 %538, %v530
      %v540 = vpop.permute.xlu0 %539
      %543 = vset.pattern.permute.xlu0 0
      %544 = vperm.xlu0 %543, %v531
      %v545 = vpop.permute.xlu0 %544
      %v547 = vmul.f32 %v526, %v535
      %v548 = vmul.f32 %v527, %v540
      %v549 = vmul.f32 %v528, %v545
      %550 = vst [vmem:[#allocation2] sm:$0xff] %v547
      %551 = vst [vmem:[#allocation2 + $0x8] sm:$0xff] %v548
      %552 = vst [vmem:[#allocation2 + $0x10] sm:$0xf] %v549
      %v553 = vld [vmem:[#allocation2] sm:$0xff]
      %v554 = vld [vmem:[%s4] sm:$0x1]
      %v556 = vperm.slane %v554, 0
      %v558 = vmul.f32 %v553, %v556
      %v559 = vld [vmem:[#allocation2 + $0x1] sm:$0xff]
      %s560 = scalar_lea.vmem %s4, 1
      %v561 = vld [vmem:[%s560] sm:$0x1]
      %v563 = vperm.slane %v561, 0
      %v565 = vmul.f32 %v559, %v563
      %v566 = vadd.f32 %v558, %v565
      %v567 = vld [vmem:[#allocation2 + $0x2] sm:$0xff]
      %s568 = scalar_lea.vmem %s4, 2
      %v569 = vld [vmem:[%s568] sm:$0x1]
      %v571 = vperm.slane %v569, 0
      %v573 = vmul.f32 %v567, %v571
      %v574 = vadd.f32 %v566, %v573
      %v575 = vld [vmem:[#allocation2 + $0x4] sm:$0xff]
      %s576 = scalar_lea.vmem %s4, 3
      %v577 = vld [vmem:[%s576] sm:$0x1]
      %v579 = vperm.slane %v577, 0
      %v581 = vmul.f32 %v575, %v579
      %v582 = vadd.f32 %v574, %v581
      %v583 = vld [vmem:[#allocation2 + $0x5] sm:$0xff]
      %s584 = scalar_lea.vmem %s4, 4
      %v585 = vld [vmem:[%s584] sm:$0x1]
      %v587 = vperm.slane %v585, 0
      %v589 = vmul.f32 %v583, %v587
      %v590 = vadd.f32 %v582, %v589
      %v591 = vld [vmem:[#allocation2 + $0x6] sm:$0xff]
      %s592 = scalar_lea.vmem %s4, 5
      %v593 = vld [vmem:[%s592] sm:$0x1]
      %v595 = vperm.slane %v593, 0
      %v597 = vmul.f32 %v591, %v595
      %v598 = vadd.f32 %v590, %v597
      %v599 = vld [vmem:[#allocation2 + $0x8] sm:$0xff]
      %s600 = scalar_lea.vmem %s4, 6
      %v601 = vld [vmem:[%s600] sm:$0x1]
      %v603 = vperm.slane %v601, 0
      %v605 = vmul.f32 %v599, %v603
      %v606 = vadd.f32 %v598, %v605
      %v607 = vld [vmem:[#allocation2 + $0x9] sm:$0xff]
      %s608 = scalar_lea.vmem %s4, 7
      %v609 = vld [vmem:[%s608] sm:$0x1]
      %v611 = vperm.slane %v609, 0
      %v613 = vmul.f32 %v607, %v611
      %v614 = vadd.f32 %v606, %v613
      %v615 = vld [vmem:[#allocation2 + $0xa] sm:$0xff]
      %s616 = scalar_lea.vmem %s4, 8
      %v617 = vld [vmem:[%s616] sm:$0x1]
      %v619 = vperm.slane %v617, 0
      %v621 = vmul.f32 %v615, %v619
      %v622 = vadd.f32 %v614, %v621
      %v623 = vld [vmem:[%s5] sm:$0x1]
      %v625 = vperm.slane %v623, 0
      %v627 = vadd.f32 %v622, %v625
      %v628 = vxor.u32 %v627, 2147483648
      %v629 = vmul.f32 %v628, 1.442695
      %v630 = vpow.pop %v629
      %v631 = vadd.f32 %v630, 1.0
      %v632 = vrcp.pop %v631
      %v633 = vmul.f32 %v631, %v632
      %v634 = vsub.f32 1.0, %v633
      %v635 = vmul.f32 %v632, %v634
      %v636 = vadd.f32 %v632, %v635
      %vm637 = vweird.f32 %v631
      %vm638 = vweird.f32 %v632
      %vm639 = vmor %vm637, %vm638
      %v640 = vsel %vm639, %v632, %v636
      %v641 = vand.u32 2147483647, %v631
      %vm642 = vcmp.eq.f32.partialorder %v641, 8.507059e+37
      %v643 = vand.u32 %v631, 2147483648
      %v644 = vor.u32 1.1754944e-38, %v643
      %v645 = vsel %vm642, %v644, %v640
      %v646 = vmul.f32 1.0, %v645
      %v647 = vmul.f32 %v627, %v646
      %v648 = vld [vmem:[%s1 + $0x5] sm:$0xff]
      %650 = vset.pattern.permute.xlu0 0
      %651 = vperm.xlu0 %650, %v648
      %v652 = vpop.permute.xlu0 %651
      %v654 = vmul.f32 %v647, %v652
      %v655 = vrot.slane %v654, 4
      %v656 = vadd.f32 %v654, %v655
      %v657 = vrot.slane %v656, 2
      %v658 = vadd.f32 %v656, %v657
      %v659 = vrot.slane %v658, 1
      %v660 = vadd.f32 %v658, %v659
      %v661 = vmul.f32 %v660, 0.25
      %v662 = vld [vmem:[%s6] sm:$0xff]
      %v663 = vmul.f32 %v662, %v661
      %664 = vadd.xlane.f32.xlu0 %v663
      %v665 = vpop.xlane.xlu0 %664
      %v666 = vld [vmem:[%s7] sm:$0xff]
      %v667 = vadd.f32 %v665, %v666
      %v668 = vxor.u32 %v667, 2147483648
      %v669 = vmul.f32 %v668, 1.442695
      %v670 = vpow.pop %v669
      %v671 = vadd.f32 %v670, 1.0
      %v672 = vrcp.pop %v671
      %v673 = vmul.f32 %v671, %v672
      %v674 = vsub.f32 1.0, %v673
      %v675 = vmul.f32 %v672, %v674
      %v676 = vadd.f32 %v672, %v675
      %vm677 = vweird.f32 %v671
      %vm678 = vweird.f32 %v672
      %vm679 = vmor %vm677, %vm678
      %v680 = vsel %vm679, %v672, %v676
      %v681 = vand.u32 2147483647, %v671
      %vm682 = vcmp.eq.f32.partialorder %v681, 8.507059e+37
      %v683 = vand.u32 %v671, 2147483648
      %v684 = vor.u32 1.1754944e-38, %v683
      %v685 = vsel %vm682, %v684, %v680
      %v686 = vmul.f32 1.0, %v685
      %v687 = vmul.f32 %v667, %v686
      %v688 = vld [vmem:[%s8] sm:$0xff]
      %690 = vset.pattern.permute.xlu0 0
      %691 = vperm.xlu0 %690, %v687
      %v692 = vpop.permute.xlu0 %691
      %v694 = vmul.f32 %v688, %v692
      %v695 = vrot.slane %v694, 4
      %v696 = vadd.f32 %v694, %v695
      %v697 = vrot.slane %v696, 2
      %v698 = vadd.f32 %v696, %v697
      %v699 = vrot.slane %v698, 1
      %v700 = vadd.f32 %v698, %v699
      %v701 = vld [vmem:[%s9] sm:$0x1]
      %v702 = vadd.f32 %v700, %v701
      %v703 = vxor.u32 %v702, 2147483648
      %v704 = vmul.f32 %v703, 1.442695
      %v705 = vpow.pop %v704
      %v706 = vadd.f32 %v705, 1.0
      %v707 = vrcp.pop %v706
      %v708 = vmul.f32 %v706, %v707
      %v709 = vsub.f32 1.0, %v708
      %v710 = vmul.f32 %v707, %v709
      %v711 = vadd.f32 %v707, %v710
      %vm712 = vweird.f32 %v706
      %vm713 = vweird.f32 %v707
      %vm714 = vmor %vm712, %vm713
      %v715 = vsel %vm714, %v707, %v711
      %v716 = vand.u32 2147483647, %v706
      %vm717 = vcmp.eq.f32.partialorder %v716, 8.507059e+37
      %v718 = vand.u32 %v706, 2147483648
      %v719 = vor.u32 1.1754944e-38, %v718
      %v720 = vsel %vm717, %v719, %v715
      %v721 = vmul.f32 1.0, %v720
      %v722 = vperm.slane %v721, 0
      %v723 = vmul.f32 %v647, %v722
      %v724 = vpack.c.bf16 %v723, %v723
      %v725 = vld [vmem:[%s10] sm:$0xf]
      %v726 = vld [vmem:[%s10 + $0x4] sm:$0xf]
      %v727 = vld [vmem:[%s10 + $0x8] sm:$0xf]
      %v728 = vld [vmem:[%s10 + $0xc] sm:$0xf]
      %v729 = vld [vmem:[%s10 + $0x10] sm:$0xf]
      %v730 = vld [vmem:[%s10 + $0x14] sm:$0xf]
      %v731 = vld [vmem:[%s10 + $0x18] sm:$0xf]
      %v732 = vld [vmem:[%s10 + $0x1c] sm:$0xf]
      %v733 = vld [vmem:[%s10 + $0x20] sm:$0xf]
      %v734 = vld [vmem:[%s10 + $0x24] sm:$0xf]
      %v735 = vld [vmem:[%s10 + $0x28] sm:$0xf]
      %v736 = vld [vmem:[%s10 + $0x2c] sm:$0xf]
      %v737 = vld [vmem:[%s10 + $0x30] sm:$0xf]
      %v738 = vld [vmem:[%s10 + $0x34] sm:$0xf]
      %v739 = vld [vmem:[%s10 + $0x38] sm:$0xf]
      %v740 = vld [vmem:[%s10 + $0x3c] sm:$0xf]
      %v741 = vld [vmem:[%s11] sm:$0x1]
      %v743 = vperm.slane %v741, 0
      %v761 = vunpack.c.l.b16 %v725
      %v762 = vunpack.c.l.b16 %v726
      %v763 = vunpack.c.l.b16 %v727
      %v764 = vunpack.c.l.b16 %v728
      %v765 = vunpack.c.l.b16 %v729
      %v766 = vunpack.c.l.b16 %v730
      %v767 = vunpack.c.l.b16 %v731
      %v768 = vunpack.c.l.b16 %v732
      %v769 = vunpack.c.l.b16 %v733
      %v770 = vunpack.c.l.b16 %v734
      %v771 = vunpack.c.l.b16 %v735
      %v772 = vunpack.c.l.b16 %v736
      %v773 = vunpack.c.l.b16 %v737
      %v774 = vunpack.c.l.b16 %v738
      %v775 = vunpack.c.l.b16 %v739
      %v776 = vunpack.c.l.b16 %v740
      %v777 = vpack.c.b16 %v762, %v761
      %v778 = vpack.c.b16 %v764, %v763
      %v779 = vpack.c.b16 %v766, %v765
      %v780 = vpack.c.b16 %v768, %v767
      %v781 = vpack.c.b16 %v770, %v769
      %v782 = vpack.c.b16 %v772, %v771
      %v783 = vpack.c.b16 %v774, %v773
      %v784 = vpack.c.b16 %v776, %v775
      %793 = vmatpush.bf16.msra.mxu0 %v784
      %794 = vmatpush.bf16.msra.mxu0 %v783
      %795 = vmatpush.bf16.msra.mxu0 %v782
      %796 = vmatpush.bf16.msra.mxu0 %v781
      %797 = vmatpush.bf16.msra.mxu0 %v780
      %798 = vmatpush.bf16.msra.mxu0 %v779
      %799 = vmatpush.bf16.msra.mxu0 %v778
      %800 = vmatpush.bf16.msra.mxu0 %v777
      %801 = vmatmul.bf16.gmra.mxu0 %v724
      %v802 = vpop.f32.mrf.mxu0
      %v803 = vadd.f32 %v743, %v802
      %v804 = vpop.f32.mrf.mxu0
      %805 = vdwg.mxu0
      %v806 = vld [vmem:[%s407] sm:$0xc]
      %v807 = vld [vmem:[%s407 + $0x4] sm:$0x7]
      %v808 = vunpack.c.l.bf16 %v806
      %v809 = vunpack.c.l.bf16 %v807
      %vm812 = vcmask 1042432
      %v813 = vrot.slane %v808, 5
      %v814 = vrot.slane %v809, 5
      %v815 = vsel %vm812, %v813, %v814
      %v817 = vadd.f32 %v803, %v815
      %818 = vst.msk [vmem:[%s411] sm:$0xff] %vm444, %v817
      %p819 = scmp.lt.s32.totalorder %s23, 1
      %s820 = scalar_select %p819, %s23, 1
      %s821 = smul.addr %s820, 8
      %s822 = scalar_lea.vmem %s12, %s821
      // Predicated region
      $region69: #{_lambda_.9} parent=67 // pred_check
        %p823 = pneg %p298
      $region70: #{_lambda_.9} parent=67 // pred_check_branch
        %825 = sbr.rel (%p823) target = $region72
      $region71: #{_lambda_.9} parent=67 // pred_region
        _
      $region72: #{_lambda_.9} parent=67 // pred_fallthru
        _
    $region68: #{_lambda_.9} parent=5 // pred_fallthru
      _
    %p826 = scmp.le.s32.totalorder 2, %s18
    // Predicated region
    $region73: #{_lambda_.9} parent=5 // pred_check
      %p827 = pneg %p826
    $region74: #{_lambda_.9} parent=5 // pred_check_branch
      %829 = sbr.rel (%p827) target = $region76
    $region75: #{_lambda_.9} parent=5 // pred_region
      %s830 = ssub.s32 %s18, 2
      // Predicated region
      $region77: #{_lambda_.9} parent=75 // pred_check
        %p831 = pneg %p304
      $region78: #{_lambda_.9} parent=75 // pred_check_branch
        %833 = sbr.rel (%p831) target = $region80
      $region79: #{_lambda_.9} parent=75 // pred_region
        %p834 = scmp.lt.s32.totalorder %s24, 1
        %s835 = scalar_select %p834, %s24, 1
        %s836 = smul.addr %s835, 8
        %s837 = scalar_lea.vmem %s12, %s836
      $region80: #{_lambda_.9} parent=75 // pred_fallthru
        _
    $region76: #{_lambda_.9} parent=5 // pred_fallthru
      _
  $region6: #{_lambda_.9} parent=0 // loop_footer
    %s22 = sadd.s32 1, %s18
  $region7: #{_lambda_.9} parent=0 // loop_footer_branch
    %17 = sbr.rel target = $region3
  $region8: #{_lambda_.9} parent=0 // loop_exit
    _

</llo_original>
